<compile_context>
chip_gen: v7x
topology: tpu7x:2x2x1
jax: 0.10.0
libtpu: 0.0.40
codegen_flags: <defaults>
</compile_context>

<pallas_src>
import functools

import jax
import jax.numpy as jnp
import numpy as np
from jax.experimental import pallas as pl
from jax.experimental.pallas import tpu as pltpu


def _basic_block_kernel(x_ref, w1_ref, s1_ref, b1_ref, w2_ref, s2_ref, b2_ref,
                        mask_ref, o_ref, h_ext_ref, *, H, W):
    """Fused BasicBlock forward for one batch element.

    x_ref:     (1, P_ext, C)     zero-extended, zero-padded, flattened NHWC input
    w1_ref:    (9, C, planes)    conv1 taps, tap index t = dy*3 + dx
    s1/b1_ref: (1, planes)       folded BN1 scale / bias
    w2_ref:    (9, planes, planes)
    s2/b2_ref: (1, planes)       folded BN2 scale / bias
    mask_ref:  (P, 1)            1.0 on interior (real-pixel) padded-grid rows
    o_ref:     (1, P, planes)    output on the padded grid (border rows junk,
                                 sliced away by the wrapper)
    h_ext_ref: VMEM (P_ext, planes) scratch for the padded conv1 activation
    """
    P = (H + 2) * (W + 2)
    S = W + 3  # max |tap offset| == zero-extension on each side
    offsets = [(dy - 1) * (W + 2) + (dx - 1) for dy in range(3) for dx in range(3)]
    planes = o_ref.shape[-1]

    # ---- conv1 + bn1 + relu -------------------------------------------------
    acc = jnp.zeros((P, planes), jnp.float32)
    for t, off in enumerate(offsets):
        xs = x_ref[0, S + off: S + off + P, :]
        acc = acc + jnp.dot(xs, w1_ref[t], preferred_element_type=jnp.float32)
    h = jnp.maximum(acc * s1_ref[...] + b1_ref[...], 0.0)
    # Zero the padded-border rows: they become conv2's zero padding.
    h = h * mask_ref[...]

    # Stage the padded intermediate in VMEM so conv2's taps are sublane slices.
    h_ext_ref[...] = jnp.zeros_like(h_ext_ref)
    h_ext_ref[S: S + P, :] = h

    # ---- conv2 + bn2 + residual + relu --------------------------------------
    acc2 = jnp.zeros((P, planes), jnp.float32)
    for t, off in enumerate(offsets):
        hs = h_ext_ref[S + off: S + off + P, :]
        acc2 = acc2 + jnp.dot(hs, w2_ref[t], preferred_element_type=jnp.float32)

    residual = x_ref[0, S: S + P, :].astype(jnp.float32)
    out = jnp.maximum(acc2 * s2_ref[...] + b2_ref[...] + residual, 0.0)
    o_ref[0] = out.astype(o_ref.dtype)


def _fold_bn(gamma, beta, mean, var, eps):
    scale = gamma / jnp.sqrt(var + eps)
    bias = beta - mean * scale
    return scale, bias


def basic_block_forward(x, w1, bn1, w2, bn2, *, eps=1e-5):
    """x: (B, C, H, W); w1: (planes, C, 3, 3); w2: (planes, planes, 3, 3).
    bn1/bn2: dicts with 'gamma','beta','mean','var', each (planes,).
    Identity residual path only (stride=1, inplanes == planes)."""
    B, C, H, W = x.shape
    planes = w1.shape[0]
    assert w1.shape == (planes, C, 3, 3)
    assert w2.shape == (planes, planes, 3, 3)
    assert planes == C, "identity residual requires inplanes == planes"
    # TODO(synk): stride != 1 and the optional external `downsample` module are
    # not translated; only the default (stride=1, downsample=None) path is fused.

    P = (H + 2) * (W + 2)
    S = W + 3
    P_ext = P + 2 * S

    # NCHW -> channels-last, zero-pad spatial by 1, flatten the padded grid onto
    # the sublane axis and zero-extend so every 3x3 tap slice stays in bounds.
    xt = jnp.transpose(x, (0, 2, 3, 1))                               # (B, H, W, C)
    xpad = jnp.pad(xt, ((0, 0), (1, 1), (1, 1), (0, 0)))              # (B, H+2, W+2, C)
    x_ext = jnp.pad(xpad.reshape(B, P, C), ((0, 0), (S, S), (0, 0)))  # (B, P_ext, C)

    # Pack conv weights as 9 (C_in, C_out) tap matrices, tap = dy*3 + dx.
    w1p = jnp.transpose(w1, (2, 3, 1, 0)).reshape(9, C, planes)
    w2p = jnp.transpose(w2, (2, 3, 1, 0)).reshape(9, planes, planes)

    s1, b1 = _fold_bn(bn1["gamma"], bn1["beta"], bn1["mean"], bn1["var"], eps)
    s2, b2 = _fold_bn(bn2["gamma"], bn2["beta"], bn2["mean"], bn2["var"], eps)
    s1 = s1.reshape(1, planes).astype(jnp.float32)
    b1 = b1.reshape(1, planes).astype(jnp.float32)
    s2 = s2.reshape(1, planes).astype(jnp.float32)
    b2 = b2.reshape(1, planes).astype(jnp.float32)

    # Interior mask of the padded grid (1.0 where the position is a real pixel).
    rows = np.arange(P) // (W + 2)
    cols = np.arange(P) % (W + 2)
    interior = (rows >= 1) & (rows <= H) & (cols >= 1) & (cols <= W)
    mask = jnp.asarray(interior.astype(np.float32)).reshape(P, 1)

    kernel = functools.partial(_basic_block_kernel, H=H, W=W)

    out_flat = pl.pallas_call(
        kernel,
        out_shape=jax.ShapeDtypeStruct((B, P, planes), x.dtype),
        grid_spec=pltpu.PrefetchScalarGridSpec(
            num_scalar_prefetch=0,
            grid=(B,),
            in_specs=[
                pl.BlockSpec((1, P_ext, C), lambda b: (b, 0, 0)),        # activations
                pl.BlockSpec((9, C, planes), lambda b: (0, 0, 0)),       # conv1 taps
                pl.BlockSpec((1, planes), lambda b: (0, 0)),             # bn1 scale
                pl.BlockSpec((1, planes), lambda b: (0, 0)),             # bn1 bias
                pl.BlockSpec((9, planes, planes), lambda b: (0, 0, 0)),  # conv2 taps
                pl.BlockSpec((1, planes), lambda b: (0, 0)),             # bn2 scale
                pl.BlockSpec((1, planes), lambda b: (0, 0)),             # bn2 bias
                pl.BlockSpec((P, 1), lambda b: (0, 0)),                  # interior mask
            ],
            out_specs=pl.BlockSpec((1, P, planes), lambda b: (b, 0, 0)),
            scratch_shapes=[pltpu.VMEM((P_ext, planes), jnp.float32)],
        ),
        compiler_params=pltpu.CompilerParams(
            dimension_semantics=("parallel",),  # batch axis: shard across TCs on v7x
        ),
    )(x_ext, w1p, s1, b1, w2p, s2, b2, mask)

    # Padded grid -> NCHW interior.
    out = out_flat.reshape(B, H + 2, W + 2, planes)[:, 1: H + 1, 1: W + 1, :]
    return jnp.transpose(out, (0, 3, 1, 2))


if __name__ == "__main__":
    key = jax.random.PRNGKey(0)
    ks = jax.random.split(key, 11)

    B, C, H, W = 2, 8, 16, 16
    planes = C

    x = jax.random.normal(ks[0], (B, C, H, W), dtype=jnp.float32)
    w1 = jax.random.normal(ks[1], (planes, C, 3, 3), dtype=jnp.float32) * 0.1
    w2 = jax.random.normal(ks[2], (planes, planes, 3, 3), dtype=jnp.float32) * 0.1
    bn1 = dict(
        gamma=1.0 + 0.1 * jax.random.normal(ks[3], (planes,), dtype=jnp.float32),
        beta=0.1 * jax.random.normal(ks[4], (planes,), dtype=jnp.float32),
        mean=0.1 * jax.random.normal(ks[5], (planes,), dtype=jnp.float32),
        var=jax.random.uniform(ks[6], (planes,), minval=0.5, maxval=1.5,
                               dtype=jnp.float32),
    )
    bn2 = dict(
        gamma=1.0 + 0.1 * jax.random.normal(ks[7], (planes,), dtype=jnp.float32),
        beta=0.1 * jax.random.normal(ks[8], (planes,), dtype=jnp.float32),
        mean=0.1 * jax.random.normal(ks[9], (planes,), dtype=jnp.float32),
        var=jax.random.uniform(ks[10], (planes,), minval=0.5, maxval=1.5,
                               dtype=jnp.float32),
    )

    y = basic_block_forward(x, w1, bn1, w2, bn2)
    y = jax.block_until_ready(y)
    assert y.shape == (B, planes, H, W), y.shape

    # Plain-JAX reference (inference-mode BatchNorm, identity residual).
    def conv3x3(z, w):
        return jax.lax.conv_general_dilated(
            z, w, window_strides=(1, 1), padding=((1, 1), (1, 1)),
            dimension_numbers=("NCHW", "OIHW", "NCHW"))

    def bn(z, p, eps=1e-5):
        s = p["gamma"] / jnp.sqrt(p["var"] + eps)
        b = p["beta"] - p["mean"] * s
        return z * s[None, :, None, None] + b[None, :, None, None]

    ref = jnp.maximum(bn(conv3x3(x, w1), bn1), 0.0)
    ref = bn(conv3x3(ref, w2), bn2)
    ref = jnp.maximum(ref + x, 0.0)

    assert jnp.allclose(y, ref, atol=1e-4, rtol=1e-4), float(
        jnp.max(jnp.abs(y - ref)))

    print("KERNEL_OK")
</pallas_src>

<mosaic_0001>
module attributes {stable_mosaic.version = 11 : i64} {
  func.func @_basic_block_kernel(%arg0: i32, %arg1: memref<1x362x8xf32, #tpu.memory_space<vmem>>, %arg2: memref<9x8x8xf32, #tpu.memory_space<vmem>>, %arg3: memref<1x8xf32, #tpu.memory_space<vmem>>, %arg4: memref<1x8xf32, #tpu.memory_space<vmem>>, %arg5: memref<9x8x8xf32, #tpu.memory_space<vmem>>, %arg6: memref<1x8xf32, #tpu.memory_space<vmem>>, %arg7: memref<1x8xf32, #tpu.memory_space<vmem>>, %arg8: memref<324x1xf32, #tpu.memory_space<vmem>>, %arg9: memref<1x324x8xf32, #tpu.memory_space<vmem>>, %arg10: memref<362x8xf32, #tpu.memory_space<vmem>>) attributes {dimension_semantics = [#tpu.dimension_semantics<parallel>], iteration_bounds = array<i64: 2>, scalar_prefetch = 0 : i64, scratch_operands = 1 : i64, tpu.core_type = #tpu.core_type<tc>, window_params = [{transform_indices = @transform_0, window_bounds = array<i64: 1, 362, 8>}, {pipeline_mode = #tpu.pipeline_mode<synchronous>, transform_indices = @transform_1, window_bounds = array<i64: 9, 8, 8>}, {pipeline_mode = #tpu.pipeline_mode<synchronous>, transform_indices = @transform_2, window_bounds = array<i64: 1, 8>}, {pipeline_mode = #tpu.pipeline_mode<synchronous>, transform_indices = @transform_3, window_bounds = array<i64: 1, 8>}, {pipeline_mode = #tpu.pipeline_mode<synchronous>, transform_indices = @transform_4, window_bounds = array<i64: 9, 8, 8>}, {pipeline_mode = #tpu.pipeline_mode<synchronous>, transform_indices = @transform_5, window_bounds = array<i64: 1, 8>}, {pipeline_mode = #tpu.pipeline_mode<synchronous>, transform_indices = @transform_6, window_bounds = array<i64: 1, 8>}, {pipeline_mode = #tpu.pipeline_mode<synchronous>, transform_indices = @transform_7, window_bounds = array<i64: 324, 1>}, {transform_indices = @transform_8, window_bounds = array<i64: 1, 324, 8>}]} {
    %cst = arith.constant 0.000000e+00 : f32
    %0 = vector.broadcast %cst : f32 to vector<324x8xf32>
    %c0 = arith.constant 0 : index
    %c0_0 = arith.constant 0 : index
    %c0_1 = arith.constant 0 : index
    %1 = vector.load %arg1[%c0, %c0_0, %c0_1] : memref<1x362x8xf32, #tpu.memory_space<vmem>>, vector<1x324x8xf32>
    %2 = vector.shape_cast %1 : vector<1x324x8xf32> to vector<324x8xf32>
    %c0_2 = arith.constant 0 : index
    %c0_3 = arith.constant 0 : index
    %c0_4 = arith.constant 0 : index
    %3 = vector.load %arg2[%c0_2, %c0_3, %c0_4] : memref<9x8x8xf32, #tpu.memory_space<vmem>>, vector<1x8x8xf32>
    %4 = vector.shape_cast %3 : vector<1x8x8xf32> to vector<8x8xf32>
    %cst_5 = arith.constant dense<0.000000e+00> : vector<324x8xf32>
    %5 = tpu.matmul %2, %4, %cst_5 {dimension_numbers = #tpu.dot_dimension_numbers<[1], [0], [0], [1], [0, 0, 1, 1], [], []>} : vector<324x8xf32>, vector<8x8xf32>, vector<324x8xf32> -> vector<324x8xf32>
    %6 = arith.addf %0, %5 : vector<324x8xf32>
    %c0_6 = arith.constant 0 : index
    %c1 = arith.constant 1 : index
    %c0_7 = arith.constant 0 : index
    %7 = vector.load %arg1[%c0_6, %c1, %c0_7] : memref<1x362x8xf32, #tpu.memory_space<vmem>>, vector<1x324x8xf32>
    %8 = vector.shape_cast %7 : vector<1x324x8xf32> to vector<324x8xf32>
    %c1_8 = arith.constant 1 : index
    %c0_9 = arith.constant 0 : index
    %c0_10 = arith.constant 0 : index
    %9 = vector.load %arg2[%c1_8, %c0_9, %c0_10] : memref<9x8x8xf32, #tpu.memory_space<vmem>>, vector<1x8x8xf32>
    %10 = vector.shape_cast %9 : vector<1x8x8xf32> to vector<8x8xf32>
    %cst_11 = arith.constant dense<0.000000e+00> : vector<324x8xf32>
    %11 = tpu.matmul %8, %10, %cst_11 {dimension_numbers = #tpu.dot_dimension_numbers<[1], [0], [0], [1], [0, 0, 1, 1], [], []>} : vector<324x8xf32>, vector<8x8xf32>, vector<324x8xf32> -> vector<324x8xf32>
    %12 = arith.addf %6, %11 : vector<324x8xf32>
    %c0_12 = arith.constant 0 : index
    %c2 = arith.constant 2 : index
    %c0_13 = arith.constant 0 : index
    %13 = vector.load %arg1[%c0_12, %c2, %c0_13] : memref<1x362x8xf32, #tpu.memory_space<vmem>>, vector<1x324x8xf32>
    %14 = vector.shape_cast %13 : vector<1x324x8xf32> to vector<324x8xf32>
    %c2_14 = arith.constant 2 : index
    %c0_15 = arith.constant 0 : index
    %c0_16 = arith.constant 0 : index
    %15 = vector.load %arg2[%c2_14, %c0_15, %c0_16] : memref<9x8x8xf32, #tpu.memory_space<vmem>>, vector<1x8x8xf32>
    %16 = vector.shape_cast %15 : vector<1x8x8xf32> to vector<8x8xf32>
    %cst_17 = arith.constant dense<0.000000e+00> : vector<324x8xf32>
    %17 = tpu.matmul %14, %16, %cst_17 {dimension_numbers = #tpu.dot_dimension_numbers<[1], [0], [0], [1], [0, 0, 1, 1], [], []>} : vector<324x8xf32>, vector<8x8xf32>, vector<324x8xf32> -> vector<324x8xf32>
    %18 = arith.addf %12, %17 : vector<324x8xf32>
    %c0_18 = arith.constant 0 : index
    %c18 = arith.constant 18 : index
    %c0_19 = arith.constant 0 : index
    %19 = vector.load %arg1[%c0_18, %c18, %c0_19] : memref<1x362x8xf32, #tpu.memory_space<vmem>>, vector<1x324x8xf32>
    %20 = vector.shape_cast %19 : vector<1x324x8xf32> to vector<324x8xf32>
    %c3 = arith.constant 3 : index
    %c0_20 = arith.constant 0 : index
    %c0_21 = arith.constant 0 : index
    %21 = vector.load %arg2[%c3, %c0_20, %c0_21] : memref<9x8x8xf32, #tpu.memory_space<vmem>>, vector<1x8x8xf32>
    %22 = vector.shape_cast %21 : vector<1x8x8xf32> to vector<8x8xf32>
    %cst_22 = arith.constant dense<0.000000e+00> : vector<324x8xf32>
    %23 = tpu.matmul %20, %22, %cst_22 {dimension_numbers = #tpu.dot_dimension_numbers<[1], [0], [0], [1], [0, 0, 1, 1], [], []>} : vector<324x8xf32>, vector<8x8xf32>, vector<324x8xf32> -> vector<324x8xf32>
    %24 = arith.addf %18, %23 : vector<324x8xf32>
    %c0_23 = arith.constant 0 : index
    %c19 = arith.constant 19 : index
    %c0_24 = arith.constant 0 : index
    %25 = vector.load %arg1[%c0_23, %c19, %c0_24] : memref<1x362x8xf32, #tpu.memory_space<vmem>>, vector<1x324x8xf32>
    %26 = vector.shape_cast %25 : vector<1x324x8xf32> to vector<324x8xf32>
    %c4 = arith.constant 4 : index
    %c0_25 = arith.constant 0 : index
    %c0_26 = arith.constant 0 : index
    %27 = vector.load %arg2[%c4, %c0_25, %c0_26] : memref<9x8x8xf32, #tpu.memory_space<vmem>>, vector<1x8x8xf32>
    %28 = vector.shape_cast %27 : vector<1x8x8xf32> to vector<8x8xf32>
    %cst_27 = arith.constant dense<0.000000e+00> : vector<324x8xf32>
    %29 = tpu.matmul %26, %28, %cst_27 {dimension_numbers = #tpu.dot_dimension_numbers<[1], [0], [0], [1], [0, 0, 1, 1], [], []>} : vector<324x8xf32>, vector<8x8xf32>, vector<324x8xf32> -> vector<324x8xf32>
    %30 = arith.addf %24, %29 : vector<324x8xf32>
    %c0_28 = arith.constant 0 : index
    %c20 = arith.constant 20 : index
    %c0_29 = arith.constant 0 : index
    %31 = vector.load %arg1[%c0_28, %c20, %c0_29] : memref<1x362x8xf32, #tpu.memory_space<vmem>>, vector<1x324x8xf32>
    %32 = vector.shape_cast %31 : vector<1x324x8xf32> to vector<324x8xf32>
    %c5 = arith.constant 5 : index
    %c0_30 = arith.constant 0 : index
    %c0_31 = arith.constant 0 : index
    %33 = vector.load %arg2[%c5, %c0_30, %c0_31] : memref<9x8x8xf32, #tpu.memory_space<vmem>>, vector<1x8x8xf32>
    %34 = vector.shape_cast %33 : vector<1x8x8xf32> to vector<8x8xf32>
    %cst_32 = arith.constant dense<0.000000e+00> : vector<324x8xf32>
    %35 = tpu.matmul %32, %34, %cst_32 {dimension_numbers = #tpu.dot_dimension_numbers<[1], [0], [0], [1], [0, 0, 1, 1], [], []>} : vector<324x8xf32>, vector<8x8xf32>, vector<324x8xf32> -> vector<324x8xf32>
    %36 = arith.addf %30, %35 : vector<324x8xf32>
    %c0_33 = arith.constant 0 : index
    %c36 = arith.constant 36 : index
    %c0_34 = arith.constant 0 : index
    %37 = vector.load %arg1[%c0_33, %c36, %c0_34] : memref<1x362x8xf32, #tpu.memory_space<vmem>>, vector<1x324x8xf32>
    %38 = vector.shape_cast %37 : vector<1x324x8xf32> to vector<324x8xf32>
    %c6 = arith.constant 6 : index
    %c0_35 = arith.constant 0 : index
    %c0_36 = arith.constant 0 : index
    %39 = vector.load %arg2[%c6, %c0_35, %c0_36] : memref<9x8x8xf32, #tpu.memory_space<vmem>>, vector<1x8x8xf32>
    %40 = vector.shape_cast %39 : vector<1x8x8xf32> to vector<8x8xf32>
    %cst_37 = arith.constant dense<0.000000e+00> : vector<324x8xf32>
    %41 = tpu.matmul %38, %40, %cst_37 {dimension_numbers = #tpu.dot_dimension_numbers<[1], [0], [0], [1], [0, 0, 1, 1], [], []>} : vector<324x8xf32>, vector<8x8xf32>, vector<324x8xf32> -> vector<324x8xf32>
    %42 = arith.addf %36, %41 : vector<324x8xf32>
    %c0_38 = arith.constant 0 : index
    %c37 = arith.constant 37 : index
    %c0_39 = arith.constant 0 : index
    %43 = vector.load %arg1[%c0_38, %c37, %c0_39] : memref<1x362x8xf32, #tpu.memory_space<vmem>>, vector<1x324x8xf32>
    %44 = vector.shape_cast %43 : vector<1x324x8xf32> to vector<324x8xf32>
    %c7 = arith.constant 7 : index
    %c0_40 = arith.constant 0 : index
    %c0_41 = arith.constant 0 : index
    %45 = vector.load %arg2[%c7, %c0_40, %c0_41] : memref<9x8x8xf32, #tpu.memory_space<vmem>>, vector<1x8x8xf32>
    %46 = vector.shape_cast %45 : vector<1x8x8xf32> to vector<8x8xf32>
    %cst_42 = arith.constant dense<0.000000e+00> : vector<324x8xf32>
    %47 = tpu.matmul %44, %46, %cst_42 {dimension_numbers = #tpu.dot_dimension_numbers<[1], [0], [0], [1], [0, 0, 1, 1], [], []>} : vector<324x8xf32>, vector<8x8xf32>, vector<324x8xf32> -> vector<324x8xf32>
    %48 = arith.addf %42, %47 : vector<324x8xf32>
    %c0_43 = arith.constant 0 : index
    %c38 = arith.constant 38 : index
    %c0_44 = arith.constant 0 : index
    %49 = vector.load %arg1[%c0_43, %c38, %c0_44] : memref<1x362x8xf32, #tpu.memory_space<vmem>>, vector<1x324x8xf32>
    %50 = vector.shape_cast %49 : vector<1x324x8xf32> to vector<324x8xf32>
    %c8 = arith.constant 8 : index
    %c0_45 = arith.constant 0 : index
    %c0_46 = arith.constant 0 : index
    %51 = vector.load %arg2[%c8, %c0_45, %c0_46] : memref<9x8x8xf32, #tpu.memory_space<vmem>>, vector<1x8x8xf32>
    %52 = vector.shape_cast %51 : vector<1x8x8xf32> to vector<8x8xf32>
    %cst_47 = arith.constant dense<0.000000e+00> : vector<324x8xf32>
    %53 = tpu.matmul %50, %52, %cst_47 {dimension_numbers = #tpu.dot_dimension_numbers<[1], [0], [0], [1], [0, 0, 1, 1], [], []>} : vector<324x8xf32>, vector<8x8xf32>, vector<324x8xf32> -> vector<324x8xf32>
    %54 = arith.addf %48, %53 : vector<324x8xf32>
    %c0_48 = arith.constant 0 : index
    %c0_49 = arith.constant 0 : index
    %55 = vector.load %arg3[%c0_48, %c0_49] : memref<1x8xf32, #tpu.memory_space<vmem>>, vector<1x8xf32>
    %56 = vector.broadcast %55 : vector<1x8xf32> to vector<324x8xf32>
    %57 = arith.mulf %54, %56 : vector<324x8xf32>
    %c0_50 = arith.constant 0 : index
    %c0_51 = arith.constant 0 : index
    %58 = vector.load %arg4[%c0_50, %c0_51] : memref<1x8xf32, #tpu.memory_space<vmem>>, vector<1x8xf32>
    %59 = vector.broadcast %58 : vector<1x8xf32> to vector<324x8xf32>
    %60 = arith.addf %57, %59 : vector<324x8xf32>
    %cst_52 = arith.constant 0.000000e+00 : f32
    %61 = vector.broadcast %cst_52 : f32 to vector<324x8xf32>
    %62 = arith.maximumf %60, %61 : vector<324x8xf32>
    %c0_53 = arith.constant 0 : index
    %c0_54 = arith.constant 0 : index
    %63 = vector.load %arg8[%c0_53, %c0_54] : memref<324x1xf32, #tpu.memory_space<vmem>>, vector<324x1xf32>
    %64 = vector.broadcast %63 : vector<324x1xf32> to vector<324x8xf32>
    %65 = arith.mulf %62, %64 : vector<324x8xf32>
    %cst_55 = arith.constant 0.000000e+00 : f32
    %66 = vector.broadcast %cst_55 : f32 to vector<362x8xf32>
    %c0_56 = arith.constant 0 : index
    %c0_57 = arith.constant 0 : index
    %67 = vector.load %arg10[%c0_56, %c0_57] : memref<362x8xf32, #tpu.memory_space<vmem>>, vector<362x8xf32>
    tpu.vector_store %arg10[%c0_56, %c0_57], %66 {strides = array<i32>} : memref<362x8xf32, #tpu.memory_space<vmem>>, vector<362x8xf32>,
    %c19_58 = arith.constant 19 : index
    %c0_59 = arith.constant 0 : index
    %68 = vector.load %arg10[%c19_58, %c0_59] : memref<362x8xf32, #tpu.memory_space<vmem>>, vector<324x8xf32>
    tpu.vector_store %arg10[%c19_58, %c0_59], %65 {strides = array<i32>} : memref<362x8xf32, #tpu.memory_space<vmem>>, vector<324x8xf32>,
    %cst_60 = arith.constant 0.000000e+00 : f32
    %69 = vector.broadcast %cst_60 : f32 to vector<324x8xf32>
    %c0_61 = arith.constant 0 : index
    %c0_62 = arith.constant 0 : index
    %70 = vector.load %arg10[%c0_61, %c0_62] : memref<362x8xf32, #tpu.memory_space<vmem>>, vector<324x8xf32>
    %c0_63 = arith.constant 0 : index
    %c0_64 = arith.constant 0 : index
    %c0_65 = arith.constant 0 : index
    %71 = vector.load %arg5[%c0_63, %c0_64, %c0_65] : memref<9x8x8xf32, #tpu.memory_space<vmem>>, vector<1x8x8xf32>
    %72 = vector.shape_cast %71 : vector<1x8x8xf32> to vector<8x8xf32>
    %cst_66 = arith.constant dense<0.000000e+00> : vector<324x8xf32>
    %73 = tpu.matmul %70, %72, %cst_66 {dimension_numbers = #tpu.dot_dimension_numbers<[1], [0], [0], [1], [0, 0, 1, 1], [], []>} : vector<324x8xf32>, vector<8x8xf32>, vector<324x8xf32> -> vector<324x8xf32>
    %74 = arith.addf %69, %73 : vector<324x8xf32>
    %c1_67 = arith.constant 1 : index
    %c0_68 = arith.constant 0 : index
    %75 = vector.load %arg10[%c1_67, %c0_68] : memref<362x8xf32, #tpu.memory_space<vmem>>, vector<324x8xf32>
    %c1_69 = arith.constant 1 : index
    %c0_70 = arith.constant 0 : index
    %c0_71 = arith.constant 0 : index
    %76 = vector.load %arg5[%c1_69, %c0_70, %c0_71] : memref<9x8x8xf32, #tpu.memory_space<vmem>>, vector<1x8x8xf32>
    %77 = vector.shape_cast %76 : vector<1x8x8xf32> to vector<8x8xf32>
    %cst_72 = arith.constant dense<0.000000e+00> : vector<324x8xf32>
    %78 = tpu.matmul %75, %77, %cst_72 {dimension_numbers = #tpu.dot_dimension_numbers<[1], [0], [0], [1], [0, 0, 1, 1], [], []>} : vector<324x8xf32>, vector<8x8xf32>, vector<324x8xf32> -> vector<324x8xf32>
    %79 = arith.addf %74, %78 : vector<324x8xf32>
    %c2_73 = arith.constant 2 : index
    %c0_74 = arith.constant 0 : index
    %80 = vector.load %arg10[%c2_73, %c0_74] : memref<362x8xf32, #tpu.memory_space<vmem>>, vector<324x8xf32>
    %c2_75 = arith.constant 2 : index
    %c0_76 = arith.constant 0 : index
    %c0_77 = arith.constant 0 : index
    %81 = vector.load %arg5[%c2_75, %c0_76, %c0_77] : memref<9x8x8xf32, #tpu.memory_space<vmem>>, vector<1x8x8xf32>
    %82 = vector.shape_cast %81 : vector<1x8x8xf32> to vector<8x8xf32>
    %cst_78 = arith.constant dense<0.000000e+00> : vector<324x8xf32>
    %83 = tpu.matmul %80, %82, %cst_78 {dimension_numbers = #tpu.dot_dimension_numbers<[1], [0], [0], [1], [0, 0, 1, 1], [], []>} : vector<324x8xf32>, vector<8x8xf32>, vector<324x8xf32> -> vector<324x8xf32>
    %84 = arith.addf %79, %83 : vector<324x8xf32>
    %c18_79 = arith.constant 18 : index
    %c0_80 = arith.constant 0 : index
    %85 = vector.load %arg10[%c18_79, %c0_80] : memref<362x8xf32, #tpu.memory_space<vmem>>, vector<324x8xf32>
    %c3_81 = arith.constant 3 : index
    %c0_82 = arith.constant 0 : index
    %c0_83 = arith.constant 0 : index
    %86 = vector.load %arg5[%c3_81, %c0_82, %c0_83] : memref<9x8x8xf32, #tpu.memory_space<vmem>>, vector<1x8x8xf32>
    %87 = vector.shape_cast %86 : vector<1x8x8xf32> to vector<8x8xf32>
    %cst_84 = arith.constant dense<0.000000e+00> : vector<324x8xf32>
    %88 = tpu.matmul %85, %87, %cst_84 {dimension_numbers = #tpu.dot_dimension_numbers<[1], [0], [0], [1], [0, 0, 1, 1], [], []>} : vector<324x8xf32>, vector<8x8xf32>, vector<324x8xf32> -> vector<324x8xf32>
    %89 = arith.addf %84, %88 : vector<324x8xf32>
    %c19_85 = arith.constant 19 : index
    %c0_86 = arith.constant 0 : index
    %90 = vector.load %arg10[%c19_85, %c0_86] : memref<362x8xf32, #tpu.memory_space<vmem>>, vector<324x8xf32>
    %c4_87 = arith.constant 4 : index
    %c0_88 = arith.constant 0 : index
    %c0_89 = arith.constant 0 : index
    %91 = vector.load %arg5[%c4_87, %c0_88, %c0_89] : memref<9x8x8xf32, #tpu.memory_space<vmem>>, vector<1x8x8xf32>
    %92 = vector.shape_cast %91 : vector<1x8x8xf32> to vector<8x8xf32>
    %cst_90 = arith.constant dense<0.000000e+00> : vector<324x8xf32>
    %93 = tpu.matmul %90, %92, %cst_90 {dimension_numbers = #tpu.dot_dimension_numbers<[1], [0], [0], [1], [0, 0, 1, 1], [], []>} : vector<324x8xf32>, vector<8x8xf32>, vector<324x8xf32> -> vector<324x8xf32>
    %94 = arith.addf %89, %93 : vector<324x8xf32>
    %c20_91 = arith.constant 20 : index
    %c0_92 = arith.constant 0 : index
    %95 = vector.load %arg10[%c20_91, %c0_92] : memref<362x8xf32, #tpu.memory_space<vmem>>, vector<324x8xf32>
    %c5_93 = arith.constant 5 : index
    %c0_94 = arith.constant 0 : index
    %c0_95 = arith.constant 0 : index
    %96 = vector.load %arg5[%c5_93, %c0_94, %c0_95] : memref<9x8x8xf32, #tpu.memory_space<vmem>>, vector<1x8x8xf32>
    %97 = vector.shape_cast %96 : vector<1x8x8xf32> to vector<8x8xf32>
    %cst_96 = arith.constant dense<0.000000e+00> : vector<324x8xf32>
    %98 = tpu.matmul %95, %97, %cst_96 {dimension_numbers = #tpu.dot_dimension_numbers<[1], [0], [0], [1], [0, 0, 1, 1], [], []>} : vector<324x8xf32>, vector<8x8xf32>, vector<324x8xf32> -> vector<324x8xf32>
    %99 = arith.addf %94, %98 : vector<324x8xf32>
    %c36_97 = arith.constant 36 : index
    %c0_98 = arith.constant 0 : index
    %100 = vector.load %arg10[%c36_97, %c0_98] : memref<362x8xf32, #tpu.memory_space<vmem>>, vector<324x8xf32>
    %c6_99 = arith.constant 6 : index
    %c0_100 = arith.constant 0 : index
    %c0_101 = arith.constant 0 : index
    %101 = vector.load %arg5[%c6_99, %c0_100, %c0_101] : memref<9x8x8xf32, #tpu.memory_space<vmem>>, vector<1x8x8xf32>
    %102 = vector.shape_cast %101 : vector<1x8x8xf32> to vector<8x8xf32>
    %cst_102 = arith.constant dense<0.000000e+00> : vector<324x8xf32>
    %103 = tpu.matmul %100, %102, %cst_102 {dimension_numbers = #tpu.dot_dimension_numbers<[1], [0], [0], [1], [0, 0, 1, 1], [], []>} : vector<324x8xf32>, vector<8x8xf32>, vector<324x8xf32> -> vector<324x8xf32>
    %104 = arith.addf %99, %103 : vector<324x8xf32>
    %c37_103 = arith.constant 37 : index
    %c0_104 = arith.constant 0 : index
    %105 = vector.load %arg10[%c37_103, %c0_104] : memref<362x8xf32, #tpu.memory_space<vmem>>, vector<324x8xf32>
    %c7_105 = arith.constant 7 : index
    %c0_106 = arith.constant 0 : index
    %c0_107 = arith.constant 0 : index
    %106 = vector.load %arg5[%c7_105, %c0_106, %c0_107] : memref<9x8x8xf32, #tpu.memory_space<vmem>>, vector<1x8x8xf32>
    %107 = vector.shape_cast %106 : vector<1x8x8xf32> to vector<8x8xf32>
    %cst_108 = arith.constant dense<0.000000e+00> : vector<324x8xf32>
    %108 = tpu.matmul %105, %107, %cst_108 {dimension_numbers = #tpu.dot_dimension_numbers<[1], [0], [0], [1], [0, 0, 1, 1], [], []>} : vector<324x8xf32>, vector<8x8xf32>, vector<324x8xf32> -> vector<324x8xf32>
    %109 = arith.addf %104, %108 : vector<324x8xf32>
    %c38_109 = arith.constant 38 : index
    %c0_110 = arith.constant 0 : index
    %110 = vector.load %arg10[%c38_109, %c0_110] : memref<362x8xf32, #tpu.memory_space<vmem>>, vector<324x8xf32>
    %c8_111 = arith.constant 8 : index
    %c0_112 = arith.constant 0 : index
    %c0_113 = arith.constant 0 : index
    %111 = vector.load %arg5[%c8_111, %c0_112, %c0_113] : memref<9x8x8xf32, #tpu.memory_space<vmem>>, vector<1x8x8xf32>
    %112 = vector.shape_cast %111 : vector<1x8x8xf32> to vector<8x8xf32>
    %cst_114 = arith.constant dense<0.000000e+00> : vector<324x8xf32>
    %113 = tpu.matmul %110, %112, %cst_114 {dimension_numbers = #tpu.dot_dimension_numbers<[1], [0], [0], [1], [0, 0, 1, 1], [], []>} : vector<324x8xf32>, vector<8x8xf32>, vector<324x8xf32> -> vector<324x8xf32>
    %114 = arith.addf %109, %113 : vector<324x8xf32>
    %c0_115 = arith.constant 0 : index
    %c19_116 = arith.constant 19 : index
    %c0_117 = arith.constant 0 : index
    %115 = vector.load %arg1[%c0_115, %c19_116, %c0_117] : memref<1x362x8xf32, #tpu.memory_space<vmem>>, vector<1x324x8xf32>
    %116 = vector.shape_cast %115 : vector<1x324x8xf32> to vector<324x8xf32>
    %c0_118 = arith.constant 0 : index
    %c0_119 = arith.constant 0 : index
    %117 = vector.load %arg6[%c0_118, %c0_119] : memref<1x8xf32, #tpu.memory_space<vmem>>, vector<1x8xf32>
    %118 = vector.broadcast %117 : vector<1x8xf32> to vector<324x8xf32>
    %119 = arith.mulf %114, %118 : vector<324x8xf32>
    %c0_120 = arith.constant 0 : index
    %c0_121 = arith.constant 0 : index
    %120 = vector.load %arg7[%c0_120, %c0_121] : memref<1x8xf32, #tpu.memory_space<vmem>>, vector<1x8xf32>
    %121 = vector.broadcast %120 : vector<1x8xf32> to vector<324x8xf32>
    %122 = arith.addf %119, %121 : vector<324x8xf32>
    %123 = arith.addf %122, %116 : vector<324x8xf32>
    %cst_122 = arith.constant 0.000000e+00 : f32
    %124 = vector.broadcast %cst_122 : f32 to vector<324x8xf32>
    %125 = arith.maximumf %123, %124 : vector<324x8xf32>
    %c0_123 = arith.constant 0 : index
    %c0_124 = arith.constant 0 : index
    %c0_125 = arith.constant 0 : index
    %126 = vector.load %arg9[%c0_123, %c0_124, %c0_125] : memref<1x324x8xf32, #tpu.memory_space<vmem>>, vector<1x324x8xf32>
    %127 = vector.shape_cast %126 : vector<1x324x8xf32> to vector<324x8xf32>
    %128 = vector.shape_cast %125 : vector<324x8xf32> to vector<1x324x8xf32>
    tpu.vector_store %arg9[%c0_123, %c0_124, %c0_125], %128 {strides = array<i32>} : memref<1x324x8xf32, #tpu.memory_space<vmem>>, vector<1x324x8xf32>,
    return
  }
  func.func @transform_0(%arg0: i32) -> (i32, i32, i32) {
    %c0_i32 = arith.constant 0 : i32
    %c0_i32_0 = arith.constant 0 : i32
    %c0_i32_1 = arith.constant 0 : i32
    return %arg0, %c0_i32, %c0_i32_0 : i32, i32, i32
  }
  func.func @transform_1(%arg0: i32) -> (i32, i32, i32) {
    %c0_i32 = arith.constant 0 : i32
    %c0_i32_0 = arith.constant 0 : i32
    %c0_i32_1 = arith.constant 0 : i32
    %c0_i32_2 = arith.constant 0 : i32
    return %c0_i32, %c0_i32_0, %c0_i32_1 : i32, i32, i32
  }
  func.func @transform_2(%arg0: i32) -> (i32, i32) {
    %c0_i32 = arith.constant 0 : i32
    %c0_i32_0 = arith.constant 0 : i32
    %c0_i32_1 = arith.constant 0 : i32
    return %c0_i32, %c0_i32_0 : i32, i32
  }
  func.func @transform_3(%arg0: i32) -> (i32, i32) {
    %c0_i32 = arith.constant 0 : i32
    %c0_i32_0 = arith.constant 0 : i32
    %c0_i32_1 = arith.constant 0 : i32
    return %c0_i32, %c0_i32_0 : i32, i32
  }
  func.func @transform_4(%arg0: i32) -> (i32, i32, i32) {
    %c0_i32 = arith.constant 0 : i32
    %c0_i32_0 = arith.constant 0 : i32
    %c0_i32_1 = arith.constant 0 : i32
    %c0_i32_2 = arith.constant 0 : i32
    return %c0_i32, %c0_i32_0, %c0_i32_1 : i32, i32, i32
  }
  func.func @transform_5(%arg0: i32) -> (i32, i32) {
    %c0_i32 = arith.constant 0 : i32
    %c0_i32_0 = arith.constant 0 : i32
    %c0_i32_1 = arith.constant 0 : i32
    return %c0_i32, %c0_i32_0 : i32, i32
  }
  func.func @transform_6(%arg0: i32) -> (i32, i32) {
    %c0_i32 = arith.constant 0 : i32
    %c0_i32_0 = arith.constant 0 : i32
    %c0_i32_1 = arith.constant 0 : i32
    return %c0_i32, %c0_i32_0 : i32, i32
  }
  func.func @transform_7(%arg0: i32) -> (i32, i32) {
    %c0_i32 = arith.constant 0 : i32
    %c0_i32_0 = arith.constant 0 : i32
    %c0_i32_1 = arith.constant 0 : i32
    return %c0_i32, %c0_i32_0 : i32, i32
  }
  func.func @transform_8(%arg0: i32) -> (i32, i32, i32) {
    %c0_i32 = arith.constant 0 : i32
    %c0_i32_0 = arith.constant 0 : i32
    %c0_i32_1 = arith.constant 0 : i32
    return %arg0, %c0_i32, %c0_i32_0 : i32, i32, i32
  }
}

</mosaic_0001>

<llo_original>
// kernel: tpu_custom_call.1
$region0: #{tpu_custom_call.1}
  #allocation0 [shape = 'u32[]', space=smem, size = 0x4, offset = 0x4, fixed_abs, tag = 'smem constant byte address 0x4 - core index']
  #allocation1 [shape = 'u32[144,128]{1,0:T(1,128)}', space=vmem, size = 0x12000, scoped, tag = 'internal scratch']
  #allocation2 [shape = 'f32[362,8]{1,0:T(8,128)}', space=vmem, size = 0x2e000, scoped, tag = 'scratch operand']
  %s0 = inlined_call_operand.vmem [shape: f32[2,362,8], index: 0, kind: input, shape index: {}]
  %s1 = inlined_call_operand.vmem [shape: f32[9,8,8], index: 1, kind: input, shape index: {}]
  %s2 = inlined_call_operand.vmem [shape: f32[1,8], index: 2, kind: input, shape index: {}]
  %s3 = inlined_call_operand.vmem [shape: f32[1,8], index: 3, kind: input, shape index: {}]
  %s4 = inlined_call_operand.vmem [shape: f32[9,8,8], index: 4, kind: input, shape index: {}]
  %s5 = inlined_call_operand.vmem [shape: f32[1,8], index: 5, kind: input, shape index: {}]
  %s6 = inlined_call_operand.vmem [shape: f32[1,8], index: 6, kind: input, shape index: {}]
  %s7 = inlined_call_operand.vmem [shape: f32[324,1], index: 7, kind: input, shape index: {}]
  %s8 = inlined_call_operand.vmem [shape: f32[2,324,8], index: 8, kind: output, shape index: {}]
  %s9 = sld [smem:[#allocation0]]
  $region65: #{tpu_custom_call.1} parent=0
    _
  %s11 = ssub.s32 1, %s9
  %s12 = scalar_select 0, %s11, %s9
  loop: start=0, step=1, limit=4
  $region2: #{tpu_custom_call.1} parent=0 // loop_pre_header
    _
  $region3: #{tpu_custom_call.1} parent=0 // loop_header
    %s14 = sphi 0, %s18
    %p15 = scmp.ge.s32.totalorder %s14, 4
    %s24 = sphi 0, %s26
    %s27 = sphi 0, %s24
    %s28 = sphi 0, %s27
    %s44 = sphi 0, %s28
    %s48 = sphi 0, %s48
    %s50 = sphi 0, %s48
    %s51 = sphi 0, %s50
    %s65 = sphi 0, %s51
    %s69 = sphi 0, %s69
    %s71 = sphi 0, %s69
    %s72 = sphi 0, %s71
    %s86 = sphi 0, %s72
    %s90 = sphi 0, %s90
    %s92 = sphi 0, %s90
    %s93 = sphi 0, %s92
    %s107 = sphi 0, %s93
    %s111 = sphi 0, %s111
    %s113 = sphi 0, %s111
    %s114 = sphi 0, %s113
    %s128 = sphi 0, %s114
    %s132 = sphi 0, %s132
    %s134 = sphi 0, %s132
    %s135 = sphi 0, %s134
    %s149 = sphi 0, %s135
    %s153 = sphi 0, %s153
    %s155 = sphi 0, %s153
    %s156 = sphi 0, %s155
    %s170 = sphi 0, %s156
    %s174 = sphi 0, %s174
    %s176 = sphi 0, %s174
    %s177 = sphi 0, %s176
    %s191 = sphi 0, %s177
    %s197 = sphi 0, %s199
    %s200 = sphi 0, %s197
    %s201 = sphi 0, %s200
    %s217 = sphi 0, %s201
  $region4: #{tpu_custom_call.1} parent=0 // loop_header_branch
    %17 = sbr.rel (%p15) target = $region8
  $region5: #{tpu_custom_call.1} parent=0 // loop_body
    %s19 = ssub.s32 %s14, 1
    %s20 = ssub.s32 %s14, 2
    %s21 = sadd.s32 %s14, 1
    %s22 = ssub.s32 %s14, %s21
    %p23 = scmp.eq.s32.totalorder %s22, 0
    %s25 = sadd.s32 %s24, 1
    %s26 = scalar_select %p23, %s24, %s25
    %p29 = pneg %p23
    %p30 = scmp.eq.s32.totalorder %s14, 1
    %p31 = por %p29, %p30
    %p32 = scmp.ne.s32.totalorder %s24, %s27
    %p33 = scmp.eq.s32.totalorder %s14, 0
    %p34 = por %p32, %p33
    %p35 = scmp.ne.s32.totalorder %s24, %s27
    %p36 = scmp.eq.s32.totalorder %s19, 1
    %p37 = por %p35, %p36
    %p38 = scmp.ne.s32.totalorder %s27, %s28
    %p39 = scmp.eq.s32.totalorder %s19, 0
    %p40 = por %p38, %p39
    %p41 = scmp.ne.s32.totalorder %s27, %s28
    %p42 = scmp.eq.s32.totalorder %s20, 1
    %p43 = por %p41, %p42
    %p45 = scmp.ne.s32.totalorder %s28, %s44
    %p46 = scmp.eq.s32.totalorder %s20, 0
    %p47 = por %p45, %p46
    %s49 = sadd.s32 %s48, 1
    %p52 = scmp.eq.s32.totalorder %s14, 1
    %p53 = scmp.ne.s32.totalorder %s48, %s50
    %p54 = scmp.eq.s32.totalorder %s14, 0
    %p55 = por %p53, %p54
    %p56 = scmp.ne.s32.totalorder %s48, %s50
    %p57 = scmp.eq.s32.totalorder %s19, 1
    %p58 = por %p56, %p57
    %p59 = scmp.ne.s32.totalorder %s50, %s51
    %p60 = scmp.eq.s32.totalorder %s19, 0
    %p61 = por %p59, %p60
    %p62 = scmp.ne.s32.totalorder %s50, %s51
    %p63 = scmp.eq.s32.totalorder %s20, 1
    %p64 = por %p62, %p63
    %p66 = scmp.ne.s32.totalorder %s51, %s65
    %p67 = scmp.eq.s32.totalorder %s20, 0
    %p68 = por %p66, %p67
    %s70 = sadd.s32 %s69, 1
    %p73 = scmp.eq.s32.totalorder %s14, 1
    %p74 = scmp.ne.s32.totalorder %s69, %s71
    %p75 = scmp.eq.s32.totalorder %s14, 0
    %p76 = por %p74, %p75
    %p77 = scmp.ne.s32.totalorder %s69, %s71
    %p78 = scmp.eq.s32.totalorder %s19, 1
    %p79 = por %p77, %p78
    %p80 = scmp.ne.s32.totalorder %s71, %s72
    %p81 = scmp.eq.s32.totalorder %s19, 0
    %p82 = por %p80, %p81
    %p83 = scmp.ne.s32.totalorder %s71, %s72
    %p84 = scmp.eq.s32.totalorder %s20, 1
    %p85 = por %p83, %p84
    %p87 = scmp.ne.s32.totalorder %s72, %s86
    %p88 = scmp.eq.s32.totalorder %s20, 0
    %p89 = por %p87, %p88
    %s91 = sadd.s32 %s90, 1
    %p94 = scmp.eq.s32.totalorder %s14, 1
    %p95 = scmp.ne.s32.totalorder %s90, %s92
    %p96 = scmp.eq.s32.totalorder %s14, 0
    %p97 = por %p95, %p96
    %p98 = scmp.ne.s32.totalorder %s90, %s92
    %p99 = scmp.eq.s32.totalorder %s19, 1
    %p100 = por %p98, %p99
    %p101 = scmp.ne.s32.totalorder %s92, %s93
    %p102 = scmp.eq.s32.totalorder %s19, 0
    %p103 = por %p101, %p102
    %p104 = scmp.ne.s32.totalorder %s92, %s93
    %p105 = scmp.eq.s32.totalorder %s20, 1
    %p106 = por %p104, %p105
    %p108 = scmp.ne.s32.totalorder %s93, %s107
    %p109 = scmp.eq.s32.totalorder %s20, 0
    %p110 = por %p108, %p109
    %s112 = sadd.s32 %s111, 1
    %p115 = scmp.eq.s32.totalorder %s14, 1
    %p116 = scmp.ne.s32.totalorder %s111, %s113
    %p117 = scmp.eq.s32.totalorder %s14, 0
    %p118 = por %p116, %p117
    %p119 = scmp.ne.s32.totalorder %s111, %s113
    %p120 = scmp.eq.s32.totalorder %s19, 1
    %p121 = por %p119, %p120
    %p122 = scmp.ne.s32.totalorder %s113, %s114
    %p123 = scmp.eq.s32.totalorder %s19, 0
    %p124 = por %p122, %p123
    %p125 = scmp.ne.s32.totalorder %s113, %s114
    %p126 = scmp.eq.s32.totalorder %s20, 1
    %p127 = por %p125, %p126
    %p129 = scmp.ne.s32.totalorder %s114, %s128
    %p130 = scmp.eq.s32.totalorder %s20, 0
    %p131 = por %p129, %p130
    %s133 = sadd.s32 %s132, 1
    %p136 = scmp.eq.s32.totalorder %s14, 1
    %p137 = scmp.ne.s32.totalorder %s132, %s134
    %p138 = scmp.eq.s32.totalorder %s14, 0
    %p139 = por %p137, %p138
    %p140 = scmp.ne.s32.totalorder %s132, %s134
    %p141 = scmp.eq.s32.totalorder %s19, 1
    %p142 = por %p140, %p141
    %p143 = scmp.ne.s32.totalorder %s134, %s135
    %p144 = scmp.eq.s32.totalorder %s19, 0
    %p145 = por %p143, %p144
    %p146 = scmp.ne.s32.totalorder %s134, %s135
    %p147 = scmp.eq.s32.totalorder %s20, 1
    %p148 = por %p146, %p147
    %p150 = scmp.ne.s32.totalorder %s135, %s149
    %p151 = scmp.eq.s32.totalorder %s20, 0
    %p152 = por %p150, %p151
    %s154 = sadd.s32 %s153, 1
    %p157 = scmp.eq.s32.totalorder %s14, 1
    %p158 = scmp.ne.s32.totalorder %s153, %s155
    %p159 = scmp.eq.s32.totalorder %s14, 0
    %p160 = por %p158, %p159
    %p161 = scmp.ne.s32.totalorder %s153, %s155
    %p162 = scmp.eq.s32.totalorder %s19, 1
    %p163 = por %p161, %p162
    %p164 = scmp.ne.s32.totalorder %s155, %s156
    %p165 = scmp.eq.s32.totalorder %s19, 0
    %p166 = por %p164, %p165
    %p167 = scmp.ne.s32.totalorder %s155, %s156
    %p168 = scmp.eq.s32.totalorder %s20, 1
    %p169 = por %p167, %p168
    %p171 = scmp.ne.s32.totalorder %s156, %s170
    %p172 = scmp.eq.s32.totalorder %s20, 0
    %p173 = por %p171, %p172
    %s175 = sadd.s32 %s174, 1
    %p178 = scmp.eq.s32.totalorder %s14, 1
    %p179 = scmp.ne.s32.totalorder %s174, %s176
    %p180 = scmp.eq.s32.totalorder %s14, 0
    %p181 = por %p179, %p180
    %p182 = scmp.ne.s32.totalorder %s174, %s176
    %p183 = scmp.eq.s32.totalorder %s19, 1
    %p184 = por %p182, %p183
    %p185 = scmp.ne.s32.totalorder %s176, %s177
    %p186 = scmp.eq.s32.totalorder %s19, 0
    %p187 = por %p185, %p186
    %p188 = scmp.ne.s32.totalorder %s176, %s177
    %p189 = scmp.eq.s32.totalorder %s20, 1
    %p190 = por %p188, %p189
    %p192 = scmp.ne.s32.totalorder %s177, %s191
    %p193 = scmp.eq.s32.totalorder %s20, 0
    %p194 = por %p192, %p193
    %s195 = ssub.s32 %s14, %s21
    %p196 = scmp.eq.s32.totalorder %s195, 0
    %s198 = sadd.s32 %s197, 1
    %s199 = scalar_select %p196, %s197, %s198
    %p202 = pneg %p196
    %p203 = scmp.eq.s32.totalorder %s14, 1
    %p204 = por %p202, %p203
    %p205 = scmp.ne.s32.totalorder %s197, %s200
    %p206 = scmp.eq.s32.totalorder %s14, 0
    %p207 = por %p205, %p206
    %p208 = scmp.ne.s32.totalorder %s197, %s200
    %p209 = scmp.eq.s32.totalorder %s19, 1
    %p210 = por %p208, %p209
    %p211 = scmp.ne.s32.totalorder %s200, %s201
    %p212 = scmp.eq.s32.totalorder %s19, 0
    %p213 = por %p211, %p212
    %p214 = scmp.ne.s32.totalorder %s200, %s201
    %p215 = scmp.eq.s32.totalorder %s20, 1
    %p216 = por %p214, %p215
    %p218 = scmp.ne.s32.totalorder %s201, %s217
    %p219 = scmp.eq.s32.totalorder %s20, 0
    %p220 = por %p218, %p219
    %p221 = scmp.le.s32.totalorder 1, %s14
    %p222 = scmp.lt.s32.totalorder %s14, 3
    %p223 = pnand %p221, %p222
    %p224 = pneg %p223
    // Predicated region
    $region9: #{tpu_custom_call.1} parent=5 // pred_check
      _
    $region10: #{tpu_custom_call.1} parent=5 // pred_check_branch
      %226 = sbr.rel (%p223) target = $region12
    $region11: #{tpu_custom_call.1} parent=5 // pred_region
      %s227 = ssub.s32 %s14, 1
      // Predicated region
      $region13: #{tpu_custom_call.1} parent=11 // pred_check
        %p228 = pneg %p61
      $region14: #{tpu_custom_call.1} parent=11 // pred_check_branch
        %230 = sbr.rel (%p228) target = $region16
      $region15: #{tpu_custom_call.1} parent=11 // pred_region
        _
      $region16: #{tpu_custom_call.1} parent=11 // pred_fallthru
        _
      // Predicated region
      $region17: #{tpu_custom_call.1} parent=11 // pred_check
        %p231 = pneg %p82
      $region18: #{tpu_custom_call.1} parent=11 // pred_check_branch
        %233 = sbr.rel (%p231) target = $region20
      $region19: #{tpu_custom_call.1} parent=11 // pred_region
        _
      $region20: #{tpu_custom_call.1} parent=11 // pred_fallthru
        _
      // Predicated region
      $region21: #{tpu_custom_call.1} parent=11 // pred_check
        %p234 = pneg %p103
      $region22: #{tpu_custom_call.1} parent=11 // pred_check_branch
        %236 = sbr.rel (%p234) target = $region24
      $region23: #{tpu_custom_call.1} parent=11 // pred_region
        _
      $region24: #{tpu_custom_call.1} parent=11 // pred_fallthru
        _
      // Predicated region
      $region25: #{tpu_custom_call.1} parent=11 // pred_check
        %p237 = pneg %p124
      $region26: #{tpu_custom_call.1} parent=11 // pred_check_branch
        %239 = sbr.rel (%p237) target = $region28
      $region27: #{tpu_custom_call.1} parent=11 // pred_region
        _
      $region28: #{tpu_custom_call.1} parent=11 // pred_fallthru
        _
      // Predicated region
      $region29: #{tpu_custom_call.1} parent=11 // pred_check
        %p240 = pneg %p145
      $region30: #{tpu_custom_call.1} parent=11 // pred_check_branch
        %242 = sbr.rel (%p240) target = $region32
      $region31: #{tpu_custom_call.1} parent=11 // pred_region
        _
      $region32: #{tpu_custom_call.1} parent=11 // pred_fallthru
        _
      // Predicated region
      $region33: #{tpu_custom_call.1} parent=11 // pred_check
        %p243 = pneg %p166
      $region34: #{tpu_custom_call.1} parent=11 // pred_check_branch
        %245 = sbr.rel (%p243) target = $region36
      $region35: #{tpu_custom_call.1} parent=11 // pred_region
        _
      $region36: #{tpu_custom_call.1} parent=11 // pred_fallthru
        _
      // Predicated region
      $region37: #{tpu_custom_call.1} parent=11 // pred_check
        %p246 = pneg %p187
      $region38: #{tpu_custom_call.1} parent=11 // pred_check_branch
        %248 = sbr.rel (%p246) target = $region40
      $region39: #{tpu_custom_call.1} parent=11 // pred_region
        _
      $region40: #{tpu_custom_call.1} parent=11 // pred_fallthru
        _
    $region12: #{tpu_custom_call.1} parent=5 // pred_fallthru
      _
    %p249 = scmp.lt.s32.totalorder %s14, 2
    // Predicated region
    $region41: #{tpu_custom_call.1} parent=5 // pred_check
      %p250 = pneg %p249
    $region42: #{tpu_custom_call.1} parent=5 // pred_check_branch
      %252 = sbr.rel (%p250) target = $region44
    $region43: #{tpu_custom_call.1} parent=5 // pred_region
      // Predicated region
      $region45: #{tpu_custom_call.1} parent=43 // pred_check
        %p253 = pneg %p34
      $region46: #{tpu_custom_call.1} parent=43 // pred_check_branch
        %255 = sbr.rel (%p253) target = $region48
      $region47: #{tpu_custom_call.1} parent=43 // pred_region
        %p256 = scmp.lt.s32.totalorder %s14, 1
        %s257 = scalar_select %p256, %s14, 1
        %s258 = smul.addr %s257, 46
        %s259 = smul.addr %s258, 8
        %s260 = scalar_lea.vmem %s0, %s259
      $region48: #{tpu_custom_call.1} parent=43 // pred_fallthru
        _
    $region44: #{tpu_custom_call.1} parent=5 // pred_fallthru
      _
    %p261 = scmp.le.s32.totalorder 1, %s14
    %p262 = scmp.lt.s32.totalorder %s14, 3
    %p263 = pnand %p261, %p262
    %p264 = pneg %p263
    // Predicated region
    $region49: #{tpu_custom_call.1} parent=5 // pred_check
      _
    $region50: #{tpu_custom_call.1} parent=5 // pred_check_branch
      %266 = sbr.rel (%p263) target = $region52
    $region51: #{tpu_custom_call.1} parent=5 // pred_region
      %s267 = ssub.s32 %s14, 1
      %p268 = scmp.lt.s32.totalorder %s19, 1
      %s269 = scalar_select %p268, %s19, 1
      %s270 = smul.addr %s269, 46
      %s271 = smul.addr %s270, 8
      %s272 = scalar_lea.vmem %s0, %s271
      %p273 = pneg %p40
      %p274 = pneg %p37
      %p275 = pneg %p61
      %p276 = pneg %p58
      %p277 = pneg %p82
      %p278 = pneg %p79
      %p279 = pneg %p103
      %p280 = pneg %p100
      %p281 = pneg %p124
      %p282 = pneg %p121
      %p283 = pneg %p145
      %p284 = pneg %p142
      %p285 = pneg %p166
      %p286 = pneg %p163
      %p287 = pneg %p187
      %p288 = pneg %p184
      %p289 = pneg %p213
      %p290 = pneg %p210
      %p291 = scmp.lt.s32.totalorder %s19, 1
      %s292 = scalar_select %p291, %s19, 1
      %s293 = smul.addr %s292, 41
      %s294 = smul.addr %s293, 8
      %s295 = scalar_lea.vmem %s8, %s294
      %p296 = scmp.lt.s32.totalorder %s19, 1
      %s297 = scalar_select %p296, %s19, 1
      %s298 = smul.addr %s297, 46
      %s299 = smul.addr %s298, 8
      %s300 = scalar_lea.vmem %s0, %s299
      %p301 = scmp.lt.s32.totalorder %s19, 1
      %s302 = scalar_select %p301, %s19, 1
      %s303 = smul.addr %s302, 41
      %s304 = smul.addr %s303, 8
      %s305 = scalar_lea.vmem %s8, %s304
      %v306 = vld [vmem:[%s300] sm:$0xff]
      %v307 = vld [vmem:[%s300 + $0x8] sm:$0xff]
      %v308 = vld [vmem:[%s300 + $0x10] sm:$0xff]
      %v309 = vld [vmem:[%s300 + $0x18] sm:$0xff]
      %v310 = vld [vmem:[%s300 + $0x20] sm:$0xff]
      %v311 = vld [vmem:[%s300 + $0x28] sm:$0xff]
      %v312 = vld [vmem:[%s300 + $0x30] sm:$0xff]
      %v313 = vld [vmem:[%s300 + $0x38] sm:$0xff]
      %v314 = vld [vmem:[%s300 + $0x40] sm:$0xff]
      %v315 = vld [vmem:[%s300 + $0x48] sm:$0xff]
      %v316 = vld [vmem:[%s300 + $0x50] sm:$0xff]
      %v317 = vld [vmem:[%s300 + $0x58] sm:$0xff]
      %v318 = vld [vmem:[%s300 + $0x60] sm:$0xff]
      %v319 = vld [vmem:[%s300 + $0x68] sm:$0xff]
      %v320 = vld [vmem:[%s300 + $0x70] sm:$0xff]
      %v321 = vld [vmem:[%s300 + $0x78] sm:$0xff]
      %v322 = vld [vmem:[%s300 + $0x80] sm:$0xff]
      %v323 = vld [vmem:[%s300 + $0x88] sm:$0xff]
      %v324 = vld [vmem:[%s300 + $0x90] sm:$0xff]
      %v325 = vld [vmem:[%s300 + $0x98] sm:$0xff]
      %v326 = vld [vmem:[%s300 + $0xa0] sm:$0xff]
      %v327 = vld [vmem:[%s300 + $0xa8] sm:$0xff]
      %v328 = vld [vmem:[%s300 + $0xb0] sm:$0xff]
      %v329 = vld [vmem:[%s300 + $0xb8] sm:$0xff]
      %v330 = vld [vmem:[%s300 + $0xc0] sm:$0xff]
      %v331 = vld [vmem:[%s300 + $0xc8] sm:$0xff]
      %v332 = vld [vmem:[%s300 + $0xd0] sm:$0xff]
      %v333 = vld [vmem:[%s300 + $0xd8] sm:$0xff]
      %v334 = vld [vmem:[%s300 + $0xe0] sm:$0xff]
      %v335 = vld [vmem:[%s300 + $0xe8] sm:$0xff]
      %v336 = vld [vmem:[%s300 + $0xf0] sm:$0xff]
      %v337 = vld [vmem:[%s300 + $0xf8] sm:$0xff]
      %v338 = vld [vmem:[%s300 + $0x100] sm:$0xff]
      %v339 = vld [vmem:[%s300 + $0x108] sm:$0xff]
      %v340 = vld [vmem:[%s300 + $0x110] sm:$0xff]
      %v341 = vld [vmem:[%s300 + $0x118] sm:$0xff]
      %v342 = vld [vmem:[%s300 + $0x120] sm:$0xff]
      %v343 = vld [vmem:[%s300 + $0x128] sm:$0xff]
      %v344 = vld [vmem:[%s300 + $0x130] sm:$0xff]
      %v345 = vld [vmem:[%s300 + $0x138] sm:$0xff]
      %v346 = vld [vmem:[%s300 + $0x140] sm:$0xf]
      %v347 = vld [vmem:[%s1] sm:$0xff]
      %v348 = vld [vmem:[%s300 + $0x1] sm:$0xff]
      %v349 = vld [vmem:[%s300 + $0x9] sm:$0xff]
      %v350 = vld [vmem:[%s300 + $0x11] sm:$0xff]
      %v351 = vld [vmem:[%s300 + $0x19] sm:$0xff]
      %v352 = vld [vmem:[%s300 + $0x21] sm:$0xff]
      %v353 = vld [vmem:[%s300 + $0x29] sm:$0xff]
      %v354 = vld [vmem:[%s300 + $0x31] sm:$0xff]
      %v355 = vld [vmem:[%s300 + $0x39] sm:$0xff]
      %v356 = vld [vmem:[%s300 + $0x41] sm:$0xff]
      %v357 = vld [vmem:[%s300 + $0x49] sm:$0xff]
      %v358 = vld [vmem:[%s300 + $0x51] sm:$0xff]
      %v359 = vld [vmem:[%s300 + $0x59] sm:$0xff]
      %v360 = vld [vmem:[%s300 + $0x61] sm:$0xff]
      %v361 = vld [vmem:[%s300 + $0x69] sm:$0xff]
      %v362 = vld [vmem:[%s300 + $0x71] sm:$0xff]
      %v363 = vld [vmem:[%s300 + $0x79] sm:$0xff]
      %v364 = vld [vmem:[%s300 + $0x81] sm:$0xff]
      %v365 = vld [vmem:[%s300 + $0x89] sm:$0xff]
      %v366 = vld [vmem:[%s300 + $0x91] sm:$0xff]
      %v367 = vld [vmem:[%s300 + $0x99] sm:$0xff]
      %v368 = vld [vmem:[%s300 + $0xa1] sm:$0xff]
      %v369 = vld [vmem:[%s300 + $0xa9] sm:$0xff]
      %v370 = vld [vmem:[%s300 + $0xb1] sm:$0xff]
      %v371 = vld [vmem:[%s300 + $0xb9] sm:$0xff]
      %v372 = vld [vmem:[%s300 + $0xc1] sm:$0xff]
      %v373 = vld [vmem:[%s300 + $0xc9] sm:$0xff]
      %v374 = vld [vmem:[%s300 + $0xd1] sm:$0xff]
      %v375 = vld [vmem:[%s300 + $0xd9] sm:$0xff]
      %v376 = vld [vmem:[%s300 + $0xe1] sm:$0xff]
      %v377 = vld [vmem:[%s300 + $0xe9] sm:$0xff]
      %v378 = vld [vmem:[%s300 + $0xf1] sm:$0xff]
      %v379 = vld [vmem:[%s300 + $0xf9] sm:$0xff]
      %v380 = vld [vmem:[%s300 + $0x101] sm:$0xff]
      %v381 = vld [vmem:[%s300 + $0x109] sm:$0xff]
      %v382 = vld [vmem:[%s300 + $0x111] sm:$0xff]
      %v383 = vld [vmem:[%s300 + $0x119] sm:$0xff]
      %v384 = vld [vmem:[%s300 + $0x121] sm:$0xff]
      %v385 = vld [vmem:[%s300 + $0x129] sm:$0xff]
      %v386 = vld [vmem:[%s300 + $0x131] sm:$0xff]
      %v387 = vld [vmem:[%s300 + $0x139] sm:$0xff]
      %v388 = vld [vmem:[%s300 + $0x141] sm:$0xf]
      %s389 = scalar_lea.vmem %s1, 8
      %v390 = vld [vmem:[%s389] sm:$0xff]
      %vm391 = vcmask 64512
      %v393 = vsel %vm391, %v348, 0
      %v396 = vsel %vm391, %v349, 0
      %v399 = vsel %vm391, %v350, 0
      %v402 = vsel %vm391, %v351, 0
      %v405 = vsel %vm391, %v352, 0
      %v408 = vsel %vm391, %v353, 0
      %v411 = vsel %vm391, %v354, 0
      %v414 = vsel %vm391, %v355, 0
      %v417 = vsel %vm391, %v356, 0
      %v420 = vsel %vm391, %v357, 0
      %v423 = vsel %vm391, %v358, 0
      %v426 = vsel %vm391, %v359, 0
      %v429 = vsel %vm391, %v360, 0
      %v432 = vsel %vm391, %v361, 0
      %v435 = vsel %vm391, %v362, 0
      %v438 = vsel %vm391, %v363, 0
      %v441 = vsel %vm391, %v364, 0
      %v444 = vsel %vm391, %v365, 0
      %v447 = vsel %vm391, %v366, 0
      %v450 = vsel %vm391, %v367, 0
      %v453 = vsel %vm391, %v368, 0
      %v456 = vsel %vm391, %v369, 0
      %v459 = vsel %vm391, %v370, 0
      %v462 = vsel %vm391, %v371, 0
      %v465 = vsel %vm391, %v372, 0
      %v468 = vsel %vm391, %v373, 0
      %v471 = vsel %vm391, %v374, 0
      %v474 = vsel %vm391, %v375, 0
      %v477 = vsel %vm391, %v376, 0
      %v480 = vsel %vm391, %v377, 0
      %v483 = vsel %vm391, %v378, 0
      %v486 = vsel %vm391, %v379, 0
      %v489 = vsel %vm391, %v380, 0
      %v492 = vsel %vm391, %v381, 0
      %v495 = vsel %vm391, %v382, 0
      %v498 = vsel %vm391, %v383, 0
      %v501 = vsel %vm391, %v384, 0
      %v504 = vsel %vm391, %v385, 0
      %v507 = vsel %vm391, %v386, 0
      %v510 = vsel %vm391, %v387, 0
      %v513 = vsel %vm391, %v388, 0
      %515 = vmatprep.subr.mxu0 0.0
      %516 = vmatpush1.msra.mxu0 %v390
      %517 = vmatprep.subr.mxu0 0.0
      %518 = vmatpush1.msra.mxu0 0.0
      %519 = vmatprep.subr.mxu0 0.0
      %520 = vmatpush1.msra.mxu0 0.0
      %521 = vmatprep.subr.mxu0 0.0
      %522 = vmatpush1.msra.mxu0 0.0
      %523 = vmatprep.subr.mxu0 0.0
      %524 = vmatpush1.msra.mxu0 0.0
      %525 = vmatprep.subr.mxu0 0.0
      %526 = vmatpush1.msra.mxu0 0.0
      %527 = vmatprep.subr.mxu0 0.0
      %528 = vmatpush1.msra.mxu0 0.0
      %529 = vmatprep.subr.mxu0 0.0
      %530 = vmatpush1.msra.mxu0 0.0
      %531 = vmatprep.subr.mxu0 0.0
      %532 = vmatpush1.msra.mxu0 0.0
      %533 = vmatprep.subr.mxu0 0.0
      %534 = vmatpush1.msra.mxu0 0.0
      %535 = vmatprep.subr.mxu0 0.0
      %536 = vmatpush1.msra.mxu0 0.0
      %537 = vmatprep.subr.mxu0 0.0
      %538 = vmatpush1.msra.mxu0 0.0
      %539 = vmatprep.subr.mxu0 0.0
      %540 = vmatpush1.msra.mxu0 0.0
      %541 = vmatprep.subr.mxu0 0.0
      %542 = vmatpush1.msra.mxu0 0.0
      %543 = vmatprep.subr.mxu0 0.0
      %544 = vmatpush1.msra.mxu0 0.0
      %545 = vmatprep.subr.mxu0 0.0
      %546 = vmatpush1.msra.mxu0 0.0
      %547 = vmatprep.subr.mxu0 0.0
      %548 = vmatpush1.msra.mxu0 0.0
      %549 = vmatprep.subr.mxu0 0.0
      %550 = vmatpush1.msra.mxu0 0.0
      %551 = vmatprep.subr.mxu0 0.0
      %552 = vmatpush1.msra.mxu0 0.0
      %553 = vmatprep.subr.mxu0 0.0
      %554 = vmatpush1.msra.mxu0 0.0
      %555 = vmatprep.subr.mxu0 0.0
      %556 = vmatpush1.msra.mxu0 0.0
      %557 = vmatprep.subr.mxu0 0.0
      %558 = vmatpush1.msra.mxu0 0.0
      %559 = vmatprep.subr.mxu0 0.0
      %560 = vmatpush1.msra.mxu0 0.0
      %561 = vmatprep.subr.mxu0 0.0
      %562 = vmatpush1.msra.mxu0 0.0
      %563 = vmatprep.subr.mxu0 0.0
      %564 = vmatpush1.msra.mxu0 0.0
      %565 = vmatprep.subr.mxu0 0.0
      %566 = vmatpush1.msra.mxu0 0.0
      %567 = vmatprep.subr.mxu0 0.0
      %568 = vmatpush1.msra.mxu0 0.0
      %569 = vmatprep.subr.mxu0 0.0
      %570 = vmatpush1.msra.mxu0 0.0
      %571 = vmatprep.subr.mxu0 0.0
      %572 = vmatpush1.msra.mxu0 0.0
      %573 = vmatprep.subr.mxu0 0.0
      %574 = vmatpush1.msra.mxu0 0.0
      %575 = vmatprep.subr.mxu0 0.0
      %576 = vmatpush1.msra.mxu0 0.0
      %577 = vmatprep.subr.mxu0 0.0
      %578 = vmatpush1.msra.mxu0 0.0
      %579 = vmatprep.mubr.f32.mxu0 0.0
      %580 = vmatmul.mubr.f32.gmra.mrb[0].mxu0 %v393
      %v581 = vpop.f32.mrb[0].mxu0
      %v582 = vadd.f32 0.0, %v581
      %v583 = vpop.f32.mrb[0].mxu0
      %584 = vmatprep.mubr.f32.mxu0 0.0
      %585 = vmatmul.mubr.f32.gmra.mrb[0].mxu0 %v396
      %v586 = vpop.f32.mrb[0].mxu0
      %v587 = vadd.f32 0.0, %v586
      %v588 = vpop.f32.mrb[0].mxu0
      %589 = vmatprep.mubr.f32.mxu0 0.0
      %590 = vmatmul.mubr.f32.gmra.mrb[0].mxu0 %v399
      %v591 = vpop.f32.mrb[0].mxu0
      %v592 = vadd.f32 0.0, %v591
      %v593 = vpop.f32.mrb[0].mxu0
      %594 = vmatprep.mubr.f32.mxu0 0.0
      %595 = vmatmul.mubr.f32.gmra.mrb[0].mxu0 %v402
      %v596 = vpop.f32.mrb[0].mxu0
      %v597 = vadd.f32 0.0, %v596
      %v598 = vpop.f32.mrb[0].mxu0
      %599 = vmatprep.mubr.f32.mxu0 0.0
      %600 = vmatmul.mubr.f32.gmra.mrb[0].mxu0 %v405
      %v601 = vpop.f32.mrb[0].mxu0
      %v602 = vadd.f32 0.0, %v601
      %v603 = vpop.f32.mrb[0].mxu0
      %604 = vmatprep.mubr.f32.mxu0 0.0
      %605 = vmatmul.mubr.f32.gmra.mrb[0].mxu0 %v408
      %v606 = vpop.f32.mrb[0].mxu0
      %v607 = vadd.f32 0.0, %v606
      %v608 = vpop.f32.mrb[0].mxu0
      %609 = vmatprep.mubr.f32.mxu0 0.0
      %610 = vmatmul.mubr.f32.gmra.mrb[0].mxu0 %v411
      %v611 = vpop.f32.mrb[0].mxu0
      %v612 = vadd.f32 0.0, %v611
      %v613 = vpop.f32.mrb[0].mxu0
      %614 = vmatprep.mubr.f32.mxu0 0.0
      %615 = vmatmul.mubr.f32.gmra.mrb[0].mxu0 %v414
      %v616 = vpop.f32.mrb[0].mxu0
      %v617 = vadd.f32 0.0, %v616
      %v618 = vpop.f32.mrb[0].mxu0
      %619 = vmatprep.mubr.f32.mxu0 0.0
      %620 = vmatmul.mubr.f32.gmra.mrb[0].mxu0 %v417
      %v621 = vpop.f32.mrb[0].mxu0
      %v622 = vadd.f32 0.0, %v621
      %v623 = vpop.f32.mrb[0].mxu0
      %624 = vmatprep.mubr.f32.mxu0 0.0
      %625 = vmatmul.mubr.f32.gmra.mrb[0].mxu0 %v420
      %v626 = vpop.f32.mrb[0].mxu0
      %v627 = vadd.f32 0.0, %v626
      %v628 = vpop.f32.mrb[0].mxu0
      %629 = vmatprep.mubr.f32.mxu0 0.0
      %630 = vmatmul.mubr.f32.gmra.mrb[0].mxu0 %v423
      %v631 = vpop.f32.mrb[0].mxu0
      %v632 = vadd.f32 0.0, %v631
      %v633 = vpop.f32.mrb[0].mxu0
      %634 = vmatprep.mubr.f32.mxu0 0.0
      %635 = vmatmul.mubr.f32.gmra.mrb[0].mxu0 %v426
      %v636 = vpop.f32.mrb[0].mxu0
      %v637 = vadd.f32 0.0, %v636
      %v638 = vpop.f32.mrb[0].mxu0
      %639 = vmatprep.mubr.f32.mxu0 0.0
      %640 = vmatmul.mubr.f32.gmra.mrb[0].mxu0 %v429
      %v641 = vpop.f32.mrb[0].mxu0
      %v642 = vadd.f32 0.0, %v641
      %v643 = vpop.f32.mrb[0].mxu0
      %644 = vmatprep.mubr.f32.mxu0 0.0
      %645 = vmatmul.mubr.f32.gmra.mrb[0].mxu0 %v432
      %v646 = vpop.f32.mrb[0].mxu0
      %v647 = vadd.f32 0.0, %v646
      %v648 = vpop.f32.mrb[0].mxu0
      %649 = vmatprep.mubr.f32.mxu0 0.0
      %650 = vmatmul.mubr.f32.gmra.mrb[0].mxu0 %v435
      %v651 = vpop.f32.mrb[0].mxu0
      %v652 = vadd.f32 0.0, %v651
      %v653 = vpop.f32.mrb[0].mxu0
      %654 = vmatprep.mubr.f32.mxu0 0.0
      %655 = vmatmul.mubr.f32.gmra.mrb[0].mxu0 %v438
      %v656 = vpop.f32.mrb[0].mxu0
      %v657 = vadd.f32 0.0, %v656
      %v658 = vpop.f32.mrb[0].mxu0
      %659 = vmatprep.mubr.f32.mxu0 0.0
      %660 = vmatmul.mubr.f32.gmra.mrb[0].mxu0 %v441
      %v661 = vpop.f32.mrb[0].mxu0
      %v662 = vadd.f32 0.0, %v661
      %v663 = vpop.f32.mrb[0].mxu0
      %664 = vmatprep.mubr.f32.mxu0 0.0
      %665 = vmatmul.mubr.f32.gmra.mrb[0].mxu0 %v444
      %v666 = vpop.f32.mrb[0].mxu0
      %v667 = vadd.f32 0.0, %v666
      %v668 = vpop.f32.mrb[0].mxu0
      %669 = vmatprep.mubr.f32.mxu0 0.0
      %670 = vmatmul.mubr.f32.gmra.mrb[0].mxu0 %v447
      %v671 = vpop.f32.mrb[0].mxu0
      %v672 = vadd.f32 0.0, %v671
      %v673 = vpop.f32.mrb[0].mxu0
      %674 = vmatprep.mubr.f32.mxu0 0.0
      %675 = vmatmul.mubr.f32.gmra.mrb[0].mxu0 %v450
      %v676 = vpop.f32.mrb[0].mxu0
      %v677 = vadd.f32 0.0, %v676
      %v678 = vpop.f32.mrb[0].mxu0
      %679 = vmatprep.mubr.f32.mxu0 0.0
      %680 = vmatmul.mubr.f32.gmra.mrb[0].mxu0 %v453
      %v681 = vpop.f32.mrb[0].mxu0
      %v682 = vadd.f32 0.0, %v681
      %v683 = vpop.f32.mrb[0].mxu0
      %684 = vmatprep.mubr.f32.mxu0 0.0
      %685 = vmatmul.mubr.f32.gmra.mrb[0].mxu0 %v456
      %v686 = vpop.f32.mrb[0].mxu0
      %v687 = vadd.f32 0.0, %v686
      %v688 = vpop.f32.mrb[0].mxu0
      %689 = vmatprep.mubr.f32.mxu0 0.0
      %690 = vmatmul.mubr.f32.gmra.mrb[0].mxu0 %v459
      %v691 = vpop.f32.mrb[0].mxu0
      %v692 = vadd.f32 0.0, %v691
      %v693 = vpop.f32.mrb[0].mxu0
      %694 = vmatprep.mubr.f32.mxu0 0.0
      %695 = vmatmul.mubr.f32.gmra.mrb[0].mxu0 %v462
      %v696 = vpop.f32.mrb[0].mxu0
      %v697 = vadd.f32 0.0, %v696
      %v698 = vpop.f32.mrb[0].mxu0
      %699 = vmatprep.mubr.f32.mxu0 0.0
      %700 = vmatmul.mubr.f32.gmra.mrb[0].mxu0 %v465
      %v701 = vpop.f32.mrb[0].mxu0
      %v702 = vadd.f32 0.0, %v701
      %v703 = vpop.f32.mrb[0].mxu0
      %704 = vmatprep.mubr.f32.mxu0 0.0
      %705 = vmatmul.mubr.f32.gmra.mrb[0].mxu0 %v468
      %v706 = vpop.f32.mrb[0].mxu0
      %v707 = vadd.f32 0.0, %v706
      %v708 = vpop.f32.mrb[0].mxu0
      %709 = vmatprep.mubr.f32.mxu0 0.0
      %710 = vmatmul.mubr.f32.gmra.mrb[0].mxu0 %v471
      %v711 = vpop.f32.mrb[0].mxu0
      %v712 = vadd.f32 0.0, %v711
      %v713 = vpop.f32.mrb[0].mxu0
      %714 = vmatprep.mubr.f32.mxu0 0.0
      %715 = vmatmul.mubr.f32.gmra.mrb[0].mxu0 %v474
      %v716 = vpop.f32.mrb[0].mxu0
      %v717 = vadd.f32 0.0, %v716
      %v718 = vpop.f32.mrb[0].mxu0
      %719 = vmatprep.mubr.f32.mxu0 0.0
      %720 = vmatmul.mubr.f32.gmra.mrb[0].mxu0 %v477
      %v721 = vpop.f32.mrb[0].mxu0
      %v722 = vadd.f32 0.0, %v721
      %v723 = vpop.f32.mrb[0].mxu0
      %724 = vmatprep.mubr.f32.mxu0 0.0
      %725 = vmatmul.mubr.f32.gmra.mrb[0].mxu0 %v480
      %v726 = vpop.f32.mrb[0].mxu0
      %v727 = vadd.f32 0.0, %v726
      %v728 = vpop.f32.mrb[0].mxu0
      %729 = vmatprep.mubr.f32.mxu0 0.0
      %730 = vmatmul.mubr.f32.gmra.mrb[0].mxu0 %v483
      %v731 = vpop.f32.mrb[0].mxu0
      %v732 = vadd.f32 0.0, %v731
      %v733 = vpop.f32.mrb[0].mxu0
      %734 = vmatprep.mubr.f32.mxu0 0.0
      %735 = vmatmul.mubr.f32.gmra.mrb[0].mxu0 %v486
      %v736 = vpop.f32.mrb[0].mxu0
      %v737 = vadd.f32 0.0, %v736
      %v738 = vpop.f32.mrb[0].mxu0
      %739 = vmatprep.mubr.f32.mxu0 0.0
      %740 = vmatmul.mubr.f32.gmra.mrb[0].mxu0 %v489
      %v741 = vpop.f32.mrb[0].mxu0
      %v742 = vadd.f32 0.0, %v741
      %v743 = vpop.f32.mrb[0].mxu0
      %744 = vmatprep.mubr.f32.mxu0 0.0
      %745 = vmatmul.mubr.f32.gmra.mrb[0].mxu0 %v492
      %v746 = vpop.f32.mrb[0].mxu0
      %v747 = vadd.f32 0.0, %v746
      %v748 = vpop.f32.mrb[0].mxu0
      %749 = vmatprep.mubr.f32.mxu0 0.0
      %750 = vmatmul.mubr.f32.gmra.mrb[0].mxu0 %v495
      %v751 = vpop.f32.mrb[0].mxu0
      %v752 = vadd.f32 0.0, %v751
      %v753 = vpop.f32.mrb[0].mxu0
      %754 = vmatprep.mubr.f32.mxu0 0.0
      %755 = vmatmul.mubr.f32.gmra.mrb[0].mxu0 %v498
      %v756 = vpop.f32.mrb[0].mxu0
      %v757 = vadd.f32 0.0, %v756
      %v758 = vpop.f32.mrb[0].mxu0
      %759 = vmatprep.mubr.f32.mxu0 0.0
      %760 = vmatmul.mubr.f32.gmra.mrb[0].mxu0 %v501
      %v761 = vpop.f32.mrb[0].mxu0
      %v762 = vadd.f32 0.0, %v761
      %v763 = vpop.f32.mrb[0].mxu0
      %764 = vmatprep.mubr.f32.mxu0 0.0
      %765 = vmatmul.mubr.f32.gmra.mrb[0].mxu0 %v504
      %v766 = vpop.f32.mrb[0].mxu0
      %v767 = vadd.f32 0.0, %v766
      %v768 = vpop.f32.mrb[0].mxu0
      %769 = vmatprep.mubr.f32.mxu0 0.0
      %770 = vmatmul.mubr.f32.gmra.mrb[0].mxu0 %v507
      %v771 = vpop.f32.mrb[0].mxu0
      %v772 = vadd.f32 0.0, %v771
      %v773 = vpop.f32.mrb[0].mxu0
      %774 = vmatprep.mubr.f32.mxu0 0.0
      %775 = vmatmul.mubr.f32.gmra.mrb[0].mxu0 %v510
      %v776 = vpop.f32.mrb[0].mxu0
      %v777 = vadd.f32 0.0, %v776
      %v778 = vpop.f32.mrb[0].mxu0
      %779 = vmatprep.mubr.f32.mxu0 0.0
      %780 = vmatmul.mubr.f32.gmra.mrb[0].mxu0 %v513
      %v781 = vpop.f32.mrb[0].mxu0
      %v782 = vadd.f32 0.0, %v781
      %v783 = vpop.f32.mrb[0].mxu0
      %784 = vdwg.mxu0
      %v786 = vsel %vm391, %v306, 0
      %v789 = vsel %vm391, %v307, 0
      %v792 = vsel %vm391, %v308, 0
      %v795 = vsel %vm391, %v309, 0
      %v798 = vsel %vm391, %v310, 0
      %v801 = vsel %vm391, %v311, 0
      %v804 = vsel %vm391, %v312, 0
      %v807 = vsel %vm391, %v313, 0
      %v810 = vsel %vm391, %v314, 0
      %v813 = vsel %vm391, %v315, 0
      %v816 = vsel %vm391, %v316, 0
      %v819 = vsel %vm391, %v317, 0
      %v822 = vsel %vm391, %v318, 0
      %v825 = vsel %vm391, %v319, 0
      %v828 = vsel %vm391, %v320, 0
      %v831 = vsel %vm391, %v321, 0
      %v834 = vsel %vm391, %v322, 0
      %v837 = vsel %vm391, %v323, 0
      %v840 = vsel %vm391, %v324, 0
      %v843 = vsel %vm391, %v325, 0
      %v846 = vsel %vm391, %v326, 0
      %v849 = vsel %vm391, %v327, 0
      %v852 = vsel %vm391, %v328, 0
      %v855 = vsel %vm391, %v329, 0
      %v858 = vsel %vm391, %v330, 0
      %v861 = vsel %vm391, %v331, 0
      %v864 = vsel %vm391, %v332, 0
      %v867 = vsel %vm391, %v333, 0
      %v870 = vsel %vm391, %v334, 0
      %v873 = vsel %vm391, %v335, 0
      %v876 = vsel %vm391, %v336, 0
      %v879 = vsel %vm391, %v337, 0
      %v882 = vsel %vm391, %v338, 0
      %v885 = vsel %vm391, %v339, 0
      %v888 = vsel %vm391, %v340, 0
      %v891 = vsel %vm391, %v341, 0
      %v894 = vsel %vm391, %v342, 0
      %v897 = vsel %vm391, %v343, 0
      %v900 = vsel %vm391, %v344, 0
      %v903 = vsel %vm391, %v345, 0
      %v906 = vsel %vm391, %v346, 0
      %908 = vmatprep.subr.mxu0 0.0
      %909 = vmatpush1.msra.mxu0 %v347
      %910 = vmatprep.subr.mxu0 0.0
      %911 = vmatpush1.msra.mxu0 0.0
      %912 = vmatprep.subr.mxu0 0.0
      %913 = vmatpush1.msra.mxu0 0.0
      %914 = vmatprep.subr.mxu0 0.0
      %915 = vmatpush1.msra.mxu0 0.0
      %916 = vmatprep.subr.mxu0 0.0
      %917 = vmatpush1.msra.mxu0 0.0
      %918 = vmatprep.subr.mxu0 0.0
      %919 = vmatpush1.msra.mxu0 0.0
      %920 = vmatprep.subr.mxu0 0.0
      %921 = vmatpush1.msra.mxu0 0.0
      %922 = vmatprep.subr.mxu0 0.0
      %923 = vmatpush1.msra.mxu0 0.0
      %924 = vmatprep.subr.mxu0 0.0
      %925 = vmatpush1.msra.mxu0 0.0
      %926 = vmatprep.subr.mxu0 0.0
      %927 = vmatpush1.msra.mxu0 0.0
      %928 = vmatprep.subr.mxu0 0.0
      %929 = vmatpush1.msra.mxu0 0.0
      %930 = vmatprep.subr.mxu0 0.0
      %931 = vmatpush1.msra.mxu0 0.0
      %932 = vmatprep.subr.mxu0 0.0
      %933 = vmatpush1.msra.mxu0 0.0
      %934 = vmatprep.subr.mxu0 0.0
      %935 = vmatpush1.msra.mxu0 0.0
      %936 = vmatprep.subr.mxu0 0.0
      %937 = vmatpush1.msra.mxu0 0.0
      %938 = vmatprep.subr.mxu0 0.0
      %939 = vmatpush1.msra.mxu0 0.0
      %940 = vmatprep.subr.mxu0 0.0
      %941 = vmatpush1.msra.mxu0 0.0
      %942 = vmatprep.subr.mxu0 0.0
      %943 = vmatpush1.msra.mxu0 0.0
      %944 = vmatprep.subr.mxu0 0.0
      %945 = vmatpush1.msra.mxu0 0.0
      %946 = vmatprep.subr.mxu0 0.0
      %947 = vmatpush1.msra.mxu0 0.0
      %948 = vmatprep.subr.mxu0 0.0
      %949 = vmatpush1.msra.mxu0 0.0
      %950 = vmatprep.subr.mxu0 0.0
      %951 = vmatpush1.msra.mxu0 0.0
      %952 = vmatprep.subr.mxu0 0.0
      %953 = vmatpush1.msra.mxu0 0.0
      %954 = vmatprep.subr.mxu0 0.0
      %955 = vmatpush1.msra.mxu0 0.0
      %956 = vmatprep.subr.mxu0 0.0
      %957 = vmatpush1.msra.mxu0 0.0
      %958 = vmatprep.subr.mxu0 0.0
      %959 = vmatpush1.msra.mxu0 0.0
      %960 = vmatprep.subr.mxu0 0.0
      %961 = vmatpush1.msra.mxu0 0.0
      %962 = vmatprep.subr.mxu0 0.0
      %963 = vmatpush1.msra.mxu0 0.0
      %964 = vmatprep.subr.mxu0 0.0
      %965 = vmatpush1.msra.mxu0 0.0
      %966 = vmatprep.subr.mxu0 0.0
      %967 = vmatpush1.msra.mxu0 0.0
      %968 = vmatprep.subr.mxu0 0.0
      %969 = vmatpush1.msra.mxu0 0.0
      %970 = vmatprep.subr.mxu0 0.0
      %971 = vmatpush1.msra.mxu0 0.0
      %972 = vmatprep.mubr.f32.mxu0 0.0
      %973 = vmatmul.mubr.f32.gmra.mrb[0].mxu0 %v786
      %v974 = vpop.f32.mrb[0].mxu0
      %v975 = vadd.f32 %v582, %v974
      %v976 = vpop.f32.mrb[0].mxu0
      %977 = vmatprep.mubr.f32.mxu0 0.0
      %978 = vmatmul.mubr.f32.gmra.mrb[0].mxu0 %v789
      %v979 = vpop.f32.mrb[0].mxu0
      %v980 = vadd.f32 %v587, %v979
      %v981 = vpop.f32.mrb[0].mxu0
      %982 = vmatprep.mubr.f32.mxu0 0.0
      %983 = vmatmul.mubr.f32.gmra.mrb[0].mxu0 %v792
      %v984 = vpop.f32.mrb[0].mxu0
      %v985 = vadd.f32 %v592, %v984
      %v986 = vpop.f32.mrb[0].mxu0
      %987 = vmatprep.mubr.f32.mxu0 0.0
      %988 = vmatmul.mubr.f32.gmra.mrb[0].mxu0 %v795
      %v989 = vpop.f32.mrb[0].mxu0
      %v990 = vadd.f32 %v597, %v989
      %v991 = vpop.f32.mrb[0].mxu0
      %992 = vmatprep.mubr.f32.mxu0 0.0
      %993 = vmatmul.mubr.f32.gmra.mrb[0].mxu0 %v798
      %v994 = vpop.f32.mrb[0].mxu0
      %v995 = vadd.f32 %v602, %v994
      %v996 = vpop.f32.mrb[0].mxu0
      %997 = vmatprep.mubr.f32.mxu0 0.0
      %998 = vmatmul.mubr.f32.gmra.mrb[0].mxu0 %v801
      %v999 = vpop.f32.mrb[0].mxu0
      %v1000 = vadd.f32 %v607, %v999
      %v1001 = vpop.f32.mrb[0].mxu0
      %1002 = vmatprep.mubr.f32.mxu0 0.0
      %1003 = vmatmul.mubr.f32.gmra.mrb[0].mxu0 %v804
      %v1004 = vpop.f32.mrb[0].mxu0
      %v1005 = vadd.f32 %v612, %v1004
      %v1006 = vpop.f32.mrb[0].mxu0
      %1007 = vmatprep.mubr.f32.mxu0 0.0
      %1008 = vmatmul.mubr.f32.gmra.mrb[0].mxu0 %v807
      %v1009 = vpop.f32.mrb[0].mxu0
      %v1010 = vadd.f32 %v617, %v1009
      %v1011 = vpop.f32.mrb[0].mxu0
      %1012 = vmatprep.mubr.f32.mxu0 0.0
      %1013 = vmatmul.mubr.f32.gmra.mrb[0].mxu0 %v810
      %v1014 = vpop.f32.mrb[0].mxu0
      %v1015 = vadd.f32 %v622, %v1014
      %v1016 = vpop.f32.mrb[0].mxu0
      %1017 = vmatprep.mubr.f32.mxu0 0.0
      %1018 = vmatmul.mubr.f32.gmra.mrb[0].mxu0 %v813
      %v1019 = vpop.f32.mrb[0].mxu0
      %v1020 = vadd.f32 %v627, %v1019
      %v1021 = vpop.f32.mrb[0].mxu0
      %1022 = vmatprep.mubr.f32.mxu0 0.0
      %1023 = vmatmul.mubr.f32.gmra.mrb[0].mxu0 %v816
      %v1024 = vpop.f32.mrb[0].mxu0
      %v1025 = vadd.f32 %v632, %v1024
      %v1026 = vpop.f32.mrb[0].mxu0
      %1027 = vmatprep.mubr.f32.mxu0 0.0
      %1028 = vmatmul.mubr.f32.gmra.mrb[0].mxu0 %v819
      %v1029 = vpop.f32.mrb[0].mxu0
      %v1030 = vadd.f32 %v637, %v1029
      %v1031 = vpop.f32.mrb[0].mxu0
      %1032 = vmatprep.mubr.f32.mxu0 0.0
      %1033 = vmatmul.mubr.f32.gmra.mrb[0].mxu0 %v822
      %v1034 = vpop.f32.mrb[0].mxu0
      %v1035 = vadd.f32 %v642, %v1034
      %v1036 = vpop.f32.mrb[0].mxu0
      %1037 = vmatprep.mubr.f32.mxu0 0.0
      %1038 = vmatmul.mubr.f32.gmra.mrb[0].mxu0 %v825
      %v1039 = vpop.f32.mrb[0].mxu0
      %v1040 = vadd.f32 %v647, %v1039
      %v1041 = vpop.f32.mrb[0].mxu0
      %1042 = vmatprep.mubr.f32.mxu0 0.0
      %1043 = vmatmul.mubr.f32.gmra.mrb[0].mxu0 %v828
      %v1044 = vpop.f32.mrb[0].mxu0
      %v1045 = vadd.f32 %v652, %v1044
      %v1046 = vpop.f32.mrb[0].mxu0
      %1047 = vmatprep.mubr.f32.mxu0 0.0
      %1048 = vmatmul.mubr.f32.gmra.mrb[0].mxu0 %v831
      %v1049 = vpop.f32.mrb[0].mxu0
      %v1050 = vadd.f32 %v657, %v1049
      %v1051 = vpop.f32.mrb[0].mxu0
      %1052 = vmatprep.mubr.f32.mxu0 0.0
      %1053 = vmatmul.mubr.f32.gmra.mrb[0].mxu0 %v834
      %v1054 = vpop.f32.mrb[0].mxu0
      %v1055 = vadd.f32 %v662, %v1054
      %v1056 = vpop.f32.mrb[0].mxu0
      %1057 = vmatprep.mubr.f32.mxu0 0.0
      %1058 = vmatmul.mubr.f32.gmra.mrb[0].mxu0 %v837
      %v1059 = vpop.f32.mrb[0].mxu0
      %v1060 = vadd.f32 %v667, %v1059
      %v1061 = vpop.f32.mrb[0].mxu0
      %1062 = vmatprep.mubr.f32.mxu0 0.0
      %1063 = vmatmul.mubr.f32.gmra.mrb[0].mxu0 %v840
      %v1064 = vpop.f32.mrb[0].mxu0
      %v1065 = vadd.f32 %v672, %v1064
      %v1066 = vpop.f32.mrb[0].mxu0
      %1067 = vmatprep.mubr.f32.mxu0 0.0
      %1068 = vmatmul.mubr.f32.gmra.mrb[0].mxu0 %v843
      %v1069 = vpop.f32.mrb[0].mxu0
      %v1070 = vadd.f32 %v677, %v1069
      %v1071 = vpop.f32.mrb[0].mxu0
      %1072 = vmatprep.mubr.f32.mxu0 0.0
      %1073 = vmatmul.mubr.f32.gmra.mrb[0].mxu0 %v846
      %v1074 = vpop.f32.mrb[0].mxu0
      %v1075 = vadd.f32 %v682, %v1074
      %v1076 = vpop.f32.mrb[0].mxu0
      %1077 = vmatprep.mubr.f32.mxu0 0.0
      %1078 = vmatmul.mubr.f32.gmra.mrb[0].mxu0 %v849
      %v1079 = vpop.f32.mrb[0].mxu0
      %v1080 = vadd.f32 %v687, %v1079
      %v1081 = vpop.f32.mrb[0].mxu0
      %1082 = vmatprep.mubr.f32.mxu0 0.0
      %1083 = vmatmul.mubr.f32.gmra.mrb[0].mxu0 %v852
      %v1084 = vpop.f32.mrb[0].mxu0
      %v1085 = vadd.f32 %v692, %v1084
      %v1086 = vpop.f32.mrb[0].mxu0
      %1087 = vmatprep.mubr.f32.mxu0 0.0
      %1088 = vmatmul.mubr.f32.gmra.mrb[0].mxu0 %v855
      %v1089 = vpop.f32.mrb[0].mxu0
      %v1090 = vadd.f32 %v697, %v1089
      %v1091 = vpop.f32.mrb[0].mxu0
      %1092 = vmatprep.mubr.f32.mxu0 0.0
      %1093 = vmatmul.mubr.f32.gmra.mrb[0].mxu0 %v858
      %v1094 = vpop.f32.mrb[0].mxu0
      %v1095 = vadd.f32 %v702, %v1094
      %v1096 = vpop.f32.mrb[0].mxu0
      %1097 = vmatprep.mubr.f32.mxu0 0.0
      %1098 = vmatmul.mubr.f32.gmra.mrb[0].mxu0 %v861
      %v1099 = vpop.f32.mrb[0].mxu0
      %v1100 = vadd.f32 %v707, %v1099
      %v1101 = vpop.f32.mrb[0].mxu0
      %1102 = vmatprep.mubr.f32.mxu0 0.0
      %1103 = vmatmul.mubr.f32.gmra.mrb[0].mxu0 %v864
      %v1104 = vpop.f32.mrb[0].mxu0
      %v1105 = vadd.f32 %v712, %v1104
      %v1106 = vpop.f32.mrb[0].mxu0
      %1107 = vmatprep.mubr.f32.mxu0 0.0
      %1108 = vmatmul.mubr.f32.gmra.mrb[0].mxu0 %v867
      %v1109 = vpop.f32.mrb[0].mxu0
      %v1110 = vadd.f32 %v717, %v1109
      %v1111 = vpop.f32.mrb[0].mxu0
      %1112 = vmatprep.mubr.f32.mxu0 0.0
      %1113 = vmatmul.mubr.f32.gmra.mrb[0].mxu0 %v870
      %v1114 = vpop.f32.mrb[0].mxu0
      %v1115 = vadd.f32 %v722, %v1114
      %v1116 = vpop.f32.mrb[0].mxu0
      %1117 = vmatprep.mubr.f32.mxu0 0.0
      %1118 = vmatmul.mubr.f32.gmra.mrb[0].mxu0 %v873
      %v1119 = vpop.f32.mrb[0].mxu0
      %v1120 = vadd.f32 %v727, %v1119
      %v1121 = vpop.f32.mrb[0].mxu0
      %1122 = vmatprep.mubr.f32.mxu0 0.0
      %1123 = vmatmul.mubr.f32.gmra.mrb[0].mxu0 %v876
      %v1124 = vpop.f32.mrb[0].mxu0
      %v1125 = vadd.f32 %v732, %v1124
      %v1126 = vpop.f32.mrb[0].mxu0
      %1127 = vmatprep.mubr.f32.mxu0 0.0
      %1128 = vmatmul.mubr.f32.gmra.mrb[0].mxu0 %v879
      %v1129 = vpop.f32.mrb[0].mxu0
      %v1130 = vadd.f32 %v737, %v1129
      %v1131 = vpop.f32.mrb[0].mxu0
      %1132 = vmatprep.mubr.f32.mxu0 0.0
      %1133 = vmatmul.mubr.f32.gmra.mrb[0].mxu0 %v882
      %v1134 = vpop.f32.mrb[0].mxu0
      %v1135 = vadd.f32 %v742, %v1134
      %v1136 = vpop.f32.mrb[0].mxu0
      %1137 = vmatprep.mubr.f32.mxu0 0.0
      %1138 = vmatmul.mubr.f32.gmra.mrb[0].mxu0 %v885
      %v1139 = vpop.f32.mrb[0].mxu0
      %v1140 = vadd.f32 %v747, %v1139
      %v1141 = vpop.f32.mrb[0].mxu0
      %1142 = vmatprep.mubr.f32.mxu0 0.0
      %1143 = vmatmul.mubr.f32.gmra.mrb[0].mxu0 %v888
      %v1144 = vpop.f32.mrb[0].mxu0
      %v1145 = vadd.f32 %v752, %v1144
      %v1146 = vpop.f32.mrb[0].mxu0
      %1147 = vmatprep.mubr.f32.mxu0 0.0
      %1148 = vmatmul.mubr.f32.gmra.mrb[0].mxu0 %v891
      %v1149 = vpop.f32.mrb[0].mxu0
      %v1150 = vadd.f32 %v757, %v1149
      %v1151 = vpop.f32.mrb[0].mxu0
      %1152 = vmatprep.mubr.f32.mxu0 0.0
      %1153 = vmatmul.mubr.f32.gmra.mrb[0].mxu0 %v894
      %v1154 = vpop.f32.mrb[0].mxu0
      %v1155 = vadd.f32 %v762, %v1154
      %v1156 = vpop.f32.mrb[0].mxu0
      %1157 = vmatprep.mubr.f32.mxu0 0.0
      %1158 = vmatmul.mubr.f32.gmra.mrb[0].mxu0 %v897
      %v1159 = vpop.f32.mrb[0].mxu0
      %v1160 = vadd.f32 %v767, %v1159
      %v1161 = vpop.f32.mrb[0].mxu0
      %1162 = vmatprep.mubr.f32.mxu0 0.0
      %1163 = vmatmul.mubr.f32.gmra.mrb[0].mxu0 %v900
      %v1164 = vpop.f32.mrb[0].mxu0
      %v1165 = vadd.f32 %v772, %v1164
      %v1166 = vpop.f32.mrb[0].mxu0
      %1167 = vmatprep.mubr.f32.mxu0 0.0
      %1168 = vmatmul.mubr.f32.gmra.mrb[0].mxu0 %v903
      %v1169 = vpop.f32.mrb[0].mxu0
      %v1170 = vadd.f32 %v777, %v1169
      %v1171 = vpop.f32.mrb[0].mxu0
      %1172 = vmatprep.mubr.f32.mxu0 0.0
      %1173 = vmatmul.mubr.f32.gmra.mrb[0].mxu0 %v906
      %v1174 = vpop.f32.mrb[0].mxu0
      %v1175 = vadd.f32 %v782, %v1174
      %v1176 = vpop.f32.mrb[0].mxu0
      %1177 = vdwg.mxu0
      %v1178 = vld [vmem:[%s300 + $0x2] sm:$0xff]
      %v1179 = vld [vmem:[%s300 + $0xa] sm:$0xff]
      %v1180 = vld [vmem:[%s300 + $0x12] sm:$0xff]
      %v1181 = vld [vmem:[%s300 + $0x1a] sm:$0xff]
      %v1182 = vld [vmem:[%s300 + $0x22] sm:$0xff]
      %v1183 = vld [vmem:[%s300 + $0x2a] sm:$0xff]
      %v1184 = vld [vmem:[%s300 + $0x32] sm:$0xff]
      %v1185 = vld [vmem:[%s300 + $0x3a] sm:$0xff]
      %v1186 = vld [vmem:[%s300 + $0x42] sm:$0xff]
      %v1187 = vld [vmem:[%s300 + $0x4a] sm:$0xff]
      %v1188 = vld [vmem:[%s300 + $0x52] sm:$0xff]
      %v1189 = vld [vmem:[%s300 + $0x5a] sm:$0xff]
      %v1190 = vld [vmem:[%s300 + $0x62] sm:$0xff]
      %v1191 = vld [vmem:[%s300 + $0x6a] sm:$0xff]
      %v1192 = vld [vmem:[%s300 + $0x72] sm:$0xff]
      %v1193 = vld [vmem:[%s300 + $0x7a] sm:$0xff]
      %v1194 = vld [vmem:[%s300 + $0x82] sm:$0xff]
      %v1195 = vld [vmem:[%s300 + $0x8a] sm:$0xff]
      %v1196 = vld [vmem:[%s300 + $0x92] sm:$0xff]
      %v1197 = vld [vmem:[%s300 + $0x9a] sm:$0xff]
      %v1198 = vld [vmem:[%s300 + $0xa2] sm:$0xff]
      %v1199 = vld [vmem:[%s300 + $0xaa] sm:$0xff]
      %v1200 = vld [vmem:[%s300 + $0xb2] sm:$0xff]
      %v1201 = vld [vmem:[%s300 + $0xba] sm:$0xff]
      %v1202 = vld [vmem:[%s300 + $0xc2] sm:$0xff]
      %v1203 = vld [vmem:[%s300 + $0xca] sm:$0xff]
      %v1204 = vld [vmem:[%s300 + $0xd2] sm:$0xff]
      %v1205 = vld [vmem:[%s300 + $0xda] sm:$0xff]
      %v1206 = vld [vmem:[%s300 + $0xe2] sm:$0xff]
      %v1207 = vld [vmem:[%s300 + $0xea] sm:$0xff]
      %v1208 = vld [vmem:[%s300 + $0xf2] sm:$0xff]
      %v1209 = vld [vmem:[%s300 + $0xfa] sm:$0xff]
      %v1210 = vld [vmem:[%s300 + $0x102] sm:$0xff]
      %v1211 = vld [vmem:[%s300 + $0x10a] sm:$0xff]
      %v1212 = vld [vmem:[%s300 + $0x112] sm:$0xff]
      %v1213 = vld [vmem:[%s300 + $0x11a] sm:$0xff]
      %v1214 = vld [vmem:[%s300 + $0x122] sm:$0xff]
      %v1215 = vld [vmem:[%s300 + $0x12a] sm:$0xff]
      %v1216 = vld [vmem:[%s300 + $0x132] sm:$0xff]
      %v1217 = vld [vmem:[%s300 + $0x13a] sm:$0xff]
      %v1218 = vld [vmem:[%s300 + $0x142] sm:$0xf]
      %s1219 = scalar_lea.vmem %s1, 16
      %v1220 = vld [vmem:[%s1219] sm:$0xff]
      %v1222 = vsel %vm391, %v1178, 0
      %v1225 = vsel %vm391, %v1179, 0
      %v1228 = vsel %vm391, %v1180, 0
      %v1231 = vsel %vm391, %v1181, 0
      %v1234 = vsel %vm391, %v1182, 0
      %v1237 = vsel %vm391, %v1183, 0
      %v1240 = vsel %vm391, %v1184, 0
      %v1243 = vsel %vm391, %v1185, 0
      %v1246 = vsel %vm391, %v1186, 0
      %v1249 = vsel %vm391, %v1187, 0
      %v1252 = vsel %vm391, %v1188, 0
      %v1255 = vsel %vm391, %v1189, 0
      %v1258 = vsel %vm391, %v1190, 0
      %v1261 = vsel %vm391, %v1191, 0
      %v1264 = vsel %vm391, %v1192, 0
      %v1267 = vsel %vm391, %v1193, 0
      %v1270 = vsel %vm391, %v1194, 0
      %v1273 = vsel %vm391, %v1195, 0
      %v1276 = vsel %vm391, %v1196, 0
      %v1279 = vsel %vm391, %v1197, 0
      %v1282 = vsel %vm391, %v1198, 0
      %v1285 = vsel %vm391, %v1199, 0
      %v1288 = vsel %vm391, %v1200, 0
      %v1291 = vsel %vm391, %v1201, 0
      %v1294 = vsel %vm391, %v1202, 0
      %v1297 = vsel %vm391, %v1203, 0
      %v1300 = vsel %vm391, %v1204, 0
      %v1303 = vsel %vm391, %v1205, 0
      %v1306 = vsel %vm391, %v1206, 0
      %v1309 = vsel %vm391, %v1207, 0
      %v1312 = vsel %vm391, %v1208, 0
      %v1315 = vsel %vm391, %v1209, 0
      %v1318 = vsel %vm391, %v1210, 0
      %v1321 = vsel %vm391, %v1211, 0
      %v1324 = vsel %vm391, %v1212, 0
      %v1327 = vsel %vm391, %v1213, 0
      %v1330 = vsel %vm391, %v1214, 0
      %v1333 = vsel %vm391, %v1215, 0
      %v1336 = vsel %vm391, %v1216, 0
      %v1339 = vsel %vm391, %v1217, 0
      %v1342 = vsel %vm391, %v1218, 0
      %1344 = vmatprep.subr.mxu0 0.0
      %1345 = vmatpush1.msra.mxu0 %v1220
      %1346 = vmatprep.subr.mxu0 0.0
      %1347 = vmatpush1.msra.mxu0 0.0
      %1348 = vmatprep.subr.mxu0 0.0
      %1349 = vmatpush1.msra.mxu0 0.0
      %1350 = vmatprep.subr.mxu0 0.0
      %1351 = vmatpush1.msra.mxu0 0.0
      %1352 = vmatprep.subr.mxu0 0.0
      %1353 = vmatpush1.msra.mxu0 0.0
      %1354 = vmatprep.subr.mxu0 0.0
      %1355 = vmatpush1.msra.mxu0 0.0
      %1356 = vmatprep.subr.mxu0 0.0
      %1357 = vmatpush1.msra.mxu0 0.0
      %1358 = vmatprep.subr.mxu0 0.0
      %1359 = vmatpush1.msra.mxu0 0.0
      %1360 = vmatprep.subr.mxu0 0.0
      %1361 = vmatpush1.msra.mxu0 0.0
      %1362 = vmatprep.subr.mxu0 0.0
      %1363 = vmatpush1.msra.mxu0 0.0
      %1364 = vmatprep.subr.mxu0 0.0
      %1365 = vmatpush1.msra.mxu0 0.0
      %1366 = vmatprep.subr.mxu0 0.0
      %1367 = vmatpush1.msra.mxu0 0.0
      %1368 = vmatprep.subr.mxu0 0.0
      %1369 = vmatpush1.msra.mxu0 0.0
      %1370 = vmatprep.subr.mxu0 0.0
      %1371 = vmatpush1.msra.mxu0 0.0
      %1372 = vmatprep.subr.mxu0 0.0
      %1373 = vmatpush1.msra.mxu0 0.0
      %1374 = vmatprep.subr.mxu0 0.0
      %1375 = vmatpush1.msra.mxu0 0.0
      %1376 = vmatprep.subr.mxu0 0.0
      %1377 = vmatpush1.msra.mxu0 0.0
      %1378 = vmatprep.subr.mxu0 0.0
      %1379 = vmatpush1.msra.mxu0 0.0
      %1380 = vmatprep.subr.mxu0 0.0
      %1381 = vmatpush1.msra.mxu0 0.0
      %1382 = vmatprep.subr.mxu0 0.0
      %1383 = vmatpush1.msra.mxu0 0.0
      %1384 = vmatprep.subr.mxu0 0.0
      %1385 = vmatpush1.msra.mxu0 0.0
      %1386 = vmatprep.subr.mxu0 0.0
      %1387 = vmatpush1.msra.mxu0 0.0
      %1388 = vmatprep.subr.mxu0 0.0
      %1389 = vmatpush1.msra.mxu0 0.0
      %1390 = vmatprep.subr.mxu0 0.0
      %1391 = vmatpush1.msra.mxu0 0.0
      %1392 = vmatprep.subr.mxu0 0.0
      %1393 = vmatpush1.msra.mxu0 0.0
      %1394 = vmatprep.subr.mxu0 0.0
      %1395 = vmatpush1.msra.mxu0 0.0
      %1396 = vmatprep.subr.mxu0 0.0
      %1397 = vmatpush1.msra.mxu0 0.0
      %1398 = vmatprep.subr.mxu0 0.0
      %1399 = vmatpush1.msra.mxu0 0.0
      %1400 = vmatprep.subr.mxu0 0.0
      %1401 = vmatpush1.msra.mxu0 0.0
      %1402 = vmatprep.subr.mxu0 0.0
      %1403 = vmatpush1.msra.mxu0 0.0
      %1404 = vmatprep.subr.mxu0 0.0
      %1405 = vmatpush1.msra.mxu0 0.0
      %1406 = vmatprep.subr.mxu0 0.0
      %1407 = vmatpush1.msra.mxu0 0.0
      %1408 = vmatprep.mubr.f32.mxu0 0.0
      %1409 = vmatmul.mubr.f32.gmra.mrb[0].mxu0 %v1222
      %v1410 = vpop.f32.mrb[0].mxu0
      %v1411 = vadd.f32 0.0, %v1410
      %v1412 = vpop.f32.mrb[0].mxu0
      %1413 = vmatprep.mubr.f32.mxu0 0.0
      %1414 = vmatmul.mubr.f32.gmra.mrb[0].mxu0 %v1225
      %v1415 = vpop.f32.mrb[0].mxu0
      %v1416 = vadd.f32 0.0, %v1415
      %v1417 = vpop.f32.mrb[0].mxu0
      %1418 = vmatprep.mubr.f32.mxu0 0.0
      %1419 = vmatmul.mubr.f32.gmra.mrb[0].mxu0 %v1228
      %v1420 = vpop.f32.mrb[0].mxu0
      %v1421 = vadd.f32 0.0, %v1420
      %v1422 = vpop.f32.mrb[0].mxu0
      %1423 = vmatprep.mubr.f32.mxu0 0.0
      %1424 = vmatmul.mubr.f32.gmra.mrb[0].mxu0 %v1231
      %v1425 = vpop.f32.mrb[0].mxu0
      %v1426 = vadd.f32 0.0, %v1425
      %v1427 = vpop.f32.mrb[0].mxu0
      %1428 = vmatprep.mubr.f32.mxu0 0.0
      %1429 = vmatmul.mubr.f32.gmra.mrb[0].mxu0 %v1234
      %v1430 = vpop.f32.mrb[0].mxu0
      %v1431 = vadd.f32 0.0, %v1430
      %v1432 = vpop.f32.mrb[0].mxu0
      %1433 = vmatprep.mubr.f32.mxu0 0.0
      %1434 = vmatmul.mubr.f32.gmra.mrb[0].mxu0 %v1237
      %v1435 = vpop.f32.mrb[0].mxu0
      %v1436 = vadd.f32 0.0, %v1435
      %v1437 = vpop.f32.mrb[0].mxu0
      %1438 = vmatprep.mubr.f32.mxu0 0.0
      %1439 = vmatmul.mubr.f32.gmra.mrb[0].mxu0 %v1240
      %v1440 = vpop.f32.mrb[0].mxu0
      %v1441 = vadd.f32 0.0, %v1440
      %v1442 = vpop.f32.mrb[0].mxu0
      %1443 = vmatprep.mubr.f32.mxu0 0.0
      %1444 = vmatmul.mubr.f32.gmra.mrb[0].mxu0 %v1243
      %v1445 = vpop.f32.mrb[0].mxu0
      %v1446 = vadd.f32 0.0, %v1445
      %v1447 = vpop.f32.mrb[0].mxu0
      %1448 = vmatprep.mubr.f32.mxu0 0.0
      %1449 = vmatmul.mubr.f32.gmra.mrb[0].mxu0 %v1246
      %v1450 = vpop.f32.mrb[0].mxu0
      %v1451 = vadd.f32 0.0, %v1450
      %v1452 = vpop.f32.mrb[0].mxu0
      %1453 = vmatprep.mubr.f32.mxu0 0.0
      %1454 = vmatmul.mubr.f32.gmra.mrb[0].mxu0 %v1249
      %v1455 = vpop.f32.mrb[0].mxu0
      %v1456 = vadd.f32 0.0, %v1455
      %v1457 = vpop.f32.mrb[0].mxu0
      %1458 = vmatprep.mubr.f32.mxu0 0.0
      %1459 = vmatmul.mubr.f32.gmra.mrb[0].mxu0 %v1252
      %v1460 = vpop.f32.mrb[0].mxu0
      %v1461 = vadd.f32 0.0, %v1460
      %v1462 = vpop.f32.mrb[0].mxu0
      %1463 = vmatprep.mubr.f32.mxu0 0.0
      %1464 = vmatmul.mubr.f32.gmra.mrb[0].mxu0 %v1255
      %v1465 = vpop.f32.mrb[0].mxu0
      %v1466 = vadd.f32 0.0, %v1465
      %v1467 = vpop.f32.mrb[0].mxu0
      %1468 = vmatprep.mubr.f32.mxu0 0.0
      %1469 = vmatmul.mubr.f32.gmra.mrb[0].mxu0 %v1258
      %v1470 = vpop.f32.mrb[0].mxu0
      %v1471 = vadd.f32 0.0, %v1470
      %v1472 = vpop.f32.mrb[0].mxu0
      %1473 = vmatprep.mubr.f32.mxu0 0.0
      %1474 = vmatmul.mubr.f32.gmra.mrb[0].mxu0 %v1261
      %v1475 = vpop.f32.mrb[0].mxu0
      %v1476 = vadd.f32 0.0, %v1475
      %v1477 = vpop.f32.mrb[0].mxu0
      %1478 = vmatprep.mubr.f32.mxu0 0.0
      %1479 = vmatmul.mubr.f32.gmra.mrb[0].mxu0 %v1264
      %v1480 = vpop.f32.mrb[0].mxu0
      %v1481 = vadd.f32 0.0, %v1480
      %v1482 = vpop.f32.mrb[0].mxu0
      %1483 = vmatprep.mubr.f32.mxu0 0.0
      %1484 = vmatmul.mubr.f32.gmra.mrb[0].mxu0 %v1267
      %v1485 = vpop.f32.mrb[0].mxu0
      %v1486 = vadd.f32 0.0, %v1485
      %v1487 = vpop.f32.mrb[0].mxu0
      %1488 = vmatprep.mubr.f32.mxu0 0.0
      %1489 = vmatmul.mubr.f32.gmra.mrb[0].mxu0 %v1270
      %v1490 = vpop.f32.mrb[0].mxu0
      %v1491 = vadd.f32 0.0, %v1490
      %v1492 = vpop.f32.mrb[0].mxu0
      %1493 = vmatprep.mubr.f32.mxu0 0.0
      %1494 = vmatmul.mubr.f32.gmra.mrb[0].mxu0 %v1273
      %v1495 = vpop.f32.mrb[0].mxu0
      %v1496 = vadd.f32 0.0, %v1495
      %v1497 = vpop.f32.mrb[0].mxu0
      %1498 = vmatprep.mubr.f32.mxu0 0.0
      %1499 = vmatmul.mubr.f32.gmra.mrb[0].mxu0 %v1276
      %v1500 = vpop.f32.mrb[0].mxu0
      %v1501 = vadd.f32 0.0, %v1500
      %v1502 = vpop.f32.mrb[0].mxu0
      %1503 = vmatprep.mubr.f32.mxu0 0.0
      %1504 = vmatmul.mubr.f32.gmra.mrb[0].mxu0 %v1279
      %v1505 = vpop.f32.mrb[0].mxu0
      %v1506 = vadd.f32 0.0, %v1505
      %v1507 = vpop.f32.mrb[0].mxu0
      %1508 = vmatprep.mubr.f32.mxu0 0.0
      %1509 = vmatmul.mubr.f32.gmra.mrb[0].mxu0 %v1282
      %v1510 = vpop.f32.mrb[0].mxu0
      %v1511 = vadd.f32 0.0, %v1510
      %v1512 = vpop.f32.mrb[0].mxu0
      %1513 = vmatprep.mubr.f32.mxu0 0.0
      %1514 = vmatmul.mubr.f32.gmra.mrb[0].mxu0 %v1285
      %v1515 = vpop.f32.mrb[0].mxu0
      %v1516 = vadd.f32 0.0, %v1515
      %v1517 = vpop.f32.mrb[0].mxu0
      %1518 = vmatprep.mubr.f32.mxu0 0.0
      %1519 = vmatmul.mubr.f32.gmra.mrb[0].mxu0 %v1288
      %v1520 = vpop.f32.mrb[0].mxu0
      %v1521 = vadd.f32 0.0, %v1520
      %v1522 = vpop.f32.mrb[0].mxu0
      %1523 = vmatprep.mubr.f32.mxu0 0.0
      %1524 = vmatmul.mubr.f32.gmra.mrb[0].mxu0 %v1291
      %v1525 = vpop.f32.mrb[0].mxu0
      %v1526 = vadd.f32 0.0, %v1525
      %v1527 = vpop.f32.mrb[0].mxu0
      %1528 = vmatprep.mubr.f32.mxu0 0.0
      %1529 = vmatmul.mubr.f32.gmra.mrb[0].mxu0 %v1294
      %v1530 = vpop.f32.mrb[0].mxu0
      %v1531 = vadd.f32 0.0, %v1530
      %v1532 = vpop.f32.mrb[0].mxu0
      %1533 = vmatprep.mubr.f32.mxu0 0.0
      %1534 = vmatmul.mubr.f32.gmra.mrb[0].mxu0 %v1297
      %v1535 = vpop.f32.mrb[0].mxu0
      %v1536 = vadd.f32 0.0, %v1535
      %v1537 = vpop.f32.mrb[0].mxu0
      %1538 = vmatprep.mubr.f32.mxu0 0.0
      %1539 = vmatmul.mubr.f32.gmra.mrb[0].mxu0 %v1300
      %v1540 = vpop.f32.mrb[0].mxu0
      %v1541 = vadd.f32 0.0, %v1540
      %v1542 = vpop.f32.mrb[0].mxu0
      %1543 = vmatprep.mubr.f32.mxu0 0.0
      %1544 = vmatmul.mubr.f32.gmra.mrb[0].mxu0 %v1303
      %v1545 = vpop.f32.mrb[0].mxu0
      %v1546 = vadd.f32 0.0, %v1545
      %v1547 = vpop.f32.mrb[0].mxu0
      %1548 = vmatprep.mubr.f32.mxu0 0.0
      %1549 = vmatmul.mubr.f32.gmra.mrb[0].mxu0 %v1306
      %v1550 = vpop.f32.mrb[0].mxu0
      %v1551 = vadd.f32 0.0, %v1550
      %v1552 = vpop.f32.mrb[0].mxu0
      %1553 = vmatprep.mubr.f32.mxu0 0.0
      %1554 = vmatmul.mubr.f32.gmra.mrb[0].mxu0 %v1309
      %v1555 = vpop.f32.mrb[0].mxu0
      %v1556 = vadd.f32 0.0, %v1555
      %v1557 = vpop.f32.mrb[0].mxu0
      %1558 = vmatprep.mubr.f32.mxu0 0.0
      %1559 = vmatmul.mubr.f32.gmra.mrb[0].mxu0 %v1312
      %v1560 = vpop.f32.mrb[0].mxu0
      %v1561 = vadd.f32 0.0, %v1560
      %v1562 = vpop.f32.mrb[0].mxu0
      %1563 = vmatprep.mubr.f32.mxu0 0.0
      %1564 = vmatmul.mubr.f32.gmra.mrb[0].mxu0 %v1315
      %v1565 = vpop.f32.mrb[0].mxu0
      %v1566 = vadd.f32 0.0, %v1565
      %v1567 = vpop.f32.mrb[0].mxu0
      %1568 = vmatprep.mubr.f32.mxu0 0.0
      %1569 = vmatmul.mubr.f32.gmra.mrb[0].mxu0 %v1318
      %v1570 = vpop.f32.mrb[0].mxu0
      %v1571 = vadd.f32 0.0, %v1570
      %v1572 = vpop.f32.mrb[0].mxu0
      %1573 = vmatprep.mubr.f32.mxu0 0.0
      %1574 = vmatmul.mubr.f32.gmra.mrb[0].mxu0 %v1321
      %v1575 = vpop.f32.mrb[0].mxu0
      %v1576 = vadd.f32 0.0, %v1575
      %v1577 = vpop.f32.mrb[0].mxu0
      %1578 = vmatprep.mubr.f32.mxu0 0.0
      %1579 = vmatmul.mubr.f32.gmra.mrb[0].mxu0 %v1324
      %v1580 = vpop.f32.mrb[0].mxu0
      %v1581 = vadd.f32 0.0, %v1580
      %v1582 = vpop.f32.mrb[0].mxu0
      %1583 = vmatprep.mubr.f32.mxu0 0.0
      %1584 = vmatmul.mubr.f32.gmra.mrb[0].mxu0 %v1327
      %v1585 = vpop.f32.mrb[0].mxu0
      %v1586 = vadd.f32 0.0, %v1585
      %v1587 = vpop.f32.mrb[0].mxu0
      %1588 = vmatprep.mubr.f32.mxu0 0.0
      %1589 = vmatmul.mubr.f32.gmra.mrb[0].mxu0 %v1330
      %v1590 = vpop.f32.mrb[0].mxu0
      %v1591 = vadd.f32 0.0, %v1590
      %v1592 = vpop.f32.mrb[0].mxu0
      %1593 = vmatprep.mubr.f32.mxu0 0.0
      %1594 = vmatmul.mubr.f32.gmra.mrb[0].mxu0 %v1333
      %v1595 = vpop.f32.mrb[0].mxu0
      %v1596 = vadd.f32 0.0, %v1595
      %v1597 = vpop.f32.mrb[0].mxu0
      %1598 = vmatprep.mubr.f32.mxu0 0.0
      %1599 = vmatmul.mubr.f32.gmra.mrb[0].mxu0 %v1336
      %v1600 = vpop.f32.mrb[0].mxu0
      %v1601 = vadd.f32 0.0, %v1600
      %v1602 = vpop.f32.mrb[0].mxu0
      %1603 = vmatprep.mubr.f32.mxu0 0.0
      %1604 = vmatmul.mubr.f32.gmra.mrb[0].mxu0 %v1339
      %v1605 = vpop.f32.mrb[0].mxu0
      %v1606 = vadd.f32 0.0, %v1605
      %v1607 = vpop.f32.mrb[0].mxu0
      %1608 = vmatprep.mubr.f32.mxu0 0.0
      %1609 = vmatmul.mubr.f32.gmra.mrb[0].mxu0 %v1342
      %v1610 = vpop.f32.mrb[0].mxu0
      %v1611 = vadd.f32 0.0, %v1610
      %v1612 = vpop.f32.mrb[0].mxu0
      %1613 = vdwg.mxu0
      %v1614 = vadd.f32 %v975, %v1411
      %v1615 = vadd.f32 %v980, %v1416
      %v1616 = vadd.f32 %v985, %v1421
      %v1617 = vadd.f32 %v990, %v1426
      %v1618 = vadd.f32 %v995, %v1431
      %v1619 = vadd.f32 %v1000, %v1436
      %v1620 = vadd.f32 %v1005, %v1441
      %v1621 = vadd.f32 %v1010, %v1446
      %v1622 = vadd.f32 %v1015, %v1451
      %v1623 = vadd.f32 %v1020, %v1456
      %v1624 = vadd.f32 %v1025, %v1461
      %v1625 = vadd.f32 %v1030, %v1466
      %v1626 = vadd.f32 %v1035, %v1471
      %v1627 = vadd.f32 %v1040, %v1476
      %v1628 = vadd.f32 %v1045, %v1481
      %v1629 = vadd.f32 %v1050, %v1486
      %v1630 = vadd.f32 %v1055, %v1491
      %v1631 = vadd.f32 %v1060, %v1496
      %v1632 = vadd.f32 %v1065, %v1501
      %v1633 = vadd.f32 %v1070, %v1506
      %v1634 = vadd.f32 %v1075, %v1511
      %v1635 = vadd.f32 %v1080, %v1516
      %v1636 = vadd.f32 %v1085, %v1521
      %v1637 = vadd.f32 %v1090, %v1526
      %v1638 = vadd.f32 %v1095, %v1531
      %v1639 = vadd.f32 %v1100, %v1536
      %v1640 = vadd.f32 %v1105, %v1541
      %v1641 = vadd.f32 %v1110, %v1546
      %v1642 = vadd.f32 %v1115, %v1551
      %v1643 = vadd.f32 %v1120, %v1556
      %v1644 = vadd.f32 %v1125, %v1561
      %v1645 = vadd.f32 %v1130, %v1566
      %v1646 = vadd.f32 %v1135, %v1571
      %v1647 = vadd.f32 %v1140, %v1576
      %v1648 = vadd.f32 %v1145, %v1581
      %v1649 = vadd.f32 %v1150, %v1586
      %v1650 = vadd.f32 %v1155, %v1591
      %v1651 = vadd.f32 %v1160, %v1596
      %v1652 = vadd.f32 %v1165, %v1601
      %v1653 = vadd.f32 %v1170, %v1606
      %v1654 = vadd.f32 %v1175, %v1611
      %v1655 = vld [vmem:[%s300 + $0x12] sm:$0xff]
      %v1656 = vld [vmem:[%s300 + $0x1a] sm:$0xff]
      %v1657 = vld [vmem:[%s300 + $0x22] sm:$0xff]
      %v1658 = vld [vmem:[%s300 + $0x2a] sm:$0xff]
      %v1659 = vld [vmem:[%s300 + $0x32] sm:$0xff]
      %v1660 = vld [vmem:[%s300 + $0x3a] sm:$0xff]
      %v1661 = vld [vmem:[%s300 + $0x42] sm:$0xff]
      %v1662 = vld [vmem:[%s300 + $0x4a] sm:$0xff]
      %v1663 = vld [vmem:[%s300 + $0x52] sm:$0xff]
      %v1664 = vld [vmem:[%s300 + $0x5a] sm:$0xff]
      %v1665 = vld [vmem:[%s300 + $0x62] sm:$0xff]
      %v1666 = vld [vmem:[%s300 + $0x6a] sm:$0xff]
      %v1667 = vld [vmem:[%s300 + $0x72] sm:$0xff]
      %v1668 = vld [vmem:[%s300 + $0x7a] sm:$0xff]
      %v1669 = vld [vmem:[%s300 + $0x82] sm:$0xff]
      %v1670 = vld [vmem:[%s300 + $0x8a] sm:$0xff]
      %v1671 = vld [vmem:[%s300 + $0x92] sm:$0xff]
      %v1672 = vld [vmem:[%s300 + $0x9a] sm:$0xff]
      %v1673 = vld [vmem:[%s300 + $0xa2] sm:$0xff]
      %v1674 = vld [vmem:[%s300 + $0xaa] sm:$0xff]
      %v1675 = vld [vmem:[%s300 + $0xb2] sm:$0xff]
      %v1676 = vld [vmem:[%s300 + $0xba] sm:$0xff]
      %v1677 = vld [vmem:[%s300 + $0xc2] sm:$0xff]
      %v1678 = vld [vmem:[%s300 + $0xca] sm:$0xff]
      %v1679 = vld [vmem:[%s300 + $0xd2] sm:$0xff]
      %v1680 = vld [vmem:[%s300 + $0xda] sm:$0xff]
      %v1681 = vld [vmem:[%s300 + $0xe2] sm:$0xff]
      %v1682 = vld [vmem:[%s300 + $0xea] sm:$0xff]
      %v1683 = vld [vmem:[%s300 + $0xf2] sm:$0xff]
      %v1684 = vld [vmem:[%s300 + $0xfa] sm:$0xff]
      %v1685 = vld [vmem:[%s300 + $0x102] sm:$0xff]
      %v1686 = vld [vmem:[%s300 + $0x10a] sm:$0xff]
      %v1687 = vld [vmem:[%s300 + $0x112] sm:$0xff]
      %v1688 = vld [vmem:[%s300 + $0x11a] sm:$0xff]
      %v1689 = vld [vmem:[%s300 + $0x122] sm:$0xff]
      %v1690 = vld [vmem:[%s300 + $0x12a] sm:$0xff]
      %v1691 = vld [vmem:[%s300 + $0x132] sm:$0xff]
      %v1692 = vld [vmem:[%s300 + $0x13a] sm:$0xff]
      %v1693 = vld [vmem:[%s300 + $0x142] sm:$0xff]
      %v1694 = vld [vmem:[%s300 + $0x14a] sm:$0xff]
      %v1695 = vld [vmem:[%s300 + $0x152] sm:$0xf]
      %s1696 = scalar_lea.vmem %s1, 24
      %v1697 = vld [vmem:[%s1696] sm:$0xff]
      %v1699 = vsel %vm391, %v1655, 0
      %v1702 = vsel %vm391, %v1656, 0
      %v1705 = vsel %vm391, %v1657, 0
      %v1708 = vsel %vm391, %v1658, 0
      %v1711 = vsel %vm391, %v1659, 0
      %v1714 = vsel %vm391, %v1660, 0
      %v1717 = vsel %vm391, %v1661, 0
      %v1720 = vsel %vm391, %v1662, 0
      %v1723 = vsel %vm391, %v1663, 0
      %v1726 = vsel %vm391, %v1664, 0
      %v1729 = vsel %vm391, %v1665, 0
      %v1732 = vsel %vm391, %v1666, 0
      %v1735 = vsel %vm391, %v1667, 0
      %v1738 = vsel %vm391, %v1668, 0
      %v1741 = vsel %vm391, %v1669, 0
      %v1744 = vsel %vm391, %v1670, 0
      %v1747 = vsel %vm391, %v1671, 0
      %v1750 = vsel %vm391, %v1672, 0
      %v1753 = vsel %vm391, %v1673, 0
      %v1756 = vsel %vm391, %v1674, 0
      %v1759 = vsel %vm391, %v1675, 0
      %v1762 = vsel %vm391, %v1676, 0
      %v1765 = vsel %vm391, %v1677, 0
      %v1768 = vsel %vm391, %v1678, 0
      %v1771 = vsel %vm391, %v1679, 0
      %v1774 = vsel %vm391, %v1680, 0
      %v1777 = vsel %vm391, %v1681, 0
      %v1780 = vsel %vm391, %v1682, 0
      %v1783 = vsel %vm391, %v1683, 0
      %v1786 = vsel %vm391, %v1684, 0
      %v1789 = vsel %vm391, %v1685, 0
      %v1792 = vsel %vm391, %v1686, 0
      %v1795 = vsel %vm391, %v1687, 0
      %v1798 = vsel %vm391, %v1688, 0
      %v1801 = vsel %vm391, %v1689, 0
      %v1804 = vsel %vm391, %v1690, 0
      %v1807 = vsel %vm391, %v1691, 0
      %v1810 = vsel %vm391, %v1692, 0
      %v1813 = vsel %vm391, %v1693, 0
      %v1816 = vsel %vm391, %v1694, 0
      %v1819 = vsel %vm391, %v1695, 0
      %1821 = vmatprep.subr.mxu0 0.0
      %1822 = vmatpush1.msra.mxu0 %v1697
      %1823 = vmatprep.subr.mxu0 0.0
      %1824 = vmatpush1.msra.mxu0 0.0
      %1825 = vmatprep.subr.mxu0 0.0
      %1826 = vmatpush1.msra.mxu0 0.0
      %1827 = vmatprep.subr.mxu0 0.0
      %1828 = vmatpush1.msra.mxu0 0.0
      %1829 = vmatprep.subr.mxu0 0.0
      %1830 = vmatpush1.msra.mxu0 0.0
      %1831 = vmatprep.subr.mxu0 0.0
      %1832 = vmatpush1.msra.mxu0 0.0
      %1833 = vmatprep.subr.mxu0 0.0
      %1834 = vmatpush1.msra.mxu0 0.0
      %1835 = vmatprep.subr.mxu0 0.0
      %1836 = vmatpush1.msra.mxu0 0.0
      %1837 = vmatprep.subr.mxu0 0.0
      %1838 = vmatpush1.msra.mxu0 0.0
      %1839 = vmatprep.subr.mxu0 0.0
      %1840 = vmatpush1.msra.mxu0 0.0
      %1841 = vmatprep.subr.mxu0 0.0
      %1842 = vmatpush1.msra.mxu0 0.0
      %1843 = vmatprep.subr.mxu0 0.0
      %1844 = vmatpush1.msra.mxu0 0.0
      %1845 = vmatprep.subr.mxu0 0.0
      %1846 = vmatpush1.msra.mxu0 0.0
      %1847 = vmatprep.subr.mxu0 0.0
      %1848 = vmatpush1.msra.mxu0 0.0
      %1849 = vmatprep.subr.mxu0 0.0
      %1850 = vmatpush1.msra.mxu0 0.0
      %1851 = vmatprep.subr.mxu0 0.0
      %1852 = vmatpush1.msra.mxu0 0.0
      %1853 = vmatprep.subr.mxu0 0.0
      %1854 = vmatpush1.msra.mxu0 0.0
      %1855 = vmatprep.subr.mxu0 0.0
      %1856 = vmatpush1.msra.mxu0 0.0
      %1857 = vmatprep.subr.mxu0 0.0
      %1858 = vmatpush1.msra.mxu0 0.0
      %1859 = vmatprep.subr.mxu0 0.0
      %1860 = vmatpush1.msra.mxu0 0.0
      %1861 = vmatprep.subr.mxu0 0.0
      %1862 = vmatpush1.msra.mxu0 0.0
      %1863 = vmatprep.subr.mxu0 0.0
      %1864 = vmatpush1.msra.mxu0 0.0
      %1865 = vmatprep.subr.mxu0 0.0
      %1866 = vmatpush1.msra.mxu0 0.0
      %1867 = vmatprep.subr.mxu0 0.0
      %1868 = vmatpush1.msra.mxu0 0.0
      %1869 = vmatprep.subr.mxu0 0.0
      %1870 = vmatpush1.msra.mxu0 0.0
      %1871 = vmatprep.subr.mxu0 0.0
      %1872 = vmatpush1.msra.mxu0 0.0
      %1873 = vmatprep.subr.mxu0 0.0
      %1874 = vmatpush1.msra.mxu0 0.0
      %1875 = vmatprep.subr.mxu0 0.0
      %1876 = vmatpush1.msra.mxu0 0.0
      %1877 = vmatprep.subr.mxu0 0.0
      %1878 = vmatpush1.msra.mxu0 0.0
      %1879 = vmatprep.subr.mxu0 0.0
      %1880 = vmatpush1.msra.mxu0 0.0
      %1881 = vmatprep.subr.mxu0 0.0
      %1882 = vmatpush1.msra.mxu0 0.0
      %1883 = vmatprep.subr.mxu0 0.0
      %1884 = vmatpush1.msra.mxu0 0.0
      %1885 = vmatprep.mubr.f32.mxu0 0.0
      %1886 = vmatmul.mubr.f32.gmra.mrb[0].mxu0 %v1699
      %v1887 = vpop.f32.mrb[0].mxu0
      %v1888 = vadd.f32 0.0, %v1887
      %v1889 = vpop.f32.mrb[0].mxu0
      %1890 = vmatprep.mubr.f32.mxu0 0.0
      %1891 = vmatmul.mubr.f32.gmra.mrb[0].mxu0 %v1702
      %v1892 = vpop.f32.mrb[0].mxu0
      %v1893 = vadd.f32 0.0, %v1892
      %v1894 = vpop.f32.mrb[0].mxu0
      %1895 = vmatprep.mubr.f32.mxu0 0.0
      %1896 = vmatmul.mubr.f32.gmra.mrb[0].mxu0 %v1705
      %v1897 = vpop.f32.mrb[0].mxu0
      %v1898 = vadd.f32 0.0, %v1897
      %v1899 = vpop.f32.mrb[0].mxu0
      %1900 = vmatprep.mubr.f32.mxu0 0.0
      %1901 = vmatmul.mubr.f32.gmra.mrb[0].mxu0 %v1708
      %v1902 = vpop.f32.mrb[0].mxu0
      %v1903 = vadd.f32 0.0, %v1902
      %v1904 = vpop.f32.mrb[0].mxu0
      %1905 = vmatprep.mubr.f32.mxu0 0.0
      %1906 = vmatmul.mubr.f32.gmra.mrb[0].mxu0 %v1711
      %v1907 = vpop.f32.mrb[0].mxu0
      %v1908 = vadd.f32 0.0, %v1907
      %v1909 = vpop.f32.mrb[0].mxu0
      %1910 = vmatprep.mubr.f32.mxu0 0.0
      %1911 = vmatmul.mubr.f32.gmra.mrb[0].mxu0 %v1714
      %v1912 = vpop.f32.mrb[0].mxu0
      %v1913 = vadd.f32 0.0, %v1912
      %v1914 = vpop.f32.mrb[0].mxu0
      %1915 = vmatprep.mubr.f32.mxu0 0.0
      %1916 = vmatmul.mubr.f32.gmra.mrb[0].mxu0 %v1717
      %v1917 = vpop.f32.mrb[0].mxu0
      %v1918 = vadd.f32 0.0, %v1917
      %v1919 = vpop.f32.mrb[0].mxu0
      %1920 = vmatprep.mubr.f32.mxu0 0.0
      %1921 = vmatmul.mubr.f32.gmra.mrb[0].mxu0 %v1720
      %v1922 = vpop.f32.mrb[0].mxu0
      %v1923 = vadd.f32 0.0, %v1922
      %v1924 = vpop.f32.mrb[0].mxu0
      %1925 = vmatprep.mubr.f32.mxu0 0.0
      %1926 = vmatmul.mubr.f32.gmra.mrb[0].mxu0 %v1723
      %v1927 = vpop.f32.mrb[0].mxu0
      %v1928 = vadd.f32 0.0, %v1927
      %v1929 = vpop.f32.mrb[0].mxu0
      %1930 = vmatprep.mubr.f32.mxu0 0.0
      %1931 = vmatmul.mubr.f32.gmra.mrb[0].mxu0 %v1726
      %v1932 = vpop.f32.mrb[0].mxu0
      %v1933 = vadd.f32 0.0, %v1932
      %v1934 = vpop.f32.mrb[0].mxu0
      %1935 = vmatprep.mubr.f32.mxu0 0.0
      %1936 = vmatmul.mubr.f32.gmra.mrb[0].mxu0 %v1729
      %v1937 = vpop.f32.mrb[0].mxu0
      %v1938 = vadd.f32 0.0, %v1937
      %v1939 = vpop.f32.mrb[0].mxu0
      %1940 = vmatprep.mubr.f32.mxu0 0.0
      %1941 = vmatmul.mubr.f32.gmra.mrb[0].mxu0 %v1732
      %v1942 = vpop.f32.mrb[0].mxu0
      %v1943 = vadd.f32 0.0, %v1942
      %v1944 = vpop.f32.mrb[0].mxu0
      %1945 = vmatprep.mubr.f32.mxu0 0.0
      %1946 = vmatmul.mubr.f32.gmra.mrb[0].mxu0 %v1735
      %v1947 = vpop.f32.mrb[0].mxu0
      %v1948 = vadd.f32 0.0, %v1947
      %v1949 = vpop.f32.mrb[0].mxu0
      %1950 = vmatprep.mubr.f32.mxu0 0.0
      %1951 = vmatmul.mubr.f32.gmra.mrb[0].mxu0 %v1738
      %v1952 = vpop.f32.mrb[0].mxu0
      %v1953 = vadd.f32 0.0, %v1952
      %v1954 = vpop.f32.mrb[0].mxu0
      %1955 = vmatprep.mubr.f32.mxu0 0.0
      %1956 = vmatmul.mubr.f32.gmra.mrb[0].mxu0 %v1741
      %v1957 = vpop.f32.mrb[0].mxu0
      %v1958 = vadd.f32 0.0, %v1957
      %v1959 = vpop.f32.mrb[0].mxu0
      %1960 = vmatprep.mubr.f32.mxu0 0.0
      %1961 = vmatmul.mubr.f32.gmra.mrb[0].mxu0 %v1744
      %v1962 = vpop.f32.mrb[0].mxu0
      %v1963 = vadd.f32 0.0, %v1962
      %v1964 = vpop.f32.mrb[0].mxu0
      %1965 = vmatprep.mubr.f32.mxu0 0.0
      %1966 = vmatmul.mubr.f32.gmra.mrb[0].mxu0 %v1747
      %v1967 = vpop.f32.mrb[0].mxu0
      %v1968 = vadd.f32 0.0, %v1967
      %v1969 = vpop.f32.mrb[0].mxu0
      %1970 = vmatprep.mubr.f32.mxu0 0.0
      %1971 = vmatmul.mubr.f32.gmra.mrb[0].mxu0 %v1750
      %v1972 = vpop.f32.mrb[0].mxu0
      %v1973 = vadd.f32 0.0, %v1972
      %v1974 = vpop.f32.mrb[0].mxu0
      %1975 = vmatprep.mubr.f32.mxu0 0.0
      %1976 = vmatmul.mubr.f32.gmra.mrb[0].mxu0 %v1753
      %v1977 = vpop.f32.mrb[0].mxu0
      %v1978 = vadd.f32 0.0, %v1977
      %v1979 = vpop.f32.mrb[0].mxu0
      %1980 = vmatprep.mubr.f32.mxu0 0.0
      %1981 = vmatmul.mubr.f32.gmra.mrb[0].mxu0 %v1756
      %v1982 = vpop.f32.mrb[0].mxu0
      %v1983 = vadd.f32 0.0, %v1982
      %v1984 = vpop.f32.mrb[0].mxu0
      %1985 = vmatprep.mubr.f32.mxu0 0.0
      %1986 = vmatmul.mubr.f32.gmra.mrb[0].mxu0 %v1759
      %v1987 = vpop.f32.mrb[0].mxu0
      %v1988 = vadd.f32 0.0, %v1987
      %v1989 = vpop.f32.mrb[0].mxu0
      %1990 = vmatprep.mubr.f32.mxu0 0.0
      %1991 = vmatmul.mubr.f32.gmra.mrb[0].mxu0 %v1762
      %v1992 = vpop.f32.mrb[0].mxu0
      %v1993 = vadd.f32 0.0, %v1992
      %v1994 = vpop.f32.mrb[0].mxu0
      %1995 = vmatprep.mubr.f32.mxu0 0.0
      %1996 = vmatmul.mubr.f32.gmra.mrb[0].mxu0 %v1765
      %v1997 = vpop.f32.mrb[0].mxu0
      %v1998 = vadd.f32 0.0, %v1997
      %v1999 = vpop.f32.mrb[0].mxu0
      %2000 = vmatprep.mubr.f32.mxu0 0.0
      %2001 = vmatmul.mubr.f32.gmra.mrb[0].mxu0 %v1768
      %v2002 = vpop.f32.mrb[0].mxu0
      %v2003 = vadd.f32 0.0, %v2002
      %v2004 = vpop.f32.mrb[0].mxu0
      %2005 = vmatprep.mubr.f32.mxu0 0.0
      %2006 = vmatmul.mubr.f32.gmra.mrb[0].mxu0 %v1771
      %v2007 = vpop.f32.mrb[0].mxu0
      %v2008 = vadd.f32 0.0, %v2007
      %v2009 = vpop.f32.mrb[0].mxu0
      %2010 = vmatprep.mubr.f32.mxu0 0.0
      %2011 = vmatmul.mubr.f32.gmra.mrb[0].mxu0 %v1774
      %v2012 = vpop.f32.mrb[0].mxu0
      %v2013 = vadd.f32 0.0, %v2012
      %v2014 = vpop.f32.mrb[0].mxu0
      %2015 = vmatprep.mubr.f32.mxu0 0.0
      %2016 = vmatmul.mubr.f32.gmra.mrb[0].mxu0 %v1777
      %v2017 = vpop.f32.mrb[0].mxu0
      %v2018 = vadd.f32 0.0, %v2017
      %v2019 = vpop.f32.mrb[0].mxu0
      %2020 = vmatprep.mubr.f32.mxu0 0.0
      %2021 = vmatmul.mubr.f32.gmra.mrb[0].mxu0 %v1780
      %v2022 = vpop.f32.mrb[0].mxu0
      %v2023 = vadd.f32 0.0, %v2022
      %v2024 = vpop.f32.mrb[0].mxu0
      %2025 = vmatprep.mubr.f32.mxu0 0.0
      %2026 = vmatmul.mubr.f32.gmra.mrb[0].mxu0 %v1783
      %v2027 = vpop.f32.mrb[0].mxu0
      %v2028 = vadd.f32 0.0, %v2027
      %v2029 = vpop.f32.mrb[0].mxu0
      %2030 = vmatprep.mubr.f32.mxu0 0.0
      %2031 = vmatmul.mubr.f32.gmra.mrb[0].mxu0 %v1786
      %v2032 = vpop.f32.mrb[0].mxu0
      %v2033 = vadd.f32 0.0, %v2032
      %v2034 = vpop.f32.mrb[0].mxu0
      %2035 = vmatprep.mubr.f32.mxu0 0.0
      %2036 = vmatmul.mubr.f32.gmra.mrb[0].mxu0 %v1789
      %v2037 = vpop.f32.mrb[0].mxu0
      %v2038 = vadd.f32 0.0, %v2037
      %v2039 = vpop.f32.mrb[0].mxu0
      %2040 = vmatprep.mubr.f32.mxu0 0.0
      %2041 = vmatmul.mubr.f32.gmra.mrb[0].mxu0 %v1792
      %v2042 = vpop.f32.mrb[0].mxu0
      %v2043 = vadd.f32 0.0, %v2042
      %v2044 = vpop.f32.mrb[0].mxu0
      %2045 = vmatprep.mubr.f32.mxu0 0.0
      %2046 = vmatmul.mubr.f32.gmra.mrb[0].mxu0 %v1795
      %v2047 = vpop.f32.mrb[0].mxu0
      %v2048 = vadd.f32 0.0, %v2047
      %v2049 = vpop.f32.mrb[0].mxu0
      %2050 = vmatprep.mubr.f32.mxu0 0.0
      %2051 = vmatmul.mubr.f32.gmra.mrb[0].mxu0 %v1798
      %v2052 = vpop.f32.mrb[0].mxu0
      %v2053 = vadd.f32 0.0, %v2052
      %v2054 = vpop.f32.mrb[0].mxu0
      %2055 = vmatprep.mubr.f32.mxu0 0.0
      %2056 = vmatmul.mubr.f32.gmra.mrb[0].mxu0 %v1801
      %v2057 = vpop.f32.mrb[0].mxu0
      %v2058 = vadd.f32 0.0, %v2057
      %v2059 = vpop.f32.mrb[0].mxu0
      %2060 = vmatprep.mubr.f32.mxu0 0.0
      %2061 = vmatmul.mubr.f32.gmra.mrb[0].mxu0 %v1804
      %v2062 = vpop.f32.mrb[0].mxu0
      %v2063 = vadd.f32 0.0, %v2062
      %v2064 = vpop.f32.mrb[0].mxu0
      %2065 = vmatprep.mubr.f32.mxu0 0.0
      %2066 = vmatmul.mubr.f32.gmra.mrb[0].mxu0 %v1807
      %v2067 = vpop.f32.mrb[0].mxu0
      %v2068 = vadd.f32 0.0, %v2067
      %v2069 = vpop.f32.mrb[0].mxu0
      %2070 = vmatprep.mubr.f32.mxu0 0.0
      %2071 = vmatmul.mubr.f32.gmra.mrb[0].mxu0 %v1810
      %v2072 = vpop.f32.mrb[0].mxu0
      %v2073 = vadd.f32 0.0, %v2072
      %v2074 = vpop.f32.mrb[0].mxu0
      %2075 = vmatprep.mubr.f32.mxu0 0.0
      %2076 = vmatmul.mubr.f32.gmra.mrb[0].mxu0 %v1813
      %v2077 = vpop.f32.mrb[0].mxu0
      %v2078 = vadd.f32 0.0, %v2077
      %v2079 = vpop.f32.mrb[0].mxu0
      %2080 = vmatprep.mubr.f32.mxu0 0.0
      %2081 = vmatmul.mubr.f32.gmra.mrb[0].mxu0 %v1816
      %v2082 = vpop.f32.mrb[0].mxu0
      %v2083 = vadd.f32 0.0, %v2082
      %v2084 = vpop.f32.mrb[0].mxu0
      %2085 = vmatprep.mubr.f32.mxu0 0.0
      %2086 = vmatmul.mubr.f32.gmra.mrb[0].mxu0 %v1819
      %v2087 = vpop.f32.mrb[0].mxu0
      %v2088 = vadd.f32 0.0, %v2087
      %v2089 = vpop.f32.mrb[0].mxu0
      %2090 = vdwg.mxu0
      %v2091 = vadd.f32 %v1614, %v1888
      %v2092 = vadd.f32 %v1615, %v1893
      %v2093 = vadd.f32 %v1616, %v1898
      %v2094 = vadd.f32 %v1617, %v1903
      %v2095 = vadd.f32 %v1618, %v1908
      %v2096 = vadd.f32 %v1619, %v1913
      %v2097 = vadd.f32 %v1620, %v1918
      %v2098 = vadd.f32 %v1621, %v1923
      %v2099 = vadd.f32 %v1622, %v1928
      %v2100 = vadd.f32 %v1623, %v1933
      %v2101 = vadd.f32 %v1624, %v1938
      %v2102 = vadd.f32 %v1625, %v1943
      %v2103 = vadd.f32 %v1626, %v1948
      %v2104 = vadd.f32 %v1627, %v1953
      %v2105 = vadd.f32 %v1628, %v1958
      %v2106 = vadd.f32 %v1629, %v1963
      %v2107 = vadd.f32 %v1630, %v1968
      %v2108 = vadd.f32 %v1631, %v1973
      %v2109 = vadd.f32 %v1632, %v1978
      %v2110 = vadd.f32 %v1633, %v1983
      %v2111 = vadd.f32 %v1634, %v1988
      %v2112 = vadd.f32 %v1635, %v1993
      %v2113 = vadd.f32 %v1636, %v1998
      %v2114 = vadd.f32 %v1637, %v2003
      %v2115 = vadd.f32 %v1638, %v2008
      %v2116 = vadd.f32 %v1639, %v2013
      %v2117 = vadd.f32 %v1640, %v2018
      %v2118 = vadd.f32 %v1641, %v2023
      %v2119 = vadd.f32 %v1642, %v2028
      %v2120 = vadd.f32 %v1643, %v2033
      %v2121 = vadd.f32 %v1644, %v2038
      %v2122 = vadd.f32 %v1645, %v2043
      %v2123 = vadd.f32 %v1646, %v2048
      %v2124 = vadd.f32 %v1647, %v2053
      %v2125 = vadd.f32 %v1648, %v2058
      %v2126 = vadd.f32 %v1649, %v2063
      %v2127 = vadd.f32 %v1650, %v2068
      %v2128 = vadd.f32 %v1651, %v2073
      %v2129 = vadd.f32 %v1652, %v2078
      %v2130 = vadd.f32 %v1653, %v2083
      %v2131 = vadd.f32 %v1654, %v2088
      %v2132 = vld [vmem:[%s300 + $0x13] sm:$0xff]
      %v2133 = vld [vmem:[%s300 + $0x1b] sm:$0xff]
      %v2134 = vld [vmem:[%s300 + $0x23] sm:$0xff]
      %v2135 = vld [vmem:[%s300 + $0x2b] sm:$0xff]
      %v2136 = vld [vmem:[%s300 + $0x33] sm:$0xff]
      %v2137 = vld [vmem:[%s300 + $0x3b] sm:$0xff]
      %v2138 = vld [vmem:[%s300 + $0x43] sm:$0xff]
      %v2139 = vld [vmem:[%s300 + $0x4b] sm:$0xff]
      %v2140 = vld [vmem:[%s300 + $0x53] sm:$0xff]
      %v2141 = vld [vmem:[%s300 + $0x5b] sm:$0xff]
      %v2142 = vld [vmem:[%s300 + $0x63] sm:$0xff]
      %v2143 = vld [vmem:[%s300 + $0x6b] sm:$0xff]
      %v2144 = vld [vmem:[%s300 + $0x73] sm:$0xff]
      %v2145 = vld [vmem:[%s300 + $0x7b] sm:$0xff]
      %v2146 = vld [vmem:[%s300 + $0x83] sm:$0xff]
      %v2147 = vld [vmem:[%s300 + $0x8b] sm:$0xff]
      %v2148 = vld [vmem:[%s300 + $0x93] sm:$0xff]
      %v2149 = vld [vmem:[%s300 + $0x9b] sm:$0xff]
      %v2150 = vld [vmem:[%s300 + $0xa3] sm:$0xff]
      %v2151 = vld [vmem:[%s300 + $0xab] sm:$0xff]
      %v2152 = vld [vmem:[%s300 + $0xb3] sm:$0xff]
      %v2153 = vld [vmem:[%s300 + $0xbb] sm:$0xff]
      %v2154 = vld [vmem:[%s300 + $0xc3] sm:$0xff]
      %v2155 = vld [vmem:[%s300 + $0xcb] sm:$0xff]
      %v2156 = vld [vmem:[%s300 + $0xd3] sm:$0xff]
      %v2157 = vld [vmem:[%s300 + $0xdb] sm:$0xff]
      %v2158 = vld [vmem:[%s300 + $0xe3] sm:$0xff]
      %v2159 = vld [vmem:[%s300 + $0xeb] sm:$0xff]
      %v2160 = vld [vmem:[%s300 + $0xf3] sm:$0xff]
      %v2161 = vld [vmem:[%s300 + $0xfb] sm:$0xff]
      %v2162 = vld [vmem:[%s300 + $0x103] sm:$0xff]
      %v2163 = vld [vmem:[%s300 + $0x10b] sm:$0xff]
      %v2164 = vld [vmem:[%s300 + $0x113] sm:$0xff]
      %v2165 = vld [vmem:[%s300 + $0x11b] sm:$0xff]
      %v2166 = vld [vmem:[%s300 + $0x123] sm:$0xff]
      %v2167 = vld [vmem:[%s300 + $0x12b] sm:$0xff]
      %v2168 = vld [vmem:[%s300 + $0x133] sm:$0xff]
      %v2169 = vld [vmem:[%s300 + $0x13b] sm:$0xff]
      %v2170 = vld [vmem:[%s300 + $0x143] sm:$0xff]
      %v2171 = vld [vmem:[%s300 + $0x14b] sm:$0xff]
      %v2172 = vld [vmem:[%s300 + $0x153] sm:$0xf]
      %s2173 = scalar_lea.vmem %s1, 32
      %v2174 = vld [vmem:[%s2173] sm:$0xff]
      %v2176 = vsel %vm391, %v2132, 0
      %v2179 = vsel %vm391, %v2133, 0
      %v2182 = vsel %vm391, %v2134, 0
      %v2185 = vsel %vm391, %v2135, 0
      %v2188 = vsel %vm391, %v2136, 0
      %v2191 = vsel %vm391, %v2137, 0
      %v2194 = vsel %vm391, %v2138, 0
      %v2197 = vsel %vm391, %v2139, 0
      %v2200 = vsel %vm391, %v2140, 0
      %v2203 = vsel %vm391, %v2141, 0
      %v2206 = vsel %vm391, %v2142, 0
      %v2209 = vsel %vm391, %v2143, 0
      %v2212 = vsel %vm391, %v2144, 0
      %v2215 = vsel %vm391, %v2145, 0
      %v2218 = vsel %vm391, %v2146, 0
      %v2221 = vsel %vm391, %v2147, 0
      %v2224 = vsel %vm391, %v2148, 0
      %v2227 = vsel %vm391, %v2149, 0
      %v2230 = vsel %vm391, %v2150, 0
      %v2233 = vsel %vm391, %v2151, 0
      %v2236 = vsel %vm391, %v2152, 0
      %v2239 = vsel %vm391, %v2153, 0
      %v2242 = vsel %vm391, %v2154, 0
      %v2245 = vsel %vm391, %v2155, 0
      %v2248 = vsel %vm391, %v2156, 0
      %v2251 = vsel %vm391, %v2157, 0
      %v2254 = vsel %vm391, %v2158, 0
      %v2257 = vsel %vm391, %v2159, 0
      %v2260 = vsel %vm391, %v2160, 0
      %v2263 = vsel %vm391, %v2161, 0
      %v2266 = vsel %vm391, %v2162, 0
      %v2269 = vsel %vm391, %v2163, 0
      %v2272 = vsel %vm391, %v2164, 0
      %v2275 = vsel %vm391, %v2165, 0
      %v2278 = vsel %vm391, %v2166, 0
      %v2281 = vsel %vm391, %v2167, 0
      %v2284 = vsel %vm391, %v2168, 0
      %v2287 = vsel %vm391, %v2169, 0
      %v2290 = vsel %vm391, %v2170, 0
      %v2293 = vsel %vm391, %v2171, 0
      %v2296 = vsel %vm391, %v2172, 0
      %2298 = vmatprep.subr.mxu0 0.0
      %2299 = vmatpush1.msra.mxu0 %v2174
      %2300 = vmatprep.subr.mxu0 0.0
      %2301 = vmatpush1.msra.mxu0 0.0
      %2302 = vmatprep.subr.mxu0 0.0
      %2303 = vmatpush1.msra.mxu0 0.0
      %2304 = vmatprep.subr.mxu0 0.0
      %2305 = vmatpush1.msra.mxu0 0.0
      %2306 = vmatprep.subr.mxu0 0.0
      %2307 = vmatpush1.msra.mxu0 0.0
      %2308 = vmatprep.subr.mxu0 0.0
      %2309 = vmatpush1.msra.mxu0 0.0
      %2310 = vmatprep.subr.mxu0 0.0
      %2311 = vmatpush1.msra.mxu0 0.0
      %2312 = vmatprep.subr.mxu0 0.0
      %2313 = vmatpush1.msra.mxu0 0.0
      %2314 = vmatprep.subr.mxu0 0.0
      %2315 = vmatpush1.msra.mxu0 0.0
      %2316 = vmatprep.subr.mxu0 0.0
      %2317 = vmatpush1.msra.mxu0 0.0
      %2318 = vmatprep.subr.mxu0 0.0
      %2319 = vmatpush1.msra.mxu0 0.0
      %2320 = vmatprep.subr.mxu0 0.0
      %2321 = vmatpush1.msra.mxu0 0.0
      %2322 = vmatprep.subr.mxu0 0.0
      %2323 = vmatpush1.msra.mxu0 0.0
      %2324 = vmatprep.subr.mxu0 0.0
      %2325 = vmatpush1.msra.mxu0 0.0
      %2326 = vmatprep.subr.mxu0 0.0
      %2327 = vmatpush1.msra.mxu0 0.0
      %2328 = vmatprep.subr.mxu0 0.0
      %2329 = vmatpush1.msra.mxu0 0.0
      %2330 = vmatprep.subr.mxu0 0.0
      %2331 = vmatpush1.msra.mxu0 0.0
      %2332 = vmatprep.subr.mxu0 0.0
      %2333 = vmatpush1.msra.mxu0 0.0
      %2334 = vmatprep.subr.mxu0 0.0
      %2335 = vmatpush1.msra.mxu0 0.0
      %2336 = vmatprep.subr.mxu0 0.0
      %2337 = vmatpush1.msra.mxu0 0.0
      %2338 = vmatprep.subr.mxu0 0.0
      %2339 = vmatpush1.msra.mxu0 0.0
      %2340 = vmatprep.subr.mxu0 0.0
      %2341 = vmatpush1.msra.mxu0 0.0
      %2342 = vmatprep.subr.mxu0 0.0
      %2343 = vmatpush1.msra.mxu0 0.0
      %2344 = vmatprep.subr.mxu0 0.0
      %2345 = vmatpush1.msra.mxu0 0.0
      %2346 = vmatprep.subr.mxu0 0.0
      %2347 = vmatpush1.msra.mxu0 0.0
      %2348 = vmatprep.subr.mxu0 0.0
      %2349 = vmatpush1.msra.mxu0 0.0
      %2350 = vmatprep.subr.mxu0 0.0
      %2351 = vmatpush1.msra.mxu0 0.0
      %2352 = vmatprep.subr.mxu0 0.0
      %2353 = vmatpush1.msra.mxu0 0.0
      %2354 = vmatprep.subr.mxu0 0.0
      %2355 = vmatpush1.msra.mxu0 0.0
      %2356 = vmatprep.subr.mxu0 0.0
      %2357 = vmatpush1.msra.mxu0 0.0
      %2358 = vmatprep.subr.mxu0 0.0
      %2359 = vmatpush1.msra.mxu0 0.0
      %2360 = vmatprep.subr.mxu0 0.0
      %2361 = vmatpush1.msra.mxu0 0.0
      %2362 = vmatprep.mubr.f32.mxu0 0.0
      %2363 = vmatmul.mubr.f32.gmra.mrb[0].mxu0 %v2176
      %v2364 = vpop.f32.mrb[0].mxu0
      %v2365 = vadd.f32 0.0, %v2364
      %v2366 = vpop.f32.mrb[0].mxu0
      %2367 = vmatprep.mubr.f32.mxu0 0.0
      %2368 = vmatmul.mubr.f32.gmra.mrb[0].mxu0 %v2179
      %v2369 = vpop.f32.mrb[0].mxu0
      %v2370 = vadd.f32 0.0, %v2369
      %v2371 = vpop.f32.mrb[0].mxu0
      %2372 = vmatprep.mubr.f32.mxu0 0.0
      %2373 = vmatmul.mubr.f32.gmra.mrb[0].mxu0 %v2182
      %v2374 = vpop.f32.mrb[0].mxu0
      %v2375 = vadd.f32 0.0, %v2374
      %v2376 = vpop.f32.mrb[0].mxu0
      %2377 = vmatprep.mubr.f32.mxu0 0.0
      %2378 = vmatmul.mubr.f32.gmra.mrb[0].mxu0 %v2185
      %v2379 = vpop.f32.mrb[0].mxu0
      %v2380 = vadd.f32 0.0, %v2379
      %v2381 = vpop.f32.mrb[0].mxu0
      %2382 = vmatprep.mubr.f32.mxu0 0.0
      %2383 = vmatmul.mubr.f32.gmra.mrb[0].mxu0 %v2188
      %v2384 = vpop.f32.mrb[0].mxu0
      %v2385 = vadd.f32 0.0, %v2384
      %v2386 = vpop.f32.mrb[0].mxu0
      %2387 = vmatprep.mubr.f32.mxu0 0.0
      %2388 = vmatmul.mubr.f32.gmra.mrb[0].mxu0 %v2191
      %v2389 = vpop.f32.mrb[0].mxu0
      %v2390 = vadd.f32 0.0, %v2389
      %v2391 = vpop.f32.mrb[0].mxu0
      %2392 = vmatprep.mubr.f32.mxu0 0.0
      %2393 = vmatmul.mubr.f32.gmra.mrb[0].mxu0 %v2194
      %v2394 = vpop.f32.mrb[0].mxu0
      %v2395 = vadd.f32 0.0, %v2394
      %v2396 = vpop.f32.mrb[0].mxu0
      %2397 = vmatprep.mubr.f32.mxu0 0.0
      %2398 = vmatmul.mubr.f32.gmra.mrb[0].mxu0 %v2197
      %v2399 = vpop.f32.mrb[0].mxu0
      %v2400 = vadd.f32 0.0, %v2399
      %v2401 = vpop.f32.mrb[0].mxu0
      %2402 = vmatprep.mubr.f32.mxu0 0.0
      %2403 = vmatmul.mubr.f32.gmra.mrb[0].mxu0 %v2200
      %v2404 = vpop.f32.mrb[0].mxu0
      %v2405 = vadd.f32 0.0, %v2404
      %v2406 = vpop.f32.mrb[0].mxu0
      %2407 = vmatprep.mubr.f32.mxu0 0.0
      %2408 = vmatmul.mubr.f32.gmra.mrb[0].mxu0 %v2203
      %v2409 = vpop.f32.mrb[0].mxu0
      %v2410 = vadd.f32 0.0, %v2409
      %v2411 = vpop.f32.mrb[0].mxu0
      %2412 = vmatprep.mubr.f32.mxu0 0.0
      %2413 = vmatmul.mubr.f32.gmra.mrb[0].mxu0 %v2206
      %v2414 = vpop.f32.mrb[0].mxu0
      %v2415 = vadd.f32 0.0, %v2414
      %v2416 = vpop.f32.mrb[0].mxu0
      %2417 = vmatprep.mubr.f32.mxu0 0.0
      %2418 = vmatmul.mubr.f32.gmra.mrb[0].mxu0 %v2209
      %v2419 = vpop.f32.mrb[0].mxu0
      %v2420 = vadd.f32 0.0, %v2419
      %v2421 = vpop.f32.mrb[0].mxu0
      %2422 = vmatprep.mubr.f32.mxu0 0.0
      %2423 = vmatmul.mubr.f32.gmra.mrb[0].mxu0 %v2212
      %v2424 = vpop.f32.mrb[0].mxu0
      %v2425 = vadd.f32 0.0, %v2424
      %v2426 = vpop.f32.mrb[0].mxu0
      %2427 = vmatprep.mubr.f32.mxu0 0.0
      %2428 = vmatmul.mubr.f32.gmra.mrb[0].mxu0 %v2215
      %v2429 = vpop.f32.mrb[0].mxu0
      %v2430 = vadd.f32 0.0, %v2429
      %v2431 = vpop.f32.mrb[0].mxu0
      %2432 = vmatprep.mubr.f32.mxu0 0.0
      %2433 = vmatmul.mubr.f32.gmra.mrb[0].mxu0 %v2218
      %v2434 = vpop.f32.mrb[0].mxu0
      %v2435 = vadd.f32 0.0, %v2434
      %v2436 = vpop.f32.mrb[0].mxu0
      %2437 = vmatprep.mubr.f32.mxu0 0.0
      %2438 = vmatmul.mubr.f32.gmra.mrb[0].mxu0 %v2221
      %v2439 = vpop.f32.mrb[0].mxu0
      %v2440 = vadd.f32 0.0, %v2439
      %v2441 = vpop.f32.mrb[0].mxu0
      %2442 = vmatprep.mubr.f32.mxu0 0.0
      %2443 = vmatmul.mubr.f32.gmra.mrb[0].mxu0 %v2224
      %v2444 = vpop.f32.mrb[0].mxu0
      %v2445 = vadd.f32 0.0, %v2444
      %v2446 = vpop.f32.mrb[0].mxu0
      %2447 = vmatprep.mubr.f32.mxu0 0.0
      %2448 = vmatmul.mubr.f32.gmra.mrb[0].mxu0 %v2227
      %v2449 = vpop.f32.mrb[0].mxu0
      %v2450 = vadd.f32 0.0, %v2449
      %v2451 = vpop.f32.mrb[0].mxu0
      %2452 = vmatprep.mubr.f32.mxu0 0.0
      %2453 = vmatmul.mubr.f32.gmra.mrb[0].mxu0 %v2230
      %v2454 = vpop.f32.mrb[0].mxu0
      %v2455 = vadd.f32 0.0, %v2454
      %v2456 = vpop.f32.mrb[0].mxu0
      %2457 = vmatprep.mubr.f32.mxu0 0.0
      %2458 = vmatmul.mubr.f32.gmra.mrb[0].mxu0 %v2233
      %v2459 = vpop.f32.mrb[0].mxu0
      %v2460 = vadd.f32 0.0, %v2459
      %v2461 = vpop.f32.mrb[0].mxu0
      %2462 = vmatprep.mubr.f32.mxu0 0.0
      %2463 = vmatmul.mubr.f32.gmra.mrb[0].mxu0 %v2236
      %v2464 = vpop.f32.mrb[0].mxu0
      %v2465 = vadd.f32 0.0, %v2464
      %v2466 = vpop.f32.mrb[0].mxu0
      %2467 = vmatprep.mubr.f32.mxu0 0.0
      %2468 = vmatmul.mubr.f32.gmra.mrb[0].mxu0 %v2239
      %v2469 = vpop.f32.mrb[0].mxu0
      %v2470 = vadd.f32 0.0, %v2469
      %v2471 = vpop.f32.mrb[0].mxu0
      %2472 = vmatprep.mubr.f32.mxu0 0.0
      %2473 = vmatmul.mubr.f32.gmra.mrb[0].mxu0 %v2242
      %v2474 = vpop.f32.mrb[0].mxu0
      %v2475 = vadd.f32 0.0, %v2474
      %v2476 = vpop.f32.mrb[0].mxu0
      %2477 = vmatprep.mubr.f32.mxu0 0.0
      %2478 = vmatmul.mubr.f32.gmra.mrb[0].mxu0 %v2245
      %v2479 = vpop.f32.mrb[0].mxu0
      %v2480 = vadd.f32 0.0, %v2479
      %v2481 = vpop.f32.mrb[0].mxu0
      %2482 = vmatprep.mubr.f32.mxu0 0.0
      %2483 = vmatmul.mubr.f32.gmra.mrb[0].mxu0 %v2248
      %v2484 = vpop.f32.mrb[0].mxu0
      %v2485 = vadd.f32 0.0, %v2484
      %v2486 = vpop.f32.mrb[0].mxu0
      %2487 = vmatprep.mubr.f32.mxu0 0.0
      %2488 = vmatmul.mubr.f32.gmra.mrb[0].mxu0 %v2251
      %v2489 = vpop.f32.mrb[0].mxu0
      %v2490 = vadd.f32 0.0, %v2489
      %v2491 = vpop.f32.mrb[0].mxu0
      %2492 = vmatprep.mubr.f32.mxu0 0.0
      %2493 = vmatmul.mubr.f32.gmra.mrb[0].mxu0 %v2254
      %v2494 = vpop.f32.mrb[0].mxu0
      %v2495 = vadd.f32 0.0, %v2494
      %v2496 = vpop.f32.mrb[0].mxu0
      %2497 = vmatprep.mubr.f32.mxu0 0.0
      %2498 = vmatmul.mubr.f32.gmra.mrb[0].mxu0 %v2257
      %v2499 = vpop.f32.mrb[0].mxu0
      %v2500 = vadd.f32 0.0, %v2499
      %v2501 = vpop.f32.mrb[0].mxu0
      %2502 = vmatprep.mubr.f32.mxu0 0.0
      %2503 = vmatmul.mubr.f32.gmra.mrb[0].mxu0 %v2260
      %v2504 = vpop.f32.mrb[0].mxu0
      %v2505 = vadd.f32 0.0, %v2504
      %v2506 = vpop.f32.mrb[0].mxu0
      %2507 = vmatprep.mubr.f32.mxu0 0.0
      %2508 = vmatmul.mubr.f32.gmra.mrb[0].mxu0 %v2263
      %v2509 = vpop.f32.mrb[0].mxu0
      %v2510 = vadd.f32 0.0, %v2509
      %v2511 = vpop.f32.mrb[0].mxu0
      %2512 = vmatprep.mubr.f32.mxu0 0.0
      %2513 = vmatmul.mubr.f32.gmra.mrb[0].mxu0 %v2266
      %v2514 = vpop.f32.mrb[0].mxu0
      %v2515 = vadd.f32 0.0, %v2514
      %v2516 = vpop.f32.mrb[0].mxu0
      %2517 = vmatprep.mubr.f32.mxu0 0.0
      %2518 = vmatmul.mubr.f32.gmra.mrb[0].mxu0 %v2269
      %v2519 = vpop.f32.mrb[0].mxu0
      %v2520 = vadd.f32 0.0, %v2519
      %v2521 = vpop.f32.mrb[0].mxu0
      %2522 = vmatprep.mubr.f32.mxu0 0.0
      %2523 = vmatmul.mubr.f32.gmra.mrb[0].mxu0 %v2272
      %v2524 = vpop.f32.mrb[0].mxu0
      %v2525 = vadd.f32 0.0, %v2524
      %v2526 = vpop.f32.mrb[0].mxu0
      %2527 = vmatprep.mubr.f32.mxu0 0.0
      %2528 = vmatmul.mubr.f32.gmra.mrb[0].mxu0 %v2275
      %v2529 = vpop.f32.mrb[0].mxu0
      %v2530 = vadd.f32 0.0, %v2529
      %v2531 = vpop.f32.mrb[0].mxu0
      %2532 = vmatprep.mubr.f32.mxu0 0.0
      %2533 = vmatmul.mubr.f32.gmra.mrb[0].mxu0 %v2278
      %v2534 = vpop.f32.mrb[0].mxu0
      %v2535 = vadd.f32 0.0, %v2534
      %v2536 = vpop.f32.mrb[0].mxu0
      %2537 = vmatprep.mubr.f32.mxu0 0.0
      %2538 = vmatmul.mubr.f32.gmra.mrb[0].mxu0 %v2281
      %v2539 = vpop.f32.mrb[0].mxu0
      %v2540 = vadd.f32 0.0, %v2539
      %v2541 = vpop.f32.mrb[0].mxu0
      %2542 = vmatprep.mubr.f32.mxu0 0.0
      %2543 = vmatmul.mubr.f32.gmra.mrb[0].mxu0 %v2284
      %v2544 = vpop.f32.mrb[0].mxu0
      %v2545 = vadd.f32 0.0, %v2544
      %v2546 = vpop.f32.mrb[0].mxu0
      %2547 = vmatprep.mubr.f32.mxu0 0.0
      %2548 = vmatmul.mubr.f32.gmra.mrb[0].mxu0 %v2287
      %v2549 = vpop.f32.mrb[0].mxu0
      %v2550 = vadd.f32 0.0, %v2549
      %v2551 = vpop.f32.mrb[0].mxu0
      %2552 = vmatprep.mubr.f32.mxu0 0.0
      %2553 = vmatmul.mubr.f32.gmra.mrb[0].mxu0 %v2290
      %v2554 = vpop.f32.mrb[0].mxu0
      %v2555 = vadd.f32 0.0, %v2554
      %v2556 = vpop.f32.mrb[0].mxu0
      %2557 = vmatprep.mubr.f32.mxu0 0.0
      %2558 = vmatmul.mubr.f32.gmra.mrb[0].mxu0 %v2293
      %v2559 = vpop.f32.mrb[0].mxu0
      %v2560 = vadd.f32 0.0, %v2559
      %v2561 = vpop.f32.mrb[0].mxu0
      %2562 = vmatprep.mubr.f32.mxu0 0.0
      %2563 = vmatmul.mubr.f32.gmra.mrb[0].mxu0 %v2296
      %v2564 = vpop.f32.mrb[0].mxu0
      %v2565 = vadd.f32 0.0, %v2564
      %v2566 = vpop.f32.mrb[0].mxu0
      %2567 = vdwg.mxu0
      %v2568 = vadd.f32 %v2091, %v2365
      %v2569 = vadd.f32 %v2092, %v2370
      %v2570 = vadd.f32 %v2093, %v2375
      %v2571 = vadd.f32 %v2094, %v2380
      %v2572 = vadd.f32 %v2095, %v2385
      %v2573 = vadd.f32 %v2096, %v2390
      %v2574 = vadd.f32 %v2097, %v2395
      %v2575 = vadd.f32 %v2098, %v2400
      %v2576 = vadd.f32 %v2099, %v2405
      %v2577 = vadd.f32 %v2100, %v2410
      %v2578 = vadd.f32 %v2101, %v2415
      %v2579 = vadd.f32 %v2102, %v2420
      %v2580 = vadd.f32 %v2103, %v2425
      %v2581 = vadd.f32 %v2104, %v2430
      %v2582 = vadd.f32 %v2105, %v2435
      %v2583 = vadd.f32 %v2106, %v2440
      %v2584 = vadd.f32 %v2107, %v2445
      %v2585 = vadd.f32 %v2108, %v2450
      %v2586 = vadd.f32 %v2109, %v2455
      %v2587 = vadd.f32 %v2110, %v2460
      %v2588 = vadd.f32 %v2111, %v2465
      %v2589 = vadd.f32 %v2112, %v2470
      %v2590 = vadd.f32 %v2113, %v2475
      %v2591 = vadd.f32 %v2114, %v2480
      %v2592 = vadd.f32 %v2115, %v2485
      %v2593 = vadd.f32 %v2116, %v2490
      %v2594 = vadd.f32 %v2117, %v2495
      %v2595 = vadd.f32 %v2118, %v2500
      %v2596 = vadd.f32 %v2119, %v2505
      %v2597 = vadd.f32 %v2120, %v2510
      %v2598 = vadd.f32 %v2121, %v2515
      %v2599 = vadd.f32 %v2122, %v2520
      %v2600 = vadd.f32 %v2123, %v2525
      %v2601 = vadd.f32 %v2124, %v2530
      %v2602 = vadd.f32 %v2125, %v2535
      %v2603 = vadd.f32 %v2126, %v2540
      %v2604 = vadd.f32 %v2127, %v2545
      %v2605 = vadd.f32 %v2128, %v2550
      %v2606 = vadd.f32 %v2129, %v2555
      %v2607 = vadd.f32 %v2130, %v2560
      %v2608 = vadd.f32 %v2131, %v2565
      %v2609 = vld [vmem:[%s300 + $0x14] sm:$0xff]
      %v2610 = vld [vmem:[%s300 + $0x1c] sm:$0xff]
      %v2611 = vld [vmem:[%s300 + $0x24] sm:$0xff]
      %v2612 = vld [vmem:[%s300 + $0x2c] sm:$0xff]
      %v2613 = vld [vmem:[%s300 + $0x34] sm:$0xff]
      %v2614 = vld [vmem:[%s300 + $0x3c] sm:$0xff]
      %v2615 = vld [vmem:[%s300 + $0x44] sm:$0xff]
      %v2616 = vld [vmem:[%s300 + $0x4c] sm:$0xff]
      %v2617 = vld [vmem:[%s300 + $0x54] sm:$0xff]
      %v2618 = vld [vmem:[%s300 + $0x5c] sm:$0xff]
      %v2619 = vld [vmem:[%s300 + $0x64] sm:$0xff]
      %v2620 = vld [vmem:[%s300 + $0x6c] sm:$0xff]
      %v2621 = vld [vmem:[%s300 + $0x74] sm:$0xff]
      %v2622 = vld [vmem:[%s300 + $0x7c] sm:$0xff]
      %v2623 = vld [vmem:[%s300 + $0x84] sm:$0xff]
      %v2624 = vld [vmem:[%s300 + $0x8c] sm:$0xff]
      %v2625 = vld [vmem:[%s300 + $0x94] sm:$0xff]
      %v2626 = vld [vmem:[%s300 + $0x9c] sm:$0xff]
      %v2627 = vld [vmem:[%s300 + $0xa4] sm:$0xff]
      %v2628 = vld [vmem:[%s300 + $0xac] sm:$0xff]
      %v2629 = vld [vmem:[%s300 + $0xb4] sm:$0xff]
      %v2630 = vld [vmem:[%s300 + $0xbc] sm:$0xff]
      %v2631 = vld [vmem:[%s300 + $0xc4] sm:$0xff]
      %v2632 = vld [vmem:[%s300 + $0xcc] sm:$0xff]
      %v2633 = vld [vmem:[%s300 + $0xd4] sm:$0xff]
      %v2634 = vld [vmem:[%s300 + $0xdc] sm:$0xff]
      %v2635 = vld [vmem:[%s300 + $0xe4] sm:$0xff]
      %v2636 = vld [vmem:[%s300 + $0xec] sm:$0xff]
      %v2637 = vld [vmem:[%s300 + $0xf4] sm:$0xff]
      %v2638 = vld [vmem:[%s300 + $0xfc] sm:$0xff]
      %v2639 = vld [vmem:[%s300 + $0x104] sm:$0xff]
      %v2640 = vld [vmem:[%s300 + $0x10c] sm:$0xff]
      %v2641 = vld [vmem:[%s300 + $0x114] sm:$0xff]
      %v2642 = vld [vmem:[%s300 + $0x11c] sm:$0xff]
      %v2643 = vld [vmem:[%s300 + $0x124] sm:$0xff]
      %v2644 = vld [vmem:[%s300 + $0x12c] sm:$0xff]
      %v2645 = vld [vmem:[%s300 + $0x134] sm:$0xff]
      %v2646 = vld [vmem:[%s300 + $0x13c] sm:$0xff]
      %v2647 = vld [vmem:[%s300 + $0x144] sm:$0xff]
      %v2648 = vld [vmem:[%s300 + $0x14c] sm:$0xff]
      %v2649 = vld [vmem:[%s300 + $0x154] sm:$0xf]
      %s2650 = scalar_lea.vmem %s1, 40
      %v2651 = vld [vmem:[%s2650] sm:$0xff]
      %v2653 = vsel %vm391, %v2609, 0
      %v2656 = vsel %vm391, %v2610, 0
      %v2659 = vsel %vm391, %v2611, 0
      %v2662 = vsel %vm391, %v2612, 0
      %v2665 = vsel %vm391, %v2613, 0
      %v2668 = vsel %vm391, %v2614, 0
      %v2671 = vsel %vm391, %v2615, 0
      %v2674 = vsel %vm391, %v2616, 0
      %v2677 = vsel %vm391, %v2617, 0
      %v2680 = vsel %vm391, %v2618, 0
      %v2683 = vsel %vm391, %v2619, 0
      %v2686 = vsel %vm391, %v2620, 0
      %v2689 = vsel %vm391, %v2621, 0
      %v2692 = vsel %vm391, %v2622, 0
      %v2695 = vsel %vm391, %v2623, 0
      %v2698 = vsel %vm391, %v2624, 0
      %v2701 = vsel %vm391, %v2625, 0
      %v2704 = vsel %vm391, %v2626, 0
      %v2707 = vsel %vm391, %v2627, 0
      %v2710 = vsel %vm391, %v2628, 0
      %v2713 = vsel %vm391, %v2629, 0
      %v2716 = vsel %vm391, %v2630, 0
      %v2719 = vsel %vm391, %v2631, 0
      %v2722 = vsel %vm391, %v2632, 0
      %v2725 = vsel %vm391, %v2633, 0
      %v2728 = vsel %vm391, %v2634, 0
      %v2731 = vsel %vm391, %v2635, 0
      %v2734 = vsel %vm391, %v2636, 0
      %v2737 = vsel %vm391, %v2637, 0
      %v2740 = vsel %vm391, %v2638, 0
      %v2743 = vsel %vm391, %v2639, 0
      %v2746 = vsel %vm391, %v2640, 0
      %v2749 = vsel %vm391, %v2641, 0
      %v2752 = vsel %vm391, %v2642, 0
      %v2755 = vsel %vm391, %v2643, 0
      %v2758 = vsel %vm391, %v2644, 0
      %v2761 = vsel %vm391, %v2645, 0
      %v2764 = vsel %vm391, %v2646, 0
      %v2767 = vsel %vm391, %v2647, 0
      %v2770 = vsel %vm391, %v2648, 0
      %v2773 = vsel %vm391, %v2649, 0
      %2775 = vmatprep.subr.mxu0 0.0
      %2776 = vmatpush1.msra.mxu0 %v2651
      %2777 = vmatprep.subr.mxu0 0.0
      %2778 = vmatpush1.msra.mxu0 0.0
      %2779 = vmatprep.subr.mxu0 0.0
      %2780 = vmatpush1.msra.mxu0 0.0
      %2781 = vmatprep.subr.mxu0 0.0
      %2782 = vmatpush1.msra.mxu0 0.0
      %2783 = vmatprep.subr.mxu0 0.0
      %2784 = vmatpush1.msra.mxu0 0.0
      %2785 = vmatprep.subr.mxu0 0.0
      %2786 = vmatpush1.msra.mxu0 0.0
      %2787 = vmatprep.subr.mxu0 0.0
      %2788 = vmatpush1.msra.mxu0 0.0
      %2789 = vmatprep.subr.mxu0 0.0
      %2790 = vmatpush1.msra.mxu0 0.0
      %2791 = vmatprep.subr.mxu0 0.0
      %2792 = vmatpush1.msra.mxu0 0.0
      %2793 = vmatprep.subr.mxu0 0.0
      %2794 = vmatpush1.msra.mxu0 0.0
      %2795 = vmatprep.subr.mxu0 0.0
      %2796 = vmatpush1.msra.mxu0 0.0
      %2797 = vmatprep.subr.mxu0 0.0
      %2798 = vmatpush1.msra.mxu0 0.0
      %2799 = vmatprep.subr.mxu0 0.0
      %2800 = vmatpush1.msra.mxu0 0.0
      %2801 = vmatprep.subr.mxu0 0.0
      %2802 = vmatpush1.msra.mxu0 0.0
      %2803 = vmatprep.subr.mxu0 0.0
      %2804 = vmatpush1.msra.mxu0 0.0
      %2805 = vmatprep.subr.mxu0 0.0
      %2806 = vmatpush1.msra.mxu0 0.0
      %2807 = vmatprep.subr.mxu0 0.0
      %2808 = vmatpush1.msra.mxu0 0.0
      %2809 = vmatprep.subr.mxu0 0.0
      %2810 = vmatpush1.msra.mxu0 0.0
      %2811 = vmatprep.subr.mxu0 0.0
      %2812 = vmatpush1.msra.mxu0 0.0
      %2813 = vmatprep.subr.mxu0 0.0
      %2814 = vmatpush1.msra.mxu0 0.0
      %2815 = vmatprep.subr.mxu0 0.0
      %2816 = vmatpush1.msra.mxu0 0.0
      %2817 = vmatprep.subr.mxu0 0.0
      %2818 = vmatpush1.msra.mxu0 0.0
      %2819 = vmatprep.subr.mxu0 0.0
      %2820 = vmatpush1.msra.mxu0 0.0
      %2821 = vmatprep.subr.mxu0 0.0
      %2822 = vmatpush1.msra.mxu0 0.0
      %2823 = vmatprep.subr.mxu0 0.0
      %2824 = vmatpush1.msra.mxu0 0.0
      %2825 = vmatprep.subr.mxu0 0.0
      %2826 = vmatpush1.msra.mxu0 0.0
      %2827 = vmatprep.subr.mxu0 0.0
      %2828 = vmatpush1.msra.mxu0 0.0
      %2829 = vmatprep.subr.mxu0 0.0
      %2830 = vmatpush1.msra.mxu0 0.0
      %2831 = vmatprep.subr.mxu0 0.0
      %2832 = vmatpush1.msra.mxu0 0.0
      %2833 = vmatprep.subr.mxu0 0.0
      %2834 = vmatpush1.msra.mxu0 0.0
      %2835 = vmatprep.subr.mxu0 0.0
      %2836 = vmatpush1.msra.mxu0 0.0
      %2837 = vmatprep.subr.mxu0 0.0
      %2838 = vmatpush1.msra.mxu0 0.0
      %2839 = vmatprep.mubr.f32.mxu0 0.0
      %2840 = vmatmul.mubr.f32.gmra.mrb[0].mxu0 %v2653
      %v2841 = vpop.f32.mrb[0].mxu0
      %v2842 = vadd.f32 0.0, %v2841
      %v2843 = vpop.f32.mrb[0].mxu0
      %2844 = vmatprep.mubr.f32.mxu0 0.0
      %2845 = vmatmul.mubr.f32.gmra.mrb[0].mxu0 %v2656
      %v2846 = vpop.f32.mrb[0].mxu0
      %v2847 = vadd.f32 0.0, %v2846
      %v2848 = vpop.f32.mrb[0].mxu0
      %2849 = vmatprep.mubr.f32.mxu0 0.0
      %2850 = vmatmul.mubr.f32.gmra.mrb[0].mxu0 %v2659
      %v2851 = vpop.f32.mrb[0].mxu0
      %v2852 = vadd.f32 0.0, %v2851
      %v2853 = vpop.f32.mrb[0].mxu0
      %2854 = vmatprep.mubr.f32.mxu0 0.0
      %2855 = vmatmul.mubr.f32.gmra.mrb[0].mxu0 %v2662
      %v2856 = vpop.f32.mrb[0].mxu0
      %v2857 = vadd.f32 0.0, %v2856
      %v2858 = vpop.f32.mrb[0].mxu0
      %2859 = vmatprep.mubr.f32.mxu0 0.0
      %2860 = vmatmul.mubr.f32.gmra.mrb[0].mxu0 %v2665
      %v2861 = vpop.f32.mrb[0].mxu0
      %v2862 = vadd.f32 0.0, %v2861
      %v2863 = vpop.f32.mrb[0].mxu0
      %2864 = vmatprep.mubr.f32.mxu0 0.0
      %2865 = vmatmul.mubr.f32.gmra.mrb[0].mxu0 %v2668
      %v2866 = vpop.f32.mrb[0].mxu0
      %v2867 = vadd.f32 0.0, %v2866
      %v2868 = vpop.f32.mrb[0].mxu0
      %2869 = vmatprep.mubr.f32.mxu0 0.0
      %2870 = vmatmul.mubr.f32.gmra.mrb[0].mxu0 %v2671
      %v2871 = vpop.f32.mrb[0].mxu0
      %v2872 = vadd.f32 0.0, %v2871
      %v2873 = vpop.f32.mrb[0].mxu0
      %2874 = vmatprep.mubr.f32.mxu0 0.0
      %2875 = vmatmul.mubr.f32.gmra.mrb[0].mxu0 %v2674
      %v2876 = vpop.f32.mrb[0].mxu0
      %v2877 = vadd.f32 0.0, %v2876
      %v2878 = vpop.f32.mrb[0].mxu0
      %2879 = vmatprep.mubr.f32.mxu0 0.0
      %2880 = vmatmul.mubr.f32.gmra.mrb[0].mxu0 %v2677
      %v2881 = vpop.f32.mrb[0].mxu0
      %v2882 = vadd.f32 0.0, %v2881
      %v2883 = vpop.f32.mrb[0].mxu0
      %2884 = vmatprep.mubr.f32.mxu0 0.0
      %2885 = vmatmul.mubr.f32.gmra.mrb[0].mxu0 %v2680
      %v2886 = vpop.f32.mrb[0].mxu0
      %v2887 = vadd.f32 0.0, %v2886
      %v2888 = vpop.f32.mrb[0].mxu0
      %2889 = vmatprep.mubr.f32.mxu0 0.0
      %2890 = vmatmul.mubr.f32.gmra.mrb[0].mxu0 %v2683
      %v2891 = vpop.f32.mrb[0].mxu0
      %v2892 = vadd.f32 0.0, %v2891
      %v2893 = vpop.f32.mrb[0].mxu0
      %2894 = vmatprep.mubr.f32.mxu0 0.0
      %2895 = vmatmul.mubr.f32.gmra.mrb[0].mxu0 %v2686
      %v2896 = vpop.f32.mrb[0].mxu0
      %v2897 = vadd.f32 0.0, %v2896
      %v2898 = vpop.f32.mrb[0].mxu0
      %2899 = vmatprep.mubr.f32.mxu0 0.0
      %2900 = vmatmul.mubr.f32.gmra.mrb[0].mxu0 %v2689
      %v2901 = vpop.f32.mrb[0].mxu0
      %v2902 = vadd.f32 0.0, %v2901
      %v2903 = vpop.f32.mrb[0].mxu0
      %2904 = vmatprep.mubr.f32.mxu0 0.0
      %2905 = vmatmul.mubr.f32.gmra.mrb[0].mxu0 %v2692
      %v2906 = vpop.f32.mrb[0].mxu0
      %v2907 = vadd.f32 0.0, %v2906
      %v2908 = vpop.f32.mrb[0].mxu0
      %2909 = vmatprep.mubr.f32.mxu0 0.0
      %2910 = vmatmul.mubr.f32.gmra.mrb[0].mxu0 %v2695
      %v2911 = vpop.f32.mrb[0].mxu0
      %v2912 = vadd.f32 0.0, %v2911
      %v2913 = vpop.f32.mrb[0].mxu0
      %2914 = vmatprep.mubr.f32.mxu0 0.0
      %2915 = vmatmul.mubr.f32.gmra.mrb[0].mxu0 %v2698
      %v2916 = vpop.f32.mrb[0].mxu0
      %v2917 = vadd.f32 0.0, %v2916
      %v2918 = vpop.f32.mrb[0].mxu0
      %2919 = vmatprep.mubr.f32.mxu0 0.0
      %2920 = vmatmul.mubr.f32.gmra.mrb[0].mxu0 %v2701
      %v2921 = vpop.f32.mrb[0].mxu0
      %v2922 = vadd.f32 0.0, %v2921
      %v2923 = vpop.f32.mrb[0].mxu0
      %2924 = vmatprep.mubr.f32.mxu0 0.0
      %2925 = vmatmul.mubr.f32.gmra.mrb[0].mxu0 %v2704
      %v2926 = vpop.f32.mrb[0].mxu0
      %v2927 = vadd.f32 0.0, %v2926
      %v2928 = vpop.f32.mrb[0].mxu0
      %2929 = vmatprep.mubr.f32.mxu0 0.0
      %2930 = vmatmul.mubr.f32.gmra.mrb[0].mxu0 %v2707
      %v2931 = vpop.f32.mrb[0].mxu0
      %v2932 = vadd.f32 0.0, %v2931
      %v2933 = vpop.f32.mrb[0].mxu0
      %2934 = vmatprep.mubr.f32.mxu0 0.0
      %2935 = vmatmul.mubr.f32.gmra.mrb[0].mxu0 %v2710
      %v2936 = vpop.f32.mrb[0].mxu0
      %v2937 = vadd.f32 0.0, %v2936
      %v2938 = vpop.f32.mrb[0].mxu0
      %2939 = vmatprep.mubr.f32.mxu0 0.0
      %2940 = vmatmul.mubr.f32.gmra.mrb[0].mxu0 %v2713
      %v2941 = vpop.f32.mrb[0].mxu0
      %v2942 = vadd.f32 0.0, %v2941
      %v2943 = vpop.f32.mrb[0].mxu0
      %2944 = vmatprep.mubr.f32.mxu0 0.0
      %2945 = vmatmul.mubr.f32.gmra.mrb[0].mxu0 %v2716
      %v2946 = vpop.f32.mrb[0].mxu0
      %v2947 = vadd.f32 0.0, %v2946
      %v2948 = vpop.f32.mrb[0].mxu0
      %2949 = vmatprep.mubr.f32.mxu0 0.0
      %2950 = vmatmul.mubr.f32.gmra.mrb[0].mxu0 %v2719
      %v2951 = vpop.f32.mrb[0].mxu0
      %v2952 = vadd.f32 0.0, %v2951
      %v2953 = vpop.f32.mrb[0].mxu0
      %2954 = vmatprep.mubr.f32.mxu0 0.0
      %2955 = vmatmul.mubr.f32.gmra.mrb[0].mxu0 %v2722
      %v2956 = vpop.f32.mrb[0].mxu0
      %v2957 = vadd.f32 0.0, %v2956
      %v2958 = vpop.f32.mrb[0].mxu0
      %2959 = vmatprep.mubr.f32.mxu0 0.0
      %2960 = vmatmul.mubr.f32.gmra.mrb[0].mxu0 %v2725
      %v2961 = vpop.f32.mrb[0].mxu0
      %v2962 = vadd.f32 0.0, %v2961
      %v2963 = vpop.f32.mrb[0].mxu0
      %2964 = vmatprep.mubr.f32.mxu0 0.0
      %2965 = vmatmul.mubr.f32.gmra.mrb[0].mxu0 %v2728
      %v2966 = vpop.f32.mrb[0].mxu0
      %v2967 = vadd.f32 0.0, %v2966
      %v2968 = vpop.f32.mrb[0].mxu0
      %2969 = vmatprep.mubr.f32.mxu0 0.0
      %2970 = vmatmul.mubr.f32.gmra.mrb[0].mxu0 %v2731
      %v2971 = vpop.f32.mrb[0].mxu0
      %v2972 = vadd.f32 0.0, %v2971
      %v2973 = vpop.f32.mrb[0].mxu0
      %2974 = vmatprep.mubr.f32.mxu0 0.0
      %2975 = vmatmul.mubr.f32.gmra.mrb[0].mxu0 %v2734
      %v2976 = vpop.f32.mrb[0].mxu0
      %v2977 = vadd.f32 0.0, %v2976
      %v2978 = vpop.f32.mrb[0].mxu0
      %2979 = vmatprep.mubr.f32.mxu0 0.0
      %2980 = vmatmul.mubr.f32.gmra.mrb[0].mxu0 %v2737
      %v2981 = vpop.f32.mrb[0].mxu0
      %v2982 = vadd.f32 0.0, %v2981
      %v2983 = vpop.f32.mrb[0].mxu0
      %2984 = vmatprep.mubr.f32.mxu0 0.0
      %2985 = vmatmul.mubr.f32.gmra.mrb[0].mxu0 %v2740
      %v2986 = vpop.f32.mrb[0].mxu0
      %v2987 = vadd.f32 0.0, %v2986
      %v2988 = vpop.f32.mrb[0].mxu0
      %2989 = vmatprep.mubr.f32.mxu0 0.0
      %2990 = vmatmul.mubr.f32.gmra.mrb[0].mxu0 %v2743
      %v2991 = vpop.f32.mrb[0].mxu0
      %v2992 = vadd.f32 0.0, %v2991
      %v2993 = vpop.f32.mrb[0].mxu0
      %2994 = vmatprep.mubr.f32.mxu0 0.0
      %2995 = vmatmul.mubr.f32.gmra.mrb[0].mxu0 %v2746
      %v2996 = vpop.f32.mrb[0].mxu0
      %v2997 = vadd.f32 0.0, %v2996
      %v2998 = vpop.f32.mrb[0].mxu0
      %2999 = vmatprep.mubr.f32.mxu0 0.0
      %3000 = vmatmul.mubr.f32.gmra.mrb[0].mxu0 %v2749
      %v3001 = vpop.f32.mrb[0].mxu0
      %v3002 = vadd.f32 0.0, %v3001
      %v3003 = vpop.f32.mrb[0].mxu0
      %3004 = vmatprep.mubr.f32.mxu0 0.0
      %3005 = vmatmul.mubr.f32.gmra.mrb[0].mxu0 %v2752
      %v3006 = vpop.f32.mrb[0].mxu0
      %v3007 = vadd.f32 0.0, %v3006
      %v3008 = vpop.f32.mrb[0].mxu0
      %3009 = vmatprep.mubr.f32.mxu0 0.0
      %3010 = vmatmul.mubr.f32.gmra.mrb[0].mxu0 %v2755
      %v3011 = vpop.f32.mrb[0].mxu0
      %v3012 = vadd.f32 0.0, %v3011
      %v3013 = vpop.f32.mrb[0].mxu0
      %3014 = vmatprep.mubr.f32.mxu0 0.0
      %3015 = vmatmul.mubr.f32.gmra.mrb[0].mxu0 %v2758
      %v3016 = vpop.f32.mrb[0].mxu0
      %v3017 = vadd.f32 0.0, %v3016
      %v3018 = vpop.f32.mrb[0].mxu0
      %3019 = vmatprep.mubr.f32.mxu0 0.0
      %3020 = vmatmul.mubr.f32.gmra.mrb[0].mxu0 %v2761
      %v3021 = vpop.f32.mrb[0].mxu0
      %v3022 = vadd.f32 0.0, %v3021
      %v3023 = vpop.f32.mrb[0].mxu0
      %3024 = vmatprep.mubr.f32.mxu0 0.0
      %3025 = vmatmul.mubr.f32.gmra.mrb[0].mxu0 %v2764
      %v3026 = vpop.f32.mrb[0].mxu0
      %v3027 = vadd.f32 0.0, %v3026
      %v3028 = vpop.f32.mrb[0].mxu0
      %3029 = vmatprep.mubr.f32.mxu0 0.0
      %3030 = vmatmul.mubr.f32.gmra.mrb[0].mxu0 %v2767
      %v3031 = vpop.f32.mrb[0].mxu0
      %v3032 = vadd.f32 0.0, %v3031
      %v3033 = vpop.f32.mrb[0].mxu0
      %3034 = vmatprep.mubr.f32.mxu0 0.0
      %3035 = vmatmul.mubr.f32.gmra.mrb[0].mxu0 %v2770
      %v3036 = vpop.f32.mrb[0].mxu0
      %v3037 = vadd.f32 0.0, %v3036
      %v3038 = vpop.f32.mrb[0].mxu0
      %3039 = vmatprep.mubr.f32.mxu0 0.0
      %3040 = vmatmul.mubr.f32.gmra.mrb[0].mxu0 %v2773
      %v3041 = vpop.f32.mrb[0].mxu0
      %v3042 = vadd.f32 0.0, %v3041
      %v3043 = vpop.f32.mrb[0].mxu0
      %3044 = vdwg.mxu0
      %v3045 = vadd.f32 %v2568, %v2842
      %v3046 = vadd.f32 %v2569, %v2847
      %v3047 = vadd.f32 %v2570, %v2852
      %v3048 = vadd.f32 %v2571, %v2857
      %v3049 = vadd.f32 %v2572, %v2862
      %v3050 = vadd.f32 %v2573, %v2867
      %v3051 = vadd.f32 %v2574, %v2872
      %v3052 = vadd.f32 %v2575, %v2877
      %v3053 = vadd.f32 %v2576, %v2882
      %v3054 = vadd.f32 %v2577, %v2887
      %v3055 = vadd.f32 %v2578, %v2892
      %v3056 = vadd.f32 %v2579, %v2897
      %v3057 = vadd.f32 %v2580, %v2902
      %v3058 = vadd.f32 %v2581, %v2907
      %v3059 = vadd.f32 %v2582, %v2912
      %v3060 = vadd.f32 %v2583, %v2917
      %v3061 = vadd.f32 %v2584, %v2922
      %v3062 = vadd.f32 %v2585, %v2927
      %v3063 = vadd.f32 %v2586, %v2932
      %v3064 = vadd.f32 %v2587, %v2937
      %v3065 = vadd.f32 %v2588, %v2942
      %v3066 = vadd.f32 %v2589, %v2947
      %v3067 = vadd.f32 %v2590, %v2952
      %v3068 = vadd.f32 %v2591, %v2957
      %v3069 = vadd.f32 %v2592, %v2962
      %v3070 = vadd.f32 %v2593, %v2967
      %v3071 = vadd.f32 %v2594, %v2972
      %v3072 = vadd.f32 %v2595, %v2977
      %v3073 = vadd.f32 %v2596, %v2982
      %v3074 = vadd.f32 %v2597, %v2987
      %v3075 = vadd.f32 %v2598, %v2992
      %v3076 = vadd.f32 %v2599, %v2997
      %v3077 = vadd.f32 %v2600, %v3002
      %v3078 = vadd.f32 %v2601, %v3007
      %v3079 = vadd.f32 %v2602, %v3012
      %v3080 = vadd.f32 %v2603, %v3017
      %v3081 = vadd.f32 %v2604, %v3022
      %v3082 = vadd.f32 %v2605, %v3027
      %v3083 = vadd.f32 %v2606, %v3032
      %v3084 = vadd.f32 %v2607, %v3037
      %v3085 = vadd.f32 %v2608, %v3042
      %v3086 = vld [vmem:[%s300 + $0x24] sm:$0xff]
      %v3087 = vld [vmem:[%s300 + $0x2c] sm:$0xff]
      %v3088 = vld [vmem:[%s300 + $0x34] sm:$0xff]
      %v3089 = vld [vmem:[%s300 + $0x3c] sm:$0xff]
      %v3090 = vld [vmem:[%s300 + $0x44] sm:$0xff]
      %v3091 = vld [vmem:[%s300 + $0x4c] sm:$0xff]
      %v3092 = vld [vmem:[%s300 + $0x54] sm:$0xff]
      %v3093 = vld [vmem:[%s300 + $0x5c] sm:$0xff]
      %v3094 = vld [vmem:[%s300 + $0x64] sm:$0xff]
      %v3095 = vld [vmem:[%s300 + $0x6c] sm:$0xff]
      %v3096 = vld [vmem:[%s300 + $0x74] sm:$0xff]
      %v3097 = vld [vmem:[%s300 + $0x7c] sm:$0xff]
      %v3098 = vld [vmem:[%s300 + $0x84] sm:$0xff]
      %v3099 = vld [vmem:[%s300 + $0x8c] sm:$0xff]
      %v3100 = vld [vmem:[%s300 + $0x94] sm:$0xff]
      %v3101 = vld [vmem:[%s300 + $0x9c] sm:$0xff]
      %v3102 = vld [vmem:[%s300 + $0xa4] sm:$0xff]
      %v3103 = vld [vmem:[%s300 + $0xac] sm:$0xff]
      %v3104 = vld [vmem:[%s300 + $0xb4] sm:$0xff]
      %v3105 = vld [vmem:[%s300 + $0xbc] sm:$0xff]
      %v3106 = vld [vmem:[%s300 + $0xc4] sm:$0xff]
      %v3107 = vld [vmem:[%s300 + $0xcc] sm:$0xff]
      %v3108 = vld [vmem:[%s300 + $0xd4] sm:$0xff]
      %v3109 = vld [vmem:[%s300 + $0xdc] sm:$0xff]
      %v3110 = vld [vmem:[%s300 + $0xe4] sm:$0xff]
      %v3111 = vld [vmem:[%s300 + $0xec] sm:$0xff]
      %v3112 = vld [vmem:[%s300 + $0xf4] sm:$0xff]
      %v3113 = vld [vmem:[%s300 + $0xfc] sm:$0xff]
      %v3114 = vld [vmem:[%s300 + $0x104] sm:$0xff]
      %v3115 = vld [vmem:[%s300 + $0x10c] sm:$0xff]
      %v3116 = vld [vmem:[%s300 + $0x114] sm:$0xff]
      %v3117 = vld [vmem:[%s300 + $0x11c] sm:$0xff]
      %v3118 = vld [vmem:[%s300 + $0x124] sm:$0xff]
      %v3119 = vld [vmem:[%s300 + $0x12c] sm:$0xff]
      %v3120 = vld [vmem:[%s300 + $0x134] sm:$0xff]
      %v3121 = vld [vmem:[%s300 + $0x13c] sm:$0xff]
      %v3122 = vld [vmem:[%s300 + $0x144] sm:$0xff]
      %v3123 = vld [vmem:[%s300 + $0x14c] sm:$0xff]
      %v3124 = vld [vmem:[%s300 + $0x154] sm:$0xff]
      %v3125 = vld [vmem:[%s300 + $0x15c] sm:$0xff]
      %v3126 = vld [vmem:[%s300 + $0x164] sm:$0xf]
      %s3127 = scalar_lea.vmem %s1, 48
      %v3128 = vld [vmem:[%s3127] sm:$0xff]
      %v3130 = vsel %vm391, %v3086, 0
      %v3133 = vsel %vm391, %v3087, 0
      %v3136 = vsel %vm391, %v3088, 0
      %v3139 = vsel %vm391, %v3089, 0
      %v3142 = vsel %vm391, %v3090, 0
      %v3145 = vsel %vm391, %v3091, 0
      %v3148 = vsel %vm391, %v3092, 0
      %v3151 = vsel %vm391, %v3093, 0
      %v3154 = vsel %vm391, %v3094, 0
      %v3157 = vsel %vm391, %v3095, 0
      %v3160 = vsel %vm391, %v3096, 0
      %v3163 = vsel %vm391, %v3097, 0
      %v3166 = vsel %vm391, %v3098, 0
      %v3169 = vsel %vm391, %v3099, 0
      %v3172 = vsel %vm391, %v3100, 0
      %v3175 = vsel %vm391, %v3101, 0
      %v3178 = vsel %vm391, %v3102, 0
      %v3181 = vsel %vm391, %v3103, 0
      %v3184 = vsel %vm391, %v3104, 0
      %v3187 = vsel %vm391, %v3105, 0
      %v3190 = vsel %vm391, %v3106, 0
      %v3193 = vsel %vm391, %v3107, 0
      %v3196 = vsel %vm391, %v3108, 0
      %v3199 = vsel %vm391, %v3109, 0
      %v3202 = vsel %vm391, %v3110, 0
      %v3205 = vsel %vm391, %v3111, 0
      %v3208 = vsel %vm391, %v3112, 0
      %v3211 = vsel %vm391, %v3113, 0
      %v3214 = vsel %vm391, %v3114, 0
      %v3217 = vsel %vm391, %v3115, 0
      %v3220 = vsel %vm391, %v3116, 0
      %v3223 = vsel %vm391, %v3117, 0
      %v3226 = vsel %vm391, %v3118, 0
      %v3229 = vsel %vm391, %v3119, 0
      %v3232 = vsel %vm391, %v3120, 0
      %v3235 = vsel %vm391, %v3121, 0
      %v3238 = vsel %vm391, %v3122, 0
      %v3241 = vsel %vm391, %v3123, 0
      %v3244 = vsel %vm391, %v3124, 0
      %v3247 = vsel %vm391, %v3125, 0
      %v3250 = vsel %vm391, %v3126, 0
      %3252 = vmatprep.subr.mxu0 0.0
      %3253 = vmatpush1.msra.mxu0 %v3128
      %3254 = vmatprep.subr.mxu0 0.0
      %3255 = vmatpush1.msra.mxu0 0.0
      %3256 = vmatprep.subr.mxu0 0.0
      %3257 = vmatpush1.msra.mxu0 0.0
      %3258 = vmatprep.subr.mxu0 0.0
      %3259 = vmatpush1.msra.mxu0 0.0
      %3260 = vmatprep.subr.mxu0 0.0
      %3261 = vmatpush1.msra.mxu0 0.0
      %3262 = vmatprep.subr.mxu0 0.0
      %3263 = vmatpush1.msra.mxu0 0.0
      %3264 = vmatprep.subr.mxu0 0.0
      %3265 = vmatpush1.msra.mxu0 0.0
      %3266 = vmatprep.subr.mxu0 0.0
      %3267 = vmatpush1.msra.mxu0 0.0
      %3268 = vmatprep.subr.mxu0 0.0
      %3269 = vmatpush1.msra.mxu0 0.0
      %3270 = vmatprep.subr.mxu0 0.0
      %3271 = vmatpush1.msra.mxu0 0.0
      %3272 = vmatprep.subr.mxu0 0.0
      %3273 = vmatpush1.msra.mxu0 0.0
      %3274 = vmatprep.subr.mxu0 0.0
      %3275 = vmatpush1.msra.mxu0 0.0
      %3276 = vmatprep.subr.mxu0 0.0
      %3277 = vmatpush1.msra.mxu0 0.0
      %3278 = vmatprep.subr.mxu0 0.0
      %3279 = vmatpush1.msra.mxu0 0.0
      %3280 = vmatprep.subr.mxu0 0.0
      %3281 = vmatpush1.msra.mxu0 0.0
      %3282 = vmatprep.subr.mxu0 0.0
      %3283 = vmatpush1.msra.mxu0 0.0
      %3284 = vmatprep.subr.mxu0 0.0
      %3285 = vmatpush1.msra.mxu0 0.0
      %3286 = vmatprep.subr.mxu0 0.0
      %3287 = vmatpush1.msra.mxu0 0.0
      %3288 = vmatprep.subr.mxu0 0.0
      %3289 = vmatpush1.msra.mxu0 0.0
      %3290 = vmatprep.subr.mxu0 0.0
      %3291 = vmatpush1.msra.mxu0 0.0
      %3292 = vmatprep.subr.mxu0 0.0
      %3293 = vmatpush1.msra.mxu0 0.0
      %3294 = vmatprep.subr.mxu0 0.0
      %3295 = vmatpush1.msra.mxu0 0.0
      %3296 = vmatprep.subr.mxu0 0.0
      %3297 = vmatpush1.msra.mxu0 0.0
      %3298 = vmatprep.subr.mxu0 0.0
      %3299 = vmatpush1.msra.mxu0 0.0
      %3300 = vmatprep.subr.mxu0 0.0
      %3301 = vmatpush1.msra.mxu0 0.0
      %3302 = vmatprep.subr.mxu0 0.0
      %3303 = vmatpush1.msra.mxu0 0.0
      %3304 = vmatprep.subr.mxu0 0.0
      %3305 = vmatpush1.msra.mxu0 0.0
      %3306 = vmatprep.subr.mxu0 0.0
      %3307 = vmatpush1.msra.mxu0 0.0
      %3308 = vmatprep.subr.mxu0 0.0
      %3309 = vmatpush1.msra.mxu0 0.0
      %3310 = vmatprep.subr.mxu0 0.0
      %3311 = vmatpush1.msra.mxu0 0.0
      %3312 = vmatprep.subr.mxu0 0.0
      %3313 = vmatpush1.msra.mxu0 0.0
      %3314 = vmatprep.subr.mxu0 0.0
      %3315 = vmatpush1.msra.mxu0 0.0
      %3316 = vmatprep.mubr.f32.mxu0 0.0
      %3317 = vmatmul.mubr.f32.gmra.mrb[0].mxu0 %v3130
      %v3318 = vpop.f32.mrb[0].mxu0
      %v3319 = vadd.f32 0.0, %v3318
      %v3320 = vpop.f32.mrb[0].mxu0
      %3321 = vmatprep.mubr.f32.mxu0 0.0
      %3322 = vmatmul.mubr.f32.gmra.mrb[0].mxu0 %v3133
      %v3323 = vpop.f32.mrb[0].mxu0
      %v3324 = vadd.f32 0.0, %v3323
      %v3325 = vpop.f32.mrb[0].mxu0
      %3326 = vmatprep.mubr.f32.mxu0 0.0
      %3327 = vmatmul.mubr.f32.gmra.mrb[0].mxu0 %v3136
      %v3328 = vpop.f32.mrb[0].mxu0
      %v3329 = vadd.f32 0.0, %v3328
      %v3330 = vpop.f32.mrb[0].mxu0
      %3331 = vmatprep.mubr.f32.mxu0 0.0
      %3332 = vmatmul.mubr.f32.gmra.mrb[0].mxu0 %v3139
      %v3333 = vpop.f32.mrb[0].mxu0
      %v3334 = vadd.f32 0.0, %v3333
      %v3335 = vpop.f32.mrb[0].mxu0
      %3336 = vmatprep.mubr.f32.mxu0 0.0
      %3337 = vmatmul.mubr.f32.gmra.mrb[0].mxu0 %v3142
      %v3338 = vpop.f32.mrb[0].mxu0
      %v3339 = vadd.f32 0.0, %v3338
      %v3340 = vpop.f32.mrb[0].mxu0
      %3341 = vmatprep.mubr.f32.mxu0 0.0
      %3342 = vmatmul.mubr.f32.gmra.mrb[0].mxu0 %v3145
      %v3343 = vpop.f32.mrb[0].mxu0
      %v3344 = vadd.f32 0.0, %v3343
      %v3345 = vpop.f32.mrb[0].mxu0
      %3346 = vmatprep.mubr.f32.mxu0 0.0
      %3347 = vmatmul.mubr.f32.gmra.mrb[0].mxu0 %v3148
      %v3348 = vpop.f32.mrb[0].mxu0
      %v3349 = vadd.f32 0.0, %v3348
      %v3350 = vpop.f32.mrb[0].mxu0
      %3351 = vmatprep.mubr.f32.mxu0 0.0
      %3352 = vmatmul.mubr.f32.gmra.mrb[0].mxu0 %v3151
      %v3353 = vpop.f32.mrb[0].mxu0
      %v3354 = vadd.f32 0.0, %v3353
      %v3355 = vpop.f32.mrb[0].mxu0
      %3356 = vmatprep.mubr.f32.mxu0 0.0
      %3357 = vmatmul.mubr.f32.gmra.mrb[0].mxu0 %v3154
      %v3358 = vpop.f32.mrb[0].mxu0
      %v3359 = vadd.f32 0.0, %v3358
      %v3360 = vpop.f32.mrb[0].mxu0
      %3361 = vmatprep.mubr.f32.mxu0 0.0
      %3362 = vmatmul.mubr.f32.gmra.mrb[0].mxu0 %v3157
      %v3363 = vpop.f32.mrb[0].mxu0
      %v3364 = vadd.f32 0.0, %v3363
      %v3365 = vpop.f32.mrb[0].mxu0
      %3366 = vmatprep.mubr.f32.mxu0 0.0
      %3367 = vmatmul.mubr.f32.gmra.mrb[0].mxu0 %v3160
      %v3368 = vpop.f32.mrb[0].mxu0
      %v3369 = vadd.f32 0.0, %v3368
      %v3370 = vpop.f32.mrb[0].mxu0
      %3371 = vmatprep.mubr.f32.mxu0 0.0
      %3372 = vmatmul.mubr.f32.gmra.mrb[0].mxu0 %v3163
      %v3373 = vpop.f32.mrb[0].mxu0
      %v3374 = vadd.f32 0.0, %v3373
      %v3375 = vpop.f32.mrb[0].mxu0
      %3376 = vmatprep.mubr.f32.mxu0 0.0
      %3377 = vmatmul.mubr.f32.gmra.mrb[0].mxu0 %v3166
      %v3378 = vpop.f32.mrb[0].mxu0
      %v3379 = vadd.f32 0.0, %v3378
      %v3380 = vpop.f32.mrb[0].mxu0
      %3381 = vmatprep.mubr.f32.mxu0 0.0
      %3382 = vmatmul.mubr.f32.gmra.mrb[0].mxu0 %v3169
      %v3383 = vpop.f32.mrb[0].mxu0
      %v3384 = vadd.f32 0.0, %v3383
      %v3385 = vpop.f32.mrb[0].mxu0
      %3386 = vmatprep.mubr.f32.mxu0 0.0
      %3387 = vmatmul.mubr.f32.gmra.mrb[0].mxu0 %v3172
      %v3388 = vpop.f32.mrb[0].mxu0
      %v3389 = vadd.f32 0.0, %v3388
      %v3390 = vpop.f32.mrb[0].mxu0
      %3391 = vmatprep.mubr.f32.mxu0 0.0
      %3392 = vmatmul.mubr.f32.gmra.mrb[0].mxu0 %v3175
      %v3393 = vpop.f32.mrb[0].mxu0
      %v3394 = vadd.f32 0.0, %v3393
      %v3395 = vpop.f32.mrb[0].mxu0
      %3396 = vmatprep.mubr.f32.mxu0 0.0
      %3397 = vmatmul.mubr.f32.gmra.mrb[0].mxu0 %v3178
      %v3398 = vpop.f32.mrb[0].mxu0
      %v3399 = vadd.f32 0.0, %v3398
      %v3400 = vpop.f32.mrb[0].mxu0
      %3401 = vmatprep.mubr.f32.mxu0 0.0
      %3402 = vmatmul.mubr.f32.gmra.mrb[0].mxu0 %v3181
      %v3403 = vpop.f32.mrb[0].mxu0
      %v3404 = vadd.f32 0.0, %v3403
      %v3405 = vpop.f32.mrb[0].mxu0
      %3406 = vmatprep.mubr.f32.mxu0 0.0
      %3407 = vmatmul.mubr.f32.gmra.mrb[0].mxu0 %v3184
      %v3408 = vpop.f32.mrb[0].mxu0
      %v3409 = vadd.f32 0.0, %v3408
      %v3410 = vpop.f32.mrb[0].mxu0
      %3411 = vmatprep.mubr.f32.mxu0 0.0
      %3412 = vmatmul.mubr.f32.gmra.mrb[0].mxu0 %v3187
      %v3413 = vpop.f32.mrb[0].mxu0
      %v3414 = vadd.f32 0.0, %v3413
      %v3415 = vpop.f32.mrb[0].mxu0
      %3416 = vmatprep.mubr.f32.mxu0 0.0
      %3417 = vmatmul.mubr.f32.gmra.mrb[0].mxu0 %v3190
      %v3418 = vpop.f32.mrb[0].mxu0
      %v3419 = vadd.f32 0.0, %v3418
      %v3420 = vpop.f32.mrb[0].mxu0
      %3421 = vmatprep.mubr.f32.mxu0 0.0
      %3422 = vmatmul.mubr.f32.gmra.mrb[0].mxu0 %v3193
      %v3423 = vpop.f32.mrb[0].mxu0
      %v3424 = vadd.f32 0.0, %v3423
      %v3425 = vpop.f32.mrb[0].mxu0
      %3426 = vmatprep.mubr.f32.mxu0 0.0
      %3427 = vmatmul.mubr.f32.gmra.mrb[0].mxu0 %v3196
      %v3428 = vpop.f32.mrb[0].mxu0
      %v3429 = vadd.f32 0.0, %v3428
      %v3430 = vpop.f32.mrb[0].mxu0
      %3431 = vmatprep.mubr.f32.mxu0 0.0
      %3432 = vmatmul.mubr.f32.gmra.mrb[0].mxu0 %v3199
      %v3433 = vpop.f32.mrb[0].mxu0
      %v3434 = vadd.f32 0.0, %v3433
      %v3435 = vpop.f32.mrb[0].mxu0
      %3436 = vmatprep.mubr.f32.mxu0 0.0
      %3437 = vmatmul.mubr.f32.gmra.mrb[0].mxu0 %v3202
      %v3438 = vpop.f32.mrb[0].mxu0
      %v3439 = vadd.f32 0.0, %v3438
      %v3440 = vpop.f32.mrb[0].mxu0
      %3441 = vmatprep.mubr.f32.mxu0 0.0
      %3442 = vmatmul.mubr.f32.gmra.mrb[0].mxu0 %v3205
      %v3443 = vpop.f32.mrb[0].mxu0
      %v3444 = vadd.f32 0.0, %v3443
      %v3445 = vpop.f32.mrb[0].mxu0
      %3446 = vmatprep.mubr.f32.mxu0 0.0
      %3447 = vmatmul.mubr.f32.gmra.mrb[0].mxu0 %v3208
      %v3448 = vpop.f32.mrb[0].mxu0
      %v3449 = vadd.f32 0.0, %v3448
      %v3450 = vpop.f32.mrb[0].mxu0
      %3451 = vmatprep.mubr.f32.mxu0 0.0
      %3452 = vmatmul.mubr.f32.gmra.mrb[0].mxu0 %v3211
      %v3453 = vpop.f32.mrb[0].mxu0
      %v3454 = vadd.f32 0.0, %v3453
      %v3455 = vpop.f32.mrb[0].mxu0
      %3456 = vmatprep.mubr.f32.mxu0 0.0
      %3457 = vmatmul.mubr.f32.gmra.mrb[0].mxu0 %v3214
      %v3458 = vpop.f32.mrb[0].mxu0
      %v3459 = vadd.f32 0.0, %v3458
      %v3460 = vpop.f32.mrb[0].mxu0
      %3461 = vmatprep.mubr.f32.mxu0 0.0
      %3462 = vmatmul.mubr.f32.gmra.mrb[0].mxu0 %v3217
      %v3463 = vpop.f32.mrb[0].mxu0
      %v3464 = vadd.f32 0.0, %v3463
      %v3465 = vpop.f32.mrb[0].mxu0
      %3466 = vmatprep.mubr.f32.mxu0 0.0
      %3467 = vmatmul.mubr.f32.gmra.mrb[0].mxu0 %v3220
      %v3468 = vpop.f32.mrb[0].mxu0
      %v3469 = vadd.f32 0.0, %v3468
      %v3470 = vpop.f32.mrb[0].mxu0
      %3471 = vmatprep.mubr.f32.mxu0 0.0
      %3472 = vmatmul.mubr.f32.gmra.mrb[0].mxu0 %v3223
      %v3473 = vpop.f32.mrb[0].mxu0
      %v3474 = vadd.f32 0.0, %v3473
      %v3475 = vpop.f32.mrb[0].mxu0
      %3476 = vmatprep.mubr.f32.mxu0 0.0
      %3477 = vmatmul.mubr.f32.gmra.mrb[0].mxu0 %v3226
      %v3478 = vpop.f32.mrb[0].mxu0
      %v3479 = vadd.f32 0.0, %v3478
      %v3480 = vpop.f32.mrb[0].mxu0
      %3481 = vmatprep.mubr.f32.mxu0 0.0
      %3482 = vmatmul.mubr.f32.gmra.mrb[0].mxu0 %v3229
      %v3483 = vpop.f32.mrb[0].mxu0
      %v3484 = vadd.f32 0.0, %v3483
      %v3485 = vpop.f32.mrb[0].mxu0
      %3486 = vmatprep.mubr.f32.mxu0 0.0
      %3487 = vmatmul.mubr.f32.gmra.mrb[0].mxu0 %v3232
      %v3488 = vpop.f32.mrb[0].mxu0
      %v3489 = vadd.f32 0.0, %v3488
      %v3490 = vpop.f32.mrb[0].mxu0
      %3491 = vmatprep.mubr.f32.mxu0 0.0
      %3492 = vmatmul.mubr.f32.gmra.mrb[0].mxu0 %v3235
      %v3493 = vpop.f32.mrb[0].mxu0
      %v3494 = vadd.f32 0.0, %v3493
      %v3495 = vpop.f32.mrb[0].mxu0
      %3496 = vmatprep.mubr.f32.mxu0 0.0
      %3497 = vmatmul.mubr.f32.gmra.mrb[0].mxu0 %v3238
      %v3498 = vpop.f32.mrb[0].mxu0
      %v3499 = vadd.f32 0.0, %v3498
      %v3500 = vpop.f32.mrb[0].mxu0
      %3501 = vmatprep.mubr.f32.mxu0 0.0
      %3502 = vmatmul.mubr.f32.gmra.mrb[0].mxu0 %v3241
      %v3503 = vpop.f32.mrb[0].mxu0
      %v3504 = vadd.f32 0.0, %v3503
      %v3505 = vpop.f32.mrb[0].mxu0
      %3506 = vmatprep.mubr.f32.mxu0 0.0
      %3507 = vmatmul.mubr.f32.gmra.mrb[0].mxu0 %v3244
      %v3508 = vpop.f32.mrb[0].mxu0
      %v3509 = vadd.f32 0.0, %v3508
      %v3510 = vpop.f32.mrb[0].mxu0
      %3511 = vmatprep.mubr.f32.mxu0 0.0
      %3512 = vmatmul.mubr.f32.gmra.mrb[0].mxu0 %v3247
      %v3513 = vpop.f32.mrb[0].mxu0
      %v3514 = vadd.f32 0.0, %v3513
      %v3515 = vpop.f32.mrb[0].mxu0
      %3516 = vmatprep.mubr.f32.mxu0 0.0
      %3517 = vmatmul.mubr.f32.gmra.mrb[0].mxu0 %v3250
      %v3518 = vpop.f32.mrb[0].mxu0
      %v3519 = vadd.f32 0.0, %v3518
      %v3520 = vpop.f32.mrb[0].mxu0
      %3521 = vdwg.mxu0
      %v3522 = vadd.f32 %v3045, %v3319
      %v3523 = vadd.f32 %v3046, %v3324
      %v3524 = vadd.f32 %v3047, %v3329
      %v3525 = vadd.f32 %v3048, %v3334
      %v3526 = vadd.f32 %v3049, %v3339
      %v3527 = vadd.f32 %v3050, %v3344
      %v3528 = vadd.f32 %v3051, %v3349
      %v3529 = vadd.f32 %v3052, %v3354
      %v3530 = vadd.f32 %v3053, %v3359
      %v3531 = vadd.f32 %v3054, %v3364
      %v3532 = vadd.f32 %v3055, %v3369
      %v3533 = vadd.f32 %v3056, %v3374
      %v3534 = vadd.f32 %v3057, %v3379
      %v3535 = vadd.f32 %v3058, %v3384
      %v3536 = vadd.f32 %v3059, %v3389
      %v3537 = vadd.f32 %v3060, %v3394
      %v3538 = vadd.f32 %v3061, %v3399
      %v3539 = vadd.f32 %v3062, %v3404
      %v3540 = vadd.f32 %v3063, %v3409
      %v3541 = vadd.f32 %v3064, %v3414
      %v3542 = vadd.f32 %v3065, %v3419
      %v3543 = vadd.f32 %v3066, %v3424
      %v3544 = vadd.f32 %v3067, %v3429
      %v3545 = vadd.f32 %v3068, %v3434
      %v3546 = vadd.f32 %v3069, %v3439
      %v3547 = vadd.f32 %v3070, %v3444
      %v3548 = vadd.f32 %v3071, %v3449
      %v3549 = vadd.f32 %v3072, %v3454
      %v3550 = vadd.f32 %v3073, %v3459
      %v3551 = vadd.f32 %v3074, %v3464
      %v3552 = vadd.f32 %v3075, %v3469
      %v3553 = vadd.f32 %v3076, %v3474
      %v3554 = vadd.f32 %v3077, %v3479
      %v3555 = vadd.f32 %v3078, %v3484
      %v3556 = vadd.f32 %v3079, %v3489
      %v3557 = vadd.f32 %v3080, %v3494
      %v3558 = vadd.f32 %v3081, %v3499
      %v3559 = vadd.f32 %v3082, %v3504
      %v3560 = vadd.f32 %v3083, %v3509
      %v3561 = vadd.f32 %v3084, %v3514
      %v3562 = vadd.f32 %v3085, %v3519
      %v3563 = vld [vmem:[%s300 + $0x25] sm:$0xff]
      %v3564 = vld [vmem:[%s300 + $0x2d] sm:$0xff]
      %v3565 = vld [vmem:[%s300 + $0x35] sm:$0xff]
      %v3566 = vld [vmem:[%s300 + $0x3d] sm:$0xff]
      %v3567 = vld [vmem:[%s300 + $0x45] sm:$0xff]
      %v3568 = vld [vmem:[%s300 + $0x4d] sm:$0xff]
      %v3569 = vld [vmem:[%s300 + $0x55] sm:$0xff]
      %v3570 = vld [vmem:[%s300 + $0x5d] sm:$0xff]
      %v3571 = vld [vmem:[%s300 + $0x65] sm:$0xff]
      %v3572 = vld [vmem:[%s300 + $0x6d] sm:$0xff]
      %v3573 = vld [vmem:[%s300 + $0x75] sm:$0xff]
      %v3574 = vld [vmem:[%s300 + $0x7d] sm:$0xff]
      %v3575 = vld [vmem:[%s300 + $0x85] sm:$0xff]
      %v3576 = vld [vmem:[%s300 + $0x8d] sm:$0xff]
      %v3577 = vld [vmem:[%s300 + $0x95] sm:$0xff]
      %v3578 = vld [vmem:[%s300 + $0x9d] sm:$0xff]
      %v3579 = vld [vmem:[%s300 + $0xa5] sm:$0xff]
      %v3580 = vld [vmem:[%s300 + $0xad] sm:$0xff]
      %v3581 = vld [vmem:[%s300 + $0xb5] sm:$0xff]
      %v3582 = vld [vmem:[%s300 + $0xbd] sm:$0xff]
      %v3583 = vld [vmem:[%s300 + $0xc5] sm:$0xff]
      %v3584 = vld [vmem:[%s300 + $0xcd] sm:$0xff]
      %v3585 = vld [vmem:[%s300 + $0xd5] sm:$0xff]
      %v3586 = vld [vmem:[%s300 + $0xdd] sm:$0xff]
      %v3587 = vld [vmem:[%s300 + $0xe5] sm:$0xff]
      %v3588 = vld [vmem:[%s300 + $0xed] sm:$0xff]
      %v3589 = vld [vmem:[%s300 + $0xf5] sm:$0xff]
      %v3590 = vld [vmem:[%s300 + $0xfd] sm:$0xff]
      %v3591 = vld [vmem:[%s300 + $0x105] sm:$0xff]
      %v3592 = vld [vmem:[%s300 + $0x10d] sm:$0xff]
      %v3593 = vld [vmem:[%s300 + $0x115] sm:$0xff]
      %v3594 = vld [vmem:[%s300 + $0x11d] sm:$0xff]
      %v3595 = vld [vmem:[%s300 + $0x125] sm:$0xff]
      %v3596 = vld [vmem:[%s300 + $0x12d] sm:$0xff]
      %v3597 = vld [vmem:[%s300 + $0x135] sm:$0xff]
      %v3598 = vld [vmem:[%s300 + $0x13d] sm:$0xff]
      %v3599 = vld [vmem:[%s300 + $0x145] sm:$0xff]
      %v3600 = vld [vmem:[%s300 + $0x14d] sm:$0xff]
      %v3601 = vld [vmem:[%s300 + $0x155] sm:$0xff]
      %v3602 = vld [vmem:[%s300 + $0x15d] sm:$0xff]
      %v3603 = vld [vmem:[%s300 + $0x165] sm:$0xf]
      %s3604 = scalar_lea.vmem %s1, 56
      %v3605 = vld [vmem:[%s3604] sm:$0xff]
      %v3607 = vsel %vm391, %v3563, 0
      %v3610 = vsel %vm391, %v3564, 0
      %v3613 = vsel %vm391, %v3565, 0
      %v3616 = vsel %vm391, %v3566, 0
      %v3619 = vsel %vm391, %v3567, 0
      %v3622 = vsel %vm391, %v3568, 0
      %v3625 = vsel %vm391, %v3569, 0
      %v3628 = vsel %vm391, %v3570, 0
      %v3631 = vsel %vm391, %v3571, 0
      %v3634 = vsel %vm391, %v3572, 0
      %v3637 = vsel %vm391, %v3573, 0
      %v3640 = vsel %vm391, %v3574, 0
      %v3643 = vsel %vm391, %v3575, 0
      %v3646 = vsel %vm391, %v3576, 0
      %v3649 = vsel %vm391, %v3577, 0
      %v3652 = vsel %vm391, %v3578, 0
      %v3655 = vsel %vm391, %v3579, 0
      %v3658 = vsel %vm391, %v3580, 0
      %v3661 = vsel %vm391, %v3581, 0
      %v3664 = vsel %vm391, %v3582, 0
      %v3667 = vsel %vm391, %v3583, 0
      %v3670 = vsel %vm391, %v3584, 0
      %v3673 = vsel %vm391, %v3585, 0
      %v3676 = vsel %vm391, %v3586, 0
      %v3679 = vsel %vm391, %v3587, 0
      %v3682 = vsel %vm391, %v3588, 0
      %v3685 = vsel %vm391, %v3589, 0
      %v3688 = vsel %vm391, %v3590, 0
      %v3691 = vsel %vm391, %v3591, 0
      %v3694 = vsel %vm391, %v3592, 0
      %v3697 = vsel %vm391, %v3593, 0
      %v3700 = vsel %vm391, %v3594, 0
      %v3703 = vsel %vm391, %v3595, 0
      %v3706 = vsel %vm391, %v3596, 0
      %v3709 = vsel %vm391, %v3597, 0
      %v3712 = vsel %vm391, %v3598, 0
      %v3715 = vsel %vm391, %v3599, 0
      %v3718 = vsel %vm391, %v3600, 0
      %v3721 = vsel %vm391, %v3601, 0
      %v3724 = vsel %vm391, %v3602, 0
      %v3727 = vsel %vm391, %v3603, 0
      %3729 = vmatprep.subr.mxu0 0.0
      %3730 = vmatpush1.msra.mxu0 %v3605
      %3731 = vmatprep.subr.mxu0 0.0
      %3732 = vmatpush1.msra.mxu0 0.0
      %3733 = vmatprep.subr.mxu0 0.0
      %3734 = vmatpush1.msra.mxu0 0.0
      %3735 = vmatprep.subr.mxu0 0.0
      %3736 = vmatpush1.msra.mxu0 0.0
      %3737 = vmatprep.subr.mxu0 0.0
      %3738 = vmatpush1.msra.mxu0 0.0
      %3739 = vmatprep.subr.mxu0 0.0
      %3740 = vmatpush1.msra.mxu0 0.0
      %3741 = vmatprep.subr.mxu0 0.0
      %3742 = vmatpush1.msra.mxu0 0.0
      %3743 = vmatprep.subr.mxu0 0.0
      %3744 = vmatpush1.msra.mxu0 0.0
      %3745 = vmatprep.subr.mxu0 0.0
      %3746 = vmatpush1.msra.mxu0 0.0
      %3747 = vmatprep.subr.mxu0 0.0
      %3748 = vmatpush1.msra.mxu0 0.0
      %3749 = vmatprep.subr.mxu0 0.0
      %3750 = vmatpush1.msra.mxu0 0.0
      %3751 = vmatprep.subr.mxu0 0.0
      %3752 = vmatpush1.msra.mxu0 0.0
      %3753 = vmatprep.subr.mxu0 0.0
      %3754 = vmatpush1.msra.mxu0 0.0
      %3755 = vmatprep.subr.mxu0 0.0
      %3756 = vmatpush1.msra.mxu0 0.0
      %3757 = vmatprep.subr.mxu0 0.0
      %3758 = vmatpush1.msra.mxu0 0.0
      %3759 = vmatprep.subr.mxu0 0.0
      %3760 = vmatpush1.msra.mxu0 0.0
      %3761 = vmatprep.subr.mxu0 0.0
      %3762 = vmatpush1.msra.mxu0 0.0
      %3763 = vmatprep.subr.mxu0 0.0
      %3764 = vmatpush1.msra.mxu0 0.0
      %3765 = vmatprep.subr.mxu0 0.0
      %3766 = vmatpush1.msra.mxu0 0.0
      %3767 = vmatprep.subr.mxu0 0.0
      %3768 = vmatpush1.msra.mxu0 0.0
      %3769 = vmatprep.subr.mxu0 0.0
      %3770 = vmatpush1.msra.mxu0 0.0
      %3771 = vmatprep.subr.mxu0 0.0
      %3772 = vmatpush1.msra.mxu0 0.0
      %3773 = vmatprep.subr.mxu0 0.0
      %3774 = vmatpush1.msra.mxu0 0.0
      %3775 = vmatprep.subr.mxu0 0.0
      %3776 = vmatpush1.msra.mxu0 0.0
      %3777 = vmatprep.subr.mxu0 0.0
      %3778 = vmatpush1.msra.mxu0 0.0
      %3779 = vmatprep.subr.mxu0 0.0
      %3780 = vmatpush1.msra.mxu0 0.0
      %3781 = vmatprep.subr.mxu0 0.0
      %3782 = vmatpush1.msra.mxu0 0.0
      %3783 = vmatprep.subr.mxu0 0.0
      %3784 = vmatpush1.msra.mxu0 0.0
      %3785 = vmatprep.subr.mxu0 0.0
      %3786 = vmatpush1.msra.mxu0 0.0
      %3787 = vmatprep.subr.mxu0 0.0
      %3788 = vmatpush1.msra.mxu0 0.0
      %3789 = vmatprep.subr.mxu0 0.0
      %3790 = vmatpush1.msra.mxu0 0.0
      %3791 = vmatprep.subr.mxu0 0.0
      %3792 = vmatpush1.msra.mxu0 0.0
      %3793 = vmatprep.mubr.f32.mxu0 0.0
      %3794 = vmatmul.mubr.f32.gmra.mrb[0].mxu0 %v3607
      %v3795 = vpop.f32.mrb[0].mxu0
      %v3796 = vadd.f32 0.0, %v3795
      %v3797 = vpop.f32.mrb[0].mxu0
      %3798 = vmatprep.mubr.f32.mxu0 0.0
      %3799 = vmatmul.mubr.f32.gmra.mrb[0].mxu0 %v3610
      %v3800 = vpop.f32.mrb[0].mxu0
      %v3801 = vadd.f32 0.0, %v3800
      %v3802 = vpop.f32.mrb[0].mxu0
      %3803 = vmatprep.mubr.f32.mxu0 0.0
      %3804 = vmatmul.mubr.f32.gmra.mrb[0].mxu0 %v3613
      %v3805 = vpop.f32.mrb[0].mxu0
      %v3806 = vadd.f32 0.0, %v3805
      %v3807 = vpop.f32.mrb[0].mxu0
      %3808 = vmatprep.mubr.f32.mxu0 0.0
      %3809 = vmatmul.mubr.f32.gmra.mrb[0].mxu0 %v3616
      %v3810 = vpop.f32.mrb[0].mxu0
      %v3811 = vadd.f32 0.0, %v3810
      %v3812 = vpop.f32.mrb[0].mxu0
      %3813 = vmatprep.mubr.f32.mxu0 0.0
      %3814 = vmatmul.mubr.f32.gmra.mrb[0].mxu0 %v3619
      %v3815 = vpop.f32.mrb[0].mxu0
      %v3816 = vadd.f32 0.0, %v3815
      %v3817 = vpop.f32.mrb[0].mxu0
      %3818 = vmatprep.mubr.f32.mxu0 0.0
      %3819 = vmatmul.mubr.f32.gmra.mrb[0].mxu0 %v3622
      %v3820 = vpop.f32.mrb[0].mxu0
      %v3821 = vadd.f32 0.0, %v3820
      %v3822 = vpop.f32.mrb[0].mxu0
      %3823 = vmatprep.mubr.f32.mxu0 0.0
      %3824 = vmatmul.mubr.f32.gmra.mrb[0].mxu0 %v3625
      %v3825 = vpop.f32.mrb[0].mxu0
      %v3826 = vadd.f32 0.0, %v3825
      %v3827 = vpop.f32.mrb[0].mxu0
      %3828 = vmatprep.mubr.f32.mxu0 0.0
      %3829 = vmatmul.mubr.f32.gmra.mrb[0].mxu0 %v3628
      %v3830 = vpop.f32.mrb[0].mxu0
      %v3831 = vadd.f32 0.0, %v3830
      %v3832 = vpop.f32.mrb[0].mxu0
      %3833 = vmatprep.mubr.f32.mxu0 0.0
      %3834 = vmatmul.mubr.f32.gmra.mrb[0].mxu0 %v3631
      %v3835 = vpop.f32.mrb[0].mxu0
      %v3836 = vadd.f32 0.0, %v3835
      %v3837 = vpop.f32.mrb[0].mxu0
      %3838 = vmatprep.mubr.f32.mxu0 0.0
      %3839 = vmatmul.mubr.f32.gmra.mrb[0].mxu0 %v3634
      %v3840 = vpop.f32.mrb[0].mxu0
      %v3841 = vadd.f32 0.0, %v3840
      %v3842 = vpop.f32.mrb[0].mxu0
      %3843 = vmatprep.mubr.f32.mxu0 0.0
      %3844 = vmatmul.mubr.f32.gmra.mrb[0].mxu0 %v3637
      %v3845 = vpop.f32.mrb[0].mxu0
      %v3846 = vadd.f32 0.0, %v3845
      %v3847 = vpop.f32.mrb[0].mxu0
      %3848 = vmatprep.mubr.f32.mxu0 0.0
      %3849 = vmatmul.mubr.f32.gmra.mrb[0].mxu0 %v3640
      %v3850 = vpop.f32.mrb[0].mxu0
      %v3851 = vadd.f32 0.0, %v3850
      %v3852 = vpop.f32.mrb[0].mxu0
      %3853 = vmatprep.mubr.f32.mxu0 0.0
      %3854 = vmatmul.mubr.f32.gmra.mrb[0].mxu0 %v3643
      %v3855 = vpop.f32.mrb[0].mxu0
      %v3856 = vadd.f32 0.0, %v3855
      %v3857 = vpop.f32.mrb[0].mxu0
      %3858 = vmatprep.mubr.f32.mxu0 0.0
      %3859 = vmatmul.mubr.f32.gmra.mrb[0].mxu0 %v3646
      %v3860 = vpop.f32.mrb[0].mxu0
      %v3861 = vadd.f32 0.0, %v3860
      %v3862 = vpop.f32.mrb[0].mxu0
      %3863 = vmatprep.mubr.f32.mxu0 0.0
      %3864 = vmatmul.mubr.f32.gmra.mrb[0].mxu0 %v3649
      %v3865 = vpop.f32.mrb[0].mxu0
      %v3866 = vadd.f32 0.0, %v3865
      %v3867 = vpop.f32.mrb[0].mxu0
      %3868 = vmatprep.mubr.f32.mxu0 0.0
      %3869 = vmatmul.mubr.f32.gmra.mrb[0].mxu0 %v3652
      %v3870 = vpop.f32.mrb[0].mxu0
      %v3871 = vadd.f32 0.0, %v3870
      %v3872 = vpop.f32.mrb[0].mxu0
      %3873 = vmatprep.mubr.f32.mxu0 0.0
      %3874 = vmatmul.mubr.f32.gmra.mrb[0].mxu0 %v3655
      %v3875 = vpop.f32.mrb[0].mxu0
      %v3876 = vadd.f32 0.0, %v3875
      %v3877 = vpop.f32.mrb[0].mxu0
      %3878 = vmatprep.mubr.f32.mxu0 0.0
      %3879 = vmatmul.mubr.f32.gmra.mrb[0].mxu0 %v3658
      %v3880 = vpop.f32.mrb[0].mxu0
      %v3881 = vadd.f32 0.0, %v3880
      %v3882 = vpop.f32.mrb[0].mxu0
      %3883 = vmatprep.mubr.f32.mxu0 0.0
      %3884 = vmatmul.mubr.f32.gmra.mrb[0].mxu0 %v3661
      %v3885 = vpop.f32.mrb[0].mxu0
      %v3886 = vadd.f32 0.0, %v3885
      %v3887 = vpop.f32.mrb[0].mxu0
      %3888 = vmatprep.mubr.f32.mxu0 0.0
      %3889 = vmatmul.mubr.f32.gmra.mrb[0].mxu0 %v3664
      %v3890 = vpop.f32.mrb[0].mxu0
      %v3891 = vadd.f32 0.0, %v3890
      %v3892 = vpop.f32.mrb[0].mxu0
      %3893 = vmatprep.mubr.f32.mxu0 0.0
      %3894 = vmatmul.mubr.f32.gmra.mrb[0].mxu0 %v3667
      %v3895 = vpop.f32.mrb[0].mxu0
      %v3896 = vadd.f32 0.0, %v3895
      %v3897 = vpop.f32.mrb[0].mxu0
      %3898 = vmatprep.mubr.f32.mxu0 0.0
      %3899 = vmatmul.mubr.f32.gmra.mrb[0].mxu0 %v3670
      %v3900 = vpop.f32.mrb[0].mxu0
      %v3901 = vadd.f32 0.0, %v3900
      %v3902 = vpop.f32.mrb[0].mxu0
      %3903 = vmatprep.mubr.f32.mxu0 0.0
      %3904 = vmatmul.mubr.f32.gmra.mrb[0].mxu0 %v3673
      %v3905 = vpop.f32.mrb[0].mxu0
      %v3906 = vadd.f32 0.0, %v3905
      %v3907 = vpop.f32.mrb[0].mxu0
      %3908 = vmatprep.mubr.f32.mxu0 0.0
      %3909 = vmatmul.mubr.f32.gmra.mrb[0].mxu0 %v3676
      %v3910 = vpop.f32.mrb[0].mxu0
      %v3911 = vadd.f32 0.0, %v3910
      %v3912 = vpop.f32.mrb[0].mxu0
      %3913 = vmatprep.mubr.f32.mxu0 0.0
      %3914 = vmatmul.mubr.f32.gmra.mrb[0].mxu0 %v3679
      %v3915 = vpop.f32.mrb[0].mxu0
      %v3916 = vadd.f32 0.0, %v3915
      %v3917 = vpop.f32.mrb[0].mxu0
      %3918 = vmatprep.mubr.f32.mxu0 0.0
      %3919 = vmatmul.mubr.f32.gmra.mrb[0].mxu0 %v3682
      %v3920 = vpop.f32.mrb[0].mxu0
      %v3921 = vadd.f32 0.0, %v3920
      %v3922 = vpop.f32.mrb[0].mxu0
      %3923 = vmatprep.mubr.f32.mxu0 0.0
      %3924 = vmatmul.mubr.f32.gmra.mrb[0].mxu0 %v3685
      %v3925 = vpop.f32.mrb[0].mxu0
      %v3926 = vadd.f32 0.0, %v3925
      %v3927 = vpop.f32.mrb[0].mxu0
      %3928 = vmatprep.mubr.f32.mxu0 0.0
      %3929 = vmatmul.mubr.f32.gmra.mrb[0].mxu0 %v3688
      %v3930 = vpop.f32.mrb[0].mxu0
      %v3931 = vadd.f32 0.0, %v3930
      %v3932 = vpop.f32.mrb[0].mxu0
      %3933 = vmatprep.mubr.f32.mxu0 0.0
      %3934 = vmatmul.mubr.f32.gmra.mrb[0].mxu0 %v3691
      %v3935 = vpop.f32.mrb[0].mxu0
      %v3936 = vadd.f32 0.0, %v3935
      %v3937 = vpop.f32.mrb[0].mxu0
      %3938 = vmatprep.mubr.f32.mxu0 0.0
      %3939 = vmatmul.mubr.f32.gmra.mrb[0].mxu0 %v3694
      %v3940 = vpop.f32.mrb[0].mxu0
      %v3941 = vadd.f32 0.0, %v3940
      %v3942 = vpop.f32.mrb[0].mxu0
      %3943 = vmatprep.mubr.f32.mxu0 0.0
      %3944 = vmatmul.mubr.f32.gmra.mrb[0].mxu0 %v3697
      %v3945 = vpop.f32.mrb[0].mxu0
      %v3946 = vadd.f32 0.0, %v3945
      %v3947 = vpop.f32.mrb[0].mxu0
      %3948 = vmatprep.mubr.f32.mxu0 0.0
      %3949 = vmatmul.mubr.f32.gmra.mrb[0].mxu0 %v3700
      %v3950 = vpop.f32.mrb[0].mxu0
      %v3951 = vadd.f32 0.0, %v3950
      %v3952 = vpop.f32.mrb[0].mxu0
      %3953 = vmatprep.mubr.f32.mxu0 0.0
      %3954 = vmatmul.mubr.f32.gmra.mrb[0].mxu0 %v3703
      %v3955 = vpop.f32.mrb[0].mxu0
      %v3956 = vadd.f32 0.0, %v3955
      %v3957 = vpop.f32.mrb[0].mxu0
      %3958 = vmatprep.mubr.f32.mxu0 0.0
      %3959 = vmatmul.mubr.f32.gmra.mrb[0].mxu0 %v3706
      %v3960 = vpop.f32.mrb[0].mxu0
      %v3961 = vadd.f32 0.0, %v3960
      %v3962 = vpop.f32.mrb[0].mxu0
      %3963 = vmatprep.mubr.f32.mxu0 0.0
      %3964 = vmatmul.mubr.f32.gmra.mrb[0].mxu0 %v3709
      %v3965 = vpop.f32.mrb[0].mxu0
      %v3966 = vadd.f32 0.0, %v3965
      %v3967 = vpop.f32.mrb[0].mxu0
      %3968 = vmatprep.mubr.f32.mxu0 0.0
      %3969 = vmatmul.mubr.f32.gmra.mrb[0].mxu0 %v3712
      %v3970 = vpop.f32.mrb[0].mxu0
      %v3971 = vadd.f32 0.0, %v3970
      %v3972 = vpop.f32.mrb[0].mxu0
      %3973 = vmatprep.mubr.f32.mxu0 0.0
      %3974 = vmatmul.mubr.f32.gmra.mrb[0].mxu0 %v3715
      %v3975 = vpop.f32.mrb[0].mxu0
      %v3976 = vadd.f32 0.0, %v3975
      %v3977 = vpop.f32.mrb[0].mxu0
      %3978 = vmatprep.mubr.f32.mxu0 0.0
      %3979 = vmatmul.mubr.f32.gmra.mrb[0].mxu0 %v3718
      %v3980 = vpop.f32.mrb[0].mxu0
      %v3981 = vadd.f32 0.0, %v3980
      %v3982 = vpop.f32.mrb[0].mxu0
      %3983 = vmatprep.mubr.f32.mxu0 0.0
      %3984 = vmatmul.mubr.f32.gmra.mrb[0].mxu0 %v3721
      %v3985 = vpop.f32.mrb[0].mxu0
      %v3986 = vadd.f32 0.0, %v3985
      %v3987 = vpop.f32.mrb[0].mxu0
      %3988 = vmatprep.mubr.f32.mxu0 0.0
      %3989 = vmatmul.mubr.f32.gmra.mrb[0].mxu0 %v3724
      %v3990 = vpop.f32.mrb[0].mxu0
      %v3991 = vadd.f32 0.0, %v3990
      %v3992 = vpop.f32.mrb[0].mxu0
      %3993 = vmatprep.mubr.f32.mxu0 0.0
      %3994 = vmatmul.mubr.f32.gmra.mrb[0].mxu0 %v3727
      %v3995 = vpop.f32.mrb[0].mxu0
      %v3996 = vadd.f32 0.0, %v3995
      %v3997 = vpop.f32.mrb[0].mxu0
      %3998 = vdwg.mxu0
      %v3999 = vadd.f32 %v3522, %v3796
      %v4000 = vadd.f32 %v3523, %v3801
      %v4001 = vadd.f32 %v3524, %v3806
      %v4002 = vadd.f32 %v3525, %v3811
      %v4003 = vadd.f32 %v3526, %v3816
      %v4004 = vadd.f32 %v3527, %v3821
      %v4005 = vadd.f32 %v3528, %v3826
      %v4006 = vadd.f32 %v3529, %v3831
      %v4007 = vadd.f32 %v3530, %v3836
      %v4008 = vadd.f32 %v3531, %v3841
      %v4009 = vadd.f32 %v3532, %v3846
      %v4010 = vadd.f32 %v3533, %v3851
      %v4011 = vadd.f32 %v3534, %v3856
      %v4012 = vadd.f32 %v3535, %v3861
      %v4013 = vadd.f32 %v3536, %v3866
      %v4014 = vadd.f32 %v3537, %v3871
      %v4015 = vadd.f32 %v3538, %v3876
      %v4016 = vadd.f32 %v3539, %v3881
      %v4017 = vadd.f32 %v3540, %v3886
      %v4018 = vadd.f32 %v3541, %v3891
      %v4019 = vadd.f32 %v3542, %v3896
      %v4020 = vadd.f32 %v3543, %v3901
      %v4021 = vadd.f32 %v3544, %v3906
      %v4022 = vadd.f32 %v3545, %v3911
      %v4023 = vadd.f32 %v3546, %v3916
      %v4024 = vadd.f32 %v3547, %v3921
      %v4025 = vadd.f32 %v3548, %v3926
      %v4026 = vadd.f32 %v3549, %v3931
      %v4027 = vadd.f32 %v3550, %v3936
      %v4028 = vadd.f32 %v3551, %v3941
      %v4029 = vadd.f32 %v3552, %v3946
      %v4030 = vadd.f32 %v3553, %v3951
      %v4031 = vadd.f32 %v3554, %v3956
      %v4032 = vadd.f32 %v3555, %v3961
      %v4033 = vadd.f32 %v3556, %v3966
      %v4034 = vadd.f32 %v3557, %v3971
      %v4035 = vadd.f32 %v3558, %v3976
      %v4036 = vadd.f32 %v3559, %v3981
      %v4037 = vadd.f32 %v3560, %v3986
      %v4038 = vadd.f32 %v3561, %v3991
      %v4039 = vadd.f32 %v3562, %v3996
      %v4040 = vld [vmem:[%s300 + $0x26] sm:$0xff]
      %v4041 = vld [vmem:[%s300 + $0x2e] sm:$0xff]
      %v4042 = vld [vmem:[%s300 + $0x36] sm:$0xff]
      %v4043 = vld [vmem:[%s300 + $0x3e] sm:$0xff]
      %v4044 = vld [vmem:[%s300 + $0x46] sm:$0xff]
      %v4045 = vld [vmem:[%s300 + $0x4e] sm:$0xff]
      %v4046 = vld [vmem:[%s300 + $0x56] sm:$0xff]
      %v4047 = vld [vmem:[%s300 + $0x5e] sm:$0xff]
      %v4048 = vld [vmem:[%s300 + $0x66] sm:$0xff]
      %v4049 = vld [vmem:[%s300 + $0x6e] sm:$0xff]
      %v4050 = vld [vmem:[%s300 + $0x76] sm:$0xff]
      %v4051 = vld [vmem:[%s300 + $0x7e] sm:$0xff]
      %v4052 = vld [vmem:[%s300 + $0x86] sm:$0xff]
      %v4053 = vld [vmem:[%s300 + $0x8e] sm:$0xff]
      %v4054 = vld [vmem:[%s300 + $0x96] sm:$0xff]
      %v4055 = vld [vmem:[%s300 + $0x9e] sm:$0xff]
      %v4056 = vld [vmem:[%s300 + $0xa6] sm:$0xff]
      %v4057 = vld [vmem:[%s300 + $0xae] sm:$0xff]
      %v4058 = vld [vmem:[%s300 + $0xb6] sm:$0xff]
      %v4059 = vld [vmem:[%s300 + $0xbe] sm:$0xff]
      %v4060 = vld [vmem:[%s300 + $0xc6] sm:$0xff]
      %v4061 = vld [vmem:[%s300 + $0xce] sm:$0xff]
      %v4062 = vld [vmem:[%s300 + $0xd6] sm:$0xff]
      %v4063 = vld [vmem:[%s300 + $0xde] sm:$0xff]
      %v4064 = vld [vmem:[%s300 + $0xe6] sm:$0xff]
      %v4065 = vld [vmem:[%s300 + $0xee] sm:$0xff]
      %v4066 = vld [vmem:[%s300 + $0xf6] sm:$0xff]
      %v4067 = vld [vmem:[%s300 + $0xfe] sm:$0xff]
      %v4068 = vld [vmem:[%s300 + $0x106] sm:$0xff]
      %v4069 = vld [vmem:[%s300 + $0x10e] sm:$0xff]
      %v4070 = vld [vmem:[%s300 + $0x116] sm:$0xff]
      %v4071 = vld [vmem:[%s300 + $0x11e] sm:$0xff]
      %v4072 = vld [vmem:[%s300 + $0x126] sm:$0xff]
      %v4073 = vld [vmem:[%s300 + $0x12e] sm:$0xff]
      %v4074 = vld [vmem:[%s300 + $0x136] sm:$0xff]
      %v4075 = vld [vmem:[%s300 + $0x13e] sm:$0xff]
      %v4076 = vld [vmem:[%s300 + $0x146] sm:$0xff]
      %v4077 = vld [vmem:[%s300 + $0x14e] sm:$0xff]
      %v4078 = vld [vmem:[%s300 + $0x156] sm:$0xff]
      %v4079 = vld [vmem:[%s300 + $0x15e] sm:$0xff]
      %v4080 = vld [vmem:[%s300 + $0x166] sm:$0xf]
      %s4081 = scalar_lea.vmem %s1, 64
      %v4082 = vld [vmem:[%s4081] sm:$0xff]
      %v4084 = vsel %vm391, %v4040, 0
      %v4087 = vsel %vm391, %v4041, 0
      %v4090 = vsel %vm391, %v4042, 0
      %v4093 = vsel %vm391, %v4043, 0
      %v4096 = vsel %vm391, %v4044, 0
      %v4099 = vsel %vm391, %v4045, 0
      %v4102 = vsel %vm391, %v4046, 0
      %v4105 = vsel %vm391, %v4047, 0
      %v4108 = vsel %vm391, %v4048, 0
      %v4111 = vsel %vm391, %v4049, 0
      %v4114 = vsel %vm391, %v4050, 0
      %v4117 = vsel %vm391, %v4051, 0
      %v4120 = vsel %vm391, %v4052, 0
      %v4123 = vsel %vm391, %v4053, 0
      %v4126 = vsel %vm391, %v4054, 0
      %v4129 = vsel %vm391, %v4055, 0
      %v4132 = vsel %vm391, %v4056, 0
      %v4135 = vsel %vm391, %v4057, 0
      %v4138 = vsel %vm391, %v4058, 0
      %v4141 = vsel %vm391, %v4059, 0
      %v4144 = vsel %vm391, %v4060, 0
      %v4147 = vsel %vm391, %v4061, 0
      %v4150 = vsel %vm391, %v4062, 0
      %v4153 = vsel %vm391, %v4063, 0
      %v4156 = vsel %vm391, %v4064, 0
      %v4159 = vsel %vm391, %v4065, 0
      %v4162 = vsel %vm391, %v4066, 0
      %v4165 = vsel %vm391, %v4067, 0
      %v4168 = vsel %vm391, %v4068, 0
      %v4171 = vsel %vm391, %v4069, 0
      %v4174 = vsel %vm391, %v4070, 0
      %v4177 = vsel %vm391, %v4071, 0
      %v4180 = vsel %vm391, %v4072, 0
      %v4183 = vsel %vm391, %v4073, 0
      %v4186 = vsel %vm391, %v4074, 0
      %v4189 = vsel %vm391, %v4075, 0
      %v4192 = vsel %vm391, %v4076, 0
      %v4195 = vsel %vm391, %v4077, 0
      %v4198 = vsel %vm391, %v4078, 0
      %v4201 = vsel %vm391, %v4079, 0
      %v4204 = vsel %vm391, %v4080, 0
      %4206 = vmatprep.subr.mxu0 0.0
      %4207 = vmatpush1.msra.mxu0 %v4082
      %4208 = vmatprep.subr.mxu0 0.0
      %4209 = vmatpush1.msra.mxu0 0.0
      %4210 = vmatprep.subr.mxu0 0.0
      %4211 = vmatpush1.msra.mxu0 0.0
      %4212 = vmatprep.subr.mxu0 0.0
      %4213 = vmatpush1.msra.mxu0 0.0
      %4214 = vmatprep.subr.mxu0 0.0
      %4215 = vmatpush1.msra.mxu0 0.0
      %4216 = vmatprep.subr.mxu0 0.0
      %4217 = vmatpush1.msra.mxu0 0.0
      %4218 = vmatprep.subr.mxu0 0.0
      %4219 = vmatpush1.msra.mxu0 0.0
      %4220 = vmatprep.subr.mxu0 0.0
      %4221 = vmatpush1.msra.mxu0 0.0
      %4222 = vmatprep.subr.mxu0 0.0
      %4223 = vmatpush1.msra.mxu0 0.0
      %4224 = vmatprep.subr.mxu0 0.0
      %4225 = vmatpush1.msra.mxu0 0.0
      %4226 = vmatprep.subr.mxu0 0.0
      %4227 = vmatpush1.msra.mxu0 0.0
      %4228 = vmatprep.subr.mxu0 0.0
      %4229 = vmatpush1.msra.mxu0 0.0
      %4230 = vmatprep.subr.mxu0 0.0
      %4231 = vmatpush1.msra.mxu0 0.0
      %4232 = vmatprep.subr.mxu0 0.0
      %4233 = vmatpush1.msra.mxu0 0.0
      %4234 = vmatprep.subr.mxu0 0.0
      %4235 = vmatpush1.msra.mxu0 0.0
      %4236 = vmatprep.subr.mxu0 0.0
      %4237 = vmatpush1.msra.mxu0 0.0
      %4238 = vmatprep.subr.mxu0 0.0
      %4239 = vmatpush1.msra.mxu0 0.0
      %4240 = vmatprep.subr.mxu0 0.0
      %4241 = vmatpush1.msra.mxu0 0.0
      %4242 = vmatprep.subr.mxu0 0.0
      %4243 = vmatpush1.msra.mxu0 0.0
      %4244 = vmatprep.subr.mxu0 0.0
      %4245 = vmatpush1.msra.mxu0 0.0
      %4246 = vmatprep.subr.mxu0 0.0
      %4247 = vmatpush1.msra.mxu0 0.0
      %4248 = vmatprep.subr.mxu0 0.0
      %4249 = vmatpush1.msra.mxu0 0.0
      %4250 = vmatprep.subr.mxu0 0.0
      %4251 = vmatpush1.msra.mxu0 0.0
      %4252 = vmatprep.subr.mxu0 0.0
      %4253 = vmatpush1.msra.mxu0 0.0
      %4254 = vmatprep.subr.mxu0 0.0
      %4255 = vmatpush1.msra.mxu0 0.0
      %4256 = vmatprep.subr.mxu0 0.0
      %4257 = vmatpush1.msra.mxu0 0.0
      %4258 = vmatprep.subr.mxu0 0.0
      %4259 = vmatpush1.msra.mxu0 0.0
      %4260 = vmatprep.subr.mxu0 0.0
      %4261 = vmatpush1.msra.mxu0 0.0
      %4262 = vmatprep.subr.mxu0 0.0
      %4263 = vmatpush1.msra.mxu0 0.0
      %4264 = vmatprep.subr.mxu0 0.0
      %4265 = vmatpush1.msra.mxu0 0.0
      %4266 = vmatprep.subr.mxu0 0.0
      %4267 = vmatpush1.msra.mxu0 0.0
      %4268 = vmatprep.subr.mxu0 0.0
      %4269 = vmatpush1.msra.mxu0 0.0
      %4270 = vmatprep.mubr.f32.mxu0 0.0
      %4271 = vmatmul.mubr.f32.gmra.mrb[0].mxu0 %v4084
      %v4272 = vpop.f32.mrb[0].mxu0
      %v4273 = vadd.f32 0.0, %v4272
      %v4274 = vpop.f32.mrb[0].mxu0
      %4275 = vmatprep.mubr.f32.mxu0 0.0
      %4276 = vmatmul.mubr.f32.gmra.mrb[0].mxu0 %v4087
      %v4277 = vpop.f32.mrb[0].mxu0
      %v4278 = vadd.f32 0.0, %v4277
      %v4279 = vpop.f32.mrb[0].mxu0
      %4280 = vmatprep.mubr.f32.mxu0 0.0
      %4281 = vmatmul.mubr.f32.gmra.mrb[0].mxu0 %v4090
      %v4282 = vpop.f32.mrb[0].mxu0
      %v4283 = vadd.f32 0.0, %v4282
      %v4284 = vpop.f32.mrb[0].mxu0
      %4285 = vmatprep.mubr.f32.mxu0 0.0
      %4286 = vmatmul.mubr.f32.gmra.mrb[0].mxu0 %v4093
      %v4287 = vpop.f32.mrb[0].mxu0
      %v4288 = vadd.f32 0.0, %v4287
      %v4289 = vpop.f32.mrb[0].mxu0
      %4290 = vmatprep.mubr.f32.mxu0 0.0
      %4291 = vmatmul.mubr.f32.gmra.mrb[0].mxu0 %v4096
      %v4292 = vpop.f32.mrb[0].mxu0
      %v4293 = vadd.f32 0.0, %v4292
      %v4294 = vpop.f32.mrb[0].mxu0
      %4295 = vmatprep.mubr.f32.mxu0 0.0
      %4296 = vmatmul.mubr.f32.gmra.mrb[0].mxu0 %v4099
      %v4297 = vpop.f32.mrb[0].mxu0
      %v4298 = vadd.f32 0.0, %v4297
      %v4299 = vpop.f32.mrb[0].mxu0
      %4300 = vmatprep.mubr.f32.mxu0 0.0
      %4301 = vmatmul.mubr.f32.gmra.mrb[0].mxu0 %v4102
      %v4302 = vpop.f32.mrb[0].mxu0
      %v4303 = vadd.f32 0.0, %v4302
      %v4304 = vpop.f32.mrb[0].mxu0
      %4305 = vmatprep.mubr.f32.mxu0 0.0
      %4306 = vmatmul.mubr.f32.gmra.mrb[0].mxu0 %v4105
      %v4307 = vpop.f32.mrb[0].mxu0
      %v4308 = vadd.f32 0.0, %v4307
      %v4309 = vpop.f32.mrb[0].mxu0
      %4310 = vmatprep.mubr.f32.mxu0 0.0
      %4311 = vmatmul.mubr.f32.gmra.mrb[0].mxu0 %v4108
      %v4312 = vpop.f32.mrb[0].mxu0
      %v4313 = vadd.f32 0.0, %v4312
      %v4314 = vpop.f32.mrb[0].mxu0
      %4315 = vmatprep.mubr.f32.mxu0 0.0
      %4316 = vmatmul.mubr.f32.gmra.mrb[0].mxu0 %v4111
      %v4317 = vpop.f32.mrb[0].mxu0
      %v4318 = vadd.f32 0.0, %v4317
      %v4319 = vpop.f32.mrb[0].mxu0
      %4320 = vmatprep.mubr.f32.mxu0 0.0
      %4321 = vmatmul.mubr.f32.gmra.mrb[0].mxu0 %v4114
      %v4322 = vpop.f32.mrb[0].mxu0
      %v4323 = vadd.f32 0.0, %v4322
      %v4324 = vpop.f32.mrb[0].mxu0
      %4325 = vmatprep.mubr.f32.mxu0 0.0
      %4326 = vmatmul.mubr.f32.gmra.mrb[0].mxu0 %v4117
      %v4327 = vpop.f32.mrb[0].mxu0
      %v4328 = vadd.f32 0.0, %v4327
      %v4329 = vpop.f32.mrb[0].mxu0
      %4330 = vmatprep.mubr.f32.mxu0 0.0
      %4331 = vmatmul.mubr.f32.gmra.mrb[0].mxu0 %v4120
      %v4332 = vpop.f32.mrb[0].mxu0
      %v4333 = vadd.f32 0.0, %v4332
      %v4334 = vpop.f32.mrb[0].mxu0
      %4335 = vmatprep.mubr.f32.mxu0 0.0
      %4336 = vmatmul.mubr.f32.gmra.mrb[0].mxu0 %v4123
      %v4337 = vpop.f32.mrb[0].mxu0
      %v4338 = vadd.f32 0.0, %v4337
      %v4339 = vpop.f32.mrb[0].mxu0
      %4340 = vmatprep.mubr.f32.mxu0 0.0
      %4341 = vmatmul.mubr.f32.gmra.mrb[0].mxu0 %v4126
      %v4342 = vpop.f32.mrb[0].mxu0
      %v4343 = vadd.f32 0.0, %v4342
      %v4344 = vpop.f32.mrb[0].mxu0
      %4345 = vmatprep.mubr.f32.mxu0 0.0
      %4346 = vmatmul.mubr.f32.gmra.mrb[0].mxu0 %v4129
      %v4347 = vpop.f32.mrb[0].mxu0
      %v4348 = vadd.f32 0.0, %v4347
      %v4349 = vpop.f32.mrb[0].mxu0
      %4350 = vmatprep.mubr.f32.mxu0 0.0
      %4351 = vmatmul.mubr.f32.gmra.mrb[0].mxu0 %v4132
      %v4352 = vpop.f32.mrb[0].mxu0
      %v4353 = vadd.f32 0.0, %v4352
      %v4354 = vpop.f32.mrb[0].mxu0
      %4355 = vmatprep.mubr.f32.mxu0 0.0
      %4356 = vmatmul.mubr.f32.gmra.mrb[0].mxu0 %v4135
      %v4357 = vpop.f32.mrb[0].mxu0
      %v4358 = vadd.f32 0.0, %v4357
      %v4359 = vpop.f32.mrb[0].mxu0
      %4360 = vmatprep.mubr.f32.mxu0 0.0
      %4361 = vmatmul.mubr.f32.gmra.mrb[0].mxu0 %v4138
      %v4362 = vpop.f32.mrb[0].mxu0
      %v4363 = vadd.f32 0.0, %v4362
      %v4364 = vpop.f32.mrb[0].mxu0
      %4365 = vmatprep.mubr.f32.mxu0 0.0
      %4366 = vmatmul.mubr.f32.gmra.mrb[0].mxu0 %v4141
      %v4367 = vpop.f32.mrb[0].mxu0
      %v4368 = vadd.f32 0.0, %v4367
      %v4369 = vpop.f32.mrb[0].mxu0
      %4370 = vmatprep.mubr.f32.mxu0 0.0
      %4371 = vmatmul.mubr.f32.gmra.mrb[0].mxu0 %v4144
      %v4372 = vpop.f32.mrb[0].mxu0
      %v4373 = vadd.f32 0.0, %v4372
      %v4374 = vpop.f32.mrb[0].mxu0
      %4375 = vmatprep.mubr.f32.mxu0 0.0
      %4376 = vmatmul.mubr.f32.gmra.mrb[0].mxu0 %v4147
      %v4377 = vpop.f32.mrb[0].mxu0
      %v4378 = vadd.f32 0.0, %v4377
      %v4379 = vpop.f32.mrb[0].mxu0
      %4380 = vmatprep.mubr.f32.mxu0 0.0
      %4381 = vmatmul.mubr.f32.gmra.mrb[0].mxu0 %v4150
      %v4382 = vpop.f32.mrb[0].mxu0
      %v4383 = vadd.f32 0.0, %v4382
      %v4384 = vpop.f32.mrb[0].mxu0
      %4385 = vmatprep.mubr.f32.mxu0 0.0
      %4386 = vmatmul.mubr.f32.gmra.mrb[0].mxu0 %v4153
      %v4387 = vpop.f32.mrb[0].mxu0
      %v4388 = vadd.f32 0.0, %v4387
      %v4389 = vpop.f32.mrb[0].mxu0
      %4390 = vmatprep.mubr.f32.mxu0 0.0
      %4391 = vmatmul.mubr.f32.gmra.mrb[0].mxu0 %v4156
      %v4392 = vpop.f32.mrb[0].mxu0
      %v4393 = vadd.f32 0.0, %v4392
      %v4394 = vpop.f32.mrb[0].mxu0
      %4395 = vmatprep.mubr.f32.mxu0 0.0
      %4396 = vmatmul.mubr.f32.gmra.mrb[0].mxu0 %v4159
      %v4397 = vpop.f32.mrb[0].mxu0
      %v4398 = vadd.f32 0.0, %v4397
      %v4399 = vpop.f32.mrb[0].mxu0
      %4400 = vmatprep.mubr.f32.mxu0 0.0
      %4401 = vmatmul.mubr.f32.gmra.mrb[0].mxu0 %v4162
      %v4402 = vpop.f32.mrb[0].mxu0
      %v4403 = vadd.f32 0.0, %v4402
      %v4404 = vpop.f32.mrb[0].mxu0
      %4405 = vmatprep.mubr.f32.mxu0 0.0
      %4406 = vmatmul.mubr.f32.gmra.mrb[0].mxu0 %v4165
      %v4407 = vpop.f32.mrb[0].mxu0
      %v4408 = vadd.f32 0.0, %v4407
      %v4409 = vpop.f32.mrb[0].mxu0
      %4410 = vmatprep.mubr.f32.mxu0 0.0
      %4411 = vmatmul.mubr.f32.gmra.mrb[0].mxu0 %v4168
      %v4412 = vpop.f32.mrb[0].mxu0
      %v4413 = vadd.f32 0.0, %v4412
      %v4414 = vpop.f32.mrb[0].mxu0
      %4415 = vmatprep.mubr.f32.mxu0 0.0
      %4416 = vmatmul.mubr.f32.gmra.mrb[0].mxu0 %v4171
      %v4417 = vpop.f32.mrb[0].mxu0
      %v4418 = vadd.f32 0.0, %v4417
      %v4419 = vpop.f32.mrb[0].mxu0
      %4420 = vmatprep.mubr.f32.mxu0 0.0
      %4421 = vmatmul.mubr.f32.gmra.mrb[0].mxu0 %v4174
      %v4422 = vpop.f32.mrb[0].mxu0
      %v4423 = vadd.f32 0.0, %v4422
      %v4424 = vpop.f32.mrb[0].mxu0
      %4425 = vmatprep.mubr.f32.mxu0 0.0
      %4426 = vmatmul.mubr.f32.gmra.mrb[0].mxu0 %v4177
      %v4427 = vpop.f32.mrb[0].mxu0
      %v4428 = vadd.f32 0.0, %v4427
      %v4429 = vpop.f32.mrb[0].mxu0
      %4430 = vmatprep.mubr.f32.mxu0 0.0
      %4431 = vmatmul.mubr.f32.gmra.mrb[0].mxu0 %v4180
      %v4432 = vpop.f32.mrb[0].mxu0
      %v4433 = vadd.f32 0.0, %v4432
      %v4434 = vpop.f32.mrb[0].mxu0
      %4435 = vmatprep.mubr.f32.mxu0 0.0
      %4436 = vmatmul.mubr.f32.gmra.mrb[0].mxu0 %v4183
      %v4437 = vpop.f32.mrb[0].mxu0
      %v4438 = vadd.f32 0.0, %v4437
      %v4439 = vpop.f32.mrb[0].mxu0
      %4440 = vmatprep.mubr.f32.mxu0 0.0
      %4441 = vmatmul.mubr.f32.gmra.mrb[0].mxu0 %v4186
      %v4442 = vpop.f32.mrb[0].mxu0
      %v4443 = vadd.f32 0.0, %v4442
      %v4444 = vpop.f32.mrb[0].mxu0
      %4445 = vmatprep.mubr.f32.mxu0 0.0
      %4446 = vmatmul.mubr.f32.gmra.mrb[0].mxu0 %v4189
      %v4447 = vpop.f32.mrb[0].mxu0
      %v4448 = vadd.f32 0.0, %v4447
      %v4449 = vpop.f32.mrb[0].mxu0
      %4450 = vmatprep.mubr.f32.mxu0 0.0
      %4451 = vmatmul.mubr.f32.gmra.mrb[0].mxu0 %v4192
      %v4452 = vpop.f32.mrb[0].mxu0
      %v4453 = vadd.f32 0.0, %v4452
      %v4454 = vpop.f32.mrb[0].mxu0
      %4455 = vmatprep.mubr.f32.mxu0 0.0
      %4456 = vmatmul.mubr.f32.gmra.mrb[0].mxu0 %v4195
      %v4457 = vpop.f32.mrb[0].mxu0
      %v4458 = vadd.f32 0.0, %v4457
      %v4459 = vpop.f32.mrb[0].mxu0
      %4460 = vmatprep.mubr.f32.mxu0 0.0
      %4461 = vmatmul.mubr.f32.gmra.mrb[0].mxu0 %v4198
      %v4462 = vpop.f32.mrb[0].mxu0
      %v4463 = vadd.f32 0.0, %v4462
      %v4464 = vpop.f32.mrb[0].mxu0
      %4465 = vmatprep.mubr.f32.mxu0 0.0
      %4466 = vmatmul.mubr.f32.gmra.mrb[0].mxu0 %v4201
      %v4467 = vpop.f32.mrb[0].mxu0
      %v4468 = vadd.f32 0.0, %v4467
      %v4469 = vpop.f32.mrb[0].mxu0
      %4470 = vmatprep.mubr.f32.mxu0 0.0
      %4471 = vmatmul.mubr.f32.gmra.mrb[0].mxu0 %v4204
      %v4472 = vpop.f32.mrb[0].mxu0
      %v4473 = vadd.f32 0.0, %v4472
      %v4474 = vpop.f32.mrb[0].mxu0
      %4475 = vdwg.mxu0
      %v4476 = vadd.f32 %v3999, %v4273
      %v4477 = vadd.f32 %v4000, %v4278
      %v4478 = vadd.f32 %v4001, %v4283
      %v4479 = vadd.f32 %v4002, %v4288
      %v4480 = vadd.f32 %v4003, %v4293
      %v4481 = vadd.f32 %v4004, %v4298
      %v4482 = vadd.f32 %v4005, %v4303
      %v4483 = vadd.f32 %v4006, %v4308
      %v4484 = vadd.f32 %v4007, %v4313
      %v4485 = vadd.f32 %v4008, %v4318
      %v4486 = vadd.f32 %v4009, %v4323
      %v4487 = vadd.f32 %v4010, %v4328
      %v4488 = vadd.f32 %v4011, %v4333
      %v4489 = vadd.f32 %v4012, %v4338
      %v4490 = vadd.f32 %v4013, %v4343
      %v4491 = vadd.f32 %v4014, %v4348
      %v4492 = vadd.f32 %v4015, %v4353
      %v4493 = vadd.f32 %v4016, %v4358
      %v4494 = vadd.f32 %v4017, %v4363
      %v4495 = vadd.f32 %v4018, %v4368
      %v4496 = vadd.f32 %v4019, %v4373
      %v4497 = vadd.f32 %v4020, %v4378
      %v4498 = vadd.f32 %v4021, %v4383
      %v4499 = vadd.f32 %v4022, %v4388
      %v4500 = vadd.f32 %v4023, %v4393
      %v4501 = vadd.f32 %v4024, %v4398
      %v4502 = vadd.f32 %v4025, %v4403
      %v4503 = vadd.f32 %v4026, %v4408
      %v4504 = vadd.f32 %v4027, %v4413
      %v4505 = vadd.f32 %v4028, %v4418
      %v4506 = vadd.f32 %v4029, %v4423
      %v4507 = vadd.f32 %v4030, %v4428
      %v4508 = vadd.f32 %v4031, %v4433
      %v4509 = vadd.f32 %v4032, %v4438
      %v4510 = vadd.f32 %v4033, %v4443
      %v4511 = vadd.f32 %v4034, %v4448
      %v4512 = vadd.f32 %v4035, %v4453
      %v4513 = vadd.f32 %v4036, %v4458
      %v4514 = vadd.f32 %v4037, %v4463
      %v4515 = vadd.f32 %v4038, %v4468
      %v4516 = vadd.f32 %v4039, %v4473
      %v4517 = vld [vmem:[%s2] sm:$0x1]
      %v4519 = vlaneseq
      %v4520 = vshrl.u32 %v4519, 7
      %v4521 = vsub.s32 0, %v4520
      %v4522 = vrot.slane %v4517, %v4521
      %v4524 = vmul.f32 %v4476, %v4522
      %v4525 = vmul.f32 %v4477, %v4522
      %v4526 = vmul.f32 %v4478, %v4522
      %v4527 = vmul.f32 %v4479, %v4522
      %v4528 = vmul.f32 %v4480, %v4522
      %v4529 = vmul.f32 %v4481, %v4522
      %v4530 = vmul.f32 %v4482, %v4522
      %v4531 = vmul.f32 %v4483, %v4522
      %v4532 = vmul.f32 %v4484, %v4522
      %v4533 = vmul.f32 %v4485, %v4522
      %v4534 = vmul.f32 %v4486, %v4522
      %v4535 = vmul.f32 %v4487, %v4522
      %v4536 = vmul.f32 %v4488, %v4522
      %v4537 = vmul.f32 %v4489, %v4522
      %v4538 = vmul.f32 %v4490, %v4522
      %v4539 = vmul.f32 %v4491, %v4522
      %v4540 = vmul.f32 %v4492, %v4522
      %v4541 = vmul.f32 %v4493, %v4522
      %v4542 = vmul.f32 %v4494, %v4522
      %v4543 = vmul.f32 %v4495, %v4522
      %v4544 = vmul.f32 %v4496, %v4522
      %v4545 = vmul.f32 %v4497, %v4522
      %v4546 = vmul.f32 %v4498, %v4522
      %v4547 = vmul.f32 %v4499, %v4522
      %v4548 = vmul.f32 %v4500, %v4522
      %v4549 = vmul.f32 %v4501, %v4522
      %v4550 = vmul.f32 %v4502, %v4522
      %v4551 = vmul.f32 %v4503, %v4522
      %v4552 = vmul.f32 %v4504, %v4522
      %v4553 = vmul.f32 %v4505, %v4522
      %v4554 = vmul.f32 %v4506, %v4522
      %v4555 = vmul.f32 %v4507, %v4522
      %v4556 = vmul.f32 %v4508, %v4522
      %v4557 = vmul.f32 %v4509, %v4522
      %v4558 = vmul.f32 %v4510, %v4522
      %v4559 = vmul.f32 %v4511, %v4522
      %v4560 = vmul.f32 %v4512, %v4522
      %v4561 = vmul.f32 %v4513, %v4522
      %v4562 = vmul.f32 %v4514, %v4522
      %v4563 = vmul.f32 %v4515, %v4522
      %v4564 = vmul.f32 %v4516, %v4522
      %v4565 = vld [vmem:[%s3] sm:$0x1]
      %v4567 = vlaneseq
      %v4568 = vshrl.u32 %v4567, 7
      %v4569 = vsub.s32 0, %v4568
      %v4570 = vrot.slane %v4565, %v4569
      %v4572 = vadd.f32 %v4524, %v4570
      %v4573 = vadd.f32 %v4525, %v4570
      %v4574 = vadd.f32 %v4526, %v4570
      %v4575 = vadd.f32 %v4527, %v4570
      %v4576 = vadd.f32 %v4528, %v4570
      %v4577 = vadd.f32 %v4529, %v4570
      %v4578 = vadd.f32 %v4530, %v4570
      %v4579 = vadd.f32 %v4531, %v4570
      %v4580 = vadd.f32 %v4532, %v4570
      %v4581 = vadd.f32 %v4533, %v4570
      %v4582 = vadd.f32 %v4534, %v4570
      %v4583 = vadd.f32 %v4535, %v4570
      %v4584 = vadd.f32 %v4536, %v4570
      %v4585 = vadd.f32 %v4537, %v4570
      %v4586 = vadd.f32 %v4538, %v4570
      %v4587 = vadd.f32 %v4539, %v4570
      %v4588 = vadd.f32 %v4540, %v4570
      %v4589 = vadd.f32 %v4541, %v4570
      %v4590 = vadd.f32 %v4542, %v4570
      %v4591 = vadd.f32 %v4543, %v4570
      %v4592 = vadd.f32 %v4544, %v4570
      %v4593 = vadd.f32 %v4545, %v4570
      %v4594 = vadd.f32 %v4546, %v4570
      %v4595 = vadd.f32 %v4547, %v4570
      %v4596 = vadd.f32 %v4548, %v4570
      %v4597 = vadd.f32 %v4549, %v4570
      %v4598 = vadd.f32 %v4550, %v4570
      %v4599 = vadd.f32 %v4551, %v4570
      %v4600 = vadd.f32 %v4552, %v4570
      %v4601 = vadd.f32 %v4553, %v4570
      %v4602 = vadd.f32 %v4554, %v4570
      %v4603 = vadd.f32 %v4555, %v4570
      %v4604 = vadd.f32 %v4556, %v4570
      %v4605 = vadd.f32 %v4557, %v4570
      %v4606 = vadd.f32 %v4558, %v4570
      %v4607 = vadd.f32 %v4559, %v4570
      %v4608 = vadd.f32 %v4560, %v4570
      %v4609 = vadd.f32 %v4561, %v4570
      %v4610 = vadd.f32 %v4562, %v4570
      %v4611 = vadd.f32 %v4563, %v4570
      %v4612 = vadd.f32 %v4564, %v4570
      %v4613 = vmax.f32 %v4572, 0.0
      %v4614 = vmax.f32 %v4573, 0.0
      %v4615 = vmax.f32 %v4574, 0.0
      %v4616 = vmax.f32 %v4575, 0.0
      %v4617 = vmax.f32 %v4576, 0.0
      %v4618 = vmax.f32 %v4577, 0.0
      %v4619 = vmax.f32 %v4578, 0.0
      %v4620 = vmax.f32 %v4579, 0.0
      %v4621 = vmax.f32 %v4580, 0.0
      %v4622 = vmax.f32 %v4581, 0.0
      %v4623 = vmax.f32 %v4582, 0.0
      %v4624 = vmax.f32 %v4583, 0.0
      %v4625 = vmax.f32 %v4584, 0.0
      %v4626 = vmax.f32 %v4585, 0.0
      %v4627 = vmax.f32 %v4586, 0.0
      %v4628 = vmax.f32 %v4587, 0.0
      %v4629 = vmax.f32 %v4588, 0.0
      %v4630 = vmax.f32 %v4589, 0.0
      %v4631 = vmax.f32 %v4590, 0.0
      %v4632 = vmax.f32 %v4591, 0.0
      %v4633 = vmax.f32 %v4592, 0.0
      %v4634 = vmax.f32 %v4593, 0.0
      %v4635 = vmax.f32 %v4594, 0.0
      %v4636 = vmax.f32 %v4595, 0.0
      %v4637 = vmax.f32 %v4596, 0.0
      %v4638 = vmax.f32 %v4597, 0.0
      %v4639 = vmax.f32 %v4598, 0.0
      %v4640 = vmax.f32 %v4599, 0.0
      %v4641 = vmax.f32 %v4600, 0.0
      %v4642 = vmax.f32 %v4601, 0.0
      %v4643 = vmax.f32 %v4602, 0.0
      %v4644 = vmax.f32 %v4603, 0.0
      %v4645 = vmax.f32 %v4604, 0.0
      %v4646 = vmax.f32 %v4605, 0.0
      %v4647 = vmax.f32 %v4606, 0.0
      %v4648 = vmax.f32 %v4607, 0.0
      %v4649 = vmax.f32 %v4608, 0.0
      %v4650 = vmax.f32 %v4609, 0.0
      %v4651 = vmax.f32 %v4610, 0.0
      %v4652 = vmax.f32 %v4611, 0.0
      %v4653 = vmax.f32 %v4612, 0.0
      %v4654 = vld [vmem:[%s7] sm:$0xff]
      %v4655 = vld [vmem:[%s7 + $0x8] sm:$0xff]
      %v4656 = vld [vmem:[%s7 + $0x10] sm:$0xff]
      %v4657 = vld [vmem:[%s7 + $0x18] sm:$0xff]
      %v4658 = vld [vmem:[%s7 + $0x20] sm:$0xff]
      %v4659 = vld [vmem:[%s7 + $0x28] sm:$0xff]
      %v4660 = vld [vmem:[%s7 + $0x30] sm:$0xff]
      %v4661 = vld [vmem:[%s7 + $0x38] sm:$0xff]
      %v4662 = vld [vmem:[%s7 + $0x40] sm:$0xff]
      %v4663 = vld [vmem:[%s7 + $0x48] sm:$0xff]
      %v4664 = vld [vmem:[%s7 + $0x50] sm:$0xff]
      %v4665 = vld [vmem:[%s7 + $0x58] sm:$0xff]
      %v4666 = vld [vmem:[%s7 + $0x60] sm:$0xff]
      %v4667 = vld [vmem:[%s7 + $0x68] sm:$0xff]
      %v4668 = vld [vmem:[%s7 + $0x70] sm:$0xff]
      %v4669 = vld [vmem:[%s7 + $0x78] sm:$0xff]
      %v4670 = vld [vmem:[%s7 + $0x80] sm:$0xff]
      %v4671 = vld [vmem:[%s7 + $0x88] sm:$0xff]
      %v4672 = vld [vmem:[%s7 + $0x90] sm:$0xff]
      %v4673 = vld [vmem:[%s7 + $0x98] sm:$0xff]
      %v4674 = vld [vmem:[%s7 + $0xa0] sm:$0xff]
      %v4675 = vld [vmem:[%s7 + $0xa8] sm:$0xff]
      %v4676 = vld [vmem:[%s7 + $0xb0] sm:$0xff]
      %v4677 = vld [vmem:[%s7 + $0xb8] sm:$0xff]
      %v4678 = vld [vmem:[%s7 + $0xc0] sm:$0xff]
      %v4679 = vld [vmem:[%s7 + $0xc8] sm:$0xff]
      %v4680 = vld [vmem:[%s7 + $0xd0] sm:$0xff]
      %v4681 = vld [vmem:[%s7 + $0xd8] sm:$0xff]
      %v4682 = vld [vmem:[%s7 + $0xe0] sm:$0xff]
      %v4683 = vld [vmem:[%s7 + $0xe8] sm:$0xff]
      %v4684 = vld [vmem:[%s7 + $0xf0] sm:$0xff]
      %v4685 = vld [vmem:[%s7 + $0xf8] sm:$0xff]
      %v4686 = vld [vmem:[%s7 + $0x100] sm:$0xff]
      %v4687 = vld [vmem:[%s7 + $0x108] sm:$0xff]
      %v4688 = vld [vmem:[%s7 + $0x110] sm:$0xff]
      %v4689 = vld [vmem:[%s7 + $0x118] sm:$0xff]
      %v4690 = vld [vmem:[%s7 + $0x120] sm:$0xff]
      %v4691 = vld [vmem:[%s7 + $0x128] sm:$0xff]
      %v4692 = vld [vmem:[%s7 + $0x130] sm:$0xff]
      %v4693 = vld [vmem:[%s7 + $0x138] sm:$0xff]
      %v4694 = vld [vmem:[%s7 + $0x140] sm:$0xf]
      %4696 = vset.pattern.permute.xlu0 0
      %4697 = vperm.xlu0 %4696, %v4654
      %v4698 = vpop.permute.xlu0 %4697
      %4701 = vset.pattern.permute.xlu0 0
      %4702 = vperm.xlu0 %4701, %v4655
      %v4703 = vpop.permute.xlu0 %4702
      %4706 = vset.pattern.permute.xlu0 0
      %4707 = vperm.xlu0 %4706, %v4656
      %v4708 = vpop.permute.xlu0 %4707
      %4711 = vset.pattern.permute.xlu0 0
      %4712 = vperm.xlu0 %4711, %v4657
      %v4713 = vpop.permute.xlu0 %4712
      %4716 = vset.pattern.permute.xlu0 0
      %4717 = vperm.xlu0 %4716, %v4658
      %v4718 = vpop.permute.xlu0 %4717
      %4721 = vset.pattern.permute.xlu0 0
      %4722 = vperm.xlu0 %4721, %v4659
      %v4723 = vpop.permute.xlu0 %4722
      %4726 = vset.pattern.permute.xlu0 0
      %4727 = vperm.xlu0 %4726, %v4660
      %v4728 = vpop.permute.xlu0 %4727
      %4731 = vset.pattern.permute.xlu0 0
      %4732 = vperm.xlu0 %4731, %v4661
      %v4733 = vpop.permute.xlu0 %4732
      %4736 = vset.pattern.permute.xlu0 0
      %4737 = vperm.xlu0 %4736, %v4662
      %v4738 = vpop.permute.xlu0 %4737
      %4741 = vset.pattern.permute.xlu0 0
      %4742 = vperm.xlu0 %4741, %v4663
      %v4743 = vpop.permute.xlu0 %4742
      %4746 = vset.pattern.permute.xlu0 0
      %4747 = vperm.xlu0 %4746, %v4664
      %v4748 = vpop.permute.xlu0 %4747
      %4751 = vset.pattern.permute.xlu0 0
      %4752 = vperm.xlu0 %4751, %v4665
      %v4753 = vpop.permute.xlu0 %4752
      %4756 = vset.pattern.permute.xlu0 0
      %4757 = vperm.xlu0 %4756, %v4666
      %v4758 = vpop.permute.xlu0 %4757
      %4761 = vset.pattern.permute.xlu0 0
      %4762 = vperm.xlu0 %4761, %v4667
      %v4763 = vpop.permute.xlu0 %4762
      %4766 = vset.pattern.permute.xlu0 0
      %4767 = vperm.xlu0 %4766, %v4668
      %v4768 = vpop.permute.xlu0 %4767
      %4771 = vset.pattern.permute.xlu0 0
      %4772 = vperm.xlu0 %4771, %v4669
      %v4773 = vpop.permute.xlu0 %4772
      %4776 = vset.pattern.permute.xlu0 0
      %4777 = vperm.xlu0 %4776, %v4670
      %v4778 = vpop.permute.xlu0 %4777
      %4781 = vset.pattern.permute.xlu0 0
      %4782 = vperm.xlu0 %4781, %v4671
      %v4783 = vpop.permute.xlu0 %4782
      %4786 = vset.pattern.permute.xlu0 0
      %4787 = vperm.xlu0 %4786, %v4672
      %v4788 = vpop.permute.xlu0 %4787
      %4791 = vset.pattern.permute.xlu0 0
      %4792 = vperm.xlu0 %4791, %v4673
      %v4793 = vpop.permute.xlu0 %4792
      %4796 = vset.pattern.permute.xlu0 0
      %4797 = vperm.xlu0 %4796, %v4674
      %v4798 = vpop.permute.xlu0 %4797
      %4801 = vset.pattern.permute.xlu0 0
      %4802 = vperm.xlu0 %4801, %v4675
      %v4803 = vpop.permute.xlu0 %4802
      %4806 = vset.pattern.permute.xlu0 0
      %4807 = vperm.xlu0 %4806, %v4676
      %v4808 = vpop.permute.xlu0 %4807
      %4811 = vset.pattern.permute.xlu0 0
      %4812 = vperm.xlu0 %4811, %v4677
      %v4813 = vpop.permute.xlu0 %4812
      %4816 = vset.pattern.permute.xlu0 0
      %4817 = vperm.xlu0 %4816, %v4678
      %v4818 = vpop.permute.xlu0 %4817
      %4821 = vset.pattern.permute.xlu0 0
      %4822 = vperm.xlu0 %4821, %v4679
      %v4823 = vpop.permute.xlu0 %4822
      %4826 = vset.pattern.permute.xlu0 0
      %4827 = vperm.xlu0 %4826, %v4680
      %v4828 = vpop.permute.xlu0 %4827
      %4831 = vset.pattern.permute.xlu0 0
      %4832 = vperm.xlu0 %4831, %v4681
      %v4833 = vpop.permute.xlu0 %4832
      %4836 = vset.pattern.permute.xlu0 0
      %4837 = vperm.xlu0 %4836, %v4682
      %v4838 = vpop.permute.xlu0 %4837
      %4841 = vset.pattern.permute.xlu0 0
      %4842 = vperm.xlu0 %4841, %v4683
      %v4843 = vpop.permute.xlu0 %4842
      %4846 = vset.pattern.permute.xlu0 0
      %4847 = vperm.xlu0 %4846, %v4684
      %v4848 = vpop.permute.xlu0 %4847
      %4851 = vset.pattern.permute.xlu0 0
      %4852 = vperm.xlu0 %4851, %v4685
      %v4853 = vpop.permute.xlu0 %4852
      %4856 = vset.pattern.permute.xlu0 0
      %4857 = vperm.xlu0 %4856, %v4686
      %v4858 = vpop.permute.xlu0 %4857
      %4861 = vset.pattern.permute.xlu0 0
      %4862 = vperm.xlu0 %4861, %v4687
      %v4863 = vpop.permute.xlu0 %4862
      %4866 = vset.pattern.permute.xlu0 0
      %4867 = vperm.xlu0 %4866, %v4688
      %v4868 = vpop.permute.xlu0 %4867
      %4871 = vset.pattern.permute.xlu0 0
      %4872 = vperm.xlu0 %4871, %v4689
      %v4873 = vpop.permute.xlu0 %4872
      %4876 = vset.pattern.permute.xlu0 0
      %4877 = vperm.xlu0 %4876, %v4690
      %v4878 = vpop.permute.xlu0 %4877
      %4881 = vset.pattern.permute.xlu0 0
      %4882 = vperm.xlu0 %4881, %v4691
      %v4883 = vpop.permute.xlu0 %4882
      %4886 = vset.pattern.permute.xlu0 0
      %4887 = vperm.xlu0 %4886, %v4692
      %v4888 = vpop.permute.xlu0 %4887
      %4891 = vset.pattern.permute.xlu0 0
      %4892 = vperm.xlu0 %4891, %v4693
      %v4893 = vpop.permute.xlu0 %4892
      %4896 = vset.pattern.permute.xlu0 0
      %4897 = vperm.xlu0 %4896, %v4694
      %v4898 = vpop.permute.xlu0 %4897
      %v4900 = vmul.f32 %v4613, %v4698
      %v4901 = vmul.f32 %v4614, %v4703
      %v4902 = vmul.f32 %v4615, %v4708
      %v4903 = vmul.f32 %v4616, %v4713
      %v4904 = vmul.f32 %v4617, %v4718
      %v4905 = vmul.f32 %v4618, %v4723
      %v4906 = vmul.f32 %v4619, %v4728
      %v4907 = vmul.f32 %v4620, %v4733
      %v4908 = vmul.f32 %v4621, %v4738
      %v4909 = vmul.f32 %v4622, %v4743
      %v4910 = vmul.f32 %v4623, %v4748
      %v4911 = vmul.f32 %v4624, %v4753
      %v4912 = vmul.f32 %v4625, %v4758
      %v4913 = vmul.f32 %v4626, %v4763
      %v4914 = vmul.f32 %v4627, %v4768
      %v4915 = vmul.f32 %v4628, %v4773
      %v4916 = vmul.f32 %v4629, %v4778
      %v4917 = vmul.f32 %v4630, %v4783
      %v4918 = vmul.f32 %v4631, %v4788
      %v4919 = vmul.f32 %v4632, %v4793
      %v4920 = vmul.f32 %v4633, %v4798
      %v4921 = vmul.f32 %v4634, %v4803
      %v4922 = vmul.f32 %v4635, %v4808
      %v4923 = vmul.f32 %v4636, %v4813
      %v4924 = vmul.f32 %v4637, %v4818
      %v4925 = vmul.f32 %v4638, %v4823
      %v4926 = vmul.f32 %v4639, %v4828
      %v4927 = vmul.f32 %v4640, %v4833
      %v4928 = vmul.f32 %v4641, %v4838
      %v4929 = vmul.f32 %v4642, %v4843
      %v4930 = vmul.f32 %v4643, %v4848
      %v4931 = vmul.f32 %v4644, %v4853
      %v4932 = vmul.f32 %v4645, %v4858
      %v4933 = vmul.f32 %v4646, %v4863
      %v4934 = vmul.f32 %v4647, %v4868
      %v4935 = vmul.f32 %v4648, %v4873
      %v4936 = vmul.f32 %v4649, %v4878
      %v4937 = vmul.f32 %v4650, %v4883
      %v4938 = vmul.f32 %v4651, %v4888
      %v4939 = vmul.f32 %v4652, %v4893
      %v4940 = vmul.f32 %v4653, %v4898
      %4941 = vst.msk [vmem:[#allocation2] sm:$0xff] %vm391, 0.0
      %4942 = vst.msk [vmem:[#allocation2 + $0x8] sm:$0xff] %vm391, 0.0
      %4943 = vst.msk [vmem:[#allocation2 + $0x10] sm:$0xff] %vm391, 0.0
      %4944 = vst.msk [vmem:[#allocation2 + $0x18] sm:$0xff] %vm391, 0.0
      %4945 = vst.msk [vmem:[#allocation2 + $0x20] sm:$0xff] %vm391, 0.0
      %4946 = vst.msk [vmem:[#allocation2 + $0x28] sm:$0xff] %vm391, 0.0
      %4947 = vst.msk [vmem:[#allocation2 + $0x30] sm:$0xff] %vm391, 0.0
      %4948 = vst.msk [vmem:[#allocation2 + $0x38] sm:$0xff] %vm391, 0.0
      %4949 = vst.msk [vmem:[#allocation2 + $0x40] sm:$0xff] %vm391, 0.0
      %4950 = vst.msk [vmem:[#allocation2 + $0x48] sm:$0xff] %vm391, 0.0
      %4951 = vst.msk [vmem:[#allocation2 + $0x50] sm:$0xff] %vm391, 0.0
      %4952 = vst.msk [vmem:[#allocation2 + $0x58] sm:$0xff] %vm391, 0.0
      %4953 = vst.msk [vmem:[#allocation2 + $0x60] sm:$0xff] %vm391, 0.0
      %4954 = vst.msk [vmem:[#allocation2 + $0x68] sm:$0xff] %vm391, 0.0
      %4955 = vst.msk [vmem:[#allocation2 + $0x70] sm:$0xff] %vm391, 0.0
      %4956 = vst.msk [vmem:[#allocation2 + $0x78] sm:$0xff] %vm391, 0.0
      %4957 = vst.msk [vmem:[#allocation2 + $0x80] sm:$0xff] %vm391, 0.0
      %4958 = vst.msk [vmem:[#allocation2 + $0x88] sm:$0xff] %vm391, 0.0
      %4959 = vst.msk [vmem:[#allocation2 + $0x90] sm:$0xff] %vm391, 0.0
      %4960 = vst.msk [vmem:[#allocation2 + $0x98] sm:$0xff] %vm391, 0.0
      %4961 = vst.msk [vmem:[#allocation2 + $0xa0] sm:$0xff] %vm391, 0.0
      %4962 = vst.msk [vmem:[#allocation2 + $0xa8] sm:$0xff] %vm391, 0.0
      %4963 = vst.msk [vmem:[#allocation2 + $0xb0] sm:$0xff] %vm391, 0.0
      %4964 = vst.msk [vmem:[#allocation2 + $0xb8] sm:$0xff] %vm391, 0.0
      %4965 = vst.msk [vmem:[#allocation2 + $0xc0] sm:$0xff] %vm391, 0.0
      %4966 = vst.msk [vmem:[#allocation2 + $0xc8] sm:$0xff] %vm391, 0.0
      %4967 = vst.msk [vmem:[#allocation2 + $0xd0] sm:$0xff] %vm391, 0.0
      %4968 = vst.msk [vmem:[#allocation2 + $0xd8] sm:$0xff] %vm391, 0.0
      %4969 = vst.msk [vmem:[#allocation2 + $0xe0] sm:$0xff] %vm391, 0.0
      %4970 = vst.msk [vmem:[#allocation2 + $0xe8] sm:$0xff] %vm391, 0.0
      %4971 = vst.msk [vmem:[#allocation2 + $0xf0] sm:$0xff] %vm391, 0.0
      %4972 = vst.msk [vmem:[#allocation2 + $0xf8] sm:$0xff] %vm391, 0.0
      %4973 = vst.msk [vmem:[#allocation2 + $0x100] sm:$0xff] %vm391, 0.0
      %4974 = vst.msk [vmem:[#allocation2 + $0x108] sm:$0xff] %vm391, 0.0
      %4975 = vst.msk [vmem:[#allocation2 + $0x110] sm:$0xff] %vm391, 0.0
      %4976 = vst.msk [vmem:[#allocation2 + $0x118] sm:$0xff] %vm391, 0.0
      %4977 = vst.msk [vmem:[#allocation2 + $0x120] sm:$0xff] %vm391, 0.0
      %4978 = vst.msk [vmem:[#allocation2 + $0x128] sm:$0xff] %vm391, 0.0
      %4979 = vst.msk [vmem:[#allocation2 + $0x130] sm:$0xff] %vm391, 0.0
      %4980 = vst.msk [vmem:[#allocation2 + $0x138] sm:$0xff] %vm391, 0.0
      %4981 = vst.msk [vmem:[#allocation2 + $0x140] sm:$0xff] %vm391, 0.0
      %4982 = vst.msk [vmem:[#allocation2 + $0x148] sm:$0xff] %vm391, 0.0
      %4983 = vst.msk [vmem:[#allocation2 + $0x150] sm:$0xff] %vm391, 0.0
      %4984 = vst.msk [vmem:[#allocation2 + $0x158] sm:$0xff] %vm391, 0.0
      %4985 = vst.msk [vmem:[#allocation2 + $0x160] sm:$0xff] %vm391, 0.0
      %vm4986 = vcmask 58368
      %4987 = vst.msk [vmem:[#allocation2 + $0x168] sm:$0x3] %vm4986, 0.0
      %4988 = vst.msk [vmem:[#allocation2 + $0x13] sm:$0xff] %vm391, %v4900
      %4989 = vst.msk [vmem:[#allocation2 + $0x1b] sm:$0xff] %vm391, %v4901
      %4990 = vst.msk [vmem:[#allocation2 + $0x23] sm:$0xff] %vm391, %v4902
      %4991 = vst.msk [vmem:[#allocation2 + $0x2b] sm:$0xff] %vm391, %v4903
      %4992 = vst.msk [vmem:[#allocation2 + $0x33] sm:$0xff] %vm391, %v4904
      %4993 = vst.msk [vmem:[#allocation2 + $0x3b] sm:$0xff] %vm391, %v4905
      %4994 = vst.msk [vmem:[#allocation2 + $0x43] sm:$0xff] %vm391, %v4906
      %4995 = vst.msk [vmem:[#allocation2 + $0x4b] sm:$0xff] %vm391, %v4907
      %4996 = vst.msk [vmem:[#allocation2 + $0x53] sm:$0xff] %vm391, %v4908
      %4997 = vst.msk [vmem:[#allocation2 + $0x5b] sm:$0xff] %vm391, %v4909
      %4998 = vst.msk [vmem:[#allocation2 + $0x63] sm:$0xff] %vm391, %v4910
      %4999 = vst.msk [vmem:[#allocation2 + $0x6b] sm:$0xff] %vm391, %v4911
      %5000 = vst.msk [vmem:[#allocation2 + $0x73] sm:$0xff] %vm391, %v4912
      %5001 = vst.msk [vmem:[#allocation2 + $0x7b] sm:$0xff] %vm391, %v4913
      %5002 = vst.msk [vmem:[#allocation2 + $0x83] sm:$0xff] %vm391, %v4914
      %5003 = vst.msk [vmem:[#allocation2 + $0x8b] sm:$0xff] %vm391, %v4915
      %5004 = vst.msk [vmem:[#allocation2 + $0x93] sm:$0xff] %vm391, %v4916
      %5005 = vst.msk [vmem:[#allocation2 + $0x9b] sm:$0xff] %vm391, %v4917
      %5006 = vst.msk [vmem:[#allocation2 + $0xa3] sm:$0xff] %vm391, %v4918
      %5007 = vst.msk [vmem:[#allocation2 + $0xab] sm:$0xff] %vm391, %v4919
      %5008 = vst.msk [vmem:[#allocation2 + $0xb3] sm:$0xff] %vm391, %v4920
      %5009 = vst.msk [vmem:[#allocation2 + $0xbb] sm:$0xff] %vm391, %v4921
      %5010 = vst.msk [vmem:[#allocation2 + $0xc3] sm:$0xff] %vm391, %v4922
      %5011 = vst.msk [vmem:[#allocation2 + $0xcb] sm:$0xff] %vm391, %v4923
      %5012 = vst.msk [vmem:[#allocation2 + $0xd3] sm:$0xff] %vm391, %v4924
      %5013 = vst.msk [vmem:[#allocation2 + $0xdb] sm:$0xff] %vm391, %v4925
      %5014 = vst.msk [vmem:[#allocation2 + $0xe3] sm:$0xff] %vm391, %v4926
      %5015 = vst.msk [vmem:[#allocation2 + $0xeb] sm:$0xff] %vm391, %v4927
      %5016 = vst.msk [vmem:[#allocation2 + $0xf3] sm:$0xff] %vm391, %v4928
      %5017 = vst.msk [vmem:[#allocation2 + $0xfb] sm:$0xff] %vm391, %v4929
      %5018 = vst.msk [vmem:[#allocation2 + $0x103] sm:$0xff] %vm391, %v4930
      %5019 = vst.msk [vmem:[#allocation2 + $0x10b] sm:$0xff] %vm391, %v4931
      %5020 = vst.msk [vmem:[#allocation2 + $0x113] sm:$0xff] %vm391, %v4932
      %5021 = vst.msk [vmem:[#allocation2 + $0x11b] sm:$0xff] %vm391, %v4933
      %5022 = vst.msk [vmem:[#allocation2 + $0x123] sm:$0xff] %vm391, %v4934
      %5023 = vst.msk [vmem:[#allocation2 + $0x12b] sm:$0xff] %vm391, %v4935
      %5024 = vst.msk [vmem:[#allocation2 + $0x133] sm:$0xff] %vm391, %v4936
      %5025 = vst.msk [vmem:[#allocation2 + $0x13b] sm:$0xff] %vm391, %v4937
      %5026 = vst.msk [vmem:[#allocation2 + $0x143] sm:$0xff] %vm391, %v4938
      %5027 = vst.msk [vmem:[#allocation2 + $0x14b] sm:$0xff] %vm391, %v4939
      %vm5028 = vcmask 60416
      %5029 = vst.msk [vmem:[#allocation2 + $0x153] sm:$0xf] %vm5028, %v4940
      %v5030 = vld [vmem:[#allocation2] sm:$0xff]
      %v5031 = vld [vmem:[#allocation2 + $0x8] sm:$0xff]
      %v5032 = vld [vmem:[#allocation2 + $0x10] sm:$0xff]
      %v5033 = vld [vmem:[#allocation2 + $0x18] sm:$0xff]
      %v5034 = vld [vmem:[#allocation2 + $0x20] sm:$0xff]
      %v5035 = vld [vmem:[#allocation2 + $0x28] sm:$0xff]
      %v5036 = vld [vmem:[#allocation2 + $0x30] sm:$0xff]
      %v5037 = vld [vmem:[#allocation2 + $0x38] sm:$0xff]
      %v5038 = vld [vmem:[#allocation2 + $0x40] sm:$0xff]
      %v5039 = vld [vmem:[#allocation2 + $0x48] sm:$0xff]
      %v5040 = vld [vmem:[#allocation2 + $0x50] sm:$0xff]
      %v5041 = vld [vmem:[#allocation2 + $0x58] sm:$0xff]
      %v5042 = vld [vmem:[#allocation2 + $0x60] sm:$0xff]
      %v5043 = vld [vmem:[#allocation2 + $0x68] sm:$0xff]
      %v5044 = vld [vmem:[#allocation2 + $0x70] sm:$0xff]
      %v5045 = vld [vmem:[#allocation2 + $0x78] sm:$0xff]
      %v5046 = vld [vmem:[#allocation2 + $0x80] sm:$0xff]
      %v5047 = vld [vmem:[#allocation2 + $0x88] sm:$0xff]
      %v5048 = vld [vmem:[#allocation2 + $0x90] sm:$0xff]
      %v5049 = vld [vmem:[#allocation2 + $0x98] sm:$0xff]
      %v5050 = vld [vmem:[#allocation2 + $0xa0] sm:$0xff]
      %v5051 = vld [vmem:[#allocation2 + $0xa8] sm:$0xff]
      %v5052 = vld [vmem:[#allocation2 + $0xb0] sm:$0xff]
      %v5053 = vld [vmem:[#allocation2 + $0xb8] sm:$0xff]
      %v5054 = vld [vmem:[#allocation2 + $0xc0] sm:$0xff]
      %v5055 = vld [vmem:[#allocation2 + $0xc8] sm:$0xff]
      %v5056 = vld [vmem:[#allocation2 + $0xd0] sm:$0xff]
      %v5057 = vld [vmem:[#allocation2 + $0xd8] sm:$0xff]
      %v5058 = vld [vmem:[#allocation2 + $0xe0] sm:$0xff]
      %v5059 = vld [vmem:[#allocation2 + $0xe8] sm:$0xff]
      %v5060 = vld [vmem:[#allocation2 + $0xf0] sm:$0xff]
      %v5061 = vld [vmem:[#allocation2 + $0xf8] sm:$0xff]
      %v5062 = vld [vmem:[#allocation2 + $0x100] sm:$0xff]
      %v5063 = vld [vmem:[#allocation2 + $0x108] sm:$0xff]
      %v5064 = vld [vmem:[#allocation2 + $0x110] sm:$0xff]
      %v5065 = vld [vmem:[#allocation2 + $0x118] sm:$0xff]
      %v5066 = vld [vmem:[#allocation2 + $0x120] sm:$0xff]
      %v5067 = vld [vmem:[#allocation2 + $0x128] sm:$0xff]
      %v5068 = vld [vmem:[#allocation2 + $0x130] sm:$0xff]
      %v5069 = vld [vmem:[#allocation2 + $0x138] sm:$0xff]
      %v5070 = vld [vmem:[#allocation2 + $0x140] sm:$0xf]
      %v5071 = vld [vmem:[%s4] sm:$0xff]
      %v5072 = vld [vmem:[#allocation2 + $0x1] sm:$0xff]
      %v5073 = vld [vmem:[#allocation2 + $0x9] sm:$0xff]
      %v5074 = vld [vmem:[#allocation2 + $0x11] sm:$0xff]
      %v5075 = vld [vmem:[#allocation2 + $0x19] sm:$0xff]
      %v5076 = vld [vmem:[#allocation2 + $0x21] sm:$0xff]
      %v5077 = vld [vmem:[#allocation2 + $0x29] sm:$0xff]
      %v5078 = vld [vmem:[#allocation2 + $0x31] sm:$0xff]
      %v5079 = vld [vmem:[#allocation2 + $0x39] sm:$0xff]
      %v5080 = vld [vmem:[#allocation2 + $0x41] sm:$0xff]
      %v5081 = vld [vmem:[#allocation2 + $0x49] sm:$0xff]
      %v5082 = vld [vmem:[#allocation2 + $0x51] sm:$0xff]
      %v5083 = vld [vmem:[#allocation2 + $0x59] sm:$0xff]
      %v5084 = vld [vmem:[#allocation2 + $0x61] sm:$0xff]
      %v5085 = vld [vmem:[#allocation2 + $0x69] sm:$0xff]
      %v5086 = vld [vmem:[#allocation2 + $0x71] sm:$0xff]
      %v5087 = vld [vmem:[#allocation2 + $0x79] sm:$0xff]
      %v5088 = vld [vmem:[#allocation2 + $0x81] sm:$0xff]
      %v5089 = vld [vmem:[#allocation2 + $0x89] sm:$0xff]
      %v5090 = vld [vmem:[#allocation2 + $0x91] sm:$0xff]
      %v5091 = vld [vmem:[#allocation2 + $0x99] sm:$0xff]
      %v5092 = vld [vmem:[#allocation2 + $0xa1] sm:$0xff]
      %v5093 = vld [vmem:[#allocation2 + $0xa9] sm:$0xff]
      %v5094 = vld [vmem:[#allocation2 + $0xb1] sm:$0xff]
      %v5095 = vld [vmem:[#allocation2 + $0xb9] sm:$0xff]
      %v5096 = vld [vmem:[#allocation2 + $0xc1] sm:$0xff]
      %v5097 = vld [vmem:[#allocation2 + $0xc9] sm:$0xff]
      %v5098 = vld [vmem:[#allocation2 + $0xd1] sm:$0xff]
      %v5099 = vld [vmem:[#allocation2 + $0xd9] sm:$0xff]
      %v5100 = vld [vmem:[#allocation2 + $0xe1] sm:$0xff]
      %v5101 = vld [vmem:[#allocation2 + $0xe9] sm:$0xff]
      %v5102 = vld [vmem:[#allocation2 + $0xf1] sm:$0xff]
      %v5103 = vld [vmem:[#allocation2 + $0xf9] sm:$0xff]
      %v5104 = vld [vmem:[#allocation2 + $0x101] sm:$0xff]
      %v5105 = vld [vmem:[#allocation2 + $0x109] sm:$0xff]
      %v5106 = vld [vmem:[#allocation2 + $0x111] sm:$0xff]
      %v5107 = vld [vmem:[#allocation2 + $0x119] sm:$0xff]
      %v5108 = vld [vmem:[#allocation2 + $0x121] sm:$0xff]
      %v5109 = vld [vmem:[#allocation2 + $0x129] sm:$0xff]
      %v5110 = vld [vmem:[#allocation2 + $0x131] sm:$0xff]
      %v5111 = vld [vmem:[#allocation2 + $0x139] sm:$0xff]
      %v5112 = vld [vmem:[#allocation2 + $0x141] sm:$0xf]
      %s5113 = scalar_lea.vmem %s4, 8
      %v5114 = vld [vmem:[%s5113] sm:$0xff]
      %v5116 = vsel %vm391, %v5072, 0
      %v5119 = vsel %vm391, %v5073, 0
      %v5122 = vsel %vm391, %v5074, 0
      %v5125 = vsel %vm391, %v5075, 0
      %v5128 = vsel %vm391, %v5076, 0
      %v5131 = vsel %vm391, %v5077, 0
      %v5134 = vsel %vm391, %v5078, 0
      %v5137 = vsel %vm391, %v5079, 0
      %v5140 = vsel %vm391, %v5080, 0
      %v5143 = vsel %vm391, %v5081, 0
      %v5146 = vsel %vm391, %v5082, 0
      %v5149 = vsel %vm391, %v5083, 0
      %v5152 = vsel %vm391, %v5084, 0
      %v5155 = vsel %vm391, %v5085, 0
      %v5158 = vsel %vm391, %v5086, 0
      %v5161 = vsel %vm391, %v5087, 0
      %v5164 = vsel %vm391, %v5088, 0
      %v5167 = vsel %vm391, %v5089, 0
      %v5170 = vsel %vm391, %v5090, 0
      %v5173 = vsel %vm391, %v5091, 0
      %v5176 = vsel %vm391, %v5092, 0
      %v5179 = vsel %vm391, %v5093, 0
      %v5182 = vsel %vm391, %v5094, 0
      %v5185 = vsel %vm391, %v5095, 0
      %v5188 = vsel %vm391, %v5096, 0
      %v5191 = vsel %vm391, %v5097, 0
      %v5194 = vsel %vm391, %v5098, 0
      %v5197 = vsel %vm391, %v5099, 0
      %v5200 = vsel %vm391, %v5100, 0
      %v5203 = vsel %vm391, %v5101, 0
      %v5206 = vsel %vm391, %v5102, 0
      %v5209 = vsel %vm391, %v5103, 0
      %v5212 = vsel %vm391, %v5104, 0
      %v5215 = vsel %vm391, %v5105, 0
      %v5218 = vsel %vm391, %v5106, 0
      %v5221 = vsel %vm391, %v5107, 0
      %v5224 = vsel %vm391, %v5108, 0
      %v5227 = vsel %vm391, %v5109, 0
      %v5230 = vsel %vm391, %v5110, 0
      %v5233 = vsel %vm391, %v5111, 0
      %v5236 = vsel %vm391, %v5112, 0
      %5238 = vmatprep.subr.mxu0 0.0
      %5239 = vmatpush1.msra.mxu0 %v5114
      %5240 = vmatprep.subr.mxu0 0.0
      %5241 = vmatpush1.msra.mxu0 0.0
      %5242 = vmatprep.subr.mxu0 0.0
      %5243 = vmatpush1.msra.mxu0 0.0
      %5244 = vmatprep.subr.mxu0 0.0
      %5245 = vmatpush1.msra.mxu0 0.0
      %5246 = vmatprep.subr.mxu0 0.0
      %5247 = vmatpush1.msra.mxu0 0.0
      %5248 = vmatprep.subr.mxu0 0.0
      %5249 = vmatpush1.msra.mxu0 0.0
      %5250 = vmatprep.subr.mxu0 0.0
      %5251 = vmatpush1.msra.mxu0 0.0
      %5252 = vmatprep.subr.mxu0 0.0
      %5253 = vmatpush1.msra.mxu0 0.0
      %5254 = vmatprep.subr.mxu0 0.0
      %5255 = vmatpush1.msra.mxu0 0.0
      %5256 = vmatprep.subr.mxu0 0.0
      %5257 = vmatpush1.msra.mxu0 0.0
      %5258 = vmatprep.subr.mxu0 0.0
      %5259 = vmatpush1.msra.mxu0 0.0
      %5260 = vmatprep.subr.mxu0 0.0
      %5261 = vmatpush1.msra.mxu0 0.0
      %5262 = vmatprep.subr.mxu0 0.0
      %5263 = vmatpush1.msra.mxu0 0.0
      %5264 = vmatprep.subr.mxu0 0.0
      %5265 = vmatpush1.msra.mxu0 0.0
      %5266 = vmatprep.subr.mxu0 0.0
      %5267 = vmatpush1.msra.mxu0 0.0
      %5268 = vmatprep.subr.mxu0 0.0
      %5269 = vmatpush1.msra.mxu0 0.0
      %5270 = vmatprep.subr.mxu0 0.0
      %5271 = vmatpush1.msra.mxu0 0.0
      %5272 = vmatprep.subr.mxu0 0.0
      %5273 = vmatpush1.msra.mxu0 0.0
      %5274 = vmatprep.subr.mxu0 0.0
      %5275 = vmatpush1.msra.mxu0 0.0
      %5276 = vmatprep.subr.mxu0 0.0
      %5277 = vmatpush1.msra.mxu0 0.0
      %5278 = vmatprep.subr.mxu0 0.0
      %5279 = vmatpush1.msra.mxu0 0.0
      %5280 = vmatprep.subr.mxu0 0.0
      %5281 = vmatpush1.msra.mxu0 0.0
      %5282 = vmatprep.subr.mxu0 0.0
      %5283 = vmatpush1.msra.mxu0 0.0
      %5284 = vmatprep.subr.mxu0 0.0
      %5285 = vmatpush1.msra.mxu0 0.0
      %5286 = vmatprep.subr.mxu0 0.0
      %5287 = vmatpush1.msra.mxu0 0.0
      %5288 = vmatprep.subr.mxu0 0.0
      %5289 = vmatpush1.msra.mxu0 0.0
      %5290 = vmatprep.subr.mxu0 0.0
      %5291 = vmatpush1.msra.mxu0 0.0
      %5292 = vmatprep.subr.mxu0 0.0
      %5293 = vmatpush1.msra.mxu0 0.0
      %5294 = vmatprep.subr.mxu0 0.0
      %5295 = vmatpush1.msra.mxu0 0.0
      %5296 = vmatprep.subr.mxu0 0.0
      %5297 = vmatpush1.msra.mxu0 0.0
      %5298 = vmatprep.subr.mxu0 0.0
      %5299 = vmatpush1.msra.mxu0 0.0
      %5300 = vmatprep.subr.mxu0 0.0
      %5301 = vmatpush1.msra.mxu0 0.0
      %5302 = vmatprep.mubr.f32.mxu0 0.0
      %5303 = vmatmul.mubr.f32.gmra.mrb[0].mxu0 %v5116
      %v5304 = vpop.f32.mrb[0].mxu0
      %v5305 = vadd.f32 0.0, %v5304
      %v5306 = vpop.f32.mrb[0].mxu0
      %5307 = vmatprep.mubr.f32.mxu0 0.0
      %5308 = vmatmul.mubr.f32.gmra.mrb[0].mxu0 %v5119
      %v5309 = vpop.f32.mrb[0].mxu0
      %v5310 = vadd.f32 0.0, %v5309
      %v5311 = vpop.f32.mrb[0].mxu0
      %5312 = vmatprep.mubr.f32.mxu0 0.0
      %5313 = vmatmul.mubr.f32.gmra.mrb[0].mxu0 %v5122
      %v5314 = vpop.f32.mrb[0].mxu0
      %v5315 = vadd.f32 0.0, %v5314
      %v5316 = vpop.f32.mrb[0].mxu0
      %5317 = vmatprep.mubr.f32.mxu0 0.0
      %5318 = vmatmul.mubr.f32.gmra.mrb[0].mxu0 %v5125
      %v5319 = vpop.f32.mrb[0].mxu0
      %v5320 = vadd.f32 0.0, %v5319
      %v5321 = vpop.f32.mrb[0].mxu0
      %5322 = vmatprep.mubr.f32.mxu0 0.0
      %5323 = vmatmul.mubr.f32.gmra.mrb[0].mxu0 %v5128
      %v5324 = vpop.f32.mrb[0].mxu0
      %v5325 = vadd.f32 0.0, %v5324
      %v5326 = vpop.f32.mrb[0].mxu0
      %5327 = vmatprep.mubr.f32.mxu0 0.0
      %5328 = vmatmul.mubr.f32.gmra.mrb[0].mxu0 %v5131
      %v5329 = vpop.f32.mrb[0].mxu0
      %v5330 = vadd.f32 0.0, %v5329
      %v5331 = vpop.f32.mrb[0].mxu0
      %5332 = vmatprep.mubr.f32.mxu0 0.0
      %5333 = vmatmul.mubr.f32.gmra.mrb[0].mxu0 %v5134
      %v5334 = vpop.f32.mrb[0].mxu0
      %v5335 = vadd.f32 0.0, %v5334
      %v5336 = vpop.f32.mrb[0].mxu0
      %5337 = vmatprep.mubr.f32.mxu0 0.0
      %5338 = vmatmul.mubr.f32.gmra.mrb[0].mxu0 %v5137
      %v5339 = vpop.f32.mrb[0].mxu0
      %v5340 = vadd.f32 0.0, %v5339
      %v5341 = vpop.f32.mrb[0].mxu0
      %5342 = vmatprep.mubr.f32.mxu0 0.0
      %5343 = vmatmul.mubr.f32.gmra.mrb[0].mxu0 %v5140
      %v5344 = vpop.f32.mrb[0].mxu0
      %v5345 = vadd.f32 0.0, %v5344
      %v5346 = vpop.f32.mrb[0].mxu0
      %5347 = vmatprep.mubr.f32.mxu0 0.0
      %5348 = vmatmul.mubr.f32.gmra.mrb[0].mxu0 %v5143
      %v5349 = vpop.f32.mrb[0].mxu0
      %v5350 = vadd.f32 0.0, %v5349
      %v5351 = vpop.f32.mrb[0].mxu0
      %5352 = vmatprep.mubr.f32.mxu0 0.0
      %5353 = vmatmul.mubr.f32.gmra.mrb[0].mxu0 %v5146
      %v5354 = vpop.f32.mrb[0].mxu0
      %v5355 = vadd.f32 0.0, %v5354
      %v5356 = vpop.f32.mrb[0].mxu0
      %5357 = vmatprep.mubr.f32.mxu0 0.0
      %5358 = vmatmul.mubr.f32.gmra.mrb[0].mxu0 %v5149
      %v5359 = vpop.f32.mrb[0].mxu0
      %v5360 = vadd.f32 0.0, %v5359
      %v5361 = vpop.f32.mrb[0].mxu0
      %5362 = vmatprep.mubr.f32.mxu0 0.0
      %5363 = vmatmul.mubr.f32.gmra.mrb[0].mxu0 %v5152
      %v5364 = vpop.f32.mrb[0].mxu0
      %v5365 = vadd.f32 0.0, %v5364
      %v5366 = vpop.f32.mrb[0].mxu0
      %5367 = vmatprep.mubr.f32.mxu0 0.0
      %5368 = vmatmul.mubr.f32.gmra.mrb[0].mxu0 %v5155
      %v5369 = vpop.f32.mrb[0].mxu0
      %v5370 = vadd.f32 0.0, %v5369
      %v5371 = vpop.f32.mrb[0].mxu0
      %5372 = vmatprep.mubr.f32.mxu0 0.0
      %5373 = vmatmul.mubr.f32.gmra.mrb[0].mxu0 %v5158
      %v5374 = vpop.f32.mrb[0].mxu0
      %v5375 = vadd.f32 0.0, %v5374
      %v5376 = vpop.f32.mrb[0].mxu0
      %5377 = vmatprep.mubr.f32.mxu0 0.0
      %5378 = vmatmul.mubr.f32.gmra.mrb[0].mxu0 %v5161
      %v5379 = vpop.f32.mrb[0].mxu0
      %v5380 = vadd.f32 0.0, %v5379
      %v5381 = vpop.f32.mrb[0].mxu0
      %5382 = vmatprep.mubr.f32.mxu0 0.0
      %5383 = vmatmul.mubr.f32.gmra.mrb[0].mxu0 %v5164
      %v5384 = vpop.f32.mrb[0].mxu0
      %v5385 = vadd.f32 0.0, %v5384
      %v5386 = vpop.f32.mrb[0].mxu0
      %5387 = vmatprep.mubr.f32.mxu0 0.0
      %5388 = vmatmul.mubr.f32.gmra.mrb[0].mxu0 %v5167
      %v5389 = vpop.f32.mrb[0].mxu0
      %v5390 = vadd.f32 0.0, %v5389
      %v5391 = vpop.f32.mrb[0].mxu0
      %5392 = vmatprep.mubr.f32.mxu0 0.0
      %5393 = vmatmul.mubr.f32.gmra.mrb[0].mxu0 %v5170
      %v5394 = vpop.f32.mrb[0].mxu0
      %v5395 = vadd.f32 0.0, %v5394
      %v5396 = vpop.f32.mrb[0].mxu0
      %5397 = vmatprep.mubr.f32.mxu0 0.0
      %5398 = vmatmul.mubr.f32.gmra.mrb[0].mxu0 %v5173
      %v5399 = vpop.f32.mrb[0].mxu0
      %v5400 = vadd.f32 0.0, %v5399
      %v5401 = vpop.f32.mrb[0].mxu0
      %5402 = vmatprep.mubr.f32.mxu0 0.0
      %5403 = vmatmul.mubr.f32.gmra.mrb[0].mxu0 %v5176
      %v5404 = vpop.f32.mrb[0].mxu0
      %v5405 = vadd.f32 0.0, %v5404
      %v5406 = vpop.f32.mrb[0].mxu0
      %5407 = vmatprep.mubr.f32.mxu0 0.0
      %5408 = vmatmul.mubr.f32.gmra.mrb[0].mxu0 %v5179
      %v5409 = vpop.f32.mrb[0].mxu0
      %v5410 = vadd.f32 0.0, %v5409
      %v5411 = vpop.f32.mrb[0].mxu0
      %5412 = vmatprep.mubr.f32.mxu0 0.0
      %5413 = vmatmul.mubr.f32.gmra.mrb[0].mxu0 %v5182
      %v5414 = vpop.f32.mrb[0].mxu0
      %v5415 = vadd.f32 0.0, %v5414
      %v5416 = vpop.f32.mrb[0].mxu0
      %5417 = vmatprep.mubr.f32.mxu0 0.0
      %5418 = vmatmul.mubr.f32.gmra.mrb[0].mxu0 %v5185
      %v5419 = vpop.f32.mrb[0].mxu0
      %v5420 = vadd.f32 0.0, %v5419
      %v5421 = vpop.f32.mrb[0].mxu0
      %5422 = vmatprep.mubr.f32.mxu0 0.0
      %5423 = vmatmul.mubr.f32.gmra.mrb[0].mxu0 %v5188
      %v5424 = vpop.f32.mrb[0].mxu0
      %v5425 = vadd.f32 0.0, %v5424
      %v5426 = vpop.f32.mrb[0].mxu0
      %5427 = vmatprep.mubr.f32.mxu0 0.0
      %5428 = vmatmul.mubr.f32.gmra.mrb[0].mxu0 %v5191
      %v5429 = vpop.f32.mrb[0].mxu0
      %v5430 = vadd.f32 0.0, %v5429
      %v5431 = vpop.f32.mrb[0].mxu0
      %5432 = vmatprep.mubr.f32.mxu0 0.0
      %5433 = vmatmul.mubr.f32.gmra.mrb[0].mxu0 %v5194
      %v5434 = vpop.f32.mrb[0].mxu0
      %v5435 = vadd.f32 0.0, %v5434
      %v5436 = vpop.f32.mrb[0].mxu0
      %5437 = vmatprep.mubr.f32.mxu0 0.0
      %5438 = vmatmul.mubr.f32.gmra.mrb[0].mxu0 %v5197
      %v5439 = vpop.f32.mrb[0].mxu0
      %v5440 = vadd.f32 0.0, %v5439
      %v5441 = vpop.f32.mrb[0].mxu0
      %5442 = vmatprep.mubr.f32.mxu0 0.0
      %5443 = vmatmul.mubr.f32.gmra.mrb[0].mxu0 %v5200
      %v5444 = vpop.f32.mrb[0].mxu0
      %v5445 = vadd.f32 0.0, %v5444
      %v5446 = vpop.f32.mrb[0].mxu0
      %5447 = vmatprep.mubr.f32.mxu0 0.0
      %5448 = vmatmul.mubr.f32.gmra.mrb[0].mxu0 %v5203
      %v5449 = vpop.f32.mrb[0].mxu0
      %v5450 = vadd.f32 0.0, %v5449
      %v5451 = vpop.f32.mrb[0].mxu0
      %5452 = vmatprep.mubr.f32.mxu0 0.0
      %5453 = vmatmul.mubr.f32.gmra.mrb[0].mxu0 %v5206
      %v5454 = vpop.f32.mrb[0].mxu0
      %v5455 = vadd.f32 0.0, %v5454
      %v5456 = vpop.f32.mrb[0].mxu0
      %5457 = vmatprep.mubr.f32.mxu0 0.0
      %5458 = vmatmul.mubr.f32.gmra.mrb[0].mxu0 %v5209
      %v5459 = vpop.f32.mrb[0].mxu0
      %v5460 = vadd.f32 0.0, %v5459
      %v5461 = vpop.f32.mrb[0].mxu0
      %5462 = vmatprep.mubr.f32.mxu0 0.0
      %5463 = vmatmul.mubr.f32.gmra.mrb[0].mxu0 %v5212
      %v5464 = vpop.f32.mrb[0].mxu0
      %v5465 = vadd.f32 0.0, %v5464
      %v5466 = vpop.f32.mrb[0].mxu0
      %5467 = vmatprep.mubr.f32.mxu0 0.0
      %5468 = vmatmul.mubr.f32.gmra.mrb[0].mxu0 %v5215
      %v5469 = vpop.f32.mrb[0].mxu0
      %v5470 = vadd.f32 0.0, %v5469
      %v5471 = vpop.f32.mrb[0].mxu0
      %5472 = vmatprep.mubr.f32.mxu0 0.0
      %5473 = vmatmul.mubr.f32.gmra.mrb[0].mxu0 %v5218
      %v5474 = vpop.f32.mrb[0].mxu0
      %v5475 = vadd.f32 0.0, %v5474
      %v5476 = vpop.f32.mrb[0].mxu0
      %5477 = vmatprep.mubr.f32.mxu0 0.0
      %5478 = vmatmul.mubr.f32.gmra.mrb[0].mxu0 %v5221
      %v5479 = vpop.f32.mrb[0].mxu0
      %v5480 = vadd.f32 0.0, %v5479
      %v5481 = vpop.f32.mrb[0].mxu0
      %5482 = vmatprep.mubr.f32.mxu0 0.0
      %5483 = vmatmul.mubr.f32.gmra.mrb[0].mxu0 %v5224
      %v5484 = vpop.f32.mrb[0].mxu0
      %v5485 = vadd.f32 0.0, %v5484
      %v5486 = vpop.f32.mrb[0].mxu0
      %5487 = vmatprep.mubr.f32.mxu0 0.0
      %5488 = vmatmul.mubr.f32.gmra.mrb[0].mxu0 %v5227
      %v5489 = vpop.f32.mrb[0].mxu0
      %v5490 = vadd.f32 0.0, %v5489
      %v5491 = vpop.f32.mrb[0].mxu0
      %5492 = vmatprep.mubr.f32.mxu0 0.0
      %5493 = vmatmul.mubr.f32.gmra.mrb[0].mxu0 %v5230
      %v5494 = vpop.f32.mrb[0].mxu0
      %v5495 = vadd.f32 0.0, %v5494
      %v5496 = vpop.f32.mrb[0].mxu0
      %5497 = vmatprep.mubr.f32.mxu0 0.0
      %5498 = vmatmul.mubr.f32.gmra.mrb[0].mxu0 %v5233
      %v5499 = vpop.f32.mrb[0].mxu0
      %v5500 = vadd.f32 0.0, %v5499
      %v5501 = vpop.f32.mrb[0].mxu0
      %5502 = vmatprep.mubr.f32.mxu0 0.0
      %5503 = vmatmul.mubr.f32.gmra.mrb[0].mxu0 %v5236
      %v5504 = vpop.f32.mrb[0].mxu0
      %v5505 = vadd.f32 0.0, %v5504
      %v5506 = vpop.f32.mrb[0].mxu0
      %5507 = vdwg.mxu0
      %v5509 = vsel %vm391, %v5030, 0
      %v5512 = vsel %vm391, %v5031, 0
      %v5515 = vsel %vm391, %v5032, 0
      %v5518 = vsel %vm391, %v5033, 0
      %v5521 = vsel %vm391, %v5034, 0
      %v5524 = vsel %vm391, %v5035, 0
      %v5527 = vsel %vm391, %v5036, 0
      %v5530 = vsel %vm391, %v5037, 0
      %v5533 = vsel %vm391, %v5038, 0
      %v5536 = vsel %vm391, %v5039, 0
      %v5539 = vsel %vm391, %v5040, 0
      %v5542 = vsel %vm391, %v5041, 0
      %v5545 = vsel %vm391, %v5042, 0
      %v5548 = vsel %vm391, %v5043, 0
      %v5551 = vsel %vm391, %v5044, 0
      %v5554 = vsel %vm391, %v5045, 0
      %v5557 = vsel %vm391, %v5046, 0
      %v5560 = vsel %vm391, %v5047, 0
      %v5563 = vsel %vm391, %v5048, 0
      %v5566 = vsel %vm391, %v5049, 0
      %v5569 = vsel %vm391, %v5050, 0
      %v5572 = vsel %vm391, %v5051, 0
      %v5575 = vsel %vm391, %v5052, 0
      %v5578 = vsel %vm391, %v5053, 0
      %v5581 = vsel %vm391, %v5054, 0
      %v5584 = vsel %vm391, %v5055, 0
      %v5587 = vsel %vm391, %v5056, 0
      %v5590 = vsel %vm391, %v5057, 0
      %v5593 = vsel %vm391, %v5058, 0
      %v5596 = vsel %vm391, %v5059, 0
      %v5599 = vsel %vm391, %v5060, 0
      %v5602 = vsel %vm391, %v5061, 0
      %v5605 = vsel %vm391, %v5062, 0
      %v5608 = vsel %vm391, %v5063, 0
      %v5611 = vsel %vm391, %v5064, 0
      %v5614 = vsel %vm391, %v5065, 0
      %v5617 = vsel %vm391, %v5066, 0
      %v5620 = vsel %vm391, %v5067, 0
      %v5623 = vsel %vm391, %v5068, 0
      %v5626 = vsel %vm391, %v5069, 0
      %v5629 = vsel %vm391, %v5070, 0
      %5631 = vmatprep.subr.mxu0 0.0
      %5632 = vmatpush1.msra.mxu0 %v5071
      %5633 = vmatprep.subr.mxu0 0.0
      %5634 = vmatpush1.msra.mxu0 0.0
      %5635 = vmatprep.subr.mxu0 0.0
      %5636 = vmatpush1.msra.mxu0 0.0
      %5637 = vmatprep.subr.mxu0 0.0
      %5638 = vmatpush1.msra.mxu0 0.0
      %5639 = vmatprep.subr.mxu0 0.0
      %5640 = vmatpush1.msra.mxu0 0.0
      %5641 = vmatprep.subr.mxu0 0.0
      %5642 = vmatpush1.msra.mxu0 0.0
      %5643 = vmatprep.subr.mxu0 0.0
      %5644 = vmatpush1.msra.mxu0 0.0
      %5645 = vmatprep.subr.mxu0 0.0
      %5646 = vmatpush1.msra.mxu0 0.0
      %5647 = vmatprep.subr.mxu0 0.0
      %5648 = vmatpush1.msra.mxu0 0.0
      %5649 = vmatprep.subr.mxu0 0.0
      %5650 = vmatpush1.msra.mxu0 0.0
      %5651 = vmatprep.subr.mxu0 0.0
      %5652 = vmatpush1.msra.mxu0 0.0
      %5653 = vmatprep.subr.mxu0 0.0
      %5654 = vmatpush1.msra.mxu0 0.0
      %5655 = vmatprep.subr.mxu0 0.0
      %5656 = vmatpush1.msra.mxu0 0.0
      %5657 = vmatprep.subr.mxu0 0.0
      %5658 = vmatpush1.msra.mxu0 0.0
      %5659 = vmatprep.subr.mxu0 0.0
      %5660 = vmatpush1.msra.mxu0 0.0
      %5661 = vmatprep.subr.mxu0 0.0
      %5662 = vmatpush1.msra.mxu0 0.0
      %5663 = vmatprep.subr.mxu0 0.0
      %5664 = vmatpush1.msra.mxu0 0.0
      %5665 = vmatprep.subr.mxu0 0.0
      %5666 = vmatpush1.msra.mxu0 0.0
      %5667 = vmatprep.subr.mxu0 0.0
      %5668 = vmatpush1.msra.mxu0 0.0
      %5669 = vmatprep.subr.mxu0 0.0
      %5670 = vmatpush1.msra.mxu0 0.0
      %5671 = vmatprep.subr.mxu0 0.0
      %5672 = vmatpush1.msra.mxu0 0.0
      %5673 = vmatprep.subr.mxu0 0.0
      %5674 = vmatpush1.msra.mxu0 0.0
      %5675 = vmatprep.subr.mxu0 0.0
      %5676 = vmatpush1.msra.mxu0 0.0
      %5677 = vmatprep.subr.mxu0 0.0
      %5678 = vmatpush1.msra.mxu0 0.0
      %5679 = vmatprep.subr.mxu0 0.0
      %5680 = vmatpush1.msra.mxu0 0.0
      %5681 = vmatprep.subr.mxu0 0.0
      %5682 = vmatpush1.msra.mxu0 0.0
      %5683 = vmatprep.subr.mxu0 0.0
      %5684 = vmatpush1.msra.mxu0 0.0
      %5685 = vmatprep.subr.mxu0 0.0
      %5686 = vmatpush1.msra.mxu0 0.0
      %5687 = vmatprep.subr.mxu0 0.0
      %5688 = vmatpush1.msra.mxu0 0.0
      %5689 = vmatprep.subr.mxu0 0.0
      %5690 = vmatpush1.msra.mxu0 0.0
      %5691 = vmatprep.subr.mxu0 0.0
      %5692 = vmatpush1.msra.mxu0 0.0
      %5693 = vmatprep.subr.mxu0 0.0
      %5694 = vmatpush1.msra.mxu0 0.0
      %5695 = vmatprep.mubr.f32.mxu0 0.0
      %5696 = vmatmul.mubr.f32.gmra.mrb[0].mxu0 %v5509
      %v5697 = vpop.f32.mrb[0].mxu0
      %v5698 = vadd.f32 %v5305, %v5697
      %v5699 = vpop.f32.mrb[0].mxu0
      %5700 = vmatprep.mubr.f32.mxu0 0.0
      %5701 = vmatmul.mubr.f32.gmra.mrb[0].mxu0 %v5512
      %v5702 = vpop.f32.mrb[0].mxu0
      %v5703 = vadd.f32 %v5310, %v5702
      %v5704 = vpop.f32.mrb[0].mxu0
      %5705 = vmatprep.mubr.f32.mxu0 0.0
      %5706 = vmatmul.mubr.f32.gmra.mrb[0].mxu0 %v5515
      %v5707 = vpop.f32.mrb[0].mxu0
      %v5708 = vadd.f32 %v5315, %v5707
      %v5709 = vpop.f32.mrb[0].mxu0
      %5710 = vmatprep.mubr.f32.mxu0 0.0
      %5711 = vmatmul.mubr.f32.gmra.mrb[0].mxu0 %v5518
      %v5712 = vpop.f32.mrb[0].mxu0
      %v5713 = vadd.f32 %v5320, %v5712
      %v5714 = vpop.f32.mrb[0].mxu0
      %5715 = vmatprep.mubr.f32.mxu0 0.0
      %5716 = vmatmul.mubr.f32.gmra.mrb[0].mxu0 %v5521
      %v5717 = vpop.f32.mrb[0].mxu0
      %v5718 = vadd.f32 %v5325, %v5717
      %v5719 = vpop.f32.mrb[0].mxu0
      %5720 = vmatprep.mubr.f32.mxu0 0.0
      %5721 = vmatmul.mubr.f32.gmra.mrb[0].mxu0 %v5524
      %v5722 = vpop.f32.mrb[0].mxu0
      %v5723 = vadd.f32 %v5330, %v5722
      %v5724 = vpop.f32.mrb[0].mxu0
      %5725 = vmatprep.mubr.f32.mxu0 0.0
      %5726 = vmatmul.mubr.f32.gmra.mrb[0].mxu0 %v5527
      %v5727 = vpop.f32.mrb[0].mxu0
      %v5728 = vadd.f32 %v5335, %v5727
      %v5729 = vpop.f32.mrb[0].mxu0
      %5730 = vmatprep.mubr.f32.mxu0 0.0
      %5731 = vmatmul.mubr.f32.gmra.mrb[0].mxu0 %v5530
      %v5732 = vpop.f32.mrb[0].mxu0
      %v5733 = vadd.f32 %v5340, %v5732
      %v5734 = vpop.f32.mrb[0].mxu0
      %5735 = vmatprep.mubr.f32.mxu0 0.0
      %5736 = vmatmul.mubr.f32.gmra.mrb[0].mxu0 %v5533
      %v5737 = vpop.f32.mrb[0].mxu0
      %v5738 = vadd.f32 %v5345, %v5737
      %v5739 = vpop.f32.mrb[0].mxu0
      %5740 = vmatprep.mubr.f32.mxu0 0.0
      %5741 = vmatmul.mubr.f32.gmra.mrb[0].mxu0 %v5536
      %v5742 = vpop.f32.mrb[0].mxu0
      %v5743 = vadd.f32 %v5350, %v5742
      %v5744 = vpop.f32.mrb[0].mxu0
      %5745 = vmatprep.mubr.f32.mxu0 0.0
      %5746 = vmatmul.mubr.f32.gmra.mrb[0].mxu0 %v5539
      %v5747 = vpop.f32.mrb[0].mxu0
      %v5748 = vadd.f32 %v5355, %v5747
      %v5749 = vpop.f32.mrb[0].mxu0
      %5750 = vmatprep.mubr.f32.mxu0 0.0
      %5751 = vmatmul.mubr.f32.gmra.mrb[0].mxu0 %v5542
      %v5752 = vpop.f32.mrb[0].mxu0
      %v5753 = vadd.f32 %v5360, %v5752
      %v5754 = vpop.f32.mrb[0].mxu0
      %5755 = vmatprep.mubr.f32.mxu0 0.0
      %5756 = vmatmul.mubr.f32.gmra.mrb[0].mxu0 %v5545
      %v5757 = vpop.f32.mrb[0].mxu0
      %v5758 = vadd.f32 %v5365, %v5757
      %v5759 = vpop.f32.mrb[0].mxu0
      %5760 = vmatprep.mubr.f32.mxu0 0.0
      %5761 = vmatmul.mubr.f32.gmra.mrb[0].mxu0 %v5548
      %v5762 = vpop.f32.mrb[0].mxu0
      %v5763 = vadd.f32 %v5370, %v5762
      %v5764 = vpop.f32.mrb[0].mxu0
      %5765 = vmatprep.mubr.f32.mxu0 0.0
      %5766 = vmatmul.mubr.f32.gmra.mrb[0].mxu0 %v5551
      %v5767 = vpop.f32.mrb[0].mxu0
      %v5768 = vadd.f32 %v5375, %v5767
      %v5769 = vpop.f32.mrb[0].mxu0
      %5770 = vmatprep.mubr.f32.mxu0 0.0
      %5771 = vmatmul.mubr.f32.gmra.mrb[0].mxu0 %v5554
      %v5772 = vpop.f32.mrb[0].mxu0
      %v5773 = vadd.f32 %v5380, %v5772
      %v5774 = vpop.f32.mrb[0].mxu0
      %5775 = vmatprep.mubr.f32.mxu0 0.0
      %5776 = vmatmul.mubr.f32.gmra.mrb[0].mxu0 %v5557
      %v5777 = vpop.f32.mrb[0].mxu0
      %v5778 = vadd.f32 %v5385, %v5777
      %v5779 = vpop.f32.mrb[0].mxu0
      %5780 = vmatprep.mubr.f32.mxu0 0.0
      %5781 = vmatmul.mubr.f32.gmra.mrb[0].mxu0 %v5560
      %v5782 = vpop.f32.mrb[0].mxu0
      %v5783 = vadd.f32 %v5390, %v5782
      %v5784 = vpop.f32.mrb[0].mxu0
      %5785 = vmatprep.mubr.f32.mxu0 0.0
      %5786 = vmatmul.mubr.f32.gmra.mrb[0].mxu0 %v5563
      %v5787 = vpop.f32.mrb[0].mxu0
      %v5788 = vadd.f32 %v5395, %v5787
      %v5789 = vpop.f32.mrb[0].mxu0
      %5790 = vmatprep.mubr.f32.mxu0 0.0
      %5791 = vmatmul.mubr.f32.gmra.mrb[0].mxu0 %v5566
      %v5792 = vpop.f32.mrb[0].mxu0
      %v5793 = vadd.f32 %v5400, %v5792
      %v5794 = vpop.f32.mrb[0].mxu0
      %5795 = vmatprep.mubr.f32.mxu0 0.0
      %5796 = vmatmul.mubr.f32.gmra.mrb[0].mxu0 %v5569
      %v5797 = vpop.f32.mrb[0].mxu0
      %v5798 = vadd.f32 %v5405, %v5797
      %v5799 = vpop.f32.mrb[0].mxu0
      %5800 = vmatprep.mubr.f32.mxu0 0.0
      %5801 = vmatmul.mubr.f32.gmra.mrb[0].mxu0 %v5572
      %v5802 = vpop.f32.mrb[0].mxu0
      %v5803 = vadd.f32 %v5410, %v5802
      %v5804 = vpop.f32.mrb[0].mxu0
      %5805 = vmatprep.mubr.f32.mxu0 0.0
      %5806 = vmatmul.mubr.f32.gmra.mrb[0].mxu0 %v5575
      %v5807 = vpop.f32.mrb[0].mxu0
      %v5808 = vadd.f32 %v5415, %v5807
      %v5809 = vpop.f32.mrb[0].mxu0
      %5810 = vmatprep.mubr.f32.mxu0 0.0
      %5811 = vmatmul.mubr.f32.gmra.mrb[0].mxu0 %v5578
      %v5812 = vpop.f32.mrb[0].mxu0
      %v5813 = vadd.f32 %v5420, %v5812
      %v5814 = vpop.f32.mrb[0].mxu0
      %5815 = vmatprep.mubr.f32.mxu0 0.0
      %5816 = vmatmul.mubr.f32.gmra.mrb[0].mxu0 %v5581
      %v5817 = vpop.f32.mrb[0].mxu0
      %v5818 = vadd.f32 %v5425, %v5817
      %v5819 = vpop.f32.mrb[0].mxu0
      %5820 = vmatprep.mubr.f32.mxu0 0.0
      %5821 = vmatmul.mubr.f32.gmra.mrb[0].mxu0 %v5584
      %v5822 = vpop.f32.mrb[0].mxu0
      %v5823 = vadd.f32 %v5430, %v5822
      %v5824 = vpop.f32.mrb[0].mxu0
      %5825 = vmatprep.mubr.f32.mxu0 0.0
      %5826 = vmatmul.mubr.f32.gmra.mrb[0].mxu0 %v5587
      %v5827 = vpop.f32.mrb[0].mxu0
      %v5828 = vadd.f32 %v5435, %v5827
      %v5829 = vpop.f32.mrb[0].mxu0
      %5830 = vmatprep.mubr.f32.mxu0 0.0
      %5831 = vmatmul.mubr.f32.gmra.mrb[0].mxu0 %v5590
      %v5832 = vpop.f32.mrb[0].mxu0
      %v5833 = vadd.f32 %v5440, %v5832
      %v5834 = vpop.f32.mrb[0].mxu0
      %5835 = vmatprep.mubr.f32.mxu0 0.0
      %5836 = vmatmul.mubr.f32.gmra.mrb[0].mxu0 %v5593
      %v5837 = vpop.f32.mrb[0].mxu0
      %v5838 = vadd.f32 %v5445, %v5837
      %v5839 = vpop.f32.mrb[0].mxu0
      %5840 = vmatprep.mubr.f32.mxu0 0.0
      %5841 = vmatmul.mubr.f32.gmra.mrb[0].mxu0 %v5596
      %v5842 = vpop.f32.mrb[0].mxu0
      %v5843 = vadd.f32 %v5450, %v5842
      %v5844 = vpop.f32.mrb[0].mxu0
      %5845 = vmatprep.mubr.f32.mxu0 0.0
      %5846 = vmatmul.mubr.f32.gmra.mrb[0].mxu0 %v5599
      %v5847 = vpop.f32.mrb[0].mxu0
      %v5848 = vadd.f32 %v5455, %v5847
      %v5849 = vpop.f32.mrb[0].mxu0
      %5850 = vmatprep.mubr.f32.mxu0 0.0
      %5851 = vmatmul.mubr.f32.gmra.mrb[0].mxu0 %v5602
      %v5852 = vpop.f32.mrb[0].mxu0
      %v5853 = vadd.f32 %v5460, %v5852
      %v5854 = vpop.f32.mrb[0].mxu0
      %5855 = vmatprep.mubr.f32.mxu0 0.0
      %5856 = vmatmul.mubr.f32.gmra.mrb[0].mxu0 %v5605
      %v5857 = vpop.f32.mrb[0].mxu0
      %v5858 = vadd.f32 %v5465, %v5857
      %v5859 = vpop.f32.mrb[0].mxu0
      %5860 = vmatprep.mubr.f32.mxu0 0.0
      %5861 = vmatmul.mubr.f32.gmra.mrb[0].mxu0 %v5608
      %v5862 = vpop.f32.mrb[0].mxu0
      %v5863 = vadd.f32 %v5470, %v5862
      %v5864 = vpop.f32.mrb[0].mxu0
      %5865 = vmatprep.mubr.f32.mxu0 0.0
      %5866 = vmatmul.mubr.f32.gmra.mrb[0].mxu0 %v5611
      %v5867 = vpop.f32.mrb[0].mxu0
      %v5868 = vadd.f32 %v5475, %v5867
      %v5869 = vpop.f32.mrb[0].mxu0
      %5870 = vmatprep.mubr.f32.mxu0 0.0
      %5871 = vmatmul.mubr.f32.gmra.mrb[0].mxu0 %v5614
      %v5872 = vpop.f32.mrb[0].mxu0
      %v5873 = vadd.f32 %v5480, %v5872
      %v5874 = vpop.f32.mrb[0].mxu0
      %5875 = vmatprep.mubr.f32.mxu0 0.0
      %5876 = vmatmul.mubr.f32.gmra.mrb[0].mxu0 %v5617
      %v5877 = vpop.f32.mrb[0].mxu0
      %v5878 = vadd.f32 %v5485, %v5877
      %v5879 = vpop.f32.mrb[0].mxu0
      %5880 = vmatprep.mubr.f32.mxu0 0.0
      %5881 = vmatmul.mubr.f32.gmra.mrb[0].mxu0 %v5620
      %v5882 = vpop.f32.mrb[0].mxu0
      %v5883 = vadd.f32 %v5490, %v5882
      %v5884 = vpop.f32.mrb[0].mxu0
      %5885 = vmatprep.mubr.f32.mxu0 0.0
      %5886 = vmatmul.mubr.f32.gmra.mrb[0].mxu0 %v5623
      %v5887 = vpop.f32.mrb[0].mxu0
      %v5888 = vadd.f32 %v5495, %v5887
      %v5889 = vpop.f32.mrb[0].mxu0
      %5890 = vmatprep.mubr.f32.mxu0 0.0
      %5891 = vmatmul.mubr.f32.gmra.mrb[0].mxu0 %v5626
      %v5892 = vpop.f32.mrb[0].mxu0
      %v5893 = vadd.f32 %v5500, %v5892
      %v5894 = vpop.f32.mrb[0].mxu0
      %5895 = vmatprep.mubr.f32.mxu0 0.0
      %5896 = vmatmul.mubr.f32.gmra.mrb[0].mxu0 %v5629
      %v5897 = vpop.f32.mrb[0].mxu0
      %v5898 = vadd.f32 %v5505, %v5897
      %v5899 = vpop.f32.mrb[0].mxu0
      %5900 = vdwg.mxu0
      %v5901 = vld [vmem:[#allocation2 + $0x2] sm:$0xff]
      %v5902 = vld [vmem:[#allocation2 + $0xa] sm:$0xff]
      %v5903 = vld [vmem:[#allocation2 + $0x12] sm:$0xff]
      %v5904 = vld [vmem:[#allocation2 + $0x1a] sm:$0xff]
      %v5905 = vld [vmem:[#allocation2 + $0x22] sm:$0xff]
      %v5906 = vld [vmem:[#allocation2 + $0x2a] sm:$0xff]
      %v5907 = vld [vmem:[#allocation2 + $0x32] sm:$0xff]
      %v5908 = vld [vmem:[#allocation2 + $0x3a] sm:$0xff]
      %v5909 = vld [vmem:[#allocation2 + $0x42] sm:$0xff]
      %v5910 = vld [vmem:[#allocation2 + $0x4a] sm:$0xff]
      %v5911 = vld [vmem:[#allocation2 + $0x52] sm:$0xff]
      %v5912 = vld [vmem:[#allocation2 + $0x5a] sm:$0xff]
      %v5913 = vld [vmem:[#allocation2 + $0x62] sm:$0xff]
      %v5914 = vld [vmem:[#allocation2 + $0x6a] sm:$0xff]
      %v5915 = vld [vmem:[#allocation2 + $0x72] sm:$0xff]
      %v5916 = vld [vmem:[#allocation2 + $0x7a] sm:$0xff]
      %v5917 = vld [vmem:[#allocation2 + $0x82] sm:$0xff]
      %v5918 = vld [vmem:[#allocation2 + $0x8a] sm:$0xff]
      %v5919 = vld [vmem:[#allocation2 + $0x92] sm:$0xff]
      %v5920 = vld [vmem:[#allocation2 + $0x9a] sm:$0xff]
      %v5921 = vld [vmem:[#allocation2 + $0xa2] sm:$0xff]
      %v5922 = vld [vmem:[#allocation2 + $0xaa] sm:$0xff]
      %v5923 = vld [vmem:[#allocation2 + $0xb2] sm:$0xff]
      %v5924 = vld [vmem:[#allocation2 + $0xba] sm:$0xff]
      %v5925 = vld [vmem:[#allocation2 + $0xc2] sm:$0xff]
      %v5926 = vld [vmem:[#allocation2 + $0xca] sm:$0xff]
      %v5927 = vld [vmem:[#allocation2 + $0xd2] sm:$0xff]
      %v5928 = vld [vmem:[#allocation2 + $0xda] sm:$0xff]
      %v5929 = vld [vmem:[#allocation2 + $0xe2] sm:$0xff]
      %v5930 = vld [vmem:[#allocation2 + $0xea] sm:$0xff]
      %v5931 = vld [vmem:[#allocation2 + $0xf2] sm:$0xff]
      %v5932 = vld [vmem:[#allocation2 + $0xfa] sm:$0xff]
      %v5933 = vld [vmem:[#allocation2 + $0x102] sm:$0xff]
      %v5934 = vld [vmem:[#allocation2 + $0x10a] sm:$0xff]
      %v5935 = vld [vmem:[#allocation2 + $0x112] sm:$0xff]
      %v5936 = vld [vmem:[#allocation2 + $0x11a] sm:$0xff]
      %v5937 = vld [vmem:[#allocation2 + $0x122] sm:$0xff]
      %v5938 = vld [vmem:[#allocation2 + $0x12a] sm:$0xff]
      %v5939 = vld [vmem:[#allocation2 + $0x132] sm:$0xff]
      %v5940 = vld [vmem:[#allocation2 + $0x13a] sm:$0xff]
      %v5941 = vld [vmem:[#allocation2 + $0x142] sm:$0xf]
      %s5942 = scalar_lea.vmem %s4, 16
      %v5943 = vld [vmem:[%s5942] sm:$0xff]
      %v5945 = vsel %vm391, %v5901, 0
      %v5948 = vsel %vm391, %v5902, 0
      %v5951 = vsel %vm391, %v5903, 0
      %v5954 = vsel %vm391, %v5904, 0
      %v5957 = vsel %vm391, %v5905, 0
      %v5960 = vsel %vm391, %v5906, 0
      %v5963 = vsel %vm391, %v5907, 0
      %v5966 = vsel %vm391, %v5908, 0
      %v5969 = vsel %vm391, %v5909, 0
      %v5972 = vsel %vm391, %v5910, 0
      %v5975 = vsel %vm391, %v5911, 0
      %v5978 = vsel %vm391, %v5912, 0
      %v5981 = vsel %vm391, %v5913, 0
      %v5984 = vsel %vm391, %v5914, 0
      %v5987 = vsel %vm391, %v5915, 0
      %v5990 = vsel %vm391, %v5916, 0
      %v5993 = vsel %vm391, %v5917, 0
      %v5996 = vsel %vm391, %v5918, 0
      %v5999 = vsel %vm391, %v5919, 0
      %v6002 = vsel %vm391, %v5920, 0
      %v6005 = vsel %vm391, %v5921, 0
      %v6008 = vsel %vm391, %v5922, 0
      %v6011 = vsel %vm391, %v5923, 0
      %v6014 = vsel %vm391, %v5924, 0
      %v6017 = vsel %vm391, %v5925, 0
      %v6020 = vsel %vm391, %v5926, 0
      %v6023 = vsel %vm391, %v5927, 0
      %v6026 = vsel %vm391, %v5928, 0
      %v6029 = vsel %vm391, %v5929, 0
      %v6032 = vsel %vm391, %v5930, 0
      %v6035 = vsel %vm391, %v5931, 0
      %v6038 = vsel %vm391, %v5932, 0
      %v6041 = vsel %vm391, %v5933, 0
      %v6044 = vsel %vm391, %v5934, 0
      %v6047 = vsel %vm391, %v5935, 0
      %v6050 = vsel %vm391, %v5936, 0
      %v6053 = vsel %vm391, %v5937, 0
      %v6056 = vsel %vm391, %v5938, 0
      %v6059 = vsel %vm391, %v5939, 0
      %v6062 = vsel %vm391, %v5940, 0
      %v6065 = vsel %vm391, %v5941, 0
      %6067 = vmatprep.subr.mxu0 0.0
      %6068 = vmatpush1.msra.mxu0 %v5943
      %6069 = vmatprep.subr.mxu0 0.0
      %6070 = vmatpush1.msra.mxu0 0.0
      %6071 = vmatprep.subr.mxu0 0.0
      %6072 = vmatpush1.msra.mxu0 0.0
      %6073 = vmatprep.subr.mxu0 0.0
      %6074 = vmatpush1.msra.mxu0 0.0
      %6075 = vmatprep.subr.mxu0 0.0
      %6076 = vmatpush1.msra.mxu0 0.0
      %6077 = vmatprep.subr.mxu0 0.0
      %6078 = vmatpush1.msra.mxu0 0.0
      %6079 = vmatprep.subr.mxu0 0.0
      %6080 = vmatpush1.msra.mxu0 0.0
      %6081 = vmatprep.subr.mxu0 0.0
      %6082 = vmatpush1.msra.mxu0 0.0
      %6083 = vmatprep.subr.mxu0 0.0
      %6084 = vmatpush1.msra.mxu0 0.0
      %6085 = vmatprep.subr.mxu0 0.0
      %6086 = vmatpush1.msra.mxu0 0.0
      %6087 = vmatprep.subr.mxu0 0.0
      %6088 = vmatpush1.msra.mxu0 0.0
      %6089 = vmatprep.subr.mxu0 0.0
      %6090 = vmatpush1.msra.mxu0 0.0
      %6091 = vmatprep.subr.mxu0 0.0
      %6092 = vmatpush1.msra.mxu0 0.0
      %6093 = vmatprep.subr.mxu0 0.0
      %6094 = vmatpush1.msra.mxu0 0.0
      %6095 = vmatprep.subr.mxu0 0.0
      %6096 = vmatpush1.msra.mxu0 0.0
      %6097 = vmatprep.subr.mxu0 0.0
      %6098 = vmatpush1.msra.mxu0 0.0
      %6099 = vmatprep.subr.mxu0 0.0
      %6100 = vmatpush1.msra.mxu0 0.0
      %6101 = vmatprep.subr.mxu0 0.0
      %6102 = vmatpush1.msra.mxu0 0.0
      %6103 = vmatprep.subr.mxu0 0.0
      %6104 = vmatpush1.msra.mxu0 0.0
      %6105 = vmatprep.subr.mxu0 0.0
      %6106 = vmatpush1.msra.mxu0 0.0
      %6107 = vmatprep.subr.mxu0 0.0
      %6108 = vmatpush1.msra.mxu0 0.0
      %6109 = vmatprep.subr.mxu0 0.0
      %6110 = vmatpush1.msra.mxu0 0.0
      %6111 = vmatprep.subr.mxu0 0.0
      %6112 = vmatpush1.msra.mxu0 0.0
      %6113 = vmatprep.subr.mxu0 0.0
      %6114 = vmatpush1.msra.mxu0 0.0
      %6115 = vmatprep.subr.mxu0 0.0
      %6116 = vmatpush1.msra.mxu0 0.0
      %6117 = vmatprep.subr.mxu0 0.0
      %6118 = vmatpush1.msra.mxu0 0.0
      %6119 = vmatprep.subr.mxu0 0.0
      %6120 = vmatpush1.msra.mxu0 0.0
      %6121 = vmatprep.subr.mxu0 0.0
      %6122 = vmatpush1.msra.mxu0 0.0
      %6123 = vmatprep.subr.mxu0 0.0
      %6124 = vmatpush1.msra.mxu0 0.0
      %6125 = vmatprep.subr.mxu0 0.0
      %6126 = vmatpush1.msra.mxu0 0.0
      %6127 = vmatprep.subr.mxu0 0.0
      %6128 = vmatpush1.msra.mxu0 0.0
      %6129 = vmatprep.subr.mxu0 0.0
      %6130 = vmatpush1.msra.mxu0 0.0
      %6131 = vmatprep.mubr.f32.mxu0 0.0
      %6132 = vmatmul.mubr.f32.gmra.mrb[0].mxu0 %v5945
      %v6133 = vpop.f32.mrb[0].mxu0
      %v6134 = vadd.f32 0.0, %v6133
      %v6135 = vpop.f32.mrb[0].mxu0
      %6136 = vmatprep.mubr.f32.mxu0 0.0
      %6137 = vmatmul.mubr.f32.gmra.mrb[0].mxu0 %v5948
      %v6138 = vpop.f32.mrb[0].mxu0
      %v6139 = vadd.f32 0.0, %v6138
      %v6140 = vpop.f32.mrb[0].mxu0
      %6141 = vmatprep.mubr.f32.mxu0 0.0
      %6142 = vmatmul.mubr.f32.gmra.mrb[0].mxu0 %v5951
      %v6143 = vpop.f32.mrb[0].mxu0
      %v6144 = vadd.f32 0.0, %v6143
      %v6145 = vpop.f32.mrb[0].mxu0
      %6146 = vmatprep.mubr.f32.mxu0 0.0
      %6147 = vmatmul.mubr.f32.gmra.mrb[0].mxu0 %v5954
      %v6148 = vpop.f32.mrb[0].mxu0
      %v6149 = vadd.f32 0.0, %v6148
      %v6150 = vpop.f32.mrb[0].mxu0
      %6151 = vmatprep.mubr.f32.mxu0 0.0
      %6152 = vmatmul.mubr.f32.gmra.mrb[0].mxu0 %v5957
      %v6153 = vpop.f32.mrb[0].mxu0
      %v6154 = vadd.f32 0.0, %v6153
      %v6155 = vpop.f32.mrb[0].mxu0
      %6156 = vmatprep.mubr.f32.mxu0 0.0
      %6157 = vmatmul.mubr.f32.gmra.mrb[0].mxu0 %v5960
      %v6158 = vpop.f32.mrb[0].mxu0
      %v6159 = vadd.f32 0.0, %v6158
      %v6160 = vpop.f32.mrb[0].mxu0
      %6161 = vmatprep.mubr.f32.mxu0 0.0
      %6162 = vmatmul.mubr.f32.gmra.mrb[0].mxu0 %v5963
      %v6163 = vpop.f32.mrb[0].mxu0
      %v6164 = vadd.f32 0.0, %v6163
      %v6165 = vpop.f32.mrb[0].mxu0
      %6166 = vmatprep.mubr.f32.mxu0 0.0
      %6167 = vmatmul.mubr.f32.gmra.mrb[0].mxu0 %v5966
      %v6168 = vpop.f32.mrb[0].mxu0
      %v6169 = vadd.f32 0.0, %v6168
      %v6170 = vpop.f32.mrb[0].mxu0
      %6171 = vmatprep.mubr.f32.mxu0 0.0
      %6172 = vmatmul.mubr.f32.gmra.mrb[0].mxu0 %v5969
      %v6173 = vpop.f32.mrb[0].mxu0
      %v6174 = vadd.f32 0.0, %v6173
      %v6175 = vpop.f32.mrb[0].mxu0
      %6176 = vmatprep.mubr.f32.mxu0 0.0
      %6177 = vmatmul.mubr.f32.gmra.mrb[0].mxu0 %v5972
      %v6178 = vpop.f32.mrb[0].mxu0
      %v6179 = vadd.f32 0.0, %v6178
      %v6180 = vpop.f32.mrb[0].mxu0
      %6181 = vmatprep.mubr.f32.mxu0 0.0
      %6182 = vmatmul.mubr.f32.gmra.mrb[0].mxu0 %v5975
      %v6183 = vpop.f32.mrb[0].mxu0
      %v6184 = vadd.f32 0.0, %v6183
      %v6185 = vpop.f32.mrb[0].mxu0
      %6186 = vmatprep.mubr.f32.mxu0 0.0
      %6187 = vmatmul.mubr.f32.gmra.mrb[0].mxu0 %v5978
      %v6188 = vpop.f32.mrb[0].mxu0
      %v6189 = vadd.f32 0.0, %v6188
      %v6190 = vpop.f32.mrb[0].mxu0
      %6191 = vmatprep.mubr.f32.mxu0 0.0
      %6192 = vmatmul.mubr.f32.gmra.mrb[0].mxu0 %v5981
      %v6193 = vpop.f32.mrb[0].mxu0
      %v6194 = vadd.f32 0.0, %v6193
      %v6195 = vpop.f32.mrb[0].mxu0
      %6196 = vmatprep.mubr.f32.mxu0 0.0
      %6197 = vmatmul.mubr.f32.gmra.mrb[0].mxu0 %v5984
      %v6198 = vpop.f32.mrb[0].mxu0
      %v6199 = vadd.f32 0.0, %v6198
      %v6200 = vpop.f32.mrb[0].mxu0
      %6201 = vmatprep.mubr.f32.mxu0 0.0
      %6202 = vmatmul.mubr.f32.gmra.mrb[0].mxu0 %v5987
      %v6203 = vpop.f32.mrb[0].mxu0
      %v6204 = vadd.f32 0.0, %v6203
      %v6205 = vpop.f32.mrb[0].mxu0
      %6206 = vmatprep.mubr.f32.mxu0 0.0
      %6207 = vmatmul.mubr.f32.gmra.mrb[0].mxu0 %v5990
      %v6208 = vpop.f32.mrb[0].mxu0
      %v6209 = vadd.f32 0.0, %v6208
      %v6210 = vpop.f32.mrb[0].mxu0
      %6211 = vmatprep.mubr.f32.mxu0 0.0
      %6212 = vmatmul.mubr.f32.gmra.mrb[0].mxu0 %v5993
      %v6213 = vpop.f32.mrb[0].mxu0
      %v6214 = vadd.f32 0.0, %v6213
      %v6215 = vpop.f32.mrb[0].mxu0
      %6216 = vmatprep.mubr.f32.mxu0 0.0
      %6217 = vmatmul.mubr.f32.gmra.mrb[0].mxu0 %v5996
      %v6218 = vpop.f32.mrb[0].mxu0
      %v6219 = vadd.f32 0.0, %v6218
      %v6220 = vpop.f32.mrb[0].mxu0
      %6221 = vmatprep.mubr.f32.mxu0 0.0
      %6222 = vmatmul.mubr.f32.gmra.mrb[0].mxu0 %v5999
      %v6223 = vpop.f32.mrb[0].mxu0
      %v6224 = vadd.f32 0.0, %v6223
      %v6225 = vpop.f32.mrb[0].mxu0
      %6226 = vmatprep.mubr.f32.mxu0 0.0
      %6227 = vmatmul.mubr.f32.gmra.mrb[0].mxu0 %v6002
      %v6228 = vpop.f32.mrb[0].mxu0
      %v6229 = vadd.f32 0.0, %v6228
      %v6230 = vpop.f32.mrb[0].mxu0
      %6231 = vmatprep.mubr.f32.mxu0 0.0
      %6232 = vmatmul.mubr.f32.gmra.mrb[0].mxu0 %v6005
      %v6233 = vpop.f32.mrb[0].mxu0
      %v6234 = vadd.f32 0.0, %v6233
      %v6235 = vpop.f32.mrb[0].mxu0
      %6236 = vmatprep.mubr.f32.mxu0 0.0
      %6237 = vmatmul.mubr.f32.gmra.mrb[0].mxu0 %v6008
      %v6238 = vpop.f32.mrb[0].mxu0
      %v6239 = vadd.f32 0.0, %v6238
      %v6240 = vpop.f32.mrb[0].mxu0
      %6241 = vmatprep.mubr.f32.mxu0 0.0
      %6242 = vmatmul.mubr.f32.gmra.mrb[0].mxu0 %v6011
      %v6243 = vpop.f32.mrb[0].mxu0
      %v6244 = vadd.f32 0.0, %v6243
      %v6245 = vpop.f32.mrb[0].mxu0
      %6246 = vmatprep.mubr.f32.mxu0 0.0
      %6247 = vmatmul.mubr.f32.gmra.mrb[0].mxu0 %v6014
      %v6248 = vpop.f32.mrb[0].mxu0
      %v6249 = vadd.f32 0.0, %v6248
      %v6250 = vpop.f32.mrb[0].mxu0
      %6251 = vmatprep.mubr.f32.mxu0 0.0
      %6252 = vmatmul.mubr.f32.gmra.mrb[0].mxu0 %v6017
      %v6253 = vpop.f32.mrb[0].mxu0
      %v6254 = vadd.f32 0.0, %v6253
      %v6255 = vpop.f32.mrb[0].mxu0
      %6256 = vmatprep.mubr.f32.mxu0 0.0
      %6257 = vmatmul.mubr.f32.gmra.mrb[0].mxu0 %v6020
      %v6258 = vpop.f32.mrb[0].mxu0
      %v6259 = vadd.f32 0.0, %v6258
      %v6260 = vpop.f32.mrb[0].mxu0
      %6261 = vmatprep.mubr.f32.mxu0 0.0
      %6262 = vmatmul.mubr.f32.gmra.mrb[0].mxu0 %v6023
      %v6263 = vpop.f32.mrb[0].mxu0
      %v6264 = vadd.f32 0.0, %v6263
      %v6265 = vpop.f32.mrb[0].mxu0
      %6266 = vmatprep.mubr.f32.mxu0 0.0
      %6267 = vmatmul.mubr.f32.gmra.mrb[0].mxu0 %v6026
      %v6268 = vpop.f32.mrb[0].mxu0
      %v6269 = vadd.f32 0.0, %v6268
      %v6270 = vpop.f32.mrb[0].mxu0
      %6271 = vmatprep.mubr.f32.mxu0 0.0
      %6272 = vmatmul.mubr.f32.gmra.mrb[0].mxu0 %v6029
      %v6273 = vpop.f32.mrb[0].mxu0
      %v6274 = vadd.f32 0.0, %v6273
      %v6275 = vpop.f32.mrb[0].mxu0
      %6276 = vmatprep.mubr.f32.mxu0 0.0
      %6277 = vmatmul.mubr.f32.gmra.mrb[0].mxu0 %v6032
      %v6278 = vpop.f32.mrb[0].mxu0
      %v6279 = vadd.f32 0.0, %v6278
      %v6280 = vpop.f32.mrb[0].mxu0
      %6281 = vmatprep.mubr.f32.mxu0 0.0
      %6282 = vmatmul.mubr.f32.gmra.mrb[0].mxu0 %v6035
      %v6283 = vpop.f32.mrb[0].mxu0
      %v6284 = vadd.f32 0.0, %v6283
      %v6285 = vpop.f32.mrb[0].mxu0
      %6286 = vmatprep.mubr.f32.mxu0 0.0
      %6287 = vmatmul.mubr.f32.gmra.mrb[0].mxu0 %v6038
      %v6288 = vpop.f32.mrb[0].mxu0
      %v6289 = vadd.f32 0.0, %v6288
      %v6290 = vpop.f32.mrb[0].mxu0
      %6291 = vmatprep.mubr.f32.mxu0 0.0
      %6292 = vmatmul.mubr.f32.gmra.mrb[0].mxu0 %v6041
      %v6293 = vpop.f32.mrb[0].mxu0
      %v6294 = vadd.f32 0.0, %v6293
      %v6295 = vpop.f32.mrb[0].mxu0
      %6296 = vmatprep.mubr.f32.mxu0 0.0
      %6297 = vmatmul.mubr.f32.gmra.mrb[0].mxu0 %v6044
      %v6298 = vpop.f32.mrb[0].mxu0
      %v6299 = vadd.f32 0.0, %v6298
      %v6300 = vpop.f32.mrb[0].mxu0
      %6301 = vmatprep.mubr.f32.mxu0 0.0
      %6302 = vmatmul.mubr.f32.gmra.mrb[0].mxu0 %v6047
      %v6303 = vpop.f32.mrb[0].mxu0
      %v6304 = vadd.f32 0.0, %v6303
      %v6305 = vpop.f32.mrb[0].mxu0
      %6306 = vmatprep.mubr.f32.mxu0 0.0
      %6307 = vmatmul.mubr.f32.gmra.mrb[0].mxu0 %v6050
      %v6308 = vpop.f32.mrb[0].mxu0
      %v6309 = vadd.f32 0.0, %v6308
      %v6310 = vpop.f32.mrb[0].mxu0
      %6311 = vmatprep.mubr.f32.mxu0 0.0
      %6312 = vmatmul.mubr.f32.gmra.mrb[0].mxu0 %v6053
      %v6313 = vpop.f32.mrb[0].mxu0
      %v6314 = vadd.f32 0.0, %v6313
      %v6315 = vpop.f32.mrb[0].mxu0
      %6316 = vmatprep.mubr.f32.mxu0 0.0
      %6317 = vmatmul.mubr.f32.gmra.mrb[0].mxu0 %v6056
      %v6318 = vpop.f32.mrb[0].mxu0
      %v6319 = vadd.f32 0.0, %v6318
      %v6320 = vpop.f32.mrb[0].mxu0
      %6321 = vmatprep.mubr.f32.mxu0 0.0
      %6322 = vmatmul.mubr.f32.gmra.mrb[0].mxu0 %v6059
      %v6323 = vpop.f32.mrb[0].mxu0
      %v6324 = vadd.f32 0.0, %v6323
      %v6325 = vpop.f32.mrb[0].mxu0
      %6326 = vmatprep.mubr.f32.mxu0 0.0
      %6327 = vmatmul.mubr.f32.gmra.mrb[0].mxu0 %v6062
      %v6328 = vpop.f32.mrb[0].mxu0
      %v6329 = vadd.f32 0.0, %v6328
      %v6330 = vpop.f32.mrb[0].mxu0
      %6331 = vmatprep.mubr.f32.mxu0 0.0
      %6332 = vmatmul.mubr.f32.gmra.mrb[0].mxu0 %v6065
      %v6333 = vpop.f32.mrb[0].mxu0
      %v6334 = vadd.f32 0.0, %v6333
      %v6335 = vpop.f32.mrb[0].mxu0
      %6336 = vdwg.mxu0
      %v6337 = vadd.f32 %v5698, %v6134
      %v6338 = vadd.f32 %v5703, %v6139
      %v6339 = vadd.f32 %v5708, %v6144
      %v6340 = vadd.f32 %v5713, %v6149
      %v6341 = vadd.f32 %v5718, %v6154
      %v6342 = vadd.f32 %v5723, %v6159
      %v6343 = vadd.f32 %v5728, %v6164
      %v6344 = vadd.f32 %v5733, %v6169
      %v6345 = vadd.f32 %v5738, %v6174
      %v6346 = vadd.f32 %v5743, %v6179
      %v6347 = vadd.f32 %v5748, %v6184
      %v6348 = vadd.f32 %v5753, %v6189
      %v6349 = vadd.f32 %v5758, %v6194
      %v6350 = vadd.f32 %v5763, %v6199
      %v6351 = vadd.f32 %v5768, %v6204
      %v6352 = vadd.f32 %v5773, %v6209
      %v6353 = vadd.f32 %v5778, %v6214
      %v6354 = vadd.f32 %v5783, %v6219
      %v6355 = vadd.f32 %v5788, %v6224
      %v6356 = vadd.f32 %v5793, %v6229
      %v6357 = vadd.f32 %v5798, %v6234
      %v6358 = vadd.f32 %v5803, %v6239
      %v6359 = vadd.f32 %v5808, %v6244
      %v6360 = vadd.f32 %v5813, %v6249
      %v6361 = vadd.f32 %v5818, %v6254
      %v6362 = vadd.f32 %v5823, %v6259
      %v6363 = vadd.f32 %v5828, %v6264
      %v6364 = vadd.f32 %v5833, %v6269
      %v6365 = vadd.f32 %v5838, %v6274
      %v6366 = vadd.f32 %v5843, %v6279
      %v6367 = vadd.f32 %v5848, %v6284
      %v6368 = vadd.f32 %v5853, %v6289
      %v6369 = vadd.f32 %v5858, %v6294
      %v6370 = vadd.f32 %v5863, %v6299
      %v6371 = vadd.f32 %v5868, %v6304
      %v6372 = vadd.f32 %v5873, %v6309
      %v6373 = vadd.f32 %v5878, %v6314
      %v6374 = vadd.f32 %v5883, %v6319
      %v6375 = vadd.f32 %v5888, %v6324
      %v6376 = vadd.f32 %v5893, %v6329
      %v6377 = vadd.f32 %v5898, %v6334
      %v6378 = vld [vmem:[#allocation2 + $0x12] sm:$0xff]
      %v6379 = vld [vmem:[#allocation2 + $0x1a] sm:$0xff]
      %v6380 = vld [vmem:[#allocation2 + $0x22] sm:$0xff]
      %v6381 = vld [vmem:[#allocation2 + $0x2a] sm:$0xff]
      %v6382 = vld [vmem:[#allocation2 + $0x32] sm:$0xff]
      %v6383 = vld [vmem:[#allocation2 + $0x3a] sm:$0xff]
      %v6384 = vld [vmem:[#allocation2 + $0x42] sm:$0xff]
      %v6385 = vld [vmem:[#allocation2 + $0x4a] sm:$0xff]
      %v6386 = vld [vmem:[#allocation2 + $0x52] sm:$0xff]
      %v6387 = vld [vmem:[#allocation2 + $0x5a] sm:$0xff]
      %v6388 = vld [vmem:[#allocation2 + $0x62] sm:$0xff]
      %v6389 = vld [vmem:[#allocation2 + $0x6a] sm:$0xff]
      %v6390 = vld [vmem:[#allocation2 + $0x72] sm:$0xff]
      %v6391 = vld [vmem:[#allocation2 + $0x7a] sm:$0xff]
      %v6392 = vld [vmem:[#allocation2 + $0x82] sm:$0xff]
      %v6393 = vld [vmem:[#allocation2 + $0x8a] sm:$0xff]
      %v6394 = vld [vmem:[#allocation2 + $0x92] sm:$0xff]
      %v6395 = vld [vmem:[#allocation2 + $0x9a] sm:$0xff]
      %v6396 = vld [vmem:[#allocation2 + $0xa2] sm:$0xff]
      %v6397 = vld [vmem:[#allocation2 + $0xaa] sm:$0xff]
      %v6398 = vld [vmem:[#allocation2 + $0xb2] sm:$0xff]
      %v6399 = vld [vmem:[#allocation2 + $0xba] sm:$0xff]
      %v6400 = vld [vmem:[#allocation2 + $0xc2] sm:$0xff]
      %v6401 = vld [vmem:[#allocation2 + $0xca] sm:$0xff]
      %v6402 = vld [vmem:[#allocation2 + $0xd2] sm:$0xff]
      %v6403 = vld [vmem:[#allocation2 + $0xda] sm:$0xff]
      %v6404 = vld [vmem:[#allocation2 + $0xe2] sm:$0xff]
      %v6405 = vld [vmem:[#allocation2 + $0xea] sm:$0xff]
      %v6406 = vld [vmem:[#allocation2 + $0xf2] sm:$0xff]
      %v6407 = vld [vmem:[#allocation2 + $0xfa] sm:$0xff]
      %v6408 = vld [vmem:[#allocation2 + $0x102] sm:$0xff]
      %v6409 = vld [vmem:[#allocation2 + $0x10a] sm:$0xff]
      %v6410 = vld [vmem:[#allocation2 + $0x112] sm:$0xff]
      %v6411 = vld [vmem:[#allocation2 + $0x11a] sm:$0xff]
      %v6412 = vld [vmem:[#allocation2 + $0x122] sm:$0xff]
      %v6413 = vld [vmem:[#allocation2 + $0x12a] sm:$0xff]
      %v6414 = vld [vmem:[#allocation2 + $0x132] sm:$0xff]
      %v6415 = vld [vmem:[#allocation2 + $0x13a] sm:$0xff]
      %v6416 = vld [vmem:[#allocation2 + $0x142] sm:$0xff]
      %v6417 = vld [vmem:[#allocation2 + $0x14a] sm:$0xff]
      %v6418 = vld [vmem:[#allocation2 + $0x152] sm:$0xf]
      %s6419 = scalar_lea.vmem %s4, 24
      %v6420 = vld [vmem:[%s6419] sm:$0xff]
      %v6422 = vsel %vm391, %v6378, 0
      %v6425 = vsel %vm391, %v6379, 0
      %v6428 = vsel %vm391, %v6380, 0
      %v6431 = vsel %vm391, %v6381, 0
      %v6434 = vsel %vm391, %v6382, 0
      %v6437 = vsel %vm391, %v6383, 0
      %v6440 = vsel %vm391, %v6384, 0
      %v6443 = vsel %vm391, %v6385, 0
      %v6446 = vsel %vm391, %v6386, 0
      %v6449 = vsel %vm391, %v6387, 0
      %v6452 = vsel %vm391, %v6388, 0
      %v6455 = vsel %vm391, %v6389, 0
      %v6458 = vsel %vm391, %v6390, 0
      %v6461 = vsel %vm391, %v6391, 0
      %v6464 = vsel %vm391, %v6392, 0
      %v6467 = vsel %vm391, %v6393, 0
      %v6470 = vsel %vm391, %v6394, 0
      %v6473 = vsel %vm391, %v6395, 0
      %v6476 = vsel %vm391, %v6396, 0
      %v6479 = vsel %vm391, %v6397, 0
      %v6482 = vsel %vm391, %v6398, 0
      %v6485 = vsel %vm391, %v6399, 0
      %v6488 = vsel %vm391, %v6400, 0
      %v6491 = vsel %vm391, %v6401, 0
      %v6494 = vsel %vm391, %v6402, 0
      %v6497 = vsel %vm391, %v6403, 0
      %v6500 = vsel %vm391, %v6404, 0
      %v6503 = vsel %vm391, %v6405, 0
      %v6506 = vsel %vm391, %v6406, 0
      %v6509 = vsel %vm391, %v6407, 0
      %v6512 = vsel %vm391, %v6408, 0
      %v6515 = vsel %vm391, %v6409, 0
      %v6518 = vsel %vm391, %v6410, 0
      %v6521 = vsel %vm391, %v6411, 0
      %v6524 = vsel %vm391, %v6412, 0
      %v6527 = vsel %vm391, %v6413, 0
      %v6530 = vsel %vm391, %v6414, 0
      %v6533 = vsel %vm391, %v6415, 0
      %v6536 = vsel %vm391, %v6416, 0
      %v6539 = vsel %vm391, %v6417, 0
      %v6542 = vsel %vm391, %v6418, 0
      %6544 = vmatprep.subr.mxu0 0.0
      %6545 = vmatpush1.msra.mxu0 %v6420
      %6546 = vmatprep.subr.mxu0 0.0
      %6547 = vmatpush1.msra.mxu0 0.0
      %6548 = vmatprep.subr.mxu0 0.0
      %6549 = vmatpush1.msra.mxu0 0.0
      %6550 = vmatprep.subr.mxu0 0.0
      %6551 = vmatpush1.msra.mxu0 0.0
      %6552 = vmatprep.subr.mxu0 0.0
      %6553 = vmatpush1.msra.mxu0 0.0
      %6554 = vmatprep.subr.mxu0 0.0
      %6555 = vmatpush1.msra.mxu0 0.0
      %6556 = vmatprep.subr.mxu0 0.0
      %6557 = vmatpush1.msra.mxu0 0.0
      %6558 = vmatprep.subr.mxu0 0.0
      %6559 = vmatpush1.msra.mxu0 0.0
      %6560 = vmatprep.subr.mxu0 0.0
      %6561 = vmatpush1.msra.mxu0 0.0
      %6562 = vmatprep.subr.mxu0 0.0
      %6563 = vmatpush1.msra.mxu0 0.0
      %6564 = vmatprep.subr.mxu0 0.0
      %6565 = vmatpush1.msra.mxu0 0.0
      %6566 = vmatprep.subr.mxu0 0.0
      %6567 = vmatpush1.msra.mxu0 0.0
      %6568 = vmatprep.subr.mxu0 0.0
      %6569 = vmatpush1.msra.mxu0 0.0
      %6570 = vmatprep.subr.mxu0 0.0
      %6571 = vmatpush1.msra.mxu0 0.0
      %6572 = vmatprep.subr.mxu0 0.0
      %6573 = vmatpush1.msra.mxu0 0.0
      %6574 = vmatprep.subr.mxu0 0.0
      %6575 = vmatpush1.msra.mxu0 0.0
      %6576 = vmatprep.subr.mxu0 0.0
      %6577 = vmatpush1.msra.mxu0 0.0
      %6578 = vmatprep.subr.mxu0 0.0
      %6579 = vmatpush1.msra.mxu0 0.0
      %6580 = vmatprep.subr.mxu0 0.0
      %6581 = vmatpush1.msra.mxu0 0.0
      %6582 = vmatprep.subr.mxu0 0.0
      %6583 = vmatpush1.msra.mxu0 0.0
      %6584 = vmatprep.subr.mxu0 0.0
      %6585 = vmatpush1.msra.mxu0 0.0
      %6586 = vmatprep.subr.mxu0 0.0
      %6587 = vmatpush1.msra.mxu0 0.0
      %6588 = vmatprep.subr.mxu0 0.0
      %6589 = vmatpush1.msra.mxu0 0.0
      %6590 = vmatprep.subr.mxu0 0.0
      %6591 = vmatpush1.msra.mxu0 0.0
      %6592 = vmatprep.subr.mxu0 0.0
      %6593 = vmatpush1.msra.mxu0 0.0
      %6594 = vmatprep.subr.mxu0 0.0
      %6595 = vmatpush1.msra.mxu0 0.0
      %6596 = vmatprep.subr.mxu0 0.0
      %6597 = vmatpush1.msra.mxu0 0.0
      %6598 = vmatprep.subr.mxu0 0.0
      %6599 = vmatpush1.msra.mxu0 0.0
      %6600 = vmatprep.subr.mxu0 0.0
      %6601 = vmatpush1.msra.mxu0 0.0
      %6602 = vmatprep.subr.mxu0 0.0
      %6603 = vmatpush1.msra.mxu0 0.0
      %6604 = vmatprep.subr.mxu0 0.0
      %6605 = vmatpush1.msra.mxu0 0.0
      %6606 = vmatprep.subr.mxu0 0.0
      %6607 = vmatpush1.msra.mxu0 0.0
      %6608 = vmatprep.mubr.f32.mxu0 0.0
      %6609 = vmatmul.mubr.f32.gmra.mrb[0].mxu0 %v6422
      %v6610 = vpop.f32.mrb[0].mxu0
      %v6611 = vadd.f32 0.0, %v6610
      %v6612 = vpop.f32.mrb[0].mxu0
      %6613 = vmatprep.mubr.f32.mxu0 0.0
      %6614 = vmatmul.mubr.f32.gmra.mrb[0].mxu0 %v6425
      %v6615 = vpop.f32.mrb[0].mxu0
      %v6616 = vadd.f32 0.0, %v6615
      %v6617 = vpop.f32.mrb[0].mxu0
      %6618 = vmatprep.mubr.f32.mxu0 0.0
      %6619 = vmatmul.mubr.f32.gmra.mrb[0].mxu0 %v6428
      %v6620 = vpop.f32.mrb[0].mxu0
      %v6621 = vadd.f32 0.0, %v6620
      %v6622 = vpop.f32.mrb[0].mxu0
      %6623 = vmatprep.mubr.f32.mxu0 0.0
      %6624 = vmatmul.mubr.f32.gmra.mrb[0].mxu0 %v6431
      %v6625 = vpop.f32.mrb[0].mxu0
      %v6626 = vadd.f32 0.0, %v6625
      %v6627 = vpop.f32.mrb[0].mxu0
      %6628 = vmatprep.mubr.f32.mxu0 0.0
      %6629 = vmatmul.mubr.f32.gmra.mrb[0].mxu0 %v6434
      %v6630 = vpop.f32.mrb[0].mxu0
      %v6631 = vadd.f32 0.0, %v6630
      %v6632 = vpop.f32.mrb[0].mxu0
      %6633 = vmatprep.mubr.f32.mxu0 0.0
      %6634 = vmatmul.mubr.f32.gmra.mrb[0].mxu0 %v6437
      %v6635 = vpop.f32.mrb[0].mxu0
      %v6636 = vadd.f32 0.0, %v6635
      %v6637 = vpop.f32.mrb[0].mxu0
      %6638 = vmatprep.mubr.f32.mxu0 0.0
      %6639 = vmatmul.mubr.f32.gmra.mrb[0].mxu0 %v6440
      %v6640 = vpop.f32.mrb[0].mxu0
      %v6641 = vadd.f32 0.0, %v6640
      %v6642 = vpop.f32.mrb[0].mxu0
      %6643 = vmatprep.mubr.f32.mxu0 0.0
      %6644 = vmatmul.mubr.f32.gmra.mrb[0].mxu0 %v6443
      %v6645 = vpop.f32.mrb[0].mxu0
      %v6646 = vadd.f32 0.0, %v6645
      %v6647 = vpop.f32.mrb[0].mxu0
      %6648 = vmatprep.mubr.f32.mxu0 0.0
      %6649 = vmatmul.mubr.f32.gmra.mrb[0].mxu0 %v6446
      %v6650 = vpop.f32.mrb[0].mxu0
      %v6651 = vadd.f32 0.0, %v6650
      %v6652 = vpop.f32.mrb[0].mxu0
      %6653 = vmatprep.mubr.f32.mxu0 0.0
      %6654 = vmatmul.mubr.f32.gmra.mrb[0].mxu0 %v6449
      %v6655 = vpop.f32.mrb[0].mxu0
      %v6656 = vadd.f32 0.0, %v6655
      %v6657 = vpop.f32.mrb[0].mxu0
      %6658 = vmatprep.mubr.f32.mxu0 0.0
      %6659 = vmatmul.mubr.f32.gmra.mrb[0].mxu0 %v6452
      %v6660 = vpop.f32.mrb[0].mxu0
      %v6661 = vadd.f32 0.0, %v6660
      %v6662 = vpop.f32.mrb[0].mxu0
      %6663 = vmatprep.mubr.f32.mxu0 0.0
      %6664 = vmatmul.mubr.f32.gmra.mrb[0].mxu0 %v6455
      %v6665 = vpop.f32.mrb[0].mxu0
      %v6666 = vadd.f32 0.0, %v6665
      %v6667 = vpop.f32.mrb[0].mxu0
      %6668 = vmatprep.mubr.f32.mxu0 0.0
      %6669 = vmatmul.mubr.f32.gmra.mrb[0].mxu0 %v6458
      %v6670 = vpop.f32.mrb[0].mxu0
      %v6671 = vadd.f32 0.0, %v6670
      %v6672 = vpop.f32.mrb[0].mxu0
      %6673 = vmatprep.mubr.f32.mxu0 0.0
      %6674 = vmatmul.mubr.f32.gmra.mrb[0].mxu0 %v6461
      %v6675 = vpop.f32.mrb[0].mxu0
      %v6676 = vadd.f32 0.0, %v6675
      %v6677 = vpop.f32.mrb[0].mxu0
      %6678 = vmatprep.mubr.f32.mxu0 0.0
      %6679 = vmatmul.mubr.f32.gmra.mrb[0].mxu0 %v6464
      %v6680 = vpop.f32.mrb[0].mxu0
      %v6681 = vadd.f32 0.0, %v6680
      %v6682 = vpop.f32.mrb[0].mxu0
      %6683 = vmatprep.mubr.f32.mxu0 0.0
      %6684 = vmatmul.mubr.f32.gmra.mrb[0].mxu0 %v6467
      %v6685 = vpop.f32.mrb[0].mxu0
      %v6686 = vadd.f32 0.0, %v6685
      %v6687 = vpop.f32.mrb[0].mxu0
      %6688 = vmatprep.mubr.f32.mxu0 0.0
      %6689 = vmatmul.mubr.f32.gmra.mrb[0].mxu0 %v6470
      %v6690 = vpop.f32.mrb[0].mxu0
      %v6691 = vadd.f32 0.0, %v6690
      %v6692 = vpop.f32.mrb[0].mxu0
      %6693 = vmatprep.mubr.f32.mxu0 0.0
      %6694 = vmatmul.mubr.f32.gmra.mrb[0].mxu0 %v6473
      %v6695 = vpop.f32.mrb[0].mxu0
      %v6696 = vadd.f32 0.0, %v6695
      %v6697 = vpop.f32.mrb[0].mxu0
      %6698 = vmatprep.mubr.f32.mxu0 0.0
      %6699 = vmatmul.mubr.f32.gmra.mrb[0].mxu0 %v6476
      %v6700 = vpop.f32.mrb[0].mxu0
      %v6701 = vadd.f32 0.0, %v6700
      %v6702 = vpop.f32.mrb[0].mxu0
      %6703 = vmatprep.mubr.f32.mxu0 0.0
      %6704 = vmatmul.mubr.f32.gmra.mrb[0].mxu0 %v6479
      %v6705 = vpop.f32.mrb[0].mxu0
      %v6706 = vadd.f32 0.0, %v6705
      %v6707 = vpop.f32.mrb[0].mxu0
      %6708 = vmatprep.mubr.f32.mxu0 0.0
      %6709 = vmatmul.mubr.f32.gmra.mrb[0].mxu0 %v6482
      %v6710 = vpop.f32.mrb[0].mxu0
      %v6711 = vadd.f32 0.0, %v6710
      %v6712 = vpop.f32.mrb[0].mxu0
      %6713 = vmatprep.mubr.f32.mxu0 0.0
      %6714 = vmatmul.mubr.f32.gmra.mrb[0].mxu0 %v6485
      %v6715 = vpop.f32.mrb[0].mxu0
      %v6716 = vadd.f32 0.0, %v6715
      %v6717 = vpop.f32.mrb[0].mxu0
      %6718 = vmatprep.mubr.f32.mxu0 0.0
      %6719 = vmatmul.mubr.f32.gmra.mrb[0].mxu0 %v6488
      %v6720 = vpop.f32.mrb[0].mxu0
      %v6721 = vadd.f32 0.0, %v6720
      %v6722 = vpop.f32.mrb[0].mxu0
      %6723 = vmatprep.mubr.f32.mxu0 0.0
      %6724 = vmatmul.mubr.f32.gmra.mrb[0].mxu0 %v6491
      %v6725 = vpop.f32.mrb[0].mxu0
      %v6726 = vadd.f32 0.0, %v6725
      %v6727 = vpop.f32.mrb[0].mxu0
      %6728 = vmatprep.mubr.f32.mxu0 0.0
      %6729 = vmatmul.mubr.f32.gmra.mrb[0].mxu0 %v6494
      %v6730 = vpop.f32.mrb[0].mxu0
      %v6731 = vadd.f32 0.0, %v6730
      %v6732 = vpop.f32.mrb[0].mxu0
      %6733 = vmatprep.mubr.f32.mxu0 0.0
      %6734 = vmatmul.mubr.f32.gmra.mrb[0].mxu0 %v6497
      %v6735 = vpop.f32.mrb[0].mxu0
      %v6736 = vadd.f32 0.0, %v6735
      %v6737 = vpop.f32.mrb[0].mxu0
      %6738 = vmatprep.mubr.f32.mxu0 0.0
      %6739 = vmatmul.mubr.f32.gmra.mrb[0].mxu0 %v6500
      %v6740 = vpop.f32.mrb[0].mxu0
      %v6741 = vadd.f32 0.0, %v6740
      %v6742 = vpop.f32.mrb[0].mxu0
      %6743 = vmatprep.mubr.f32.mxu0 0.0
      %6744 = vmatmul.mubr.f32.gmra.mrb[0].mxu0 %v6503
      %v6745 = vpop.f32.mrb[0].mxu0
      %v6746 = vadd.f32 0.0, %v6745
      %v6747 = vpop.f32.mrb[0].mxu0
      %6748 = vmatprep.mubr.f32.mxu0 0.0
      %6749 = vmatmul.mubr.f32.gmra.mrb[0].mxu0 %v6506
      %v6750 = vpop.f32.mrb[0].mxu0
      %v6751 = vadd.f32 0.0, %v6750
      %v6752 = vpop.f32.mrb[0].mxu0
      %6753 = vmatprep.mubr.f32.mxu0 0.0
      %6754 = vmatmul.mubr.f32.gmra.mrb[0].mxu0 %v6509
      %v6755 = vpop.f32.mrb[0].mxu0
      %v6756 = vadd.f32 0.0, %v6755
      %v6757 = vpop.f32.mrb[0].mxu0
      %6758 = vmatprep.mubr.f32.mxu0 0.0
      %6759 = vmatmul.mubr.f32.gmra.mrb[0].mxu0 %v6512
      %v6760 = vpop.f32.mrb[0].mxu0
      %v6761 = vadd.f32 0.0, %v6760
      %v6762 = vpop.f32.mrb[0].mxu0
      %6763 = vmatprep.mubr.f32.mxu0 0.0
      %6764 = vmatmul.mubr.f32.gmra.mrb[0].mxu0 %v6515
      %v6765 = vpop.f32.mrb[0].mxu0
      %v6766 = vadd.f32 0.0, %v6765
      %v6767 = vpop.f32.mrb[0].mxu0
      %6768 = vmatprep.mubr.f32.mxu0 0.0
      %6769 = vmatmul.mubr.f32.gmra.mrb[0].mxu0 %v6518
      %v6770 = vpop.f32.mrb[0].mxu0
      %v6771 = vadd.f32 0.0, %v6770
      %v6772 = vpop.f32.mrb[0].mxu0
      %6773 = vmatprep.mubr.f32.mxu0 0.0
      %6774 = vmatmul.mubr.f32.gmra.mrb[0].mxu0 %v6521
      %v6775 = vpop.f32.mrb[0].mxu0
      %v6776 = vadd.f32 0.0, %v6775
      %v6777 = vpop.f32.mrb[0].mxu0
      %6778 = vmatprep.mubr.f32.mxu0 0.0
      %6779 = vmatmul.mubr.f32.gmra.mrb[0].mxu0 %v6524
      %v6780 = vpop.f32.mrb[0].mxu0
      %v6781 = vadd.f32 0.0, %v6780
      %v6782 = vpop.f32.mrb[0].mxu0
      %6783 = vmatprep.mubr.f32.mxu0 0.0
      %6784 = vmatmul.mubr.f32.gmra.mrb[0].mxu0 %v6527
      %v6785 = vpop.f32.mrb[0].mxu0
      %v6786 = vadd.f32 0.0, %v6785
      %v6787 = vpop.f32.mrb[0].mxu0
      %6788 = vmatprep.mubr.f32.mxu0 0.0
      %6789 = vmatmul.mubr.f32.gmra.mrb[0].mxu0 %v6530
      %v6790 = vpop.f32.mrb[0].mxu0
      %v6791 = vadd.f32 0.0, %v6790
      %v6792 = vpop.f32.mrb[0].mxu0
      %6793 = vmatprep.mubr.f32.mxu0 0.0
      %6794 = vmatmul.mubr.f32.gmra.mrb[0].mxu0 %v6533
      %v6795 = vpop.f32.mrb[0].mxu0
      %v6796 = vadd.f32 0.0, %v6795
      %v6797 = vpop.f32.mrb[0].mxu0
      %6798 = vmatprep.mubr.f32.mxu0 0.0
      %6799 = vmatmul.mubr.f32.gmra.mrb[0].mxu0 %v6536
      %v6800 = vpop.f32.mrb[0].mxu0
      %v6801 = vadd.f32 0.0, %v6800
      %v6802 = vpop.f32.mrb[0].mxu0
      %6803 = vmatprep.mubr.f32.mxu0 0.0
      %6804 = vmatmul.mubr.f32.gmra.mrb[0].mxu0 %v6539
      %v6805 = vpop.f32.mrb[0].mxu0
      %v6806 = vadd.f32 0.0, %v6805
      %v6807 = vpop.f32.mrb[0].mxu0
      %6808 = vmatprep.mubr.f32.mxu0 0.0
      %6809 = vmatmul.mubr.f32.gmra.mrb[0].mxu0 %v6542
      %v6810 = vpop.f32.mrb[0].mxu0
      %v6811 = vadd.f32 0.0, %v6810
      %v6812 = vpop.f32.mrb[0].mxu0
      %6813 = vdwg.mxu0
      %v6814 = vadd.f32 %v6337, %v6611
      %v6815 = vadd.f32 %v6338, %v6616
      %v6816 = vadd.f32 %v6339, %v6621
      %v6817 = vadd.f32 %v6340, %v6626
      %v6818 = vadd.f32 %v6341, %v6631
      %v6819 = vadd.f32 %v6342, %v6636
      %v6820 = vadd.f32 %v6343, %v6641
      %v6821 = vadd.f32 %v6344, %v6646
      %v6822 = vadd.f32 %v6345, %v6651
      %v6823 = vadd.f32 %v6346, %v6656
      %v6824 = vadd.f32 %v6347, %v6661
      %v6825 = vadd.f32 %v6348, %v6666
      %v6826 = vadd.f32 %v6349, %v6671
      %v6827 = vadd.f32 %v6350, %v6676
      %v6828 = vadd.f32 %v6351, %v6681
      %v6829 = vadd.f32 %v6352, %v6686
      %v6830 = vadd.f32 %v6353, %v6691
      %v6831 = vadd.f32 %v6354, %v6696
      %v6832 = vadd.f32 %v6355, %v6701
      %v6833 = vadd.f32 %v6356, %v6706
      %v6834 = vadd.f32 %v6357, %v6711
      %v6835 = vadd.f32 %v6358, %v6716
      %v6836 = vadd.f32 %v6359, %v6721
      %v6837 = vadd.f32 %v6360, %v6726
      %v6838 = vadd.f32 %v6361, %v6731
      %v6839 = vadd.f32 %v6362, %v6736
      %v6840 = vadd.f32 %v6363, %v6741
      %v6841 = vadd.f32 %v6364, %v6746
      %v6842 = vadd.f32 %v6365, %v6751
      %v6843 = vadd.f32 %v6366, %v6756
      %v6844 = vadd.f32 %v6367, %v6761
      %v6845 = vadd.f32 %v6368, %v6766
      %v6846 = vadd.f32 %v6369, %v6771
      %v6847 = vadd.f32 %v6370, %v6776
      %v6848 = vadd.f32 %v6371, %v6781
      %v6849 = vadd.f32 %v6372, %v6786
      %v6850 = vadd.f32 %v6373, %v6791
      %v6851 = vadd.f32 %v6374, %v6796
      %v6852 = vadd.f32 %v6375, %v6801
      %v6853 = vadd.f32 %v6376, %v6806
      %v6854 = vadd.f32 %v6377, %v6811
      %v6855 = vld [vmem:[#allocation2 + $0x13] sm:$0xff]
      %v6856 = vld [vmem:[#allocation2 + $0x1b] sm:$0xff]
      %v6857 = vld [vmem:[#allocation2 + $0x23] sm:$0xff]
      %v6858 = vld [vmem:[#allocation2 + $0x2b] sm:$0xff]
      %v6859 = vld [vmem:[#allocation2 + $0x33] sm:$0xff]
      %v6860 = vld [vmem:[#allocation2 + $0x3b] sm:$0xff]
      %v6861 = vld [vmem:[#allocation2 + $0x43] sm:$0xff]
      %v6862 = vld [vmem:[#allocation2 + $0x4b] sm:$0xff]
      %v6863 = vld [vmem:[#allocation2 + $0x53] sm:$0xff]
      %v6864 = vld [vmem:[#allocation2 + $0x5b] sm:$0xff]
      %v6865 = vld [vmem:[#allocation2 + $0x63] sm:$0xff]
      %v6866 = vld [vmem:[#allocation2 + $0x6b] sm:$0xff]
      %v6867 = vld [vmem:[#allocation2 + $0x73] sm:$0xff]
      %v6868 = vld [vmem:[#allocation2 + $0x7b] sm:$0xff]
      %v6869 = vld [vmem:[#allocation2 + $0x83] sm:$0xff]
      %v6870 = vld [vmem:[#allocation2 + $0x8b] sm:$0xff]
      %v6871 = vld [vmem:[#allocation2 + $0x93] sm:$0xff]
      %v6872 = vld [vmem:[#allocation2 + $0x9b] sm:$0xff]
      %v6873 = vld [vmem:[#allocation2 + $0xa3] sm:$0xff]
      %v6874 = vld [vmem:[#allocation2 + $0xab] sm:$0xff]
      %v6875 = vld [vmem:[#allocation2 + $0xb3] sm:$0xff]
      %v6876 = vld [vmem:[#allocation2 + $0xbb] sm:$0xff]
      %v6877 = vld [vmem:[#allocation2 + $0xc3] sm:$0xff]
      %v6878 = vld [vmem:[#allocation2 + $0xcb] sm:$0xff]
      %v6879 = vld [vmem:[#allocation2 + $0xd3] sm:$0xff]
      %v6880 = vld [vmem:[#allocation2 + $0xdb] sm:$0xff]
      %v6881 = vld [vmem:[#allocation2 + $0xe3] sm:$0xff]
      %v6882 = vld [vmem:[#allocation2 + $0xeb] sm:$0xff]
      %v6883 = vld [vmem:[#allocation2 + $0xf3] sm:$0xff]
      %v6884 = vld [vmem:[#allocation2 + $0xfb] sm:$0xff]
      %v6885 = vld [vmem:[#allocation2 + $0x103] sm:$0xff]
      %v6886 = vld [vmem:[#allocation2 + $0x10b] sm:$0xff]
      %v6887 = vld [vmem:[#allocation2 + $0x113] sm:$0xff]
      %v6888 = vld [vmem:[#allocation2 + $0x11b] sm:$0xff]
      %v6889 = vld [vmem:[#allocation2 + $0x123] sm:$0xff]
      %v6890 = vld [vmem:[#allocation2 + $0x12b] sm:$0xff]
      %v6891 = vld [vmem:[#allocation2 + $0x133] sm:$0xff]
      %v6892 = vld [vmem:[#allocation2 + $0x13b] sm:$0xff]
      %v6893 = vld [vmem:[#allocation2 + $0x143] sm:$0xff]
      %v6894 = vld [vmem:[#allocation2 + $0x14b] sm:$0xff]
      %v6895 = vld [vmem:[#allocation2 + $0x153] sm:$0xf]
      %s6896 = scalar_lea.vmem %s4, 32
      %v6897 = vld [vmem:[%s6896] sm:$0xff]
      %v6899 = vsel %vm391, %v6855, 0
      %v6902 = vsel %vm391, %v6856, 0
      %v6905 = vsel %vm391, %v6857, 0
      %v6908 = vsel %vm391, %v6858, 0
      %v6911 = vsel %vm391, %v6859, 0
      %v6914 = vsel %vm391, %v6860, 0
      %v6917 = vsel %vm391, %v6861, 0
      %v6920 = vsel %vm391, %v6862, 0
      %v6923 = vsel %vm391, %v6863, 0
      %v6926 = vsel %vm391, %v6864, 0
      %v6929 = vsel %vm391, %v6865, 0
      %v6932 = vsel %vm391, %v6866, 0
      %v6935 = vsel %vm391, %v6867, 0
      %v6938 = vsel %vm391, %v6868, 0
      %v6941 = vsel %vm391, %v6869, 0
      %v6944 = vsel %vm391, %v6870, 0
      %v6947 = vsel %vm391, %v6871, 0
      %v6950 = vsel %vm391, %v6872, 0
      %v6953 = vsel %vm391, %v6873, 0
      %v6956 = vsel %vm391, %v6874, 0
      %v6959 = vsel %vm391, %v6875, 0
      %v6962 = vsel %vm391, %v6876, 0
      %v6965 = vsel %vm391, %v6877, 0
      %v6968 = vsel %vm391, %v6878, 0
      %v6971 = vsel %vm391, %v6879, 0
      %v6974 = vsel %vm391, %v6880, 0
      %v6977 = vsel %vm391, %v6881, 0
      %v6980 = vsel %vm391, %v6882, 0
      %v6983 = vsel %vm391, %v6883, 0
      %v6986 = vsel %vm391, %v6884, 0
      %v6989 = vsel %vm391, %v6885, 0
      %v6992 = vsel %vm391, %v6886, 0
      %v6995 = vsel %vm391, %v6887, 0
      %v6998 = vsel %vm391, %v6888, 0
      %v7001 = vsel %vm391, %v6889, 0
      %v7004 = vsel %vm391, %v6890, 0
      %v7007 = vsel %vm391, %v6891, 0
      %v7010 = vsel %vm391, %v6892, 0
      %v7013 = vsel %vm391, %v6893, 0
      %v7016 = vsel %vm391, %v6894, 0
      %v7019 = vsel %vm391, %v6895, 0
      %7021 = vmatprep.subr.mxu0 0.0
      %7022 = vmatpush1.msra.mxu0 %v6897
      %7023 = vmatprep.subr.mxu0 0.0
      %7024 = vmatpush1.msra.mxu0 0.0
      %7025 = vmatprep.subr.mxu0 0.0
      %7026 = vmatpush1.msra.mxu0 0.0
      %7027 = vmatprep.subr.mxu0 0.0
      %7028 = vmatpush1.msra.mxu0 0.0
      %7029 = vmatprep.subr.mxu0 0.0
      %7030 = vmatpush1.msra.mxu0 0.0
      %7031 = vmatprep.subr.mxu0 0.0
      %7032 = vmatpush1.msra.mxu0 0.0
      %7033 = vmatprep.subr.mxu0 0.0
      %7034 = vmatpush1.msra.mxu0 0.0
      %7035 = vmatprep.subr.mxu0 0.0
      %7036 = vmatpush1.msra.mxu0 0.0
      %7037 = vmatprep.subr.mxu0 0.0
      %7038 = vmatpush1.msra.mxu0 0.0
      %7039 = vmatprep.subr.mxu0 0.0
      %7040 = vmatpush1.msra.mxu0 0.0
      %7041 = vmatprep.subr.mxu0 0.0
      %7042 = vmatpush1.msra.mxu0 0.0
      %7043 = vmatprep.subr.mxu0 0.0
      %7044 = vmatpush1.msra.mxu0 0.0
      %7045 = vmatprep.subr.mxu0 0.0
      %7046 = vmatpush1.msra.mxu0 0.0
      %7047 = vmatprep.subr.mxu0 0.0
      %7048 = vmatpush1.msra.mxu0 0.0
      %7049 = vmatprep.subr.mxu0 0.0
      %7050 = vmatpush1.msra.mxu0 0.0
      %7051 = vmatprep.subr.mxu0 0.0
      %7052 = vmatpush1.msra.mxu0 0.0
      %7053 = vmatprep.subr.mxu0 0.0
      %7054 = vmatpush1.msra.mxu0 0.0
      %7055 = vmatprep.subr.mxu0 0.0
      %7056 = vmatpush1.msra.mxu0 0.0
      %7057 = vmatprep.subr.mxu0 0.0
      %7058 = vmatpush1.msra.mxu0 0.0
      %7059 = vmatprep.subr.mxu0 0.0
      %7060 = vmatpush1.msra.mxu0 0.0
      %7061 = vmatprep.subr.mxu0 0.0
      %7062 = vmatpush1.msra.mxu0 0.0
      %7063 = vmatprep.subr.mxu0 0.0
      %7064 = vmatpush1.msra.mxu0 0.0
      %7065 = vmatprep.subr.mxu0 0.0
      %7066 = vmatpush1.msra.mxu0 0.0
      %7067 = vmatprep.subr.mxu0 0.0
      %7068 = vmatpush1.msra.mxu0 0.0
      %7069 = vmatprep.subr.mxu0 0.0
      %7070 = vmatpush1.msra.mxu0 0.0
      %7071 = vmatprep.subr.mxu0 0.0
      %7072 = vmatpush1.msra.mxu0 0.0
      %7073 = vmatprep.subr.mxu0 0.0
      %7074 = vmatpush1.msra.mxu0 0.0
      %7075 = vmatprep.subr.mxu0 0.0
      %7076 = vmatpush1.msra.mxu0 0.0
      %7077 = vmatprep.subr.mxu0 0.0
      %7078 = vmatpush1.msra.mxu0 0.0
      %7079 = vmatprep.subr.mxu0 0.0
      %7080 = vmatpush1.msra.mxu0 0.0
      %7081 = vmatprep.subr.mxu0 0.0
      %7082 = vmatpush1.msra.mxu0 0.0
      %7083 = vmatprep.subr.mxu0 0.0
      %7084 = vmatpush1.msra.mxu0 0.0
      %7085 = vmatprep.mubr.f32.mxu0 0.0
      %7086 = vmatmul.mubr.f32.gmra.mrb[0].mxu0 %v6899
      %v7087 = vpop.f32.mrb[0].mxu0
      %v7088 = vadd.f32 0.0, %v7087
      %v7089 = vpop.f32.mrb[0].mxu0
      %7090 = vmatprep.mubr.f32.mxu0 0.0
      %7091 = vmatmul.mubr.f32.gmra.mrb[0].mxu0 %v6902
      %v7092 = vpop.f32.mrb[0].mxu0
      %v7093 = vadd.f32 0.0, %v7092
      %v7094 = vpop.f32.mrb[0].mxu0
      %7095 = vmatprep.mubr.f32.mxu0 0.0
      %7096 = vmatmul.mubr.f32.gmra.mrb[0].mxu0 %v6905
      %v7097 = vpop.f32.mrb[0].mxu0
      %v7098 = vadd.f32 0.0, %v7097
      %v7099 = vpop.f32.mrb[0].mxu0
      %7100 = vmatprep.mubr.f32.mxu0 0.0
      %7101 = vmatmul.mubr.f32.gmra.mrb[0].mxu0 %v6908
      %v7102 = vpop.f32.mrb[0].mxu0
      %v7103 = vadd.f32 0.0, %v7102
      %v7104 = vpop.f32.mrb[0].mxu0
      %7105 = vmatprep.mubr.f32.mxu0 0.0
      %7106 = vmatmul.mubr.f32.gmra.mrb[0].mxu0 %v6911
      %v7107 = vpop.f32.mrb[0].mxu0
      %v7108 = vadd.f32 0.0, %v7107
      %v7109 = vpop.f32.mrb[0].mxu0
      %7110 = vmatprep.mubr.f32.mxu0 0.0
      %7111 = vmatmul.mubr.f32.gmra.mrb[0].mxu0 %v6914
      %v7112 = vpop.f32.mrb[0].mxu0
      %v7113 = vadd.f32 0.0, %v7112
      %v7114 = vpop.f32.mrb[0].mxu0
      %7115 = vmatprep.mubr.f32.mxu0 0.0
      %7116 = vmatmul.mubr.f32.gmra.mrb[0].mxu0 %v6917
      %v7117 = vpop.f32.mrb[0].mxu0
      %v7118 = vadd.f32 0.0, %v7117
      %v7119 = vpop.f32.mrb[0].mxu0
      %7120 = vmatprep.mubr.f32.mxu0 0.0
      %7121 = vmatmul.mubr.f32.gmra.mrb[0].mxu0 %v6920
      %v7122 = vpop.f32.mrb[0].mxu0
      %v7123 = vadd.f32 0.0, %v7122
      %v7124 = vpop.f32.mrb[0].mxu0
      %7125 = vmatprep.mubr.f32.mxu0 0.0
      %7126 = vmatmul.mubr.f32.gmra.mrb[0].mxu0 %v6923
      %v7127 = vpop.f32.mrb[0].mxu0
      %v7128 = vadd.f32 0.0, %v7127
      %v7129 = vpop.f32.mrb[0].mxu0
      %7130 = vmatprep.mubr.f32.mxu0 0.0
      %7131 = vmatmul.mubr.f32.gmra.mrb[0].mxu0 %v6926
      %v7132 = vpop.f32.mrb[0].mxu0
      %v7133 = vadd.f32 0.0, %v7132
      %v7134 = vpop.f32.mrb[0].mxu0
      %7135 = vmatprep.mubr.f32.mxu0 0.0
      %7136 = vmatmul.mubr.f32.gmra.mrb[0].mxu0 %v6929
      %v7137 = vpop.f32.mrb[0].mxu0
      %v7138 = vadd.f32 0.0, %v7137
      %v7139 = vpop.f32.mrb[0].mxu0
      %7140 = vmatprep.mubr.f32.mxu0 0.0
      %7141 = vmatmul.mubr.f32.gmra.mrb[0].mxu0 %v6932
      %v7142 = vpop.f32.mrb[0].mxu0
      %v7143 = vadd.f32 0.0, %v7142
      %v7144 = vpop.f32.mrb[0].mxu0
      %7145 = vmatprep.mubr.f32.mxu0 0.0
      %7146 = vmatmul.mubr.f32.gmra.mrb[0].mxu0 %v6935
      %v7147 = vpop.f32.mrb[0].mxu0
      %v7148 = vadd.f32 0.0, %v7147
      %v7149 = vpop.f32.mrb[0].mxu0
      %7150 = vmatprep.mubr.f32.mxu0 0.0
      %7151 = vmatmul.mubr.f32.gmra.mrb[0].mxu0 %v6938
      %v7152 = vpop.f32.mrb[0].mxu0
      %v7153 = vadd.f32 0.0, %v7152
      %v7154 = vpop.f32.mrb[0].mxu0
      %7155 = vmatprep.mubr.f32.mxu0 0.0
      %7156 = vmatmul.mubr.f32.gmra.mrb[0].mxu0 %v6941
      %v7157 = vpop.f32.mrb[0].mxu0
      %v7158 = vadd.f32 0.0, %v7157
      %v7159 = vpop.f32.mrb[0].mxu0
      %7160 = vmatprep.mubr.f32.mxu0 0.0
      %7161 = vmatmul.mubr.f32.gmra.mrb[0].mxu0 %v6944
      %v7162 = vpop.f32.mrb[0].mxu0
      %v7163 = vadd.f32 0.0, %v7162
      %v7164 = vpop.f32.mrb[0].mxu0
      %7165 = vmatprep.mubr.f32.mxu0 0.0
      %7166 = vmatmul.mubr.f32.gmra.mrb[0].mxu0 %v6947
      %v7167 = vpop.f32.mrb[0].mxu0
      %v7168 = vadd.f32 0.0, %v7167
      %v7169 = vpop.f32.mrb[0].mxu0
      %7170 = vmatprep.mubr.f32.mxu0 0.0
      %7171 = vmatmul.mubr.f32.gmra.mrb[0].mxu0 %v6950
      %v7172 = vpop.f32.mrb[0].mxu0
      %v7173 = vadd.f32 0.0, %v7172
      %v7174 = vpop.f32.mrb[0].mxu0
      %7175 = vmatprep.mubr.f32.mxu0 0.0
      %7176 = vmatmul.mubr.f32.gmra.mrb[0].mxu0 %v6953
      %v7177 = vpop.f32.mrb[0].mxu0
      %v7178 = vadd.f32 0.0, %v7177
      %v7179 = vpop.f32.mrb[0].mxu0
      %7180 = vmatprep.mubr.f32.mxu0 0.0
      %7181 = vmatmul.mubr.f32.gmra.mrb[0].mxu0 %v6956
      %v7182 = vpop.f32.mrb[0].mxu0
      %v7183 = vadd.f32 0.0, %v7182
      %v7184 = vpop.f32.mrb[0].mxu0
      %7185 = vmatprep.mubr.f32.mxu0 0.0
      %7186 = vmatmul.mubr.f32.gmra.mrb[0].mxu0 %v6959
      %v7187 = vpop.f32.mrb[0].mxu0
      %v7188 = vadd.f32 0.0, %v7187
      %v7189 = vpop.f32.mrb[0].mxu0
      %7190 = vmatprep.mubr.f32.mxu0 0.0
      %7191 = vmatmul.mubr.f32.gmra.mrb[0].mxu0 %v6962
      %v7192 = vpop.f32.mrb[0].mxu0
      %v7193 = vadd.f32 0.0, %v7192
      %v7194 = vpop.f32.mrb[0].mxu0
      %7195 = vmatprep.mubr.f32.mxu0 0.0
      %7196 = vmatmul.mubr.f32.gmra.mrb[0].mxu0 %v6965
      %v7197 = vpop.f32.mrb[0].mxu0
      %v7198 = vadd.f32 0.0, %v7197
      %v7199 = vpop.f32.mrb[0].mxu0
      %7200 = vmatprep.mubr.f32.mxu0 0.0
      %7201 = vmatmul.mubr.f32.gmra.mrb[0].mxu0 %v6968
      %v7202 = vpop.f32.mrb[0].mxu0
      %v7203 = vadd.f32 0.0, %v7202
      %v7204 = vpop.f32.mrb[0].mxu0
      %7205 = vmatprep.mubr.f32.mxu0 0.0
      %7206 = vmatmul.mubr.f32.gmra.mrb[0].mxu0 %v6971
      %v7207 = vpop.f32.mrb[0].mxu0
      %v7208 = vadd.f32 0.0, %v7207
      %v7209 = vpop.f32.mrb[0].mxu0
      %7210 = vmatprep.mubr.f32.mxu0 0.0
      %7211 = vmatmul.mubr.f32.gmra.mrb[0].mxu0 %v6974
      %v7212 = vpop.f32.mrb[0].mxu0
      %v7213 = vadd.f32 0.0, %v7212
      %v7214 = vpop.f32.mrb[0].mxu0
      %7215 = vmatprep.mubr.f32.mxu0 0.0
      %7216 = vmatmul.mubr.f32.gmra.mrb[0].mxu0 %v6977
      %v7217 = vpop.f32.mrb[0].mxu0
      %v7218 = vadd.f32 0.0, %v7217
      %v7219 = vpop.f32.mrb[0].mxu0
      %7220 = vmatprep.mubr.f32.mxu0 0.0
      %7221 = vmatmul.mubr.f32.gmra.mrb[0].mxu0 %v6980
      %v7222 = vpop.f32.mrb[0].mxu0
      %v7223 = vadd.f32 0.0, %v7222
      %v7224 = vpop.f32.mrb[0].mxu0
      %7225 = vmatprep.mubr.f32.mxu0 0.0
      %7226 = vmatmul.mubr.f32.gmra.mrb[0].mxu0 %v6983
      %v7227 = vpop.f32.mrb[0].mxu0
      %v7228 = vadd.f32 0.0, %v7227
      %v7229 = vpop.f32.mrb[0].mxu0
      %7230 = vmatprep.mubr.f32.mxu0 0.0
      %7231 = vmatmul.mubr.f32.gmra.mrb[0].mxu0 %v6986
      %v7232 = vpop.f32.mrb[0].mxu0
      %v7233 = vadd.f32 0.0, %v7232
      %v7234 = vpop.f32.mrb[0].mxu0
      %7235 = vmatprep.mubr.f32.mxu0 0.0
      %7236 = vmatmul.mubr.f32.gmra.mrb[0].mxu0 %v6989
      %v7237 = vpop.f32.mrb[0].mxu0
      %v7238 = vadd.f32 0.0, %v7237
      %v7239 = vpop.f32.mrb[0].mxu0
      %7240 = vmatprep.mubr.f32.mxu0 0.0
      %7241 = vmatmul.mubr.f32.gmra.mrb[0].mxu0 %v6992
      %v7242 = vpop.f32.mrb[0].mxu0
      %v7243 = vadd.f32 0.0, %v7242
      %v7244 = vpop.f32.mrb[0].mxu0
      %7245 = vmatprep.mubr.f32.mxu0 0.0
      %7246 = vmatmul.mubr.f32.gmra.mrb[0].mxu0 %v6995
      %v7247 = vpop.f32.mrb[0].mxu0
      %v7248 = vadd.f32 0.0, %v7247
      %v7249 = vpop.f32.mrb[0].mxu0
      %7250 = vmatprep.mubr.f32.mxu0 0.0
      %7251 = vmatmul.mubr.f32.gmra.mrb[0].mxu0 %v6998
      %v7252 = vpop.f32.mrb[0].mxu0
      %v7253 = vadd.f32 0.0, %v7252
      %v7254 = vpop.f32.mrb[0].mxu0
      %7255 = vmatprep.mubr.f32.mxu0 0.0
      %7256 = vmatmul.mubr.f32.gmra.mrb[0].mxu0 %v7001
      %v7257 = vpop.f32.mrb[0].mxu0
      %v7258 = vadd.f32 0.0, %v7257
      %v7259 = vpop.f32.mrb[0].mxu0
      %7260 = vmatprep.mubr.f32.mxu0 0.0
      %7261 = vmatmul.mubr.f32.gmra.mrb[0].mxu0 %v7004
      %v7262 = vpop.f32.mrb[0].mxu0
      %v7263 = vadd.f32 0.0, %v7262
      %v7264 = vpop.f32.mrb[0].mxu0
      %7265 = vmatprep.mubr.f32.mxu0 0.0
      %7266 = vmatmul.mubr.f32.gmra.mrb[0].mxu0 %v7007
      %v7267 = vpop.f32.mrb[0].mxu0
      %v7268 = vadd.f32 0.0, %v7267
      %v7269 = vpop.f32.mrb[0].mxu0
      %7270 = vmatprep.mubr.f32.mxu0 0.0
      %7271 = vmatmul.mubr.f32.gmra.mrb[0].mxu0 %v7010
      %v7272 = vpop.f32.mrb[0].mxu0
      %v7273 = vadd.f32 0.0, %v7272
      %v7274 = vpop.f32.mrb[0].mxu0
      %7275 = vmatprep.mubr.f32.mxu0 0.0
      %7276 = vmatmul.mubr.f32.gmra.mrb[0].mxu0 %v7013
      %v7277 = vpop.f32.mrb[0].mxu0
      %v7278 = vadd.f32 0.0, %v7277
      %v7279 = vpop.f32.mrb[0].mxu0
      %7280 = vmatprep.mubr.f32.mxu0 0.0
      %7281 = vmatmul.mubr.f32.gmra.mrb[0].mxu0 %v7016
      %v7282 = vpop.f32.mrb[0].mxu0
      %v7283 = vadd.f32 0.0, %v7282
      %v7284 = vpop.f32.mrb[0].mxu0
      %7285 = vmatprep.mubr.f32.mxu0 0.0
      %7286 = vmatmul.mubr.f32.gmra.mrb[0].mxu0 %v7019
      %v7287 = vpop.f32.mrb[0].mxu0
      %v7288 = vadd.f32 0.0, %v7287
      %v7289 = vpop.f32.mrb[0].mxu0
      %7290 = vdwg.mxu0
      %v7291 = vadd.f32 %v6814, %v7088
      %v7292 = vadd.f32 %v6815, %v7093
      %v7293 = vadd.f32 %v6816, %v7098
      %v7294 = vadd.f32 %v6817, %v7103
      %v7295 = vadd.f32 %v6818, %v7108
      %v7296 = vadd.f32 %v6819, %v7113
      %v7297 = vadd.f32 %v6820, %v7118
      %v7298 = vadd.f32 %v6821, %v7123
      %v7299 = vadd.f32 %v6822, %v7128
      %v7300 = vadd.f32 %v6823, %v7133
      %v7301 = vadd.f32 %v6824, %v7138
      %v7302 = vadd.f32 %v6825, %v7143
      %v7303 = vadd.f32 %v6826, %v7148
      %v7304 = vadd.f32 %v6827, %v7153
      %v7305 = vadd.f32 %v6828, %v7158
      %v7306 = vadd.f32 %v6829, %v7163
      %v7307 = vadd.f32 %v6830, %v7168
      %v7308 = vadd.f32 %v6831, %v7173
      %v7309 = vadd.f32 %v6832, %v7178
      %v7310 = vadd.f32 %v6833, %v7183
      %v7311 = vadd.f32 %v6834, %v7188
      %v7312 = vadd.f32 %v6835, %v7193
      %v7313 = vadd.f32 %v6836, %v7198
      %v7314 = vadd.f32 %v6837, %v7203
      %v7315 = vadd.f32 %v6838, %v7208
      %v7316 = vadd.f32 %v6839, %v7213
      %v7317 = vadd.f32 %v6840, %v7218
      %v7318 = vadd.f32 %v6841, %v7223
      %v7319 = vadd.f32 %v6842, %v7228
      %v7320 = vadd.f32 %v6843, %v7233
      %v7321 = vadd.f32 %v6844, %v7238
      %v7322 = vadd.f32 %v6845, %v7243
      %v7323 = vadd.f32 %v6846, %v7248
      %v7324 = vadd.f32 %v6847, %v7253
      %v7325 = vadd.f32 %v6848, %v7258
      %v7326 = vadd.f32 %v6849, %v7263
      %v7327 = vadd.f32 %v6850, %v7268
      %v7328 = vadd.f32 %v6851, %v7273
      %v7329 = vadd.f32 %v6852, %v7278
      %v7330 = vadd.f32 %v6853, %v7283
      %v7331 = vadd.f32 %v6854, %v7288
      %v7332 = vld [vmem:[#allocation2 + $0x14] sm:$0xff]
      %v7333 = vld [vmem:[#allocation2 + $0x1c] sm:$0xff]
      %v7334 = vld [vmem:[#allocation2 + $0x24] sm:$0xff]
      %v7335 = vld [vmem:[#allocation2 + $0x2c] sm:$0xff]
      %v7336 = vld [vmem:[#allocation2 + $0x34] sm:$0xff]
      %v7337 = vld [vmem:[#allocation2 + $0x3c] sm:$0xff]
      %v7338 = vld [vmem:[#allocation2 + $0x44] sm:$0xff]
      %v7339 = vld [vmem:[#allocation2 + $0x4c] sm:$0xff]
      %v7340 = vld [vmem:[#allocation2 + $0x54] sm:$0xff]
      %v7341 = vld [vmem:[#allocation2 + $0x5c] sm:$0xff]
      %v7342 = vld [vmem:[#allocation2 + $0x64] sm:$0xff]
      %v7343 = vld [vmem:[#allocation2 + $0x6c] sm:$0xff]
      %v7344 = vld [vmem:[#allocation2 + $0x74] sm:$0xff]
      %v7345 = vld [vmem:[#allocation2 + $0x7c] sm:$0xff]
      %v7346 = vld [vmem:[#allocation2 + $0x84] sm:$0xff]
      %v7347 = vld [vmem:[#allocation2 + $0x8c] sm:$0xff]
      %v7348 = vld [vmem:[#allocation2 + $0x94] sm:$0xff]
      %v7349 = vld [vmem:[#allocation2 + $0x9c] sm:$0xff]
      %v7350 = vld [vmem:[#allocation2 + $0xa4] sm:$0xff]
      %v7351 = vld [vmem:[#allocation2 + $0xac] sm:$0xff]
      %v7352 = vld [vmem:[#allocation2 + $0xb4] sm:$0xff]
      %v7353 = vld [vmem:[#allocation2 + $0xbc] sm:$0xff]
      %v7354 = vld [vmem:[#allocation2 + $0xc4] sm:$0xff]
      %v7355 = vld [vmem:[#allocation2 + $0xcc] sm:$0xff]
      %v7356 = vld [vmem:[#allocation2 + $0xd4] sm:$0xff]
      %v7357 = vld [vmem:[#allocation2 + $0xdc] sm:$0xff]
      %v7358 = vld [vmem:[#allocation2 + $0xe4] sm:$0xff]
      %v7359 = vld [vmem:[#allocation2 + $0xec] sm:$0xff]
      %v7360 = vld [vmem:[#allocation2 + $0xf4] sm:$0xff]
      %v7361 = vld [vmem:[#allocation2 + $0xfc] sm:$0xff]
      %v7362 = vld [vmem:[#allocation2 + $0x104] sm:$0xff]
      %v7363 = vld [vmem:[#allocation2 + $0x10c] sm:$0xff]
      %v7364 = vld [vmem:[#allocation2 + $0x114] sm:$0xff]
      %v7365 = vld [vmem:[#allocation2 + $0x11c] sm:$0xff]
      %v7366 = vld [vmem:[#allocation2 + $0x124] sm:$0xff]
      %v7367 = vld [vmem:[#allocation2 + $0x12c] sm:$0xff]
      %v7368 = vld [vmem:[#allocation2 + $0x134] sm:$0xff]
      %v7369 = vld [vmem:[#allocation2 + $0x13c] sm:$0xff]
      %v7370 = vld [vmem:[#allocation2 + $0x144] sm:$0xff]
      %v7371 = vld [vmem:[#allocation2 + $0x14c] sm:$0xff]
      %v7372 = vld [vmem:[#allocation2 + $0x154] sm:$0xf]
      %s7373 = scalar_lea.vmem %s4, 40
      %v7374 = vld [vmem:[%s7373] sm:$0xff]
      %v7376 = vsel %vm391, %v7332, 0
      %v7379 = vsel %vm391, %v7333, 0
      %v7382 = vsel %vm391, %v7334, 0
      %v7385 = vsel %vm391, %v7335, 0
      %v7388 = vsel %vm391, %v7336, 0
      %v7391 = vsel %vm391, %v7337, 0
      %v7394 = vsel %vm391, %v7338, 0
      %v7397 = vsel %vm391, %v7339, 0
      %v7400 = vsel %vm391, %v7340, 0
      %v7403 = vsel %vm391, %v7341, 0
      %v7406 = vsel %vm391, %v7342, 0
      %v7409 = vsel %vm391, %v7343, 0
      %v7412 = vsel %vm391, %v7344, 0
      %v7415 = vsel %vm391, %v7345, 0
      %v7418 = vsel %vm391, %v7346, 0
      %v7421 = vsel %vm391, %v7347, 0
      %v7424 = vsel %vm391, %v7348, 0
      %v7427 = vsel %vm391, %v7349, 0
      %v7430 = vsel %vm391, %v7350, 0
      %v7433 = vsel %vm391, %v7351, 0
      %v7436 = vsel %vm391, %v7352, 0
      %v7439 = vsel %vm391, %v7353, 0
      %v7442 = vsel %vm391, %v7354, 0
      %v7445 = vsel %vm391, %v7355, 0
      %v7448 = vsel %vm391, %v7356, 0
      %v7451 = vsel %vm391, %v7357, 0
      %v7454 = vsel %vm391, %v7358, 0
      %v7457 = vsel %vm391, %v7359, 0
      %v7460 = vsel %vm391, %v7360, 0
      %v7463 = vsel %vm391, %v7361, 0
      %v7466 = vsel %vm391, %v7362, 0
      %v7469 = vsel %vm391, %v7363, 0
      %v7472 = vsel %vm391, %v7364, 0
      %v7475 = vsel %vm391, %v7365, 0
      %v7478 = vsel %vm391, %v7366, 0
      %v7481 = vsel %vm391, %v7367, 0
      %v7484 = vsel %vm391, %v7368, 0
      %v7487 = vsel %vm391, %v7369, 0
      %v7490 = vsel %vm391, %v7370, 0
      %v7493 = vsel %vm391, %v7371, 0
      %v7496 = vsel %vm391, %v7372, 0
      %7498 = vmatprep.subr.mxu0 0.0
      %7499 = vmatpush1.msra.mxu0 %v7374
      %7500 = vmatprep.subr.mxu0 0.0
      %7501 = vmatpush1.msra.mxu0 0.0
      %7502 = vmatprep.subr.mxu0 0.0
      %7503 = vmatpush1.msra.mxu0 0.0
      %7504 = vmatprep.subr.mxu0 0.0
      %7505 = vmatpush1.msra.mxu0 0.0
      %7506 = vmatprep.subr.mxu0 0.0
      %7507 = vmatpush1.msra.mxu0 0.0
      %7508 = vmatprep.subr.mxu0 0.0
      %7509 = vmatpush1.msra.mxu0 0.0
      %7510 = vmatprep.subr.mxu0 0.0
      %7511 = vmatpush1.msra.mxu0 0.0
      %7512 = vmatprep.subr.mxu0 0.0
      %7513 = vmatpush1.msra.mxu0 0.0
      %7514 = vmatprep.subr.mxu0 0.0
      %7515 = vmatpush1.msra.mxu0 0.0
      %7516 = vmatprep.subr.mxu0 0.0
      %7517 = vmatpush1.msra.mxu0 0.0
      %7518 = vmatprep.subr.mxu0 0.0
      %7519 = vmatpush1.msra.mxu0 0.0
      %7520 = vmatprep.subr.mxu0 0.0
      %7521 = vmatpush1.msra.mxu0 0.0
      %7522 = vmatprep.subr.mxu0 0.0
      %7523 = vmatpush1.msra.mxu0 0.0
      %7524 = vmatprep.subr.mxu0 0.0
      %7525 = vmatpush1.msra.mxu0 0.0
      %7526 = vmatprep.subr.mxu0 0.0
      %7527 = vmatpush1.msra.mxu0 0.0
      %7528 = vmatprep.subr.mxu0 0.0
      %7529 = vmatpush1.msra.mxu0 0.0
      %7530 = vmatprep.subr.mxu0 0.0
      %7531 = vmatpush1.msra.mxu0 0.0
      %7532 = vmatprep.subr.mxu0 0.0
      %7533 = vmatpush1.msra.mxu0 0.0
      %7534 = vmatprep.subr.mxu0 0.0
      %7535 = vmatpush1.msra.mxu0 0.0
      %7536 = vmatprep.subr.mxu0 0.0
      %7537 = vmatpush1.msra.mxu0 0.0
      %7538 = vmatprep.subr.mxu0 0.0
      %7539 = vmatpush1.msra.mxu0 0.0
      %7540 = vmatprep.subr.mxu0 0.0
      %7541 = vmatpush1.msra.mxu0 0.0
      %7542 = vmatprep.subr.mxu0 0.0
      %7543 = vmatpush1.msra.mxu0 0.0
      %7544 = vmatprep.subr.mxu0 0.0
      %7545 = vmatpush1.msra.mxu0 0.0
      %7546 = vmatprep.subr.mxu0 0.0
      %7547 = vmatpush1.msra.mxu0 0.0
      %7548 = vmatprep.subr.mxu0 0.0
      %7549 = vmatpush1.msra.mxu0 0.0
      %7550 = vmatprep.subr.mxu0 0.0
      %7551 = vmatpush1.msra.mxu0 0.0
      %7552 = vmatprep.subr.mxu0 0.0
      %7553 = vmatpush1.msra.mxu0 0.0
      %7554 = vmatprep.subr.mxu0 0.0
      %7555 = vmatpush1.msra.mxu0 0.0
      %7556 = vmatprep.subr.mxu0 0.0
      %7557 = vmatpush1.msra.mxu0 0.0
      %7558 = vmatprep.subr.mxu0 0.0
      %7559 = vmatpush1.msra.mxu0 0.0
      %7560 = vmatprep.subr.mxu0 0.0
      %7561 = vmatpush1.msra.mxu0 0.0
      %7562 = vmatprep.mubr.f32.mxu0 0.0
      %7563 = vmatmul.mubr.f32.gmra.mrb[0].mxu0 %v7376
      %v7564 = vpop.f32.mrb[0].mxu0
      %v7565 = vadd.f32 0.0, %v7564
      %v7566 = vpop.f32.mrb[0].mxu0
      %7567 = vmatprep.mubr.f32.mxu0 0.0
      %7568 = vmatmul.mubr.f32.gmra.mrb[0].mxu0 %v7379
      %v7569 = vpop.f32.mrb[0].mxu0
      %v7570 = vadd.f32 0.0, %v7569
      %v7571 = vpop.f32.mrb[0].mxu0
      %7572 = vmatprep.mubr.f32.mxu0 0.0
      %7573 = vmatmul.mubr.f32.gmra.mrb[0].mxu0 %v7382
      %v7574 = vpop.f32.mrb[0].mxu0
      %v7575 = vadd.f32 0.0, %v7574
      %v7576 = vpop.f32.mrb[0].mxu0
      %7577 = vmatprep.mubr.f32.mxu0 0.0
      %7578 = vmatmul.mubr.f32.gmra.mrb[0].mxu0 %v7385
      %v7579 = vpop.f32.mrb[0].mxu0
      %v7580 = vadd.f32 0.0, %v7579
      %v7581 = vpop.f32.mrb[0].mxu0
      %7582 = vmatprep.mubr.f32.mxu0 0.0
      %7583 = vmatmul.mubr.f32.gmra.mrb[0].mxu0 %v7388
      %v7584 = vpop.f32.mrb[0].mxu0
      %v7585 = vadd.f32 0.0, %v7584
      %v7586 = vpop.f32.mrb[0].mxu0
      %7587 = vmatprep.mubr.f32.mxu0 0.0
      %7588 = vmatmul.mubr.f32.gmra.mrb[0].mxu0 %v7391
      %v7589 = vpop.f32.mrb[0].mxu0
      %v7590 = vadd.f32 0.0, %v7589
      %v7591 = vpop.f32.mrb[0].mxu0
      %7592 = vmatprep.mubr.f32.mxu0 0.0
      %7593 = vmatmul.mubr.f32.gmra.mrb[0].mxu0 %v7394
      %v7594 = vpop.f32.mrb[0].mxu0
      %v7595 = vadd.f32 0.0, %v7594
      %v7596 = vpop.f32.mrb[0].mxu0
      %7597 = vmatprep.mubr.f32.mxu0 0.0
      %7598 = vmatmul.mubr.f32.gmra.mrb[0].mxu0 %v7397
      %v7599 = vpop.f32.mrb[0].mxu0
      %v7600 = vadd.f32 0.0, %v7599
      %v7601 = vpop.f32.mrb[0].mxu0
      %7602 = vmatprep.mubr.f32.mxu0 0.0
      %7603 = vmatmul.mubr.f32.gmra.mrb[0].mxu0 %v7400
      %v7604 = vpop.f32.mrb[0].mxu0
      %v7605 = vadd.f32 0.0, %v7604
      %v7606 = vpop.f32.mrb[0].mxu0
      %7607 = vmatprep.mubr.f32.mxu0 0.0
      %7608 = vmatmul.mubr.f32.gmra.mrb[0].mxu0 %v7403
      %v7609 = vpop.f32.mrb[0].mxu0
      %v7610 = vadd.f32 0.0, %v7609
      %v7611 = vpop.f32.mrb[0].mxu0
      %7612 = vmatprep.mubr.f32.mxu0 0.0
      %7613 = vmatmul.mubr.f32.gmra.mrb[0].mxu0 %v7406
      %v7614 = vpop.f32.mrb[0].mxu0
      %v7615 = vadd.f32 0.0, %v7614
      %v7616 = vpop.f32.mrb[0].mxu0
      %7617 = vmatprep.mubr.f32.mxu0 0.0
      %7618 = vmatmul.mubr.f32.gmra.mrb[0].mxu0 %v7409
      %v7619 = vpop.f32.mrb[0].mxu0
      %v7620 = vadd.f32 0.0, %v7619
      %v7621 = vpop.f32.mrb[0].mxu0
      %7622 = vmatprep.mubr.f32.mxu0 0.0
      %7623 = vmatmul.mubr.f32.gmra.mrb[0].mxu0 %v7412
      %v7624 = vpop.f32.mrb[0].mxu0
      %v7625 = vadd.f32 0.0, %v7624
      %v7626 = vpop.f32.mrb[0].mxu0
      %7627 = vmatprep.mubr.f32.mxu0 0.0
      %7628 = vmatmul.mubr.f32.gmra.mrb[0].mxu0 %v7415
      %v7629 = vpop.f32.mrb[0].mxu0
      %v7630 = vadd.f32 0.0, %v7629
      %v7631 = vpop.f32.mrb[0].mxu0
      %7632 = vmatprep.mubr.f32.mxu0 0.0
      %7633 = vmatmul.mubr.f32.gmra.mrb[0].mxu0 %v7418
      %v7634 = vpop.f32.mrb[0].mxu0
      %v7635 = vadd.f32 0.0, %v7634
      %v7636 = vpop.f32.mrb[0].mxu0
      %7637 = vmatprep.mubr.f32.mxu0 0.0
      %7638 = vmatmul.mubr.f32.gmra.mrb[0].mxu0 %v7421
      %v7639 = vpop.f32.mrb[0].mxu0
      %v7640 = vadd.f32 0.0, %v7639
      %v7641 = vpop.f32.mrb[0].mxu0
      %7642 = vmatprep.mubr.f32.mxu0 0.0
      %7643 = vmatmul.mubr.f32.gmra.mrb[0].mxu0 %v7424
      %v7644 = vpop.f32.mrb[0].mxu0
      %v7645 = vadd.f32 0.0, %v7644
      %v7646 = vpop.f32.mrb[0].mxu0
      %7647 = vmatprep.mubr.f32.mxu0 0.0
      %7648 = vmatmul.mubr.f32.gmra.mrb[0].mxu0 %v7427
      %v7649 = vpop.f32.mrb[0].mxu0
      %v7650 = vadd.f32 0.0, %v7649
      %v7651 = vpop.f32.mrb[0].mxu0
      %7652 = vmatprep.mubr.f32.mxu0 0.0
      %7653 = vmatmul.mubr.f32.gmra.mrb[0].mxu0 %v7430
      %v7654 = vpop.f32.mrb[0].mxu0
      %v7655 = vadd.f32 0.0, %v7654
      %v7656 = vpop.f32.mrb[0].mxu0
      %7657 = vmatprep.mubr.f32.mxu0 0.0
      %7658 = vmatmul.mubr.f32.gmra.mrb[0].mxu0 %v7433
      %v7659 = vpop.f32.mrb[0].mxu0
      %v7660 = vadd.f32 0.0, %v7659
      %v7661 = vpop.f32.mrb[0].mxu0
      %7662 = vmatprep.mubr.f32.mxu0 0.0
      %7663 = vmatmul.mubr.f32.gmra.mrb[0].mxu0 %v7436
      %v7664 = vpop.f32.mrb[0].mxu0
      %v7665 = vadd.f32 0.0, %v7664
      %v7666 = vpop.f32.mrb[0].mxu0
      %7667 = vmatprep.mubr.f32.mxu0 0.0
      %7668 = vmatmul.mubr.f32.gmra.mrb[0].mxu0 %v7439
      %v7669 = vpop.f32.mrb[0].mxu0
      %v7670 = vadd.f32 0.0, %v7669
      %v7671 = vpop.f32.mrb[0].mxu0
      %7672 = vmatprep.mubr.f32.mxu0 0.0
      %7673 = vmatmul.mubr.f32.gmra.mrb[0].mxu0 %v7442
      %v7674 = vpop.f32.mrb[0].mxu0
      %v7675 = vadd.f32 0.0, %v7674
      %v7676 = vpop.f32.mrb[0].mxu0
      %7677 = vmatprep.mubr.f32.mxu0 0.0
      %7678 = vmatmul.mubr.f32.gmra.mrb[0].mxu0 %v7445
      %v7679 = vpop.f32.mrb[0].mxu0
      %v7680 = vadd.f32 0.0, %v7679
      %v7681 = vpop.f32.mrb[0].mxu0
      %7682 = vmatprep.mubr.f32.mxu0 0.0
      %7683 = vmatmul.mubr.f32.gmra.mrb[0].mxu0 %v7448
      %v7684 = vpop.f32.mrb[0].mxu0
      %v7685 = vadd.f32 0.0, %v7684
      %v7686 = vpop.f32.mrb[0].mxu0
      %7687 = vmatprep.mubr.f32.mxu0 0.0
      %7688 = vmatmul.mubr.f32.gmra.mrb[0].mxu0 %v7451
      %v7689 = vpop.f32.mrb[0].mxu0
      %v7690 = vadd.f32 0.0, %v7689
      %v7691 = vpop.f32.mrb[0].mxu0
      %7692 = vmatprep.mubr.f32.mxu0 0.0
      %7693 = vmatmul.mubr.f32.gmra.mrb[0].mxu0 %v7454
      %v7694 = vpop.f32.mrb[0].mxu0
      %v7695 = vadd.f32 0.0, %v7694
      %v7696 = vpop.f32.mrb[0].mxu0
      %7697 = vmatprep.mubr.f32.mxu0 0.0
      %7698 = vmatmul.mubr.f32.gmra.mrb[0].mxu0 %v7457
      %v7699 = vpop.f32.mrb[0].mxu0
      %v7700 = vadd.f32 0.0, %v7699
      %v7701 = vpop.f32.mrb[0].mxu0
      %7702 = vmatprep.mubr.f32.mxu0 0.0
      %7703 = vmatmul.mubr.f32.gmra.mrb[0].mxu0 %v7460
      %v7704 = vpop.f32.mrb[0].mxu0
      %v7705 = vadd.f32 0.0, %v7704
      %v7706 = vpop.f32.mrb[0].mxu0
      %7707 = vmatprep.mubr.f32.mxu0 0.0
      %7708 = vmatmul.mubr.f32.gmra.mrb[0].mxu0 %v7463
      %v7709 = vpop.f32.mrb[0].mxu0
      %v7710 = vadd.f32 0.0, %v7709
      %v7711 = vpop.f32.mrb[0].mxu0
      %7712 = vmatprep.mubr.f32.mxu0 0.0
      %7713 = vmatmul.mubr.f32.gmra.mrb[0].mxu0 %v7466
      %v7714 = vpop.f32.mrb[0].mxu0
      %v7715 = vadd.f32 0.0, %v7714
      %v7716 = vpop.f32.mrb[0].mxu0
      %7717 = vmatprep.mubr.f32.mxu0 0.0
      %7718 = vmatmul.mubr.f32.gmra.mrb[0].mxu0 %v7469
      %v7719 = vpop.f32.mrb[0].mxu0
      %v7720 = vadd.f32 0.0, %v7719
      %v7721 = vpop.f32.mrb[0].mxu0
      %7722 = vmatprep.mubr.f32.mxu0 0.0
      %7723 = vmatmul.mubr.f32.gmra.mrb[0].mxu0 %v7472
      %v7724 = vpop.f32.mrb[0].mxu0
      %v7725 = vadd.f32 0.0, %v7724
      %v7726 = vpop.f32.mrb[0].mxu0
      %7727 = vmatprep.mubr.f32.mxu0 0.0
      %7728 = vmatmul.mubr.f32.gmra.mrb[0].mxu0 %v7475
      %v7729 = vpop.f32.mrb[0].mxu0
      %v7730 = vadd.f32 0.0, %v7729
      %v7731 = vpop.f32.mrb[0].mxu0
      %7732 = vmatprep.mubr.f32.mxu0 0.0
      %7733 = vmatmul.mubr.f32.gmra.mrb[0].mxu0 %v7478
      %v7734 = vpop.f32.mrb[0].mxu0
      %v7735 = vadd.f32 0.0, %v7734
      %v7736 = vpop.f32.mrb[0].mxu0
      %7737 = vmatprep.mubr.f32.mxu0 0.0
      %7738 = vmatmul.mubr.f32.gmra.mrb[0].mxu0 %v7481
      %v7739 = vpop.f32.mrb[0].mxu0
      %v7740 = vadd.f32 0.0, %v7739
      %v7741 = vpop.f32.mrb[0].mxu0
      %7742 = vmatprep.mubr.f32.mxu0 0.0
      %7743 = vmatmul.mubr.f32.gmra.mrb[0].mxu0 %v7484
      %v7744 = vpop.f32.mrb[0].mxu0
      %v7745 = vadd.f32 0.0, %v7744
      %v7746 = vpop.f32.mrb[0].mxu0
      %7747 = vmatprep.mubr.f32.mxu0 0.0
      %7748 = vmatmul.mubr.f32.gmra.mrb[0].mxu0 %v7487
      %v7749 = vpop.f32.mrb[0].mxu0
      %v7750 = vadd.f32 0.0, %v7749
      %v7751 = vpop.f32.mrb[0].mxu0
      %7752 = vmatprep.mubr.f32.mxu0 0.0
      %7753 = vmatmul.mubr.f32.gmra.mrb[0].mxu0 %v7490
      %v7754 = vpop.f32.mrb[0].mxu0
      %v7755 = vadd.f32 0.0, %v7754
      %v7756 = vpop.f32.mrb[0].mxu0
      %7757 = vmatprep.mubr.f32.mxu0 0.0
      %7758 = vmatmul.mubr.f32.gmra.mrb[0].mxu0 %v7493
      %v7759 = vpop.f32.mrb[0].mxu0
      %v7760 = vadd.f32 0.0, %v7759
      %v7761 = vpop.f32.mrb[0].mxu0
      %7762 = vmatprep.mubr.f32.mxu0 0.0
      %7763 = vmatmul.mubr.f32.gmra.mrb[0].mxu0 %v7496
      %v7764 = vpop.f32.mrb[0].mxu0
      %v7765 = vadd.f32 0.0, %v7764
      %v7766 = vpop.f32.mrb[0].mxu0
      %7767 = vdwg.mxu0
      %v7768 = vadd.f32 %v7291, %v7565
      %v7769 = vadd.f32 %v7292, %v7570
      %v7770 = vadd.f32 %v7293, %v7575
      %v7771 = vadd.f32 %v7294, %v7580
      %v7772 = vadd.f32 %v7295, %v7585
      %v7773 = vadd.f32 %v7296, %v7590
      %v7774 = vadd.f32 %v7297, %v7595
      %v7775 = vadd.f32 %v7298, %v7600
      %v7776 = vadd.f32 %v7299, %v7605
      %v7777 = vadd.f32 %v7300, %v7610
      %v7778 = vadd.f32 %v7301, %v7615
      %v7779 = vadd.f32 %v7302, %v7620
      %v7780 = vadd.f32 %v7303, %v7625
      %v7781 = vadd.f32 %v7304, %v7630
      %v7782 = vadd.f32 %v7305, %v7635
      %v7783 = vadd.f32 %v7306, %v7640
      %v7784 = vadd.f32 %v7307, %v7645
      %v7785 = vadd.f32 %v7308, %v7650
      %v7786 = vadd.f32 %v7309, %v7655
      %v7787 = vadd.f32 %v7310, %v7660
      %v7788 = vadd.f32 %v7311, %v7665
      %v7789 = vadd.f32 %v7312, %v7670
      %v7790 = vadd.f32 %v7313, %v7675
      %v7791 = vadd.f32 %v7314, %v7680
      %v7792 = vadd.f32 %v7315, %v7685
      %v7793 = vadd.f32 %v7316, %v7690
      %v7794 = vadd.f32 %v7317, %v7695
      %v7795 = vadd.f32 %v7318, %v7700
      %v7796 = vadd.f32 %v7319, %v7705
      %v7797 = vadd.f32 %v7320, %v7710
      %v7798 = vadd.f32 %v7321, %v7715
      %v7799 = vadd.f32 %v7322, %v7720
      %v7800 = vadd.f32 %v7323, %v7725
      %v7801 = vadd.f32 %v7324, %v7730
      %v7802 = vadd.f32 %v7325, %v7735
      %v7803 = vadd.f32 %v7326, %v7740
      %v7804 = vadd.f32 %v7327, %v7745
      %v7805 = vadd.f32 %v7328, %v7750
      %v7806 = vadd.f32 %v7329, %v7755
      %v7807 = vadd.f32 %v7330, %v7760
      %v7808 = vadd.f32 %v7331, %v7765
      %v7809 = vld [vmem:[#allocation2 + $0x24] sm:$0xff]
      %v7810 = vld [vmem:[#allocation2 + $0x2c] sm:$0xff]
      %v7811 = vld [vmem:[#allocation2 + $0x34] sm:$0xff]
      %v7812 = vld [vmem:[#allocation2 + $0x3c] sm:$0xff]
      %v7813 = vld [vmem:[#allocation2 + $0x44] sm:$0xff]
      %v7814 = vld [vmem:[#allocation2 + $0x4c] sm:$0xff]
      %v7815 = vld [vmem:[#allocation2 + $0x54] sm:$0xff]
      %v7816 = vld [vmem:[#allocation2 + $0x5c] sm:$0xff]
      %v7817 = vld [vmem:[#allocation2 + $0x64] sm:$0xff]
      %v7818 = vld [vmem:[#allocation2 + $0x6c] sm:$0xff]
      %v7819 = vld [vmem:[#allocation2 + $0x74] sm:$0xff]
      %v7820 = vld [vmem:[#allocation2 + $0x7c] sm:$0xff]
      %v7821 = vld [vmem:[#allocation2 + $0x84] sm:$0xff]
      %v7822 = vld [vmem:[#allocation2 + $0x8c] sm:$0xff]
      %v7823 = vld [vmem:[#allocation2 + $0x94] sm:$0xff]
      %v7824 = vld [vmem:[#allocation2 + $0x9c] sm:$0xff]
      %v7825 = vld [vmem:[#allocation2 + $0xa4] sm:$0xff]
      %v7826 = vld [vmem:[#allocation2 + $0xac] sm:$0xff]
      %v7827 = vld [vmem:[#allocation2 + $0xb4] sm:$0xff]
      %v7828 = vld [vmem:[#allocation2 + $0xbc] sm:$0xff]
      %v7829 = vld [vmem:[#allocation2 + $0xc4] sm:$0xff]
      %v7830 = vld [vmem:[#allocation2 + $0xcc] sm:$0xff]
      %v7831 = vld [vmem:[#allocation2 + $0xd4] sm:$0xff]
      %v7832 = vld [vmem:[#allocation2 + $0xdc] sm:$0xff]
      %v7833 = vld [vmem:[#allocation2 + $0xe4] sm:$0xff]
      %v7834 = vld [vmem:[#allocation2 + $0xec] sm:$0xff]
      %v7835 = vld [vmem:[#allocation2 + $0xf4] sm:$0xff]
      %v7836 = vld [vmem:[#allocation2 + $0xfc] sm:$0xff]
      %v7837 = vld [vmem:[#allocation2 + $0x104] sm:$0xff]
      %v7838 = vld [vmem:[#allocation2 + $0x10c] sm:$0xff]
      %v7839 = vld [vmem:[#allocation2 + $0x114] sm:$0xff]
      %v7840 = vld [vmem:[#allocation2 + $0x11c] sm:$0xff]
      %v7841 = vld [vmem:[#allocation2 + $0x124] sm:$0xff]
      %v7842 = vld [vmem:[#allocation2 + $0x12c] sm:$0xff]
      %v7843 = vld [vmem:[#allocation2 + $0x134] sm:$0xff]
      %v7844 = vld [vmem:[#allocation2 + $0x13c] sm:$0xff]
      %v7845 = vld [vmem:[#allocation2 + $0x144] sm:$0xff]
      %v7846 = vld [vmem:[#allocation2 + $0x14c] sm:$0xff]
      %v7847 = vld [vmem:[#allocation2 + $0x154] sm:$0xff]
      %v7848 = vld [vmem:[#allocation2 + $0x15c] sm:$0xff]
      %v7849 = vld [vmem:[#allocation2 + $0x164] sm:$0xf]
      %s7850 = scalar_lea.vmem %s4, 48
      %v7851 = vld [vmem:[%s7850] sm:$0xff]
      %v7853 = vsel %vm391, %v7809, 0
      %v7856 = vsel %vm391, %v7810, 0
      %v7859 = vsel %vm391, %v7811, 0
      %v7862 = vsel %vm391, %v7812, 0
      %v7865 = vsel %vm391, %v7813, 0
      %v7868 = vsel %vm391, %v7814, 0
      %v7871 = vsel %vm391, %v7815, 0
      %v7874 = vsel %vm391, %v7816, 0
      %v7877 = vsel %vm391, %v7817, 0
      %v7880 = vsel %vm391, %v7818, 0
      %v7883 = vsel %vm391, %v7819, 0
      %v7886 = vsel %vm391, %v7820, 0
      %v7889 = vsel %vm391, %v7821, 0
      %v7892 = vsel %vm391, %v7822, 0
      %v7895 = vsel %vm391, %v7823, 0
      %v7898 = vsel %vm391, %v7824, 0
      %v7901 = vsel %vm391, %v7825, 0
      %v7904 = vsel %vm391, %v7826, 0
      %v7907 = vsel %vm391, %v7827, 0
      %v7910 = vsel %vm391, %v7828, 0
      %v7913 = vsel %vm391, %v7829, 0
      %v7916 = vsel %vm391, %v7830, 0
      %v7919 = vsel %vm391, %v7831, 0
      %v7922 = vsel %vm391, %v7832, 0
      %v7925 = vsel %vm391, %v7833, 0
      %v7928 = vsel %vm391, %v7834, 0
      %v7931 = vsel %vm391, %v7835, 0
      %v7934 = vsel %vm391, %v7836, 0
      %v7937 = vsel %vm391, %v7837, 0
      %v7940 = vsel %vm391, %v7838, 0
      %v7943 = vsel %vm391, %v7839, 0
      %v7946 = vsel %vm391, %v7840, 0
      %v7949 = vsel %vm391, %v7841, 0
      %v7952 = vsel %vm391, %v7842, 0
      %v7955 = vsel %vm391, %v7843, 0
      %v7958 = vsel %vm391, %v7844, 0
      %v7961 = vsel %vm391, %v7845, 0
      %v7964 = vsel %vm391, %v7846, 0
      %v7967 = vsel %vm391, %v7847, 0
      %v7970 = vsel %vm391, %v7848, 0
      %v7973 = vsel %vm391, %v7849, 0
      %7975 = vmatprep.subr.mxu0 0.0
      %7976 = vmatpush1.msra.mxu0 %v7851
      %7977 = vmatprep.subr.mxu0 0.0
      %7978 = vmatpush1.msra.mxu0 0.0
      %7979 = vmatprep.subr.mxu0 0.0
      %7980 = vmatpush1.msra.mxu0 0.0
      %7981 = vmatprep.subr.mxu0 0.0
      %7982 = vmatpush1.msra.mxu0 0.0
      %7983 = vmatprep.subr.mxu0 0.0
      %7984 = vmatpush1.msra.mxu0 0.0
      %7985 = vmatprep.subr.mxu0 0.0
      %7986 = vmatpush1.msra.mxu0 0.0
      %7987 = vmatprep.subr.mxu0 0.0
      %7988 = vmatpush1.msra.mxu0 0.0
      %7989 = vmatprep.subr.mxu0 0.0
      %7990 = vmatpush1.msra.mxu0 0.0
      %7991 = vmatprep.subr.mxu0 0.0
      %7992 = vmatpush1.msra.mxu0 0.0
      %7993 = vmatprep.subr.mxu0 0.0
      %7994 = vmatpush1.msra.mxu0 0.0
      %7995 = vmatprep.subr.mxu0 0.0
      %7996 = vmatpush1.msra.mxu0 0.0
      %7997 = vmatprep.subr.mxu0 0.0
      %7998 = vmatpush1.msra.mxu0 0.0
      %7999 = vmatprep.subr.mxu0 0.0
      %8000 = vmatpush1.msra.mxu0 0.0
      %8001 = vmatprep.subr.mxu0 0.0
      %8002 = vmatpush1.msra.mxu0 0.0
      %8003 = vmatprep.subr.mxu0 0.0
      %8004 = vmatpush1.msra.mxu0 0.0
      %8005 = vmatprep.subr.mxu0 0.0
      %8006 = vmatpush1.msra.mxu0 0.0
      %8007 = vmatprep.subr.mxu0 0.0
      %8008 = vmatpush1.msra.mxu0 0.0
      %8009 = vmatprep.subr.mxu0 0.0
      %8010 = vmatpush1.msra.mxu0 0.0
      %8011 = vmatprep.subr.mxu0 0.0
      %8012 = vmatpush1.msra.mxu0 0.0
      %8013 = vmatprep.subr.mxu0 0.0
      %8014 = vmatpush1.msra.mxu0 0.0
      %8015 = vmatprep.subr.mxu0 0.0
      %8016 = vmatpush1.msra.mxu0 0.0
      %8017 = vmatprep.subr.mxu0 0.0
      %8018 = vmatpush1.msra.mxu0 0.0
      %8019 = vmatprep.subr.mxu0 0.0
      %8020 = vmatpush1.msra.mxu0 0.0
      %8021 = vmatprep.subr.mxu0 0.0
      %8022 = vmatpush1.msra.mxu0 0.0
      %8023 = vmatprep.subr.mxu0 0.0
      %8024 = vmatpush1.msra.mxu0 0.0
      %8025 = vmatprep.subr.mxu0 0.0
      %8026 = vmatpush1.msra.mxu0 0.0
      %8027 = vmatprep.subr.mxu0 0.0
      %8028 = vmatpush1.msra.mxu0 0.0
      %8029 = vmatprep.subr.mxu0 0.0
      %8030 = vmatpush1.msra.mxu0 0.0
      %8031 = vmatprep.subr.mxu0 0.0
      %8032 = vmatpush1.msra.mxu0 0.0
      %8033 = vmatprep.subr.mxu0 0.0
      %8034 = vmatpush1.msra.mxu0 0.0
      %8035 = vmatprep.subr.mxu0 0.0
      %8036 = vmatpush1.msra.mxu0 0.0
      %8037 = vmatprep.subr.mxu0 0.0
      %8038 = vmatpush1.msra.mxu0 0.0
      %8039 = vmatprep.mubr.f32.mxu0 0.0
      %8040 = vmatmul.mubr.f32.gmra.mrb[0].mxu0 %v7853
      %v8041 = vpop.f32.mrb[0].mxu0
      %v8042 = vadd.f32 0.0, %v8041
      %v8043 = vpop.f32.mrb[0].mxu0
      %8044 = vmatprep.mubr.f32.mxu0 0.0
      %8045 = vmatmul.mubr.f32.gmra.mrb[0].mxu0 %v7856
      %v8046 = vpop.f32.mrb[0].mxu0
      %v8047 = vadd.f32 0.0, %v8046
      %v8048 = vpop.f32.mrb[0].mxu0
      %8049 = vmatprep.mubr.f32.mxu0 0.0
      %8050 = vmatmul.mubr.f32.gmra.mrb[0].mxu0 %v7859
      %v8051 = vpop.f32.mrb[0].mxu0
      %v8052 = vadd.f32 0.0, %v8051
      %v8053 = vpop.f32.mrb[0].mxu0
      %8054 = vmatprep.mubr.f32.mxu0 0.0
      %8055 = vmatmul.mubr.f32.gmra.mrb[0].mxu0 %v7862
      %v8056 = vpop.f32.mrb[0].mxu0
      %v8057 = vadd.f32 0.0, %v8056
      %v8058 = vpop.f32.mrb[0].mxu0
      %8059 = vmatprep.mubr.f32.mxu0 0.0
      %8060 = vmatmul.mubr.f32.gmra.mrb[0].mxu0 %v7865
      %v8061 = vpop.f32.mrb[0].mxu0
      %v8062 = vadd.f32 0.0, %v8061
      %v8063 = vpop.f32.mrb[0].mxu0
      %8064 = vmatprep.mubr.f32.mxu0 0.0
      %8065 = vmatmul.mubr.f32.gmra.mrb[0].mxu0 %v7868
      %v8066 = vpop.f32.mrb[0].mxu0
      %v8067 = vadd.f32 0.0, %v8066
      %v8068 = vpop.f32.mrb[0].mxu0
      %8069 = vmatprep.mubr.f32.mxu0 0.0
      %8070 = vmatmul.mubr.f32.gmra.mrb[0].mxu0 %v7871
      %v8071 = vpop.f32.mrb[0].mxu0
      %v8072 = vadd.f32 0.0, %v8071
      %v8073 = vpop.f32.mrb[0].mxu0
      %8074 = vmatprep.mubr.f32.mxu0 0.0
      %8075 = vmatmul.mubr.f32.gmra.mrb[0].mxu0 %v7874
      %v8076 = vpop.f32.mrb[0].mxu0
      %v8077 = vadd.f32 0.0, %v8076
      %v8078 = vpop.f32.mrb[0].mxu0
      %8079 = vmatprep.mubr.f32.mxu0 0.0
      %8080 = vmatmul.mubr.f32.gmra.mrb[0].mxu0 %v7877
      %v8081 = vpop.f32.mrb[0].mxu0
      %v8082 = vadd.f32 0.0, %v8081
      %v8083 = vpop.f32.mrb[0].mxu0
      %8084 = vmatprep.mubr.f32.mxu0 0.0
      %8085 = vmatmul.mubr.f32.gmra.mrb[0].mxu0 %v7880
      %v8086 = vpop.f32.mrb[0].mxu0
      %v8087 = vadd.f32 0.0, %v8086
      %v8088 = vpop.f32.mrb[0].mxu0
      %8089 = vmatprep.mubr.f32.mxu0 0.0
      %8090 = vmatmul.mubr.f32.gmra.mrb[0].mxu0 %v7883
      %v8091 = vpop.f32.mrb[0].mxu0
      %v8092 = vadd.f32 0.0, %v8091
      %v8093 = vpop.f32.mrb[0].mxu0
      %8094 = vmatprep.mubr.f32.mxu0 0.0
      %8095 = vmatmul.mubr.f32.gmra.mrb[0].mxu0 %v7886
      %v8096 = vpop.f32.mrb[0].mxu0
      %v8097 = vadd.f32 0.0, %v8096
      %v8098 = vpop.f32.mrb[0].mxu0
      %8099 = vmatprep.mubr.f32.mxu0 0.0
      %8100 = vmatmul.mubr.f32.gmra.mrb[0].mxu0 %v7889
      %v8101 = vpop.f32.mrb[0].mxu0
      %v8102 = vadd.f32 0.0, %v8101
      %v8103 = vpop.f32.mrb[0].mxu0
      %8104 = vmatprep.mubr.f32.mxu0 0.0
      %8105 = vmatmul.mubr.f32.gmra.mrb[0].mxu0 %v7892
      %v8106 = vpop.f32.mrb[0].mxu0
      %v8107 = vadd.f32 0.0, %v8106
      %v8108 = vpop.f32.mrb[0].mxu0
      %8109 = vmatprep.mubr.f32.mxu0 0.0
      %8110 = vmatmul.mubr.f32.gmra.mrb[0].mxu0 %v7895
      %v8111 = vpop.f32.mrb[0].mxu0
      %v8112 = vadd.f32 0.0, %v8111
      %v8113 = vpop.f32.mrb[0].mxu0
      %8114 = vmatprep.mubr.f32.mxu0 0.0
      %8115 = vmatmul.mubr.f32.gmra.mrb[0].mxu0 %v7898
      %v8116 = vpop.f32.mrb[0].mxu0
      %v8117 = vadd.f32 0.0, %v8116
      %v8118 = vpop.f32.mrb[0].mxu0
      %8119 = vmatprep.mubr.f32.mxu0 0.0
      %8120 = vmatmul.mubr.f32.gmra.mrb[0].mxu0 %v7901
      %v8121 = vpop.f32.mrb[0].mxu0
      %v8122 = vadd.f32 0.0, %v8121
      %v8123 = vpop.f32.mrb[0].mxu0
      %8124 = vmatprep.mubr.f32.mxu0 0.0
      %8125 = vmatmul.mubr.f32.gmra.mrb[0].mxu0 %v7904
      %v8126 = vpop.f32.mrb[0].mxu0
      %v8127 = vadd.f32 0.0, %v8126
      %v8128 = vpop.f32.mrb[0].mxu0
      %8129 = vmatprep.mubr.f32.mxu0 0.0
      %8130 = vmatmul.mubr.f32.gmra.mrb[0].mxu0 %v7907
      %v8131 = vpop.f32.mrb[0].mxu0
      %v8132 = vadd.f32 0.0, %v8131
      %v8133 = vpop.f32.mrb[0].mxu0
      %8134 = vmatprep.mubr.f32.mxu0 0.0
      %8135 = vmatmul.mubr.f32.gmra.mrb[0].mxu0 %v7910
      %v8136 = vpop.f32.mrb[0].mxu0
      %v8137 = vadd.f32 0.0, %v8136
      %v8138 = vpop.f32.mrb[0].mxu0
      %8139 = vmatprep.mubr.f32.mxu0 0.0
      %8140 = vmatmul.mubr.f32.gmra.mrb[0].mxu0 %v7913
      %v8141 = vpop.f32.mrb[0].mxu0
      %v8142 = vadd.f32 0.0, %v8141
      %v8143 = vpop.f32.mrb[0].mxu0
      %8144 = vmatprep.mubr.f32.mxu0 0.0
      %8145 = vmatmul.mubr.f32.gmra.mrb[0].mxu0 %v7916
      %v8146 = vpop.f32.mrb[0].mxu0
      %v8147 = vadd.f32 0.0, %v8146
      %v8148 = vpop.f32.mrb[0].mxu0
      %8149 = vmatprep.mubr.f32.mxu0 0.0
      %8150 = vmatmul.mubr.f32.gmra.mrb[0].mxu0 %v7919
      %v8151 = vpop.f32.mrb[0].mxu0
      %v8152 = vadd.f32 0.0, %v8151
      %v8153 = vpop.f32.mrb[0].mxu0
      %8154 = vmatprep.mubr.f32.mxu0 0.0
      %8155 = vmatmul.mubr.f32.gmra.mrb[0].mxu0 %v7922
      %v8156 = vpop.f32.mrb[0].mxu0
      %v8157 = vadd.f32 0.0, %v8156
      %v8158 = vpop.f32.mrb[0].mxu0
      %8159 = vmatprep.mubr.f32.mxu0 0.0
      %8160 = vmatmul.mubr.f32.gmra.mrb[0].mxu0 %v7925
      %v8161 = vpop.f32.mrb[0].mxu0
      %v8162 = vadd.f32 0.0, %v8161
      %v8163 = vpop.f32.mrb[0].mxu0
      %8164 = vmatprep.mubr.f32.mxu0 0.0
      %8165 = vmatmul.mubr.f32.gmra.mrb[0].mxu0 %v7928
      %v8166 = vpop.f32.mrb[0].mxu0
      %v8167 = vadd.f32 0.0, %v8166
      %v8168 = vpop.f32.mrb[0].mxu0
      %8169 = vmatprep.mubr.f32.mxu0 0.0
      %8170 = vmatmul.mubr.f32.gmra.mrb[0].mxu0 %v7931
      %v8171 = vpop.f32.mrb[0].mxu0
      %v8172 = vadd.f32 0.0, %v8171
      %v8173 = vpop.f32.mrb[0].mxu0
      %8174 = vmatprep.mubr.f32.mxu0 0.0
      %8175 = vmatmul.mubr.f32.gmra.mrb[0].mxu0 %v7934
      %v8176 = vpop.f32.mrb[0].mxu0
      %v8177 = vadd.f32 0.0, %v8176
      %v8178 = vpop.f32.mrb[0].mxu0
      %8179 = vmatprep.mubr.f32.mxu0 0.0
      %8180 = vmatmul.mubr.f32.gmra.mrb[0].mxu0 %v7937
      %v8181 = vpop.f32.mrb[0].mxu0
      %v8182 = vadd.f32 0.0, %v8181
      %v8183 = vpop.f32.mrb[0].mxu0
      %8184 = vmatprep.mubr.f32.mxu0 0.0
      %8185 = vmatmul.mubr.f32.gmra.mrb[0].mxu0 %v7940
      %v8186 = vpop.f32.mrb[0].mxu0
      %v8187 = vadd.f32 0.0, %v8186
      %v8188 = vpop.f32.mrb[0].mxu0
      %8189 = vmatprep.mubr.f32.mxu0 0.0
      %8190 = vmatmul.mubr.f32.gmra.mrb[0].mxu0 %v7943
      %v8191 = vpop.f32.mrb[0].mxu0
      %v8192 = vadd.f32 0.0, %v8191
      %v8193 = vpop.f32.mrb[0].mxu0
      %8194 = vmatprep.mubr.f32.mxu0 0.0
      %8195 = vmatmul.mubr.f32.gmra.mrb[0].mxu0 %v7946
      %v8196 = vpop.f32.mrb[0].mxu0
      %v8197 = vadd.f32 0.0, %v8196
      %v8198 = vpop.f32.mrb[0].mxu0
      %8199 = vmatprep.mubr.f32.mxu0 0.0
      %8200 = vmatmul.mubr.f32.gmra.mrb[0].mxu0 %v7949
      %v8201 = vpop.f32.mrb[0].mxu0
      %v8202 = vadd.f32 0.0, %v8201
      %v8203 = vpop.f32.mrb[0].mxu0
      %8204 = vmatprep.mubr.f32.mxu0 0.0
      %8205 = vmatmul.mubr.f32.gmra.mrb[0].mxu0 %v7952
      %v8206 = vpop.f32.mrb[0].mxu0
      %v8207 = vadd.f32 0.0, %v8206
      %v8208 = vpop.f32.mrb[0].mxu0
      %8209 = vmatprep.mubr.f32.mxu0 0.0
      %8210 = vmatmul.mubr.f32.gmra.mrb[0].mxu0 %v7955
      %v8211 = vpop.f32.mrb[0].mxu0
      %v8212 = vadd.f32 0.0, %v8211
      %v8213 = vpop.f32.mrb[0].mxu0
      %8214 = vmatprep.mubr.f32.mxu0 0.0
      %8215 = vmatmul.mubr.f32.gmra.mrb[0].mxu0 %v7958
      %v8216 = vpop.f32.mrb[0].mxu0
      %v8217 = vadd.f32 0.0, %v8216
      %v8218 = vpop.f32.mrb[0].mxu0
      %8219 = vmatprep.mubr.f32.mxu0 0.0
      %8220 = vmatmul.mubr.f32.gmra.mrb[0].mxu0 %v7961
      %v8221 = vpop.f32.mrb[0].mxu0
      %v8222 = vadd.f32 0.0, %v8221
      %v8223 = vpop.f32.mrb[0].mxu0
      %8224 = vmatprep.mubr.f32.mxu0 0.0
      %8225 = vmatmul.mubr.f32.gmra.mrb[0].mxu0 %v7964
      %v8226 = vpop.f32.mrb[0].mxu0
      %v8227 = vadd.f32 0.0, %v8226
      %v8228 = vpop.f32.mrb[0].mxu0
      %8229 = vmatprep.mubr.f32.mxu0 0.0
      %8230 = vmatmul.mubr.f32.gmra.mrb[0].mxu0 %v7967
      %v8231 = vpop.f32.mrb[0].mxu0
      %v8232 = vadd.f32 0.0, %v8231
      %v8233 = vpop.f32.mrb[0].mxu0
      %8234 = vmatprep.mubr.f32.mxu0 0.0
      %8235 = vmatmul.mubr.f32.gmra.mrb[0].mxu0 %v7970
      %v8236 = vpop.f32.mrb[0].mxu0
      %v8237 = vadd.f32 0.0, %v8236
      %v8238 = vpop.f32.mrb[0].mxu0
      %8239 = vmatprep.mubr.f32.mxu0 0.0
      %8240 = vmatmul.mubr.f32.gmra.mrb[0].mxu0 %v7973
      %v8241 = vpop.f32.mrb[0].mxu0
      %v8242 = vadd.f32 0.0, %v8241
      %v8243 = vpop.f32.mrb[0].mxu0
      %8244 = vdwg.mxu0
      %v8245 = vadd.f32 %v7768, %v8042
      %v8246 = vadd.f32 %v7769, %v8047
      %v8247 = vadd.f32 %v7770, %v8052
      %v8248 = vadd.f32 %v7771, %v8057
      %v8249 = vadd.f32 %v7772, %v8062
      %v8250 = vadd.f32 %v7773, %v8067
      %v8251 = vadd.f32 %v7774, %v8072
      %v8252 = vadd.f32 %v7775, %v8077
      %v8253 = vadd.f32 %v7776, %v8082
      %v8254 = vadd.f32 %v7777, %v8087
      %v8255 = vadd.f32 %v7778, %v8092
      %v8256 = vadd.f32 %v7779, %v8097
      %v8257 = vadd.f32 %v7780, %v8102
      %v8258 = vadd.f32 %v7781, %v8107
      %v8259 = vadd.f32 %v7782, %v8112
      %v8260 = vadd.f32 %v7783, %v8117
      %v8261 = vadd.f32 %v7784, %v8122
      %v8262 = vadd.f32 %v7785, %v8127
      %v8263 = vadd.f32 %v7786, %v8132
      %v8264 = vadd.f32 %v7787, %v8137
      %v8265 = vadd.f32 %v7788, %v8142
      %v8266 = vadd.f32 %v7789, %v8147
      %v8267 = vadd.f32 %v7790, %v8152
      %v8268 = vadd.f32 %v7791, %v8157
      %v8269 = vadd.f32 %v7792, %v8162
      %v8270 = vadd.f32 %v7793, %v8167
      %v8271 = vadd.f32 %v7794, %v8172
      %v8272 = vadd.f32 %v7795, %v8177
      %v8273 = vadd.f32 %v7796, %v8182
      %v8274 = vadd.f32 %v7797, %v8187
      %v8275 = vadd.f32 %v7798, %v8192
      %v8276 = vadd.f32 %v7799, %v8197
      %v8277 = vadd.f32 %v7800, %v8202
      %v8278 = vadd.f32 %v7801, %v8207
      %v8279 = vadd.f32 %v7802, %v8212
      %v8280 = vadd.f32 %v7803, %v8217
      %v8281 = vadd.f32 %v7804, %v8222
      %v8282 = vadd.f32 %v7805, %v8227
      %v8283 = vadd.f32 %v7806, %v8232
      %v8284 = vadd.f32 %v7807, %v8237
      %v8285 = vadd.f32 %v7808, %v8242
      %v8286 = vld [vmem:[#allocation2 + $0x25] sm:$0xff]
      %v8287 = vld [vmem:[#allocation2 + $0x2d] sm:$0xff]
      %v8288 = vld [vmem:[#allocation2 + $0x35] sm:$0xff]
      %v8289 = vld [vmem:[#allocation2 + $0x3d] sm:$0xff]
      %v8290 = vld [vmem:[#allocation2 + $0x45] sm:$0xff]
      %v8291 = vld [vmem:[#allocation2 + $0x4d] sm:$0xff]
      %v8292 = vld [vmem:[#allocation2 + $0x55] sm:$0xff]
      %v8293 = vld [vmem:[#allocation2 + $0x5d] sm:$0xff]
      %v8294 = vld [vmem:[#allocation2 + $0x65] sm:$0xff]
      %v8295 = vld [vmem:[#allocation2 + $0x6d] sm:$0xff]
      %v8296 = vld [vmem:[#allocation2 + $0x75] sm:$0xff]
      %v8297 = vld [vmem:[#allocation2 + $0x7d] sm:$0xff]
      %v8298 = vld [vmem:[#allocation2 + $0x85] sm:$0xff]
      %v8299 = vld [vmem:[#allocation2 + $0x8d] sm:$0xff]
      %v8300 = vld [vmem:[#allocation2 + $0x95] sm:$0xff]
      %v8301 = vld [vmem:[#allocation2 + $0x9d] sm:$0xff]
      %v8302 = vld [vmem:[#allocation2 + $0xa5] sm:$0xff]
      %v8303 = vld [vmem:[#allocation2 + $0xad] sm:$0xff]
      %v8304 = vld [vmem:[#allocation2 + $0xb5] sm:$0xff]
      %v8305 = vld [vmem:[#allocation2 + $0xbd] sm:$0xff]
      %v8306 = vld [vmem:[#allocation2 + $0xc5] sm:$0xff]
      %v8307 = vld [vmem:[#allocation2 + $0xcd] sm:$0xff]
      %v8308 = vld [vmem:[#allocation2 + $0xd5] sm:$0xff]
      %v8309 = vld [vmem:[#allocation2 + $0xdd] sm:$0xff]
      %v8310 = vld [vmem:[#allocation2 + $0xe5] sm:$0xff]
      %v8311 = vld [vmem:[#allocation2 + $0xed] sm:$0xff]
      %v8312 = vld [vmem:[#allocation2 + $0xf5] sm:$0xff]
      %v8313 = vld [vmem:[#allocation2 + $0xfd] sm:$0xff]
      %v8314 = vld [vmem:[#allocation2 + $0x105] sm:$0xff]
      %v8315 = vld [vmem:[#allocation2 + $0x10d] sm:$0xff]
      %v8316 = vld [vmem:[#allocation2 + $0x115] sm:$0xff]
      %v8317 = vld [vmem:[#allocation2 + $0x11d] sm:$0xff]
      %v8318 = vld [vmem:[#allocation2 + $0x125] sm:$0xff]
      %v8319 = vld [vmem:[#allocation2 + $0x12d] sm:$0xff]
      %v8320 = vld [vmem:[#allocation2 + $0x135] sm:$0xff]
      %v8321 = vld [vmem:[#allocation2 + $0x13d] sm:$0xff]
      %v8322 = vld [vmem:[#allocation2 + $0x145] sm:$0xff]
      %v8323 = vld [vmem:[#allocation2 + $0x14d] sm:$0xff]
      %v8324 = vld [vmem:[#allocation2 + $0x155] sm:$0xff]
      %v8325 = vld [vmem:[#allocation2 + $0x15d] sm:$0xff]
      %v8326 = vld [vmem:[#allocation2 + $0x165] sm:$0xf]
      %s8327 = scalar_lea.vmem %s4, 56
      %v8328 = vld [vmem:[%s8327] sm:$0xff]
      %v8330 = vsel %vm391, %v8286, 0
      %v8333 = vsel %vm391, %v8287, 0
      %v8336 = vsel %vm391, %v8288, 0
      %v8339 = vsel %vm391, %v8289, 0
      %v8342 = vsel %vm391, %v8290, 0
      %v8345 = vsel %vm391, %v8291, 0
      %v8348 = vsel %vm391, %v8292, 0
      %v8351 = vsel %vm391, %v8293, 0
      %v8354 = vsel %vm391, %v8294, 0
      %v8357 = vsel %vm391, %v8295, 0
      %v8360 = vsel %vm391, %v8296, 0
      %v8363 = vsel %vm391, %v8297, 0
      %v8366 = vsel %vm391, %v8298, 0
      %v8369 = vsel %vm391, %v8299, 0
      %v8372 = vsel %vm391, %v8300, 0
      %v8375 = vsel %vm391, %v8301, 0
      %v8378 = vsel %vm391, %v8302, 0
      %v8381 = vsel %vm391, %v8303, 0
      %v8384 = vsel %vm391, %v8304, 0
      %v8387 = vsel %vm391, %v8305, 0
      %v8390 = vsel %vm391, %v8306, 0
      %v8393 = vsel %vm391, %v8307, 0
      %v8396 = vsel %vm391, %v8308, 0
      %v8399 = vsel %vm391, %v8309, 0
      %v8402 = vsel %vm391, %v8310, 0
      %v8405 = vsel %vm391, %v8311, 0
      %v8408 = vsel %vm391, %v8312, 0
      %v8411 = vsel %vm391, %v8313, 0
      %v8414 = vsel %vm391, %v8314, 0
      %v8417 = vsel %vm391, %v8315, 0
      %v8420 = vsel %vm391, %v8316, 0
      %v8423 = vsel %vm391, %v8317, 0
      %v8426 = vsel %vm391, %v8318, 0
      %v8429 = vsel %vm391, %v8319, 0
      %v8432 = vsel %vm391, %v8320, 0
      %v8435 = vsel %vm391, %v8321, 0
      %v8438 = vsel %vm391, %v8322, 0
      %v8441 = vsel %vm391, %v8323, 0
      %v8444 = vsel %vm391, %v8324, 0
      %v8447 = vsel %vm391, %v8325, 0
      %v8450 = vsel %vm391, %v8326, 0
      %8452 = vmatprep.subr.mxu0 0.0
      %8453 = vmatpush1.msra.mxu0 %v8328
      %8454 = vmatprep.subr.mxu0 0.0
      %8455 = vmatpush1.msra.mxu0 0.0
      %8456 = vmatprep.subr.mxu0 0.0
      %8457 = vmatpush1.msra.mxu0 0.0
      %8458 = vmatprep.subr.mxu0 0.0
      %8459 = vmatpush1.msra.mxu0 0.0
      %8460 = vmatprep.subr.mxu0 0.0
      %8461 = vmatpush1.msra.mxu0 0.0
      %8462 = vmatprep.subr.mxu0 0.0
      %8463 = vmatpush1.msra.mxu0 0.0
      %8464 = vmatprep.subr.mxu0 0.0
      %8465 = vmatpush1.msra.mxu0 0.0
      %8466 = vmatprep.subr.mxu0 0.0
      %8467 = vmatpush1.msra.mxu0 0.0
      %8468 = vmatprep.subr.mxu0 0.0
      %8469 = vmatpush1.msra.mxu0 0.0
      %8470 = vmatprep.subr.mxu0 0.0
      %8471 = vmatpush1.msra.mxu0 0.0
      %8472 = vmatprep.subr.mxu0 0.0
      %8473 = vmatpush1.msra.mxu0 0.0
      %8474 = vmatprep.subr.mxu0 0.0
      %8475 = vmatpush1.msra.mxu0 0.0
      %8476 = vmatprep.subr.mxu0 0.0
      %8477 = vmatpush1.msra.mxu0 0.0
      %8478 = vmatprep.subr.mxu0 0.0
      %8479 = vmatpush1.msra.mxu0 0.0
      %8480 = vmatprep.subr.mxu0 0.0
      %8481 = vmatpush1.msra.mxu0 0.0
      %8482 = vmatprep.subr.mxu0 0.0
      %8483 = vmatpush1.msra.mxu0 0.0
      %8484 = vmatprep.subr.mxu0 0.0
      %8485 = vmatpush1.msra.mxu0 0.0
      %8486 = vmatprep.subr.mxu0 0.0
      %8487 = vmatpush1.msra.mxu0 0.0
      %8488 = vmatprep.subr.mxu0 0.0
      %8489 = vmatpush1.msra.mxu0 0.0
      %8490 = vmatprep.subr.mxu0 0.0
      %8491 = vmatpush1.msra.mxu0 0.0
      %8492 = vmatprep.subr.mxu0 0.0
      %8493 = vmatpush1.msra.mxu0 0.0
      %8494 = vmatprep.subr.mxu0 0.0
      %8495 = vmatpush1.msra.mxu0 0.0
      %8496 = vmatprep.subr.mxu0 0.0
      %8497 = vmatpush1.msra.mxu0 0.0
      %8498 = vmatprep.subr.mxu0 0.0
      %8499 = vmatpush1.msra.mxu0 0.0
      %8500 = vmatprep.subr.mxu0 0.0
      %8501 = vmatpush1.msra.mxu0 0.0
      %8502 = vmatprep.subr.mxu0 0.0
      %8503 = vmatpush1.msra.mxu0 0.0
      %8504 = vmatprep.subr.mxu0 0.0
      %8505 = vmatpush1.msra.mxu0 0.0
      %8506 = vmatprep.subr.mxu0 0.0
      %8507 = vmatpush1.msra.mxu0 0.0
      %8508 = vmatprep.subr.mxu0 0.0
      %8509 = vmatpush1.msra.mxu0 0.0
      %8510 = vmatprep.subr.mxu0 0.0
      %8511 = vmatpush1.msra.mxu0 0.0
      %8512 = vmatprep.subr.mxu0 0.0
      %8513 = vmatpush1.msra.mxu0 0.0
      %8514 = vmatprep.subr.mxu0 0.0
      %8515 = vmatpush1.msra.mxu0 0.0
      %8516 = vmatprep.mubr.f32.mxu0 0.0
      %8517 = vmatmul.mubr.f32.gmra.mrb[0].mxu0 %v8330
      %v8518 = vpop.f32.mrb[0].mxu0
      %v8519 = vadd.f32 0.0, %v8518
      %v8520 = vpop.f32.mrb[0].mxu0
      %8521 = vmatprep.mubr.f32.mxu0 0.0
      %8522 = vmatmul.mubr.f32.gmra.mrb[0].mxu0 %v8333
      %v8523 = vpop.f32.mrb[0].mxu0
      %v8524 = vadd.f32 0.0, %v8523
      %v8525 = vpop.f32.mrb[0].mxu0
      %8526 = vmatprep.mubr.f32.mxu0 0.0
      %8527 = vmatmul.mubr.f32.gmra.mrb[0].mxu0 %v8336
      %v8528 = vpop.f32.mrb[0].mxu0
      %v8529 = vadd.f32 0.0, %v8528
      %v8530 = vpop.f32.mrb[0].mxu0
      %8531 = vmatprep.mubr.f32.mxu0 0.0
      %8532 = vmatmul.mubr.f32.gmra.mrb[0].mxu0 %v8339
      %v8533 = vpop.f32.mrb[0].mxu0
      %v8534 = vadd.f32 0.0, %v8533
      %v8535 = vpop.f32.mrb[0].mxu0
      %8536 = vmatprep.mubr.f32.mxu0 0.0
      %8537 = vmatmul.mubr.f32.gmra.mrb[0].mxu0 %v8342
      %v8538 = vpop.f32.mrb[0].mxu0
      %v8539 = vadd.f32 0.0, %v8538
      %v8540 = vpop.f32.mrb[0].mxu0
      %8541 = vmatprep.mubr.f32.mxu0 0.0
      %8542 = vmatmul.mubr.f32.gmra.mrb[0].mxu0 %v8345
      %v8543 = vpop.f32.mrb[0].mxu0
      %v8544 = vadd.f32 0.0, %v8543
      %v8545 = vpop.f32.mrb[0].mxu0
      %8546 = vmatprep.mubr.f32.mxu0 0.0
      %8547 = vmatmul.mubr.f32.gmra.mrb[0].mxu0 %v8348
      %v8548 = vpop.f32.mrb[0].mxu0
      %v8549 = vadd.f32 0.0, %v8548
      %v8550 = vpop.f32.mrb[0].mxu0
      %8551 = vmatprep.mubr.f32.mxu0 0.0
      %8552 = vmatmul.mubr.f32.gmra.mrb[0].mxu0 %v8351
      %v8553 = vpop.f32.mrb[0].mxu0
      %v8554 = vadd.f32 0.0, %v8553
      %v8555 = vpop.f32.mrb[0].mxu0
      %8556 = vmatprep.mubr.f32.mxu0 0.0
      %8557 = vmatmul.mubr.f32.gmra.mrb[0].mxu0 %v8354
      %v8558 = vpop.f32.mrb[0].mxu0
      %v8559 = vadd.f32 0.0, %v8558
      %v8560 = vpop.f32.mrb[0].mxu0
      %8561 = vmatprep.mubr.f32.mxu0 0.0
      %8562 = vmatmul.mubr.f32.gmra.mrb[0].mxu0 %v8357
      %v8563 = vpop.f32.mrb[0].mxu0
      %v8564 = vadd.f32 0.0, %v8563
      %v8565 = vpop.f32.mrb[0].mxu0
      %8566 = vmatprep.mubr.f32.mxu0 0.0
      %8567 = vmatmul.mubr.f32.gmra.mrb[0].mxu0 %v8360
      %v8568 = vpop.f32.mrb[0].mxu0
      %v8569 = vadd.f32 0.0, %v8568
      %v8570 = vpop.f32.mrb[0].mxu0
      %8571 = vmatprep.mubr.f32.mxu0 0.0
      %8572 = vmatmul.mubr.f32.gmra.mrb[0].mxu0 %v8363
      %v8573 = vpop.f32.mrb[0].mxu0
      %v8574 = vadd.f32 0.0, %v8573
      %v8575 = vpop.f32.mrb[0].mxu0
      %8576 = vmatprep.mubr.f32.mxu0 0.0
      %8577 = vmatmul.mubr.f32.gmra.mrb[0].mxu0 %v8366
      %v8578 = vpop.f32.mrb[0].mxu0
      %v8579 = vadd.f32 0.0, %v8578
      %v8580 = vpop.f32.mrb[0].mxu0
      %8581 = vmatprep.mubr.f32.mxu0 0.0
      %8582 = vmatmul.mubr.f32.gmra.mrb[0].mxu0 %v8369
      %v8583 = vpop.f32.mrb[0].mxu0
      %v8584 = vadd.f32 0.0, %v8583
      %v8585 = vpop.f32.mrb[0].mxu0
      %8586 = vmatprep.mubr.f32.mxu0 0.0
      %8587 = vmatmul.mubr.f32.gmra.mrb[0].mxu0 %v8372
      %v8588 = vpop.f32.mrb[0].mxu0
      %v8589 = vadd.f32 0.0, %v8588
      %v8590 = vpop.f32.mrb[0].mxu0
      %8591 = vmatprep.mubr.f32.mxu0 0.0
      %8592 = vmatmul.mubr.f32.gmra.mrb[0].mxu0 %v8375
      %v8593 = vpop.f32.mrb[0].mxu0
      %v8594 = vadd.f32 0.0, %v8593
      %v8595 = vpop.f32.mrb[0].mxu0
      %8596 = vmatprep.mubr.f32.mxu0 0.0
      %8597 = vmatmul.mubr.f32.gmra.mrb[0].mxu0 %v8378
      %v8598 = vpop.f32.mrb[0].mxu0
      %v8599 = vadd.f32 0.0, %v8598
      %v8600 = vpop.f32.mrb[0].mxu0
      %8601 = vmatprep.mubr.f32.mxu0 0.0
      %8602 = vmatmul.mubr.f32.gmra.mrb[0].mxu0 %v8381
      %v8603 = vpop.f32.mrb[0].mxu0
      %v8604 = vadd.f32 0.0, %v8603
      %v8605 = vpop.f32.mrb[0].mxu0
      %8606 = vmatprep.mubr.f32.mxu0 0.0
      %8607 = vmatmul.mubr.f32.gmra.mrb[0].mxu0 %v8384
      %v8608 = vpop.f32.mrb[0].mxu0
      %v8609 = vadd.f32 0.0, %v8608
      %v8610 = vpop.f32.mrb[0].mxu0
      %8611 = vmatprep.mubr.f32.mxu0 0.0
      %8612 = vmatmul.mubr.f32.gmra.mrb[0].mxu0 %v8387
      %v8613 = vpop.f32.mrb[0].mxu0
      %v8614 = vadd.f32 0.0, %v8613
      %v8615 = vpop.f32.mrb[0].mxu0
      %8616 = vmatprep.mubr.f32.mxu0 0.0
      %8617 = vmatmul.mubr.f32.gmra.mrb[0].mxu0 %v8390
      %v8618 = vpop.f32.mrb[0].mxu0
      %v8619 = vadd.f32 0.0, %v8618
      %v8620 = vpop.f32.mrb[0].mxu0
      %8621 = vmatprep.mubr.f32.mxu0 0.0
      %8622 = vmatmul.mubr.f32.gmra.mrb[0].mxu0 %v8393
      %v8623 = vpop.f32.mrb[0].mxu0
      %v8624 = vadd.f32 0.0, %v8623
      %v8625 = vpop.f32.mrb[0].mxu0
      %8626 = vmatprep.mubr.f32.mxu0 0.0
      %8627 = vmatmul.mubr.f32.gmra.mrb[0].mxu0 %v8396
      %v8628 = vpop.f32.mrb[0].mxu0
      %v8629 = vadd.f32 0.0, %v8628
      %v8630 = vpop.f32.mrb[0].mxu0
      %8631 = vmatprep.mubr.f32.mxu0 0.0
      %8632 = vmatmul.mubr.f32.gmra.mrb[0].mxu0 %v8399
      %v8633 = vpop.f32.mrb[0].mxu0
      %v8634 = vadd.f32 0.0, %v8633
      %v8635 = vpop.f32.mrb[0].mxu0
      %8636 = vmatprep.mubr.f32.mxu0 0.0
      %8637 = vmatmul.mubr.f32.gmra.mrb[0].mxu0 %v8402
      %v8638 = vpop.f32.mrb[0].mxu0
      %v8639 = vadd.f32 0.0, %v8638
      %v8640 = vpop.f32.mrb[0].mxu0
      %8641 = vmatprep.mubr.f32.mxu0 0.0
      %8642 = vmatmul.mubr.f32.gmra.mrb[0].mxu0 %v8405
      %v8643 = vpop.f32.mrb[0].mxu0
      %v8644 = vadd.f32 0.0, %v8643
      %v8645 = vpop.f32.mrb[0].mxu0
      %8646 = vmatprep.mubr.f32.mxu0 0.0
      %8647 = vmatmul.mubr.f32.gmra.mrb[0].mxu0 %v8408
      %v8648 = vpop.f32.mrb[0].mxu0
      %v8649 = vadd.f32 0.0, %v8648
      %v8650 = vpop.f32.mrb[0].mxu0
      %8651 = vmatprep.mubr.f32.mxu0 0.0
      %8652 = vmatmul.mubr.f32.gmra.mrb[0].mxu0 %v8411
      %v8653 = vpop.f32.mrb[0].mxu0
      %v8654 = vadd.f32 0.0, %v8653
      %v8655 = vpop.f32.mrb[0].mxu0
      %8656 = vmatprep.mubr.f32.mxu0 0.0
      %8657 = vmatmul.mubr.f32.gmra.mrb[0].mxu0 %v8414
      %v8658 = vpop.f32.mrb[0].mxu0
      %v8659 = vadd.f32 0.0, %v8658
      %v8660 = vpop.f32.mrb[0].mxu0
      %8661 = vmatprep.mubr.f32.mxu0 0.0
      %8662 = vmatmul.mubr.f32.gmra.mrb[0].mxu0 %v8417
      %v8663 = vpop.f32.mrb[0].mxu0
      %v8664 = vadd.f32 0.0, %v8663
      %v8665 = vpop.f32.mrb[0].mxu0
      %8666 = vmatprep.mubr.f32.mxu0 0.0
      %8667 = vmatmul.mubr.f32.gmra.mrb[0].mxu0 %v8420
      %v8668 = vpop.f32.mrb[0].mxu0
      %v8669 = vadd.f32 0.0, %v8668
      %v8670 = vpop.f32.mrb[0].mxu0
      %8671 = vmatprep.mubr.f32.mxu0 0.0
      %8672 = vmatmul.mubr.f32.gmra.mrb[0].mxu0 %v8423
      %v8673 = vpop.f32.mrb[0].mxu0
      %v8674 = vadd.f32 0.0, %v8673
      %v8675 = vpop.f32.mrb[0].mxu0
      %8676 = vmatprep.mubr.f32.mxu0 0.0
      %8677 = vmatmul.mubr.f32.gmra.mrb[0].mxu0 %v8426
      %v8678 = vpop.f32.mrb[0].mxu0
      %v8679 = vadd.f32 0.0, %v8678
      %v8680 = vpop.f32.mrb[0].mxu0
      %8681 = vmatprep.mubr.f32.mxu0 0.0
      %8682 = vmatmul.mubr.f32.gmra.mrb[0].mxu0 %v8429
      %v8683 = vpop.f32.mrb[0].mxu0
      %v8684 = vadd.f32 0.0, %v8683
      %v8685 = vpop.f32.mrb[0].mxu0
      %8686 = vmatprep.mubr.f32.mxu0 0.0
      %8687 = vmatmul.mubr.f32.gmra.mrb[0].mxu0 %v8432
      %v8688 = vpop.f32.mrb[0].mxu0
      %v8689 = vadd.f32 0.0, %v8688
      %v8690 = vpop.f32.mrb[0].mxu0
      %8691 = vmatprep.mubr.f32.mxu0 0.0
      %8692 = vmatmul.mubr.f32.gmra.mrb[0].mxu0 %v8435
      %v8693 = vpop.f32.mrb[0].mxu0
      %v8694 = vadd.f32 0.0, %v8693
      %v8695 = vpop.f32.mrb[0].mxu0
      %8696 = vmatprep.mubr.f32.mxu0 0.0
      %8697 = vmatmul.mubr.f32.gmra.mrb[0].mxu0 %v8438
      %v8698 = vpop.f32.mrb[0].mxu0
      %v8699 = vadd.f32 0.0, %v8698
      %v8700 = vpop.f32.mrb[0].mxu0
      %8701 = vmatprep.mubr.f32.mxu0 0.0
      %8702 = vmatmul.mubr.f32.gmra.mrb[0].mxu0 %v8441
      %v8703 = vpop.f32.mrb[0].mxu0
      %v8704 = vadd.f32 0.0, %v8703
      %v8705 = vpop.f32.mrb[0].mxu0
      %8706 = vmatprep.mubr.f32.mxu0 0.0
      %8707 = vmatmul.mubr.f32.gmra.mrb[0].mxu0 %v8444
      %v8708 = vpop.f32.mrb[0].mxu0
      %v8709 = vadd.f32 0.0, %v8708
      %v8710 = vpop.f32.mrb[0].mxu0
      %8711 = vmatprep.mubr.f32.mxu0 0.0
      %8712 = vmatmul.mubr.f32.gmra.mrb[0].mxu0 %v8447
      %v8713 = vpop.f32.mrb[0].mxu0
      %v8714 = vadd.f32 0.0, %v8713
      %v8715 = vpop.f32.mrb[0].mxu0
      %8716 = vmatprep.mubr.f32.mxu0 0.0
      %8717 = vmatmul.mubr.f32.gmra.mrb[0].mxu0 %v8450
      %v8718 = vpop.f32.mrb[0].mxu0
      %v8719 = vadd.f32 0.0, %v8718
      %v8720 = vpop.f32.mrb[0].mxu0
      %8721 = vdwg.mxu0
      %v8722 = vadd.f32 %v8245, %v8519
      %v8723 = vadd.f32 %v8246, %v8524
      %v8724 = vadd.f32 %v8247, %v8529
      %v8725 = vadd.f32 %v8248, %v8534
      %v8726 = vadd.f32 %v8249, %v8539
      %v8727 = vadd.f32 %v8250, %v8544
      %v8728 = vadd.f32 %v8251, %v8549
      %v8729 = vadd.f32 %v8252, %v8554
      %v8730 = vadd.f32 %v8253, %v8559
      %v8731 = vadd.f32 %v8254, %v8564
      %v8732 = vadd.f32 %v8255, %v8569
      %v8733 = vadd.f32 %v8256, %v8574
      %v8734 = vadd.f32 %v8257, %v8579
      %v8735 = vadd.f32 %v8258, %v8584
      %v8736 = vadd.f32 %v8259, %v8589
      %v8737 = vadd.f32 %v8260, %v8594
      %v8738 = vadd.f32 %v8261, %v8599
      %v8739 = vadd.f32 %v8262, %v8604
      %v8740 = vadd.f32 %v8263, %v8609
      %v8741 = vadd.f32 %v8264, %v8614
      %v8742 = vadd.f32 %v8265, %v8619
      %v8743 = vadd.f32 %v8266, %v8624
      %v8744 = vadd.f32 %v8267, %v8629
      %v8745 = vadd.f32 %v8268, %v8634
      %v8746 = vadd.f32 %v8269, %v8639
      %v8747 = vadd.f32 %v8270, %v8644
      %v8748 = vadd.f32 %v8271, %v8649
      %v8749 = vadd.f32 %v8272, %v8654
      %v8750 = vadd.f32 %v8273, %v8659
      %v8751 = vadd.f32 %v8274, %v8664
      %v8752 = vadd.f32 %v8275, %v8669
      %v8753 = vadd.f32 %v8276, %v8674
      %v8754 = vadd.f32 %v8277, %v8679
      %v8755 = vadd.f32 %v8278, %v8684
      %v8756 = vadd.f32 %v8279, %v8689
      %v8757 = vadd.f32 %v8280, %v8694
      %v8758 = vadd.f32 %v8281, %v8699
      %v8759 = vadd.f32 %v8282, %v8704
      %v8760 = vadd.f32 %v8283, %v8709
      %v8761 = vadd.f32 %v8284, %v8714
      %v8762 = vadd.f32 %v8285, %v8719
      %v8763 = vld [vmem:[#allocation2 + $0x26] sm:$0xff]
      %v8764 = vld [vmem:[#allocation2 + $0x2e] sm:$0xff]
      %v8765 = vld [vmem:[#allocation2 + $0x36] sm:$0xff]
      %v8766 = vld [vmem:[#allocation2 + $0x3e] sm:$0xff]
      %v8767 = vld [vmem:[#allocation2 + $0x46] sm:$0xff]
      %v8768 = vld [vmem:[#allocation2 + $0x4e] sm:$0xff]
      %v8769 = vld [vmem:[#allocation2 + $0x56] sm:$0xff]
      %v8770 = vld [vmem:[#allocation2 + $0x5e] sm:$0xff]
      %v8771 = vld [vmem:[#allocation2 + $0x66] sm:$0xff]
      %v8772 = vld [vmem:[#allocation2 + $0x6e] sm:$0xff]
      %v8773 = vld [vmem:[#allocation2 + $0x76] sm:$0xff]
      %v8774 = vld [vmem:[#allocation2 + $0x7e] sm:$0xff]
      %v8775 = vld [vmem:[#allocation2 + $0x86] sm:$0xff]
      %v8776 = vld [vmem:[#allocation2 + $0x8e] sm:$0xff]
      %v8777 = vld [vmem:[#allocation2 + $0x96] sm:$0xff]
      %v8778 = vld [vmem:[#allocation2 + $0x9e] sm:$0xff]
      %v8779 = vld [vmem:[#allocation2 + $0xa6] sm:$0xff]
      %v8780 = vld [vmem:[#allocation2 + $0xae] sm:$0xff]
      %v8781 = vld [vmem:[#allocation2 + $0xb6] sm:$0xff]
      %v8782 = vld [vmem:[#allocation2 + $0xbe] sm:$0xff]
      %v8783 = vld [vmem:[#allocation2 + $0xc6] sm:$0xff]
      %v8784 = vld [vmem:[#allocation2 + $0xce] sm:$0xff]
      %v8785 = vld [vmem:[#allocation2 + $0xd6] sm:$0xff]
      %v8786 = vld [vmem:[#allocation2 + $0xde] sm:$0xff]
      %v8787 = vld [vmem:[#allocation2 + $0xe6] sm:$0xff]
      %v8788 = vld [vmem:[#allocation2 + $0xee] sm:$0xff]
      %v8789 = vld [vmem:[#allocation2 + $0xf6] sm:$0xff]
      %v8790 = vld [vmem:[#allocation2 + $0xfe] sm:$0xff]
      %v8791 = vld [vmem:[#allocation2 + $0x106] sm:$0xff]
      %v8792 = vld [vmem:[#allocation2 + $0x10e] sm:$0xff]
      %v8793 = vld [vmem:[#allocation2 + $0x116] sm:$0xff]
      %v8794 = vld [vmem:[#allocation2 + $0x11e] sm:$0xff]
      %v8795 = vld [vmem:[#allocation2 + $0x126] sm:$0xff]
      %v8796 = vld [vmem:[#allocation2 + $0x12e] sm:$0xff]
      %v8797 = vld [vmem:[#allocation2 + $0x136] sm:$0xff]
      %v8798 = vld [vmem:[#allocation2 + $0x13e] sm:$0xff]
      %v8799 = vld [vmem:[#allocation2 + $0x146] sm:$0xff]
      %v8800 = vld [vmem:[#allocation2 + $0x14e] sm:$0xff]
      %v8801 = vld [vmem:[#allocation2 + $0x156] sm:$0xff]
      %v8802 = vld [vmem:[#allocation2 + $0x15e] sm:$0xff]
      %v8803 = vld [vmem:[#allocation2 + $0x166] sm:$0xf]
      %s8804 = scalar_lea.vmem %s4, 64
      %v8805 = vld [vmem:[%s8804] sm:$0xff]
      %v8807 = vsel %vm391, %v8763, 0
      %v8810 = vsel %vm391, %v8764, 0
      %v8813 = vsel %vm391, %v8765, 0
      %v8816 = vsel %vm391, %v8766, 0
      %v8819 = vsel %vm391, %v8767, 0
      %v8822 = vsel %vm391, %v8768, 0
      %v8825 = vsel %vm391, %v8769, 0
      %v8828 = vsel %vm391, %v8770, 0
      %v8831 = vsel %vm391, %v8771, 0
      %v8834 = vsel %vm391, %v8772, 0
      %v8837 = vsel %vm391, %v8773, 0
      %v8840 = vsel %vm391, %v8774, 0
      %v8843 = vsel %vm391, %v8775, 0
      %v8846 = vsel %vm391, %v8776, 0
      %v8849 = vsel %vm391, %v8777, 0
      %v8852 = vsel %vm391, %v8778, 0
      %v8855 = vsel %vm391, %v8779, 0
      %v8858 = vsel %vm391, %v8780, 0
      %v8861 = vsel %vm391, %v8781, 0
      %v8864 = vsel %vm391, %v8782, 0
      %v8867 = vsel %vm391, %v8783, 0
      %v8870 = vsel %vm391, %v8784, 0
      %v8873 = vsel %vm391, %v8785, 0
      %v8876 = vsel %vm391, %v8786, 0
      %v8879 = vsel %vm391, %v8787, 0
      %v8882 = vsel %vm391, %v8788, 0
      %v8885 = vsel %vm391, %v8789, 0
      %v8888 = vsel %vm391, %v8790, 0
      %v8891 = vsel %vm391, %v8791, 0
      %v8894 = vsel %vm391, %v8792, 0
      %v8897 = vsel %vm391, %v8793, 0
      %v8900 = vsel %vm391, %v8794, 0
      %v8903 = vsel %vm391, %v8795, 0
      %v8906 = vsel %vm391, %v8796, 0
      %v8909 = vsel %vm391, %v8797, 0
      %v8912 = vsel %vm391, %v8798, 0
      %v8915 = vsel %vm391, %v8799, 0
      %v8918 = vsel %vm391, %v8800, 0
      %v8921 = vsel %vm391, %v8801, 0
      %v8924 = vsel %vm391, %v8802, 0
      %v8927 = vsel %vm391, %v8803, 0
      %8929 = vmatprep.subr.mxu0 0.0
      %8930 = vmatpush1.msra.mxu0 %v8805
      %8931 = vmatprep.subr.mxu0 0.0
      %8932 = vmatpush1.msra.mxu0 0.0
      %8933 = vmatprep.subr.mxu0 0.0
      %8934 = vmatpush1.msra.mxu0 0.0
      %8935 = vmatprep.subr.mxu0 0.0
      %8936 = vmatpush1.msra.mxu0 0.0
      %8937 = vmatprep.subr.mxu0 0.0
      %8938 = vmatpush1.msra.mxu0 0.0
      %8939 = vmatprep.subr.mxu0 0.0
      %8940 = vmatpush1.msra.mxu0 0.0
      %8941 = vmatprep.subr.mxu0 0.0
      %8942 = vmatpush1.msra.mxu0 0.0
      %8943 = vmatprep.subr.mxu0 0.0
      %8944 = vmatpush1.msra.mxu0 0.0
      %8945 = vmatprep.subr.mxu0 0.0
      %8946 = vmatpush1.msra.mxu0 0.0
      %8947 = vmatprep.subr.mxu0 0.0
      %8948 = vmatpush1.msra.mxu0 0.0
      %8949 = vmatprep.subr.mxu0 0.0
      %8950 = vmatpush1.msra.mxu0 0.0
      %8951 = vmatprep.subr.mxu0 0.0
      %8952 = vmatpush1.msra.mxu0 0.0
      %8953 = vmatprep.subr.mxu0 0.0
      %8954 = vmatpush1.msra.mxu0 0.0
      %8955 = vmatprep.subr.mxu0 0.0
      %8956 = vmatpush1.msra.mxu0 0.0
      %8957 = vmatprep.subr.mxu0 0.0
      %8958 = vmatpush1.msra.mxu0 0.0
      %8959 = vmatprep.subr.mxu0 0.0
      %8960 = vmatpush1.msra.mxu0 0.0
      %8961 = vmatprep.subr.mxu0 0.0
      %8962 = vmatpush1.msra.mxu0 0.0
      %8963 = vmatprep.subr.mxu0 0.0
      %8964 = vmatpush1.msra.mxu0 0.0
      %8965 = vmatprep.subr.mxu0 0.0
      %8966 = vmatpush1.msra.mxu0 0.0
      %8967 = vmatprep.subr.mxu0 0.0
      %8968 = vmatpush1.msra.mxu0 0.0
      %8969 = vmatprep.subr.mxu0 0.0
      %8970 = vmatpush1.msra.mxu0 0.0
      %8971 = vmatprep.subr.mxu0 0.0
      %8972 = vmatpush1.msra.mxu0 0.0
      %8973 = vmatprep.subr.mxu0 0.0
      %8974 = vmatpush1.msra.mxu0 0.0
      %8975 = vmatprep.subr.mxu0 0.0
      %8976 = vmatpush1.msra.mxu0 0.0
      %8977 = vmatprep.subr.mxu0 0.0
      %8978 = vmatpush1.msra.mxu0 0.0
      %8979 = vmatprep.subr.mxu0 0.0
      %8980 = vmatpush1.msra.mxu0 0.0
      %8981 = vmatprep.subr.mxu0 0.0
      %8982 = vmatpush1.msra.mxu0 0.0
      %8983 = vmatprep.subr.mxu0 0.0
      %8984 = vmatpush1.msra.mxu0 0.0
      %8985 = vmatprep.subr.mxu0 0.0
      %8986 = vmatpush1.msra.mxu0 0.0
      %8987 = vmatprep.subr.mxu0 0.0
      %8988 = vmatpush1.msra.mxu0 0.0
      %8989 = vmatprep.subr.mxu0 0.0
      %8990 = vmatpush1.msra.mxu0 0.0
      %8991 = vmatprep.subr.mxu0 0.0
      %8992 = vmatpush1.msra.mxu0 0.0
      %8993 = vmatprep.mubr.f32.mxu0 0.0
      %8994 = vmatmul.mubr.f32.gmra.mrb[0].mxu0 %v8807
      %v8995 = vpop.f32.mrb[0].mxu0
      %v8996 = vadd.f32 0.0, %v8995
      %v8997 = vpop.f32.mrb[0].mxu0
      %8998 = vmatprep.mubr.f32.mxu0 0.0
      %8999 = vmatmul.mubr.f32.gmra.mrb[0].mxu0 %v8810
      %v9000 = vpop.f32.mrb[0].mxu0
      %v9001 = vadd.f32 0.0, %v9000
      %v9002 = vpop.f32.mrb[0].mxu0
      %9003 = vmatprep.mubr.f32.mxu0 0.0
      %9004 = vmatmul.mubr.f32.gmra.mrb[0].mxu0 %v8813
      %v9005 = vpop.f32.mrb[0].mxu0
      %v9006 = vadd.f32 0.0, %v9005
      %v9007 = vpop.f32.mrb[0].mxu0
      %9008 = vmatprep.mubr.f32.mxu0 0.0
      %9009 = vmatmul.mubr.f32.gmra.mrb[0].mxu0 %v8816
      %v9010 = vpop.f32.mrb[0].mxu0
      %v9011 = vadd.f32 0.0, %v9010
      %v9012 = vpop.f32.mrb[0].mxu0
      %9013 = vmatprep.mubr.f32.mxu0 0.0
      %9014 = vmatmul.mubr.f32.gmra.mrb[0].mxu0 %v8819
      %v9015 = vpop.f32.mrb[0].mxu0
      %v9016 = vadd.f32 0.0, %v9015
      %v9017 = vpop.f32.mrb[0].mxu0
      %9018 = vmatprep.mubr.f32.mxu0 0.0
      %9019 = vmatmul.mubr.f32.gmra.mrb[0].mxu0 %v8822
      %v9020 = vpop.f32.mrb[0].mxu0
      %v9021 = vadd.f32 0.0, %v9020
      %v9022 = vpop.f32.mrb[0].mxu0
      %9023 = vmatprep.mubr.f32.mxu0 0.0
      %9024 = vmatmul.mubr.f32.gmra.mrb[0].mxu0 %v8825
      %v9025 = vpop.f32.mrb[0].mxu0
      %v9026 = vadd.f32 0.0, %v9025
      %v9027 = vpop.f32.mrb[0].mxu0
      %9028 = vmatprep.mubr.f32.mxu0 0.0
      %9029 = vmatmul.mubr.f32.gmra.mrb[0].mxu0 %v8828
      %v9030 = vpop.f32.mrb[0].mxu0
      %v9031 = vadd.f32 0.0, %v9030
      %v9032 = vpop.f32.mrb[0].mxu0
      %9033 = vmatprep.mubr.f32.mxu0 0.0
      %9034 = vmatmul.mubr.f32.gmra.mrb[0].mxu0 %v8831
      %v9035 = vpop.f32.mrb[0].mxu0
      %v9036 = vadd.f32 0.0, %v9035
      %v9037 = vpop.f32.mrb[0].mxu0
      %9038 = vmatprep.mubr.f32.mxu0 0.0
      %9039 = vmatmul.mubr.f32.gmra.mrb[0].mxu0 %v8834
      %v9040 = vpop.f32.mrb[0].mxu0
      %v9041 = vadd.f32 0.0, %v9040
      %v9042 = vpop.f32.mrb[0].mxu0
      %9043 = vmatprep.mubr.f32.mxu0 0.0
      %9044 = vmatmul.mubr.f32.gmra.mrb[0].mxu0 %v8837
      %v9045 = vpop.f32.mrb[0].mxu0
      %v9046 = vadd.f32 0.0, %v9045
      %v9047 = vpop.f32.mrb[0].mxu0
      %9048 = vmatprep.mubr.f32.mxu0 0.0
      %9049 = vmatmul.mubr.f32.gmra.mrb[0].mxu0 %v8840
      %v9050 = vpop.f32.mrb[0].mxu0
      %v9051 = vadd.f32 0.0, %v9050
      %v9052 = vpop.f32.mrb[0].mxu0
      %9053 = vmatprep.mubr.f32.mxu0 0.0
      %9054 = vmatmul.mubr.f32.gmra.mrb[0].mxu0 %v8843
      %v9055 = vpop.f32.mrb[0].mxu0
      %v9056 = vadd.f32 0.0, %v9055
      %v9057 = vpop.f32.mrb[0].mxu0
      %9058 = vmatprep.mubr.f32.mxu0 0.0
      %9059 = vmatmul.mubr.f32.gmra.mrb[0].mxu0 %v8846
      %v9060 = vpop.f32.mrb[0].mxu0
      %v9061 = vadd.f32 0.0, %v9060
      %v9062 = vpop.f32.mrb[0].mxu0
      %9063 = vmatprep.mubr.f32.mxu0 0.0
      %9064 = vmatmul.mubr.f32.gmra.mrb[0].mxu0 %v8849
      %v9065 = vpop.f32.mrb[0].mxu0
      %v9066 = vadd.f32 0.0, %v9065
      %v9067 = vpop.f32.mrb[0].mxu0
      %9068 = vmatprep.mubr.f32.mxu0 0.0
      %9069 = vmatmul.mubr.f32.gmra.mrb[0].mxu0 %v8852
      %v9070 = vpop.f32.mrb[0].mxu0
      %v9071 = vadd.f32 0.0, %v9070
      %v9072 = vpop.f32.mrb[0].mxu0
      %9073 = vmatprep.mubr.f32.mxu0 0.0
      %9074 = vmatmul.mubr.f32.gmra.mrb[0].mxu0 %v8855
      %v9075 = vpop.f32.mrb[0].mxu0
      %v9076 = vadd.f32 0.0, %v9075
      %v9077 = vpop.f32.mrb[0].mxu0
      %9078 = vmatprep.mubr.f32.mxu0 0.0
      %9079 = vmatmul.mubr.f32.gmra.mrb[0].mxu0 %v8858
      %v9080 = vpop.f32.mrb[0].mxu0
      %v9081 = vadd.f32 0.0, %v9080
      %v9082 = vpop.f32.mrb[0].mxu0
      %9083 = vmatprep.mubr.f32.mxu0 0.0
      %9084 = vmatmul.mubr.f32.gmra.mrb[0].mxu0 %v8861
      %v9085 = vpop.f32.mrb[0].mxu0
      %v9086 = vadd.f32 0.0, %v9085
      %v9087 = vpop.f32.mrb[0].mxu0
      %9088 = vmatprep.mubr.f32.mxu0 0.0
      %9089 = vmatmul.mubr.f32.gmra.mrb[0].mxu0 %v8864
      %v9090 = vpop.f32.mrb[0].mxu0
      %v9091 = vadd.f32 0.0, %v9090
      %v9092 = vpop.f32.mrb[0].mxu0
      %9093 = vmatprep.mubr.f32.mxu0 0.0
      %9094 = vmatmul.mubr.f32.gmra.mrb[0].mxu0 %v8867
      %v9095 = vpop.f32.mrb[0].mxu0
      %v9096 = vadd.f32 0.0, %v9095
      %v9097 = vpop.f32.mrb[0].mxu0
      %9098 = vmatprep.mubr.f32.mxu0 0.0
      %9099 = vmatmul.mubr.f32.gmra.mrb[0].mxu0 %v8870
      %v9100 = vpop.f32.mrb[0].mxu0
      %v9101 = vadd.f32 0.0, %v9100
      %v9102 = vpop.f32.mrb[0].mxu0
      %9103 = vmatprep.mubr.f32.mxu0 0.0
      %9104 = vmatmul.mubr.f32.gmra.mrb[0].mxu0 %v8873
      %v9105 = vpop.f32.mrb[0].mxu0
      %v9106 = vadd.f32 0.0, %v9105
      %v9107 = vpop.f32.mrb[0].mxu0
      %9108 = vmatprep.mubr.f32.mxu0 0.0
      %9109 = vmatmul.mubr.f32.gmra.mrb[0].mxu0 %v8876
      %v9110 = vpop.f32.mrb[0].mxu0
      %v9111 = vadd.f32 0.0, %v9110
      %v9112 = vpop.f32.mrb[0].mxu0
      %9113 = vmatprep.mubr.f32.mxu0 0.0
      %9114 = vmatmul.mubr.f32.gmra.mrb[0].mxu0 %v8879
      %v9115 = vpop.f32.mrb[0].mxu0
      %v9116 = vadd.f32 0.0, %v9115
      %v9117 = vpop.f32.mrb[0].mxu0
      %9118 = vmatprep.mubr.f32.mxu0 0.0
      %9119 = vmatmul.mubr.f32.gmra.mrb[0].mxu0 %v8882
      %v9120 = vpop.f32.mrb[0].mxu0
      %v9121 = vadd.f32 0.0, %v9120
      %v9122 = vpop.f32.mrb[0].mxu0
      %9123 = vmatprep.mubr.f32.mxu0 0.0
      %9124 = vmatmul.mubr.f32.gmra.mrb[0].mxu0 %v8885
      %v9125 = vpop.f32.mrb[0].mxu0
      %v9126 = vadd.f32 0.0, %v9125
      %v9127 = vpop.f32.mrb[0].mxu0
      %9128 = vmatprep.mubr.f32.mxu0 0.0
      %9129 = vmatmul.mubr.f32.gmra.mrb[0].mxu0 %v8888
      %v9130 = vpop.f32.mrb[0].mxu0
      %v9131 = vadd.f32 0.0, %v9130
      %v9132 = vpop.f32.mrb[0].mxu0
      %9133 = vmatprep.mubr.f32.mxu0 0.0
      %9134 = vmatmul.mubr.f32.gmra.mrb[0].mxu0 %v8891
      %v9135 = vpop.f32.mrb[0].mxu0
      %v9136 = vadd.f32 0.0, %v9135
      %v9137 = vpop.f32.mrb[0].mxu0
      %9138 = vmatprep.mubr.f32.mxu0 0.0
      %9139 = vmatmul.mubr.f32.gmra.mrb[0].mxu0 %v8894
      %v9140 = vpop.f32.mrb[0].mxu0
      %v9141 = vadd.f32 0.0, %v9140
      %v9142 = vpop.f32.mrb[0].mxu0
      %9143 = vmatprep.mubr.f32.mxu0 0.0
      %9144 = vmatmul.mubr.f32.gmra.mrb[0].mxu0 %v8897
      %v9145 = vpop.f32.mrb[0].mxu0
      %v9146 = vadd.f32 0.0, %v9145
      %v9147 = vpop.f32.mrb[0].mxu0
      %9148 = vmatprep.mubr.f32.mxu0 0.0
      %9149 = vmatmul.mubr.f32.gmra.mrb[0].mxu0 %v8900
      %v9150 = vpop.f32.mrb[0].mxu0
      %v9151 = vadd.f32 0.0, %v9150
      %v9152 = vpop.f32.mrb[0].mxu0
      %9153 = vmatprep.mubr.f32.mxu0 0.0
      %9154 = vmatmul.mubr.f32.gmra.mrb[0].mxu0 %v8903
      %v9155 = vpop.f32.mrb[0].mxu0
      %v9156 = vadd.f32 0.0, %v9155
      %v9157 = vpop.f32.mrb[0].mxu0
      %9158 = vmatprep.mubr.f32.mxu0 0.0
      %9159 = vmatmul.mubr.f32.gmra.mrb[0].mxu0 %v8906
      %v9160 = vpop.f32.mrb[0].mxu0
      %v9161 = vadd.f32 0.0, %v9160
      %v9162 = vpop.f32.mrb[0].mxu0
      %9163 = vmatprep.mubr.f32.mxu0 0.0
      %9164 = vmatmul.mubr.f32.gmra.mrb[0].mxu0 %v8909
      %v9165 = vpop.f32.mrb[0].mxu0
      %v9166 = vadd.f32 0.0, %v9165
      %v9167 = vpop.f32.mrb[0].mxu0
      %9168 = vmatprep.mubr.f32.mxu0 0.0
      %9169 = vmatmul.mubr.f32.gmra.mrb[0].mxu0 %v8912
      %v9170 = vpop.f32.mrb[0].mxu0
      %v9171 = vadd.f32 0.0, %v9170
      %v9172 = vpop.f32.mrb[0].mxu0
      %9173 = vmatprep.mubr.f32.mxu0 0.0
      %9174 = vmatmul.mubr.f32.gmra.mrb[0].mxu0 %v8915
      %v9175 = vpop.f32.mrb[0].mxu0
      %v9176 = vadd.f32 0.0, %v9175
      %v9177 = vpop.f32.mrb[0].mxu0
      %9178 = vmatprep.mubr.f32.mxu0 0.0
      %9179 = vmatmul.mubr.f32.gmra.mrb[0].mxu0 %v8918
      %v9180 = vpop.f32.mrb[0].mxu0
      %v9181 = vadd.f32 0.0, %v9180
      %v9182 = vpop.f32.mrb[0].mxu0
      %9183 = vmatprep.mubr.f32.mxu0 0.0
      %9184 = vmatmul.mubr.f32.gmra.mrb[0].mxu0 %v8921
      %v9185 = vpop.f32.mrb[0].mxu0
      %v9186 = vadd.f32 0.0, %v9185
      %v9187 = vpop.f32.mrb[0].mxu0
      %9188 = vmatprep.mubr.f32.mxu0 0.0
      %9189 = vmatmul.mubr.f32.gmra.mrb[0].mxu0 %v8924
      %v9190 = vpop.f32.mrb[0].mxu0
      %v9191 = vadd.f32 0.0, %v9190
      %v9192 = vpop.f32.mrb[0].mxu0
      %9193 = vmatprep.mubr.f32.mxu0 0.0
      %9194 = vmatmul.mubr.f32.gmra.mrb[0].mxu0 %v8927
      %v9195 = vpop.f32.mrb[0].mxu0
      %v9196 = vadd.f32 0.0, %v9195
      %v9197 = vpop.f32.mrb[0].mxu0
      %9198 = vdwg.mxu0
      %v9199 = vadd.f32 %v8722, %v8996
      %v9200 = vadd.f32 %v8723, %v9001
      %v9201 = vadd.f32 %v8724, %v9006
      %v9202 = vadd.f32 %v8725, %v9011
      %v9203 = vadd.f32 %v8726, %v9016
      %v9204 = vadd.f32 %v8727, %v9021
      %v9205 = vadd.f32 %v8728, %v9026
      %v9206 = vadd.f32 %v8729, %v9031
      %v9207 = vadd.f32 %v8730, %v9036
      %v9208 = vadd.f32 %v8731, %v9041
      %v9209 = vadd.f32 %v8732, %v9046
      %v9210 = vadd.f32 %v8733, %v9051
      %v9211 = vadd.f32 %v8734, %v9056
      %v9212 = vadd.f32 %v8735, %v9061
      %v9213 = vadd.f32 %v8736, %v9066
      %v9214 = vadd.f32 %v8737, %v9071
      %v9215 = vadd.f32 %v8738, %v9076
      %v9216 = vadd.f32 %v8739, %v9081
      %v9217 = vadd.f32 %v8740, %v9086
      %v9218 = vadd.f32 %v8741, %v9091
      %v9219 = vadd.f32 %v8742, %v9096
      %v9220 = vadd.f32 %v8743, %v9101
      %v9221 = vadd.f32 %v8744, %v9106
      %v9222 = vadd.f32 %v8745, %v9111
      %v9223 = vadd.f32 %v8746, %v9116
      %v9224 = vadd.f32 %v8747, %v9121
      %v9225 = vadd.f32 %v8748, %v9126
      %v9226 = vadd.f32 %v8749, %v9131
      %v9227 = vadd.f32 %v8750, %v9136
      %v9228 = vadd.f32 %v8751, %v9141
      %v9229 = vadd.f32 %v8752, %v9146
      %v9230 = vadd.f32 %v8753, %v9151
      %v9231 = vadd.f32 %v8754, %v9156
      %v9232 = vadd.f32 %v8755, %v9161
      %v9233 = vadd.f32 %v8756, %v9166
      %v9234 = vadd.f32 %v8757, %v9171
      %v9235 = vadd.f32 %v8758, %v9176
      %v9236 = vadd.f32 %v8759, %v9181
      %v9237 = vadd.f32 %v8760, %v9186
      %v9238 = vadd.f32 %v8761, %v9191
      %v9239 = vadd.f32 %v8762, %v9196
      %v9240 = vld [vmem:[%s300 + $0x13] sm:$0xff]
      %v9241 = vld [vmem:[%s300 + $0x1b] sm:$0xff]
      %v9242 = vld [vmem:[%s300 + $0x23] sm:$0xff]
      %v9243 = vld [vmem:[%s300 + $0x2b] sm:$0xff]
      %v9244 = vld [vmem:[%s300 + $0x33] sm:$0xff]
      %v9245 = vld [vmem:[%s300 + $0x3b] sm:$0xff]
      %v9246 = vld [vmem:[%s300 + $0x43] sm:$0xff]
      %v9247 = vld [vmem:[%s300 + $0x4b] sm:$0xff]
      %v9248 = vld [vmem:[%s300 + $0x53] sm:$0xff]
      %v9249 = vld [vmem:[%s300 + $0x5b] sm:$0xff]
      %v9250 = vld [vmem:[%s300 + $0x63] sm:$0xff]
      %v9251 = vld [vmem:[%s300 + $0x6b] sm:$0xff]
      %v9252 = vld [vmem:[%s300 + $0x73] sm:$0xff]
      %v9253 = vld [vmem:[%s300 + $0x7b] sm:$0xff]
      %v9254 = vld [vmem:[%s300 + $0x83] sm:$0xff]
      %v9255 = vld [vmem:[%s300 + $0x8b] sm:$0xff]
      %v9256 = vld [vmem:[%s300 + $0x93] sm:$0xff]
      %v9257 = vld [vmem:[%s300 + $0x9b] sm:$0xff]
      %v9258 = vld [vmem:[%s300 + $0xa3] sm:$0xff]
      %v9259 = vld [vmem:[%s300 + $0xab] sm:$0xff]
      %v9260 = vld [vmem:[%s300 + $0xb3] sm:$0xff]
      %v9261 = vld [vmem:[%s300 + $0xbb] sm:$0xff]
      %v9262 = vld [vmem:[%s300 + $0xc3] sm:$0xff]
      %v9263 = vld [vmem:[%s300 + $0xcb] sm:$0xff]
      %v9264 = vld [vmem:[%s300 + $0xd3] sm:$0xff]
      %v9265 = vld [vmem:[%s300 + $0xdb] sm:$0xff]
      %v9266 = vld [vmem:[%s300 + $0xe3] sm:$0xff]
      %v9267 = vld [vmem:[%s300 + $0xeb] sm:$0xff]
      %v9268 = vld [vmem:[%s300 + $0xf3] sm:$0xff]
      %v9269 = vld [vmem:[%s300 + $0xfb] sm:$0xff]
      %v9270 = vld [vmem:[%s300 + $0x103] sm:$0xff]
      %v9271 = vld [vmem:[%s300 + $0x10b] sm:$0xff]
      %v9272 = vld [vmem:[%s300 + $0x113] sm:$0xff]
      %v9273 = vld [vmem:[%s300 + $0x11b] sm:$0xff]
      %v9274 = vld [vmem:[%s300 + $0x123] sm:$0xff]
      %v9275 = vld [vmem:[%s300 + $0x12b] sm:$0xff]
      %v9276 = vld [vmem:[%s300 + $0x133] sm:$0xff]
      %v9277 = vld [vmem:[%s300 + $0x13b] sm:$0xff]
      %v9278 = vld [vmem:[%s300 + $0x143] sm:$0xff]
      %v9279 = vld [vmem:[%s300 + $0x14b] sm:$0xff]
      %v9280 = vld [vmem:[%s300 + $0x153] sm:$0xf]
      %v9281 = vld [vmem:[%s5] sm:$0x1]
      %v9283 = vlaneseq
      %v9284 = vshrl.u32 %v9283, 7
      %v9285 = vsub.s32 0, %v9284
      %v9286 = vrot.slane %v9281, %v9285
      %v9288 = vmul.f32 %v9199, %v9286
      %v9289 = vmul.f32 %v9200, %v9286
      %v9290 = vmul.f32 %v9201, %v9286
      %v9291 = vmul.f32 %v9202, %v9286
      %v9292 = vmul.f32 %v9203, %v9286
      %v9293 = vmul.f32 %v9204, %v9286
      %v9294 = vmul.f32 %v9205, %v9286
      %v9295 = vmul.f32 %v9206, %v9286
      %v9296 = vmul.f32 %v9207, %v9286
      %v9297 = vmul.f32 %v9208, %v9286
      %v9298 = vmul.f32 %v9209, %v9286
      %v9299 = vmul.f32 %v9210, %v9286
      %v9300 = vmul.f32 %v9211, %v9286
      %v9301 = vmul.f32 %v9212, %v9286
      %v9302 = vmul.f32 %v9213, %v9286
      %v9303 = vmul.f32 %v9214, %v9286
      %v9304 = vmul.f32 %v9215, %v9286
      %v9305 = vmul.f32 %v9216, %v9286
      %v9306 = vmul.f32 %v9217, %v9286
      %v9307 = vmul.f32 %v9218, %v9286
      %v9308 = vmul.f32 %v9219, %v9286
      %v9309 = vmul.f32 %v9220, %v9286
      %v9310 = vmul.f32 %v9221, %v9286
      %v9311 = vmul.f32 %v9222, %v9286
      %v9312 = vmul.f32 %v9223, %v9286
      %v9313 = vmul.f32 %v9224, %v9286
      %v9314 = vmul.f32 %v9225, %v9286
      %v9315 = vmul.f32 %v9226, %v9286
      %v9316 = vmul.f32 %v9227, %v9286
      %v9317 = vmul.f32 %v9228, %v9286
      %v9318 = vmul.f32 %v9229, %v9286
      %v9319 = vmul.f32 %v9230, %v9286
      %v9320 = vmul.f32 %v9231, %v9286
      %v9321 = vmul.f32 %v9232, %v9286
      %v9322 = vmul.f32 %v9233, %v9286
      %v9323 = vmul.f32 %v9234, %v9286
      %v9324 = vmul.f32 %v9235, %v9286
      %v9325 = vmul.f32 %v9236, %v9286
      %v9326 = vmul.f32 %v9237, %v9286
      %v9327 = vmul.f32 %v9238, %v9286
      %v9328 = vmul.f32 %v9239, %v9286
      %v9329 = vld [vmem:[%s6] sm:$0x1]
      %v9331 = vlaneseq
      %v9332 = vshrl.u32 %v9331, 7
      %v9333 = vsub.s32 0, %v9332
      %v9334 = vrot.slane %v9329, %v9333
      %v9336 = vadd.f32 %v9288, %v9334
      %v9337 = vadd.f32 %v9289, %v9334
      %v9338 = vadd.f32 %v9290, %v9334
      %v9339 = vadd.f32 %v9291, %v9334
      %v9340 = vadd.f32 %v9292, %v9334
      %v9341 = vadd.f32 %v9293, %v9334
      %v9342 = vadd.f32 %v9294, %v9334
      %v9343 = vadd.f32 %v9295, %v9334
      %v9344 = vadd.f32 %v9296, %v9334
      %v9345 = vadd.f32 %v9297, %v9334
      %v9346 = vadd.f32 %v9298, %v9334
      %v9347 = vadd.f32 %v9299, %v9334
      %v9348 = vadd.f32 %v9300, %v9334
      %v9349 = vadd.f32 %v9301, %v9334
      %v9350 = vadd.f32 %v9302, %v9334
      %v9351 = vadd.f32 %v9303, %v9334
      %v9352 = vadd.f32 %v9304, %v9334
      %v9353 = vadd.f32 %v9305, %v9334
      %v9354 = vadd.f32 %v9306, %v9334
      %v9355 = vadd.f32 %v9307, %v9334
      %v9356 = vadd.f32 %v9308, %v9334
      %v9357 = vadd.f32 %v9309, %v9334
      %v9358 = vadd.f32 %v9310, %v9334
      %v9359 = vadd.f32 %v9311, %v9334
      %v9360 = vadd.f32 %v9312, %v9334
      %v9361 = vadd.f32 %v9313, %v9334
      %v9362 = vadd.f32 %v9314, %v9334
      %v9363 = vadd.f32 %v9315, %v9334
      %v9364 = vadd.f32 %v9316, %v9334
      %v9365 = vadd.f32 %v9317, %v9334
      %v9366 = vadd.f32 %v9318, %v9334
      %v9367 = vadd.f32 %v9319, %v9334
      %v9368 = vadd.f32 %v9320, %v9334
      %v9369 = vadd.f32 %v9321, %v9334
      %v9370 = vadd.f32 %v9322, %v9334
      %v9371 = vadd.f32 %v9323, %v9334
      %v9372 = vadd.f32 %v9324, %v9334
      %v9373 = vadd.f32 %v9325, %v9334
      %v9374 = vadd.f32 %v9326, %v9334
      %v9375 = vadd.f32 %v9327, %v9334
      %v9376 = vadd.f32 %v9328, %v9334
      %v9377 = vadd.f32 %v9336, %v9240
      %v9378 = vadd.f32 %v9337, %v9241
      %v9379 = vadd.f32 %v9338, %v9242
      %v9380 = vadd.f32 %v9339, %v9243
      %v9381 = vadd.f32 %v9340, %v9244
      %v9382 = vadd.f32 %v9341, %v9245
      %v9383 = vadd.f32 %v9342, %v9246
      %v9384 = vadd.f32 %v9343, %v9247
      %v9385 = vadd.f32 %v9344, %v9248
      %v9386 = vadd.f32 %v9345, %v9249
      %v9387 = vadd.f32 %v9346, %v9250
      %v9388 = vadd.f32 %v9347, %v9251
      %v9389 = vadd.f32 %v9348, %v9252
      %v9390 = vadd.f32 %v9349, %v9253
      %v9391 = vadd.f32 %v9350, %v9254
      %v9392 = vadd.f32 %v9351, %v9255
      %v9393 = vadd.f32 %v9352, %v9256
      %v9394 = vadd.f32 %v9353, %v9257
      %v9395 = vadd.f32 %v9354, %v9258
      %v9396 = vadd.f32 %v9355, %v9259
      %v9397 = vadd.f32 %v9356, %v9260
      %v9398 = vadd.f32 %v9357, %v9261
      %v9399 = vadd.f32 %v9358, %v9262
      %v9400 = vadd.f32 %v9359, %v9263
      %v9401 = vadd.f32 %v9360, %v9264
      %v9402 = vadd.f32 %v9361, %v9265
      %v9403 = vadd.f32 %v9362, %v9266
      %v9404 = vadd.f32 %v9363, %v9267
      %v9405 = vadd.f32 %v9364, %v9268
      %v9406 = vadd.f32 %v9365, %v9269
      %v9407 = vadd.f32 %v9366, %v9270
      %v9408 = vadd.f32 %v9367, %v9271
      %v9409 = vadd.f32 %v9368, %v9272
      %v9410 = vadd.f32 %v9369, %v9273
      %v9411 = vadd.f32 %v9370, %v9274
      %v9412 = vadd.f32 %v9371, %v9275
      %v9413 = vadd.f32 %v9372, %v9276
      %v9414 = vadd.f32 %v9373, %v9277
      %v9415 = vadd.f32 %v9374, %v9278
      %v9416 = vadd.f32 %v9375, %v9279
      %v9417 = vadd.f32 %v9376, %v9280
      %v9418 = vmax.f32 %v9377, 0.0
      %v9419 = vmax.f32 %v9378, 0.0
      %v9420 = vmax.f32 %v9379, 0.0
      %v9421 = vmax.f32 %v9380, 0.0
      %v9422 = vmax.f32 %v9381, 0.0
      %v9423 = vmax.f32 %v9382, 0.0
      %v9424 = vmax.f32 %v9383, 0.0
      %v9425 = vmax.f32 %v9384, 0.0
      %v9426 = vmax.f32 %v9385, 0.0
      %v9427 = vmax.f32 %v9386, 0.0
      %v9428 = vmax.f32 %v9387, 0.0
      %v9429 = vmax.f32 %v9388, 0.0
      %v9430 = vmax.f32 %v9389, 0.0
      %v9431 = vmax.f32 %v9390, 0.0
      %v9432 = vmax.f32 %v9391, 0.0
      %v9433 = vmax.f32 %v9392, 0.0
      %v9434 = vmax.f32 %v9393, 0.0
      %v9435 = vmax.f32 %v9394, 0.0
      %v9436 = vmax.f32 %v9395, 0.0
      %v9437 = vmax.f32 %v9396, 0.0
      %v9438 = vmax.f32 %v9397, 0.0
      %v9439 = vmax.f32 %v9398, 0.0
      %v9440 = vmax.f32 %v9399, 0.0
      %v9441 = vmax.f32 %v9400, 0.0
      %v9442 = vmax.f32 %v9401, 0.0
      %v9443 = vmax.f32 %v9402, 0.0
      %v9444 = vmax.f32 %v9403, 0.0
      %v9445 = vmax.f32 %v9404, 0.0
      %v9446 = vmax.f32 %v9405, 0.0
      %v9447 = vmax.f32 %v9406, 0.0
      %v9448 = vmax.f32 %v9407, 0.0
      %v9449 = vmax.f32 %v9408, 0.0
      %v9450 = vmax.f32 %v9409, 0.0
      %v9451 = vmax.f32 %v9410, 0.0
      %v9452 = vmax.f32 %v9411, 0.0
      %v9453 = vmax.f32 %v9412, 0.0
      %v9454 = vmax.f32 %v9413, 0.0
      %v9455 = vmax.f32 %v9414, 0.0
      %v9456 = vmax.f32 %v9415, 0.0
      %v9457 = vmax.f32 %v9416, 0.0
      %v9458 = vmax.f32 %v9417, 0.0
      %9459 = vst.msk [vmem:[%s305] sm:$0xff] %vm391, %v9418
      %9460 = vst.msk [vmem:[%s305 + $0x8] sm:$0xff] %vm391, %v9419
      %9461 = vst.msk [vmem:[%s305 + $0x10] sm:$0xff] %vm391, %v9420
      %9462 = vst.msk [vmem:[%s305 + $0x18] sm:$0xff] %vm391, %v9421
      %9463 = vst.msk [vmem:[%s305 + $0x20] sm:$0xff] %vm391, %v9422
      %9464 = vst.msk [vmem:[%s305 + $0x28] sm:$0xff] %vm391, %v9423
      %9465 = vst.msk [vmem:[%s305 + $0x30] sm:$0xff] %vm391, %v9424
      %9466 = vst.msk [vmem:[%s305 + $0x38] sm:$0xff] %vm391, %v9425
      %9467 = vst.msk [vmem:[%s305 + $0x40] sm:$0xff] %vm391, %v9426
      %9468 = vst.msk [vmem:[%s305 + $0x48] sm:$0xff] %vm391, %v9427
      %9469 = vst.msk [vmem:[%s305 + $0x50] sm:$0xff] %vm391, %v9428
      %9470 = vst.msk [vmem:[%s305 + $0x58] sm:$0xff] %vm391, %v9429
      %9471 = vst.msk [vmem:[%s305 + $0x60] sm:$0xff] %vm391, %v9430
      %9472 = vst.msk [vmem:[%s305 + $0x68] sm:$0xff] %vm391, %v9431
      %9473 = vst.msk [vmem:[%s305 + $0x70] sm:$0xff] %vm391, %v9432
      %9474 = vst.msk [vmem:[%s305 + $0x78] sm:$0xff] %vm391, %v9433
      %9475 = vst.msk [vmem:[%s305 + $0x80] sm:$0xff] %vm391, %v9434
      %9476 = vst.msk [vmem:[%s305 + $0x88] sm:$0xff] %vm391, %v9435
      %9477 = vst.msk [vmem:[%s305 + $0x90] sm:$0xff] %vm391, %v9436
      %9478 = vst.msk [vmem:[%s305 + $0x98] sm:$0xff] %vm391, %v9437
      %9479 = vst.msk [vmem:[%s305 + $0xa0] sm:$0xff] %vm391, %v9438
      %9480 = vst.msk [vmem:[%s305 + $0xa8] sm:$0xff] %vm391, %v9439
      %9481 = vst.msk [vmem:[%s305 + $0xb0] sm:$0xff] %vm391, %v9440
      %9482 = vst.msk [vmem:[%s305 + $0xb8] sm:$0xff] %vm391, %v9441
      %9483 = vst.msk [vmem:[%s305 + $0xc0] sm:$0xff] %vm391, %v9442
      %9484 = vst.msk [vmem:[%s305 + $0xc8] sm:$0xff] %vm391, %v9443
      %9485 = vst.msk [vmem:[%s305 + $0xd0] sm:$0xff] %vm391, %v9444
      %9486 = vst.msk [vmem:[%s305 + $0xd8] sm:$0xff] %vm391, %v9445
      %9487 = vst.msk [vmem:[%s305 + $0xe0] sm:$0xff] %vm391, %v9446
      %9488 = vst.msk [vmem:[%s305 + $0xe8] sm:$0xff] %vm391, %v9447
      %9489 = vst.msk [vmem:[%s305 + $0xf0] sm:$0xff] %vm391, %v9448
      %9490 = vst.msk [vmem:[%s305 + $0xf8] sm:$0xff] %vm391, %v9449
      %9491 = vst.msk [vmem:[%s305 + $0x100] sm:$0xff] %vm391, %v9450
      %9492 = vst.msk [vmem:[%s305 + $0x108] sm:$0xff] %vm391, %v9451
      %9493 = vst.msk [vmem:[%s305 + $0x110] sm:$0xff] %vm391, %v9452
      %9494 = vst.msk [vmem:[%s305 + $0x118] sm:$0xff] %vm391, %v9453
      %9495 = vst.msk [vmem:[%s305 + $0x120] sm:$0xff] %vm391, %v9454
      %9496 = vst.msk [vmem:[%s305 + $0x128] sm:$0xff] %vm391, %v9455
      %9497 = vst.msk [vmem:[%s305 + $0x130] sm:$0xff] %vm391, %v9456
      %9498 = vst.msk [vmem:[%s305 + $0x138] sm:$0xff] %vm391, %v9457
      %9499 = vst.msk [vmem:[%s305 + $0x140] sm:$0xf] %vm5028, %v9458
      %p9500 = scmp.lt.s32.totalorder %s19, 1
      %s9501 = scalar_select %p9500, %s19, 1
      %s9502 = smul.addr %s9501, 41
      %s9503 = smul.addr %s9502, 8
      %s9504 = scalar_lea.vmem %s8, %s9503
      // Predicated region
      $region53: #{tpu_custom_call.1} parent=51 // pred_check
        %p9505 = pneg %p210
      $region54: #{tpu_custom_call.1} parent=51 // pred_check_branch
        %9507 = sbr.rel (%p9505) target = $region56
      $region55: #{tpu_custom_call.1} parent=51 // pred_region
        _
      $region56: #{tpu_custom_call.1} parent=51 // pred_fallthru
        _
    $region52: #{tpu_custom_call.1} parent=5 // pred_fallthru
      _
    %p9508 = scmp.le.s32.totalorder 2, %s14
    // Predicated region
    $region57: #{tpu_custom_call.1} parent=5 // pred_check
      %p9509 = pneg %p9508
    $region58: #{tpu_custom_call.1} parent=5 // pred_check_branch
      %9511 = sbr.rel (%p9509) target = $region60
    $region59: #{tpu_custom_call.1} parent=5 // pred_region
      %s9512 = ssub.s32 %s14, 2
      // Predicated region
      $region61: #{tpu_custom_call.1} parent=59 // pred_check
        %p9513 = pneg %p216
      $region62: #{tpu_custom_call.1} parent=59 // pred_check_branch
        %9515 = sbr.rel (%p9513) target = $region64
      $region63: #{tpu_custom_call.1} parent=59 // pred_region
        %p9516 = scmp.lt.s32.totalorder %s20, 1
        %s9517 = scalar_select %p9516, %s20, 1
        %s9518 = smul.addr %s9517, 41
        %s9519 = smul.addr %s9518, 8
        %s9520 = scalar_lea.vmem %s8, %s9519
      $region64: #{tpu_custom_call.1} parent=59 // pred_fallthru
        _
    $region60: #{tpu_custom_call.1} parent=5 // pred_fallthru
      _
  $region6: #{tpu_custom_call.1} parent=0 // loop_footer
    %s18 = sadd.s32 1, %s14
  $region7: #{tpu_custom_call.1} parent=0 // loop_footer_branch
    %13 = sbr.rel target = $region3
  $region8: #{tpu_custom_call.1} parent=0 // loop_exit
    _

</llo_original>
